<compile_context>
chip_gen: v6e
topology: v6e:2x2x1
jax: 0.10.0
libtpu: 0.0.40
codegen_flags: <defaults>
</compile_context>

<pallas_src>
import functools

import jax
import jax.numpy as jnp
from jax import lax
from jax.experimental import pallas as pl
from jax.experimental.pallas import tpu as pltpu


def _round_up(n, m):
    return ((n + m - 1) // m) * m


# -----------------------------------------------------------------------------
# Fused kernel: full autoencoder forward for one batch block.
# -----------------------------------------------------------------------------
def _make_fused_kernel(T_enc, T_dec, BBLK, BH, nsplit, H, F_in, G4P, OUTP,
                       num_layers, chunk_t):
    n_lstm = 2 * num_layers
    bf16 = jnp.bfloat16
    f32 = jnp.float32

    def kernel(*args):
        x_ref = args[0]                          # (T_enc, BBLK, F_in) f32
        layers = []
        p = 1
        for _ in range(n_lstm):
            layers.append((args[p], args[p + 1], args[p + 2]))  # wih, whh, b
            p += 3
        lin_w_ref = args[p]                      # (H, OUTP)  bf16
        lin_b_ref = args[p + 1]                  # (1, OUTP)  f32
        out_ref = args[p + 2]                    # (T_dec, BBLK, OUTP) f32
        act_a = args[p + 3]                      # (TMAX*BBLK, H) f32
        act_b = args[p + 4]                      # (TMAX*BBLK, H) f32
        gx_scr = args[p + 5]                     # (chunk_t*BBLK, G4P) f32
        bufs = (act_a, act_b)

        def lstm_layer(T, prepare_chunk, gx_row, whh_ref, dst_buf):
            """Serial LSTM recurrence over T steps.

            prepare_chunk(t0, tc): make the input projections for steps
              [t0, t0+tc) available (e.g. one hoisted MXU matmul into gx_scr).
            gx_row(tl, s, r0): (BH, G4P) pre-activation input projection for
              chunk-local step tl, batch sub-block s (rows r0:r0+BH).
            Returns the per-sub-block final hidden states.
            """
            whh = whh_ref[...]                               # bf16 (H, G4P)
            hs = [jnp.zeros((BH, H), f32) for _ in range(nsplit)]
            cs = [jnp.zeros((BH, H), f32) for _ in range(nsplit)]
            for t0 in range(0, T, chunk_t):                  # static chunks
                tc = min(chunk_t, T - t0)
                prepare_chunk(t0, tc)
                for tl in range(tc):                         # static unroll
                    t = t0 + tl
                    # nsplit independent dependency chains -> ILP in the
                    # latency-bound recurrence.
                    for s in range(nsplit):
                        r0 = s * BH
                        gates = gx_row(tl, s, r0) + jnp.dot(
                            hs[s].astype(bf16), whh,
                            preferred_element_type=f32)      # (BH, G4P)
                        # Packed gates: one full-width sigmoid + one tanh on
                        # the g slice (PyTorch gate order i,f,g,o).
                        sig = jax.nn.sigmoid(gates)
                        gi = sig[:, 0 * H:1 * H]
                        gf = sig[:, 1 * H:2 * H]
                        go = sig[:, 3 * H:4 * H]
                        gg = jnp.tanh(gates[:, 2 * H:3 * H])
                        cs[s] = gf * cs[s] + gi * gg
                        hs[s] = go * jnp.tanh(cs[s])
                        if dst_buf is not None:
                            dst_buf[t * BBLK + r0:t * BBLK + r0 + BH, :] = hs[s]
            return hs

        def projected_layer(T, src_slab, wih_ref, whh_ref, b_ref, dst_buf):
            """LSTM layer whose input projection is hoisted (per time chunk)."""
            wih = wih_ref[...]                               # bf16 (Din, G4P)
            bias = b_ref[...]                                # f32  (1, G4P)

            def prepare_chunk(t0, tc):
                rows = tc * BBLK
                gx_scr[0:rows, :] = (
                    jnp.dot(src_slab(t0, tc).astype(bf16), wih,
                            preferred_element_type=f32) + bias)

            def gx_row(tl, s, r0):
                return gx_scr[tl * BBLK + r0:tl * BBLK + r0 + BH, :]

            return lstm_layer(T, prepare_chunk, gx_row, whh_ref, dst_buf)

        def x_slab(t0, tc):
            return x_ref[t0:t0 + tc].reshape(tc * BBLK, F_in)

        def buf_slab(buf):
            def f(t0, tc):
                return buf[t0 * BBLK:(t0 + tc) * BBLK, :]
            return f

        # ------------------------------ Encoder ------------------------------
        src = x_slab
        widx = 0
        z_parts = None
        for l in range(num_layers):
            wih_ref, whh_ref, b_ref = layers[l]
            last = l == num_layers - 1
            dst = None if last else bufs[widx]               # last layer: only z
            z_parts = projected_layer(T_enc, src, wih_ref, whh_ref, b_ref, dst)
            if not last:
                src = buf_slab(bufs[widx])
                widx ^= 1

        # ------------------------------ Decoder ------------------------------
        # Layer 0: the input is the constant latent z at every step, so its
        # input projection is computed exactly once (no per-step matmul).
        wih_ref, whh_ref, b_ref = layers[num_layers]
        gz = [jnp.dot(z_parts[s].astype(bf16), wih_ref[...],
                      preferred_element_type=f32) + b_ref[...]
              for s in range(nsplit)]
        lstm_layer(T_dec, lambda t0, tc: None, lambda tl, s, r0: gz[s],
                   whh_ref, bufs[0])
        prev = bufs[0]
        widx = 1
        for l in range(1, num_layers):
            wih_ref, whh_ref, b_ref = layers[num_layers + l]
            projected_layer(T_dec, buf_slab(prev), wih_ref, whh_ref, b_ref,
                            bufs[widx])
            prev = bufs[widx]
            widx ^= 1

        # --------------------- Output head: tanh(Linear) ---------------------
        nd = T_dec * BBLK
        y2d = jnp.tanh(
            jnp.dot(prev[0:nd, :].astype(bf16), lin_w_ref[...],
                    preferred_element_type=f32) + lin_b_ref[...])
        out_ref[...] = y2d.reshape(T_dec, BBLK, OUTP)

    return kernel


# -----------------------------------------------------------------------------
# Parameter init (PyTorch-style uniform(-1/sqrt(H), 1/sqrt(H)))
# -----------------------------------------------------------------------------
def init_params(key, in_features, hidden_units, num_layers, out_features):
    H = hidden_units
    k = float(1.0 / (H ** 0.5))

    def lstm_layer_params(subkey, din):
        k1, k2, k3, k4 = jax.random.split(subkey, 4)
        return dict(
            w_ih=jax.random.uniform(k1, (4 * H, din), jnp.float32, -k, k),
            w_hh=jax.random.uniform(k2, (4 * H, H), jnp.float32, -k, k),
            b_ih=jax.random.uniform(k3, (4 * H,), jnp.float32, -k, k),
            b_hh=jax.random.uniform(k4, (4 * H,), jnp.float32, -k, k),
        )

    keys = jax.random.split(key, 2 * num_layers + 1)
    params = {"enc": [], "dec": []}
    for l in range(num_layers):
        din = in_features if l == 0 else H
        params["enc"].append(lstm_layer_params(keys[l], din))
    for l in range(num_layers):
        params["dec"].append(lstm_layer_params(keys[num_layers + l], H))
    kl1, kl2 = jax.random.split(keys[-1])
    params["lin_w"] = jax.random.uniform(kl1, (out_features, H), jnp.float32, -k, k)
    params["lin_b"] = jax.random.uniform(kl2, (out_features,), jnp.float32, -k, k)
    return params


# -----------------------------------------------------------------------------
# One-time preparation: transpose, combine biases, packed-gate layout, bf16.
# Gate g occupies contiguous columns [g*H, (g+1)*H); only columns >= 4*H are
# zero padding (and are never read by the kernel's gate slices).
# -----------------------------------------------------------------------------
def prepare_params(params, in_features, hidden_units, num_layers, out_features):
    H = hidden_units
    G4P = _round_up(4 * H, 128)
    OUTP = _round_up(out_features, 128)

    def pack_lstm(lp, din):
        b = lp["b_ih"] + lp["b_hh"]
        wih_t = jnp.zeros((din, G4P), jnp.float32).at[:, :4 * H].set(
            jnp.transpose(lp["w_ih"]))
        whh_t = jnp.zeros((H, G4P), jnp.float32).at[:, :4 * H].set(
            jnp.transpose(lp["w_hh"]))
        bp = jnp.zeros((1, G4P), jnp.float32).at[0, :4 * H].set(b)
        return (wih_t.astype(jnp.bfloat16), whh_t.astype(jnp.bfloat16), bp)

    enc = []
    for l, lp in enumerate(params["enc"]):
        din = in_features if l == 0 else H
        enc.append(pack_lstm(lp, din))
    dec = [pack_lstm(lp, H) for lp in params["dec"]]

    lin_w_t = jnp.zeros((H, OUTP), jnp.float32).at[:, :out_features].set(
        jnp.transpose(params["lin_w"])).astype(jnp.bfloat16)
    lin_b = jnp.zeros((1, OUTP), jnp.float32).at[0, :out_features].set(
        params["lin_b"])

    return dict(enc=enc, dec=dec, lin=(lin_w_t, lin_b),
                in_features=in_features, H=H, out_features=out_features,
                G4P=G4P, OUTP=OUTP, num_layers=num_layers)


# -----------------------------------------------------------------------------
# Forward pass (inference, pred=False)
# -----------------------------------------------------------------------------
def lstm_autoencoder_forward(prepped, x, sequence, single_buffer_weights=True):
    B, T_enc, F = x.shape
    T_dec = int(sequence)
    H, G4P, OUTP = prepped["H"], prepped["G4P"], prepped["OUTP"]
    num_layers = prepped["num_layers"]
    out_features = prepped["out_features"]

    # Batch blocking: multiple of 8 sublanes; when the padded batch allows it,
    # use >= 2 grid steps so the parallel axis feeds both v7x TensorCores.
    B8 = _round_up(B, 8)
    if B8 <= 8:
        BBLK = B8
    else:
        BBLK = min(_round_up((B8 + 1) // 2, 8), 128)
    Bp = _round_up(B8, BBLK)
    n_bblk = Bp // BBLK
    # Two independent batch sub-chains inside the serial recurrence (hides
    # MXU/EUP latency) whenever the block splits evenly into 8-row halves.
    nsplit = 2 if (BBLK >= 16 and BBLK % 16 == 0) else 1
    BH = BBLK // nsplit
    TMAX = max(T_enc, T_dec)
    CHUNK_T = min(16, TMAX)          # bounds gx scratch AND per-chunk unroll

    # (B, T, F) batch-first -> time-major (T, Bp, F); NO lane padding of F.
    x_tm = jnp.transpose(x, (1, 0, 2)).astype(jnp.float32)
    x_pad = jnp.zeros((T_enc, Bp, F), jnp.float32).at[:, :B, :].set(x_tm)

    # Weights are grid-invariant -> single VMEM buffer (no double-buffering).
    if single_buffer_weights:
        weight_kw = {"pipeline_mode": pl.Buffered(1)}
    else:
        weight_kw = {}

    flat_params = []
    in_specs = [pl.BlockSpec((T_enc, BBLK, F), lambda j: (0, j, 0))]
    for (wih_t, whh_t, b) in prepped["enc"] + prepped["dec"]:
        flat_params += [wih_t, whh_t, b]
        in_specs += [pl.BlockSpec(wih_t.shape, lambda j: (0, 0), **weight_kw),
                     pl.BlockSpec(whh_t.shape, lambda j: (0, 0), **weight_kw),
                     pl.BlockSpec(b.shape, lambda j: (0, 0), **weight_kw)]
    lin_w_t, lin_b = prepped["lin"]
    flat_params += [lin_w_t, lin_b]
    in_specs += [pl.BlockSpec(lin_w_t.shape, lambda j: (0, 0), **weight_kw),
                 pl.BlockSpec(lin_b.shape, lambda j: (0, 0), **weight_kw)]

    scratch_shapes = [pltpu.VMEM((TMAX * BBLK, H), jnp.float32),   # act ping
                      pltpu.VMEM((TMAX * BBLK, H), jnp.float32),   # act pong
                      pltpu.VMEM((CHUNK_T * BBLK, G4P), jnp.float32)]  # gx

    # Scoped-VMEM budget derived from what we actually allocate (important on
    # v5e's 16 MiB default and v7x's 64 MiB physical VMEM).
    w_mult = 1 if single_buffer_weights else 2
    w_bytes = w_mult * sum(int(a.size) * a.dtype.itemsize for a in flat_params)
    act_bytes = 2 * TMAX * BBLK * _round_up(H, 128) * 4
    gx_bytes = CHUNK_T * BBLK * G4P * 4
    io_bytes = 2 * (T_enc * BBLK * _round_up(F, 128) * 4
                    + T_dec * BBLK * OUTP * 4)
    vmem_limit = int(min(96 * 2 ** 20,
                         max(32 * 2 ** 20,
                             2 * (w_bytes + act_bytes + gx_bytes + io_bytes)
                             + (4 << 20))))

    kernel = _make_fused_kernel(T_enc, T_dec, BBLK, BH, nsplit, H, F, G4P,
                                OUTP, num_layers, CHUNK_T)
    y_pad = pl.pallas_call(
        kernel,
        grid=(n_bblk,),
        in_specs=in_specs,
        out_specs=pl.BlockSpec((T_dec, BBLK, OUTP), lambda j: (0, j, 0)),
        out_shape=jax.ShapeDtypeStruct((T_dec, Bp, OUTP), jnp.float32),
        scratch_shapes=scratch_shapes,
        compiler_params=pltpu.CompilerParams(
            dimension_semantics=("parallel",),
            vmem_limit_bytes=vmem_limit),
    )(x_pad, *flat_params)

    # (T_dec, Bp, OUTP) -> (B, T_dec, out_features)
    return jnp.transpose(y_pad[:, :B, :out_features], (1, 0, 2))


# -----------------------------------------------------------------------------
# Pure-JAX reference (mirrors the PyTorch module) for a correctness check.
# -----------------------------------------------------------------------------
def lstm_autoencoder_ref(params, x, sequence):
    def lstm_layer_ref(x_tm, lp):
        H = lp["w_hh"].shape[1]
        B = x_tm.shape[1]

        def step(carry, x_t):
            h, c = carry
            gates = (x_t @ lp["w_ih"].T + lp["b_ih"]
                     + h @ lp["w_hh"].T + lp["b_hh"])
            i, f, g, o = jnp.split(gates, 4, axis=-1)
            c = jax.nn.sigmoid(f) * c + jax.nn.sigmoid(i) * jnp.tanh(g)
            h = jax.nn.sigmoid(o) * jnp.tanh(c)
            return (h, c), h

        init = (jnp.zeros((B, H), jnp.float32), jnp.zeros((B, H), jnp.float32))
        (h_last, _), out = lax.scan(step, init, x_tm)
        return out, h_last

    h = jnp.transpose(x, (1, 0, 2))
    h_last = None
    for lp in params["enc"]:
        h, h_last = lstm_layer_ref(h, lp)
    z = h_last
    d = jnp.broadcast_to(z[None, :, :], (sequence,) + z.shape)
    for lp in params["dec"]:
        d, _ = lstm_layer_ref(d, lp)
    y = jnp.tanh(d @ params["lin_w"].T + params["lin_b"])
    return jnp.transpose(y, (1, 0, 2))


if __name__ == "__main__":
    B, T = 2, 8
    in_features, hidden_units, num_layers, out_features = 4, 32, 2, 4

    key = jax.random.PRNGKey(0)
    kp, kx = jax.random.split(key)
    params = init_params(kp, in_features, hidden_units, num_layers, out_features)
    prepped = prepare_params(params, in_features, hidden_units, num_layers,
                             out_features)
    x = jax.random.normal(kx, (B, T, in_features), jnp.float32)

    def run(single_buffer_weights):
        fwd = jax.jit(functools.partial(
            lstm_autoencoder_forward, prepped, sequence=T,
            single_buffer_weights=single_buffer_weights))
        y = fwd(x)
        jax.block_until_ready(y)
        return y

    try:
        y = run(True)
    except Exception:
        # Fallback if this JAX build rejects single-buffered (Buffered(1))
        # weight BlockSpecs; semantics are identical, weights just get the
        # default double buffer.
        y = run(False)

    assert y.shape == (B, T, out_features), y.shape
    assert bool(jnp.all(jnp.isfinite(y)))

    y_ref = lstm_autoencoder_ref(params, x, sequence=T)
    err = float(jnp.max(jnp.abs(y - y_ref)))
    assert err < 5e-2, f"max abs err vs reference: {err}"

    print("KERNEL_OK")
</pallas_src>

<mosaic_0001>
module attributes {stable_mosaic.version = 11 : i64} {
  func.func @kernel(%arg0: i32, %arg1: memref<8x8x4xf32, #tpu.memory_space<vmem>>, %arg2: memref<4x128xbf16, #tpu.memory_space<vmem>>, %arg3: memref<32x128xbf16, #tpu.memory_space<vmem>>, %arg4: memref<1x128xf32, #tpu.memory_space<vmem>>, %arg5: memref<32x128xbf16, #tpu.memory_space<vmem>>, %arg6: memref<32x128xbf16, #tpu.memory_space<vmem>>, %arg7: memref<1x128xf32, #tpu.memory_space<vmem>>, %arg8: memref<32x128xbf16, #tpu.memory_space<vmem>>, %arg9: memref<32x128xbf16, #tpu.memory_space<vmem>>, %arg10: memref<1x128xf32, #tpu.memory_space<vmem>>, %arg11: memref<32x128xbf16, #tpu.memory_space<vmem>>, %arg12: memref<32x128xbf16, #tpu.memory_space<vmem>>, %arg13: memref<1x128xf32, #tpu.memory_space<vmem>>, %arg14: memref<32x128xbf16, #tpu.memory_space<vmem>>, %arg15: memref<1x128xf32, #tpu.memory_space<vmem>>, %arg16: memref<8x8x128xf32, #tpu.memory_space<vmem>>, %arg17: memref<64x32xf32, #tpu.memory_space<vmem>>, %arg18: memref<64x32xf32, #tpu.memory_space<vmem>>, %arg19: memref<64x128xf32, #tpu.memory_space<vmem>>) attributes {dimension_semantics = [#tpu.dimension_semantics<parallel>], iteration_bounds = array<i64: 1>, scalar_prefetch = 0 : i64, scratch_operands = 3 : i64, tpu.core_type = #tpu.core_type<tc>, window_params = [{transform_indices = @transform_0, window_bounds = array<i64: 8, 8, 4>}, {pipeline_mode = #tpu.pipeline_mode<synchronous>, transform_indices = @transform_1, window_bounds = array<i64: 4, 128>}, {pipeline_mode = #tpu.pipeline_mode<synchronous>, transform_indices = @transform_2, window_bounds = array<i64: 32, 128>}, {pipeline_mode = #tpu.pipeline_mode<synchronous>, transform_indices = @transform_3, window_bounds = array<i64: 1, 128>}, {pipeline_mode = #tpu.pipeline_mode<synchronous>, transform_indices = @transform_4, window_bounds = array<i64: 32, 128>}, {pipeline_mode = #tpu.pipeline_mode<synchronous>, transform_indices = @transform_5, window_bounds = array<i64: 32, 128>}, {pipeline_mode = #tpu.pipeline_mode<synchronous>, transform_indices = @transform_6, window_bounds = array<i64: 1, 128>}, {pipeline_mode = #tpu.pipeline_mode<synchronous>, transform_indices = @transform_7, window_bounds = array<i64: 32, 128>}, {pipeline_mode = #tpu.pipeline_mode<synchronous>, transform_indices = @transform_8, window_bounds = array<i64: 32, 128>}, {pipeline_mode = #tpu.pipeline_mode<synchronous>, transform_indices = @transform_9, window_bounds = array<i64: 1, 128>}, {pipeline_mode = #tpu.pipeline_mode<synchronous>, transform_indices = @transform_10, window_bounds = array<i64: 32, 128>}, {pipeline_mode = #tpu.pipeline_mode<synchronous>, transform_indices = @transform_11, window_bounds = array<i64: 32, 128>}, {pipeline_mode = #tpu.pipeline_mode<synchronous>, transform_indices = @transform_12, window_bounds = array<i64: 1, 128>}, {pipeline_mode = #tpu.pipeline_mode<synchronous>, transform_indices = @transform_13, window_bounds = array<i64: 32, 128>}, {pipeline_mode = #tpu.pipeline_mode<synchronous>, transform_indices = @transform_14, window_bounds = array<i64: 1, 128>}, {transform_indices = @transform_15, window_bounds = array<i64: 8, 8, 128>}]} {
    %c0 = arith.constant 0 : index
    %c0_0 = arith.constant 0 : index
    %0 = vector.load %arg2[%c0, %c0_0] : memref<4x128xbf16, #tpu.memory_space<vmem>>, vector<4x128xbf16>
    %c0_1 = arith.constant 0 : index
    %c0_2 = arith.constant 0 : index
    %1 = vector.load %arg4[%c0_1, %c0_2] : memref<1x128xf32, #tpu.memory_space<vmem>>, vector<1x128xf32>
    %c0_3 = arith.constant 0 : index
    %c0_4 = arith.constant 0 : index
    %2 = vector.load %arg3[%c0_3, %c0_4] : memref<32x128xbf16, #tpu.memory_space<vmem>>, vector<32x128xbf16>
    %cst = arith.constant 0.000000e+00 : f32
    %3 = vector.broadcast %cst : f32 to vector<8x32xf32>
    %cst_5 = arith.constant 0.000000e+00 : f32
    %4 = vector.broadcast %cst_5 : f32 to vector<8x32xf32>
    %c0_6 = arith.constant 0 : index
    %c0_7 = arith.constant 0 : index
    %c0_8 = arith.constant 0 : index
    %5 = vector.load %arg1[%c0_6, %c0_7, %c0_8] : memref<8x8x4xf32, #tpu.memory_space<vmem>>, vector<8x8x4xf32>
    %6 = vector.shape_cast %5 : vector<8x8x4xf32> to vector<64x4xf32>
    %7 = arith.truncf %6 : vector<64x4xf32> to vector<64x4xbf16>
    %cst_9 = arith.constant dense<0.000000e+00> : vector<64x128xf32>
    %8 = tpu.matmul %7, %0, %cst_9 {dimension_numbers = #tpu.dot_dimension_numbers<[1], [0], [0], [1], [0, 0, 1, 1], [], []>} : vector<64x4xbf16>, vector<4x128xbf16>, vector<64x128xf32> -> vector<64x128xf32>
    %9 = vector.broadcast %1 : vector<1x128xf32> to vector<64x128xf32>
    %10 = arith.addf %8, %9 : vector<64x128xf32>
    %c0_10 = arith.constant 0 : index
    %c0_11 = arith.constant 0 : index
    %11 = vector.load %arg19[%c0_10, %c0_11] : memref<64x128xf32, #tpu.memory_space<vmem>>, vector<64x128xf32>
    tpu.vector_store %arg19[%c0_10, %c0_11], %10 {strides = array<i32>} : memref<64x128xf32, #tpu.memory_space<vmem>>, vector<64x128xf32>,
    %c0_12 = arith.constant 0 : index
    %c0_13 = arith.constant 0 : index
    %12 = vector.load %arg19[%c0_12, %c0_13] : memref<64x128xf32, #tpu.memory_space<vmem>>, vector<8x128xf32>
    %13 = arith.truncf %3 : vector<8x32xf32> to vector<8x32xbf16>
    %cst_14 = arith.constant dense<0.000000e+00> : vector<8x128xf32>
    %14 = tpu.matmul %13, %2, %cst_14 {dimension_numbers = #tpu.dot_dimension_numbers<[1], [0], [0], [1], [0, 0, 1, 1], [], []>} : vector<8x32xbf16>, vector<32x128xbf16>, vector<8x128xf32> -> vector<8x128xf32>
    %15 = arith.addf %12, %14 : vector<8x128xf32>
    %16 = arith.negf %15 : vector<8x128xf32>
    %17 = math.exp %16 : vector<8x128xf32>
    %cst_15 = arith.constant 1.000000e+00 : f32
    %18 = vector.broadcast %cst_15 : f32 to vector<8x128xf32>
    %19 = arith.addf %18, %17 : vector<8x128xf32>
    %20 = arith.divf %18, %19 : vector<8x128xf32>
    %21 = vector.extract_strided_slice %20 {offsets = [0, 0], sizes = [8, 32], strides = [1, 1]} : vector<8x128xf32> to vector<8x32xf32>
    %22 = vector.extract_strided_slice %20 {offsets = [0, 32], sizes = [8, 32], strides = [1, 1]} : vector<8x128xf32> to vector<8x32xf32>
    %23 = vector.extract_strided_slice %20 {offsets = [0, 96], sizes = [8, 32], strides = [1, 1]} : vector<8x128xf32> to vector<8x32xf32>
    %24 = vector.extract_strided_slice %15 {offsets = [0, 64], sizes = [8, 32], strides = [1, 1]} : vector<8x128xf32> to vector<8x32xf32>
    %25 = math.tanh %24 : vector<8x32xf32>
    %26 = arith.mulf %22, %4 : vector<8x32xf32>
    %27 = arith.mulf %21, %25 : vector<8x32xf32>
    %28 = arith.addf %26, %27 : vector<8x32xf32>
    %29 = math.tanh %28 : vector<8x32xf32>
    %30 = arith.mulf %23, %29 : vector<8x32xf32>
    %c0_16 = arith.constant 0 : index
    %c0_17 = arith.constant 0 : index
    %31 = vector.load %arg17[%c0_16, %c0_17] : memref<64x32xf32, #tpu.memory_space<vmem>>, vector<8x32xf32>
    tpu.vector_store %arg17[%c0_16, %c0_17], %30 {strides = array<i32>} : memref<64x32xf32, #tpu.memory_space<vmem>>, vector<8x32xf32>,
    %c8 = arith.constant 8 : index
    %c0_18 = arith.constant 0 : index
    %32 = vector.load %arg19[%c8, %c0_18] : memref<64x128xf32, #tpu.memory_space<vmem>>, vector<8x128xf32>
    %33 = arith.truncf %30 : vector<8x32xf32> to vector<8x32xbf16>
    %cst_19 = arith.constant dense<0.000000e+00> : vector<8x128xf32>
    %34 = tpu.matmul %33, %2, %cst_19 {dimension_numbers = #tpu.dot_dimension_numbers<[1], [0], [0], [1], [0, 0, 1, 1], [], []>} : vector<8x32xbf16>, vector<32x128xbf16>, vector<8x128xf32> -> vector<8x128xf32>
    %35 = arith.addf %32, %34 : vector<8x128xf32>
    %36 = arith.negf %35 : vector<8x128xf32>
    %37 = math.exp %36 : vector<8x128xf32>
    %cst_20 = arith.constant 1.000000e+00 : f32
    %38 = vector.broadcast %cst_20 : f32 to vector<8x128xf32>
    %39 = arith.addf %38, %37 : vector<8x128xf32>
    %40 = arith.divf %38, %39 : vector<8x128xf32>
    %41 = vector.extract_strided_slice %40 {offsets = [0, 0], sizes = [8, 32], strides = [1, 1]} : vector<8x128xf32> to vector<8x32xf32>
    %42 = vector.extract_strided_slice %40 {offsets = [0, 32], sizes = [8, 32], strides = [1, 1]} : vector<8x128xf32> to vector<8x32xf32>
    %43 = vector.extract_strided_slice %40 {offsets = [0, 96], sizes = [8, 32], strides = [1, 1]} : vector<8x128xf32> to vector<8x32xf32>
    %44 = vector.extract_strided_slice %35 {offsets = [0, 64], sizes = [8, 32], strides = [1, 1]} : vector<8x128xf32> to vector<8x32xf32>
    %45 = math.tanh %44 : vector<8x32xf32>
    %46 = arith.mulf %42, %28 : vector<8x32xf32>
    %47 = arith.mulf %41, %45 : vector<8x32xf32>
    %48 = arith.addf %46, %47 : vector<8x32xf32>
    %49 = math.tanh %48 : vector<8x32xf32>
    %50 = arith.mulf %43, %49 : vector<8x32xf32>
    %c8_21 = arith.constant 8 : index
    %c0_22 = arith.constant 0 : index
    %51 = vector.load %arg17[%c8_21, %c0_22] : memref<64x32xf32, #tpu.memory_space<vmem>>, vector<8x32xf32>
    tpu.vector_store %arg17[%c8_21, %c0_22], %50 {strides = array<i32>} : memref<64x32xf32, #tpu.memory_space<vmem>>, vector<8x32xf32>,
    %c16 = arith.constant 16 : index
    %c0_23 = arith.constant 0 : index
    %52 = vector.load %arg19[%c16, %c0_23] : memref<64x128xf32, #tpu.memory_space<vmem>>, vector<8x128xf32>
    %53 = arith.truncf %50 : vector<8x32xf32> to vector<8x32xbf16>
    %cst_24 = arith.constant dense<0.000000e+00> : vector<8x128xf32>
    %54 = tpu.matmul %53, %2, %cst_24 {dimension_numbers = #tpu.dot_dimension_numbers<[1], [0], [0], [1], [0, 0, 1, 1], [], []>} : vector<8x32xbf16>, vector<32x128xbf16>, vector<8x128xf32> -> vector<8x128xf32>
    %55 = arith.addf %52, %54 : vector<8x128xf32>
    %56 = arith.negf %55 : vector<8x128xf32>
    %57 = math.exp %56 : vector<8x128xf32>
    %cst_25 = arith.constant 1.000000e+00 : f32
    %58 = vector.broadcast %cst_25 : f32 to vector<8x128xf32>
    %59 = arith.addf %58, %57 : vector<8x128xf32>
    %60 = arith.divf %58, %59 : vector<8x128xf32>
    %61 = vector.extract_strided_slice %60 {offsets = [0, 0], sizes = [8, 32], strides = [1, 1]} : vector<8x128xf32> to vector<8x32xf32>
    %62 = vector.extract_strided_slice %60 {offsets = [0, 32], sizes = [8, 32], strides = [1, 1]} : vector<8x128xf32> to vector<8x32xf32>
    %63 = vector.extract_strided_slice %60 {offsets = [0, 96], sizes = [8, 32], strides = [1, 1]} : vector<8x128xf32> to vector<8x32xf32>
    %64 = vector.extract_strided_slice %55 {offsets = [0, 64], sizes = [8, 32], strides = [1, 1]} : vector<8x128xf32> to vector<8x32xf32>
    %65 = math.tanh %64 : vector<8x32xf32>
    %66 = arith.mulf %62, %48 : vector<8x32xf32>
    %67 = arith.mulf %61, %65 : vector<8x32xf32>
    %68 = arith.addf %66, %67 : vector<8x32xf32>
    %69 = math.tanh %68 : vector<8x32xf32>
    %70 = arith.mulf %63, %69 : vector<8x32xf32>
    %c16_26 = arith.constant 16 : index
    %c0_27 = arith.constant 0 : index
    %71 = vector.load %arg17[%c16_26, %c0_27] : memref<64x32xf32, #tpu.memory_space<vmem>>, vector<8x32xf32>
    tpu.vector_store %arg17[%c16_26, %c0_27], %70 {strides = array<i32>} : memref<64x32xf32, #tpu.memory_space<vmem>>, vector<8x32xf32>,
    %c24 = arith.constant 24 : index
    %c0_28 = arith.constant 0 : index
    %72 = vector.load %arg19[%c24, %c0_28] : memref<64x128xf32, #tpu.memory_space<vmem>>, vector<8x128xf32>
    %73 = arith.truncf %70 : vector<8x32xf32> to vector<8x32xbf16>
    %cst_29 = arith.constant dense<0.000000e+00> : vector<8x128xf32>
    %74 = tpu.matmul %73, %2, %cst_29 {dimension_numbers = #tpu.dot_dimension_numbers<[1], [0], [0], [1], [0, 0, 1, 1], [], []>} : vector<8x32xbf16>, vector<32x128xbf16>, vector<8x128xf32> -> vector<8x128xf32>
    %75 = arith.addf %72, %74 : vector<8x128xf32>
    %76 = arith.negf %75 : vector<8x128xf32>
    %77 = math.exp %76 : vector<8x128xf32>
    %cst_30 = arith.constant 1.000000e+00 : f32
    %78 = vector.broadcast %cst_30 : f32 to vector<8x128xf32>
    %79 = arith.addf %78, %77 : vector<8x128xf32>
    %80 = arith.divf %78, %79 : vector<8x128xf32>
    %81 = vector.extract_strided_slice %80 {offsets = [0, 0], sizes = [8, 32], strides = [1, 1]} : vector<8x128xf32> to vector<8x32xf32>
    %82 = vector.extract_strided_slice %80 {offsets = [0, 32], sizes = [8, 32], strides = [1, 1]} : vector<8x128xf32> to vector<8x32xf32>
    %83 = vector.extract_strided_slice %80 {offsets = [0, 96], sizes = [8, 32], strides = [1, 1]} : vector<8x128xf32> to vector<8x32xf32>
    %84 = vector.extract_strided_slice %75 {offsets = [0, 64], sizes = [8, 32], strides = [1, 1]} : vector<8x128xf32> to vector<8x32xf32>
    %85 = math.tanh %84 : vector<8x32xf32>
    %86 = arith.mulf %82, %68 : vector<8x32xf32>
    %87 = arith.mulf %81, %85 : vector<8x32xf32>
    %88 = arith.addf %86, %87 : vector<8x32xf32>
    %89 = math.tanh %88 : vector<8x32xf32>
    %90 = arith.mulf %83, %89 : vector<8x32xf32>
    %c24_31 = arith.constant 24 : index
    %c0_32 = arith.constant 0 : index
    %91 = vector.load %arg17[%c24_31, %c0_32] : memref<64x32xf32, #tpu.memory_space<vmem>>, vector<8x32xf32>
    tpu.vector_store %arg17[%c24_31, %c0_32], %90 {strides = array<i32>} : memref<64x32xf32, #tpu.memory_space<vmem>>, vector<8x32xf32>,
    %c32 = arith.constant 32 : index
    %c0_33 = arith.constant 0 : index
    %92 = vector.load %arg19[%c32, %c0_33] : memref<64x128xf32, #tpu.memory_space<vmem>>, vector<8x128xf32>
    %93 = arith.truncf %90 : vector<8x32xf32> to vector<8x32xbf16>
    %cst_34 = arith.constant dense<0.000000e+00> : vector<8x128xf32>
    %94 = tpu.matmul %93, %2, %cst_34 {dimension_numbers = #tpu.dot_dimension_numbers<[1], [0], [0], [1], [0, 0, 1, 1], [], []>} : vector<8x32xbf16>, vector<32x128xbf16>, vector<8x128xf32> -> vector<8x128xf32>
    %95 = arith.addf %92, %94 : vector<8x128xf32>
    %96 = arith.negf %95 : vector<8x128xf32>
    %97 = math.exp %96 : vector<8x128xf32>
    %cst_35 = arith.constant 1.000000e+00 : f32
    %98 = vector.broadcast %cst_35 : f32 to vector<8x128xf32>
    %99 = arith.addf %98, %97 : vector<8x128xf32>
    %100 = arith.divf %98, %99 : vector<8x128xf32>
    %101 = vector.extract_strided_slice %100 {offsets = [0, 0], sizes = [8, 32], strides = [1, 1]} : vector<8x128xf32> to vector<8x32xf32>
    %102 = vector.extract_strided_slice %100 {offsets = [0, 32], sizes = [8, 32], strides = [1, 1]} : vector<8x128xf32> to vector<8x32xf32>
    %103 = vector.extract_strided_slice %100 {offsets = [0, 96], sizes = [8, 32], strides = [1, 1]} : vector<8x128xf32> to vector<8x32xf32>
    %104 = vector.extract_strided_slice %95 {offsets = [0, 64], sizes = [8, 32], strides = [1, 1]} : vector<8x128xf32> to vector<8x32xf32>
    %105 = math.tanh %104 : vector<8x32xf32>
    %106 = arith.mulf %102, %88 : vector<8x32xf32>
    %107 = arith.mulf %101, %105 : vector<8x32xf32>
    %108 = arith.addf %106, %107 : vector<8x32xf32>
    %109 = math.tanh %108 : vector<8x32xf32>
    %110 = arith.mulf %103, %109 : vector<8x32xf32>
    %c32_36 = arith.constant 32 : index
    %c0_37 = arith.constant 0 : index
    %111 = vector.load %arg17[%c32_36, %c0_37] : memref<64x32xf32, #tpu.memory_space<vmem>>, vector<8x32xf32>
    tpu.vector_store %arg17[%c32_36, %c0_37], %110 {strides = array<i32>} : memref<64x32xf32, #tpu.memory_space<vmem>>, vector<8x32xf32>,
    %c40 = arith.constant 40 : index
    %c0_38 = arith.constant 0 : index
    %112 = vector.load %arg19[%c40, %c0_38] : memref<64x128xf32, #tpu.memory_space<vmem>>, vector<8x128xf32>
    %113 = arith.truncf %110 : vector<8x32xf32> to vector<8x32xbf16>
    %cst_39 = arith.constant dense<0.000000e+00> : vector<8x128xf32>
    %114 = tpu.matmul %113, %2, %cst_39 {dimension_numbers = #tpu.dot_dimension_numbers<[1], [0], [0], [1], [0, 0, 1, 1], [], []>} : vector<8x32xbf16>, vector<32x128xbf16>, vector<8x128xf32> -> vector<8x128xf32>
    %115 = arith.addf %112, %114 : vector<8x128xf32>
    %116 = arith.negf %115 : vector<8x128xf32>
    %117 = math.exp %116 : vector<8x128xf32>
    %cst_40 = arith.constant 1.000000e+00 : f32
    %118 = vector.broadcast %cst_40 : f32 to vector<8x128xf32>
    %119 = arith.addf %118, %117 : vector<8x128xf32>
    %120 = arith.divf %118, %119 : vector<8x128xf32>
    %121 = vector.extract_strided_slice %120 {offsets = [0, 0], sizes = [8, 32], strides = [1, 1]} : vector<8x128xf32> to vector<8x32xf32>
    %122 = vector.extract_strided_slice %120 {offsets = [0, 32], sizes = [8, 32], strides = [1, 1]} : vector<8x128xf32> to vector<8x32xf32>
    %123 = vector.extract_strided_slice %120 {offsets = [0, 96], sizes = [8, 32], strides = [1, 1]} : vector<8x128xf32> to vector<8x32xf32>
    %124 = vector.extract_strided_slice %115 {offsets = [0, 64], sizes = [8, 32], strides = [1, 1]} : vector<8x128xf32> to vector<8x32xf32>
    %125 = math.tanh %124 : vector<8x32xf32>
    %126 = arith.mulf %122, %108 : vector<8x32xf32>
    %127 = arith.mulf %121, %125 : vector<8x32xf32>
    %128 = arith.addf %126, %127 : vector<8x32xf32>
    %129 = math.tanh %128 : vector<8x32xf32>
    %130 = arith.mulf %123, %129 : vector<8x32xf32>
    %c40_41 = arith.constant 40 : index
    %c0_42 = arith.constant 0 : index
    %131 = vector.load %arg17[%c40_41, %c0_42] : memref<64x32xf32, #tpu.memory_space<vmem>>, vector<8x32xf32>
    tpu.vector_store %arg17[%c40_41, %c0_42], %130 {strides = array<i32>} : memref<64x32xf32, #tpu.memory_space<vmem>>, vector<8x32xf32>,
    %c48 = arith.constant 48 : index
    %c0_43 = arith.constant 0 : index
    %132 = vector.load %arg19[%c48, %c0_43] : memref<64x128xf32, #tpu.memory_space<vmem>>, vector<8x128xf32>
    %133 = arith.truncf %130 : vector<8x32xf32> to vector<8x32xbf16>
    %cst_44 = arith.constant dense<0.000000e+00> : vector<8x128xf32>
    %134 = tpu.matmul %133, %2, %cst_44 {dimension_numbers = #tpu.dot_dimension_numbers<[1], [0], [0], [1], [0, 0, 1, 1], [], []>} : vector<8x32xbf16>, vector<32x128xbf16>, vector<8x128xf32> -> vector<8x128xf32>
    %135 = arith.addf %132, %134 : vector<8x128xf32>
    %136 = arith.negf %135 : vector<8x128xf32>
    %137 = math.exp %136 : vector<8x128xf32>
    %cst_45 = arith.constant 1.000000e+00 : f32
    %138 = vector.broadcast %cst_45 : f32 to vector<8x128xf32>
    %139 = arith.addf %138, %137 : vector<8x128xf32>
    %140 = arith.divf %138, %139 : vector<8x128xf32>
    %141 = vector.extract_strided_slice %140 {offsets = [0, 0], sizes = [8, 32], strides = [1, 1]} : vector<8x128xf32> to vector<8x32xf32>
    %142 = vector.extract_strided_slice %140 {offsets = [0, 32], sizes = [8, 32], strides = [1, 1]} : vector<8x128xf32> to vector<8x32xf32>
    %143 = vector.extract_strided_slice %140 {offsets = [0, 96], sizes = [8, 32], strides = [1, 1]} : vector<8x128xf32> to vector<8x32xf32>
    %144 = vector.extract_strided_slice %135 {offsets = [0, 64], sizes = [8, 32], strides = [1, 1]} : vector<8x128xf32> to vector<8x32xf32>
    %145 = math.tanh %144 : vector<8x32xf32>
    %146 = arith.mulf %142, %128 : vector<8x32xf32>
    %147 = arith.mulf %141, %145 : vector<8x32xf32>
    %148 = arith.addf %146, %147 : vector<8x32xf32>
    %149 = math.tanh %148 : vector<8x32xf32>
    %150 = arith.mulf %143, %149 : vector<8x32xf32>
    %c48_46 = arith.constant 48 : index
    %c0_47 = arith.constant 0 : index
    %151 = vector.load %arg17[%c48_46, %c0_47] : memref<64x32xf32, #tpu.memory_space<vmem>>, vector<8x32xf32>
    tpu.vector_store %arg17[%c48_46, %c0_47], %150 {strides = array<i32>} : memref<64x32xf32, #tpu.memory_space<vmem>>, vector<8x32xf32>,
    %c56 = arith.constant 56 : index
    %c0_48 = arith.constant 0 : index
    %152 = vector.load %arg19[%c56, %c0_48] : memref<64x128xf32, #tpu.memory_space<vmem>>, vector<8x128xf32>
    %153 = arith.truncf %150 : vector<8x32xf32> to vector<8x32xbf16>
    %cst_49 = arith.constant dense<0.000000e+00> : vector<8x128xf32>
    %154 = tpu.matmul %153, %2, %cst_49 {dimension_numbers = #tpu.dot_dimension_numbers<[1], [0], [0], [1], [0, 0, 1, 1], [], []>} : vector<8x32xbf16>, vector<32x128xbf16>, vector<8x128xf32> -> vector<8x128xf32>
    %155 = arith.addf %152, %154 : vector<8x128xf32>
    %156 = arith.negf %155 : vector<8x128xf32>
    %157 = math.exp %156 : vector<8x128xf32>
    %cst_50 = arith.constant 1.000000e+00 : f32
    %158 = vector.broadcast %cst_50 : f32 to vector<8x128xf32>
    %159 = arith.addf %158, %157 : vector<8x128xf32>
    %160 = arith.divf %158, %159 : vector<8x128xf32>
    %161 = vector.extract_strided_slice %160 {offsets = [0, 0], sizes = [8, 32], strides = [1, 1]} : vector<8x128xf32> to vector<8x32xf32>
    %162 = vector.extract_strided_slice %160 {offsets = [0, 32], sizes = [8, 32], strides = [1, 1]} : vector<8x128xf32> to vector<8x32xf32>
    %163 = vector.extract_strided_slice %160 {offsets = [0, 96], sizes = [8, 32], strides = [1, 1]} : vector<8x128xf32> to vector<8x32xf32>
    %164 = vector.extract_strided_slice %155 {offsets = [0, 64], sizes = [8, 32], strides = [1, 1]} : vector<8x128xf32> to vector<8x32xf32>
    %165 = math.tanh %164 : vector<8x32xf32>
    %166 = arith.mulf %162, %148 : vector<8x32xf32>
    %167 = arith.mulf %161, %165 : vector<8x32xf32>
    %168 = arith.addf %166, %167 : vector<8x32xf32>
    %169 = math.tanh %168 : vector<8x32xf32>
    %170 = arith.mulf %163, %169 : vector<8x32xf32>
    %c56_51 = arith.constant 56 : index
    %c0_52 = arith.constant 0 : index
    %171 = vector.load %arg17[%c56_51, %c0_52] : memref<64x32xf32, #tpu.memory_space<vmem>>, vector<8x32xf32>
    tpu.vector_store %arg17[%c56_51, %c0_52], %170 {strides = array<i32>} : memref<64x32xf32, #tpu.memory_space<vmem>>, vector<8x32xf32>,
    %c0_53 = arith.constant 0 : index
    %c0_54 = arith.constant 0 : index
    %172 = vector.load %arg5[%c0_53, %c0_54] : memref<32x128xbf16, #tpu.memory_space<vmem>>, vector<32x128xbf16>
    %c0_55 = arith.constant 0 : index
    %c0_56 = arith.constant 0 : index
    %173 = vector.load %arg7[%c0_55, %c0_56] : memref<1x128xf32, #tpu.memory_space<vmem>>, vector<1x128xf32>
    %c0_57 = arith.constant 0 : index
    %c0_58 = arith.constant 0 : index
    %174 = vector.load %arg6[%c0_57, %c0_58] : memref<32x128xbf16, #tpu.memory_space<vmem>>, vector<32x128xbf16>
    %cst_59 = arith.constant 0.000000e+00 : f32
    %175 = vector.broadcast %cst_59 : f32 to vector<8x32xf32>
    %cst_60 = arith.constant 0.000000e+00 : f32
    %176 = vector.broadcast %cst_60 : f32 to vector<8x32xf32>
    %c0_61 = arith.constant 0 : index
    %c0_62 = arith.constant 0 : index
    %177 = vector.load %arg17[%c0_61, %c0_62] : memref<64x32xf32, #tpu.memory_space<vmem>>, vector<64x32xf32>
    %178 = arith.truncf %177 : vector<64x32xf32> to vector<64x32xbf16>
    %cst_63 = arith.constant dense<0.000000e+00> : vector<64x128xf32>
    %179 = tpu.matmul %178, %172, %cst_63 {dimension_numbers = #tpu.dot_dimension_numbers<[1], [0], [0], [1], [0, 0, 1, 1], [], []>} : vector<64x32xbf16>, vector<32x128xbf16>, vector<64x128xf32> -> vector<64x128xf32>
    %180 = vector.broadcast %173 : vector<1x128xf32> to vector<64x128xf32>
    %181 = arith.addf %179, %180 : vector<64x128xf32>
    %c0_64 = arith.constant 0 : index
    %c0_65 = arith.constant 0 : index
    %182 = vector.load %arg19[%c0_64, %c0_65] : memref<64x128xf32, #tpu.memory_space<vmem>>, vector<64x128xf32>
    tpu.vector_store %arg19[%c0_64, %c0_65], %181 {strides = array<i32>} : memref<64x128xf32, #tpu.memory_space<vmem>>, vector<64x128xf32>,
    %c0_66 = arith.constant 0 : index
    %c0_67 = arith.constant 0 : index
    %183 = vector.load %arg19[%c0_66, %c0_67] : memref<64x128xf32, #tpu.memory_space<vmem>>, vector<8x128xf32>
    %184 = arith.truncf %175 : vector<8x32xf32> to vector<8x32xbf16>
    %cst_68 = arith.constant dense<0.000000e+00> : vector<8x128xf32>
    %185 = tpu.matmul %184, %174, %cst_68 {dimension_numbers = #tpu.dot_dimension_numbers<[1], [0], [0], [1], [0, 0, 1, 1], [], []>} : vector<8x32xbf16>, vector<32x128xbf16>, vector<8x128xf32> -> vector<8x128xf32>
    %186 = arith.addf %183, %185 : vector<8x128xf32>
    %187 = arith.negf %186 : vector<8x128xf32>
    %188 = math.exp %187 : vector<8x128xf32>
    %cst_69 = arith.constant 1.000000e+00 : f32
    %189 = vector.broadcast %cst_69 : f32 to vector<8x128xf32>
    %190 = arith.addf %189, %188 : vector<8x128xf32>
    %191 = arith.divf %189, %190 : vector<8x128xf32>
    %192 = vector.extract_strided_slice %191 {offsets = [0, 0], sizes = [8, 32], strides = [1, 1]} : vector<8x128xf32> to vector<8x32xf32>
    %193 = vector.extract_strided_slice %191 {offsets = [0, 32], sizes = [8, 32], strides = [1, 1]} : vector<8x128xf32> to vector<8x32xf32>
    %194 = vector.extract_strided_slice %191 {offsets = [0, 96], sizes = [8, 32], strides = [1, 1]} : vector<8x128xf32> to vector<8x32xf32>
    %195 = vector.extract_strided_slice %186 {offsets = [0, 64], sizes = [8, 32], strides = [1, 1]} : vector<8x128xf32> to vector<8x32xf32>
    %196 = math.tanh %195 : vector<8x32xf32>
    %197 = arith.mulf %193, %176 : vector<8x32xf32>
    %198 = arith.mulf %192, %196 : vector<8x32xf32>
    %199 = arith.addf %197, %198 : vector<8x32xf32>
    %200 = math.tanh %199 : vector<8x32xf32>
    %201 = arith.mulf %194, %200 : vector<8x32xf32>
    %c8_70 = arith.constant 8 : index
    %c0_71 = arith.constant 0 : index
    %202 = vector.load %arg19[%c8_70, %c0_71] : memref<64x128xf32, #tpu.memory_space<vmem>>, vector<8x128xf32>
    %203 = arith.truncf %201 : vector<8x32xf32> to vector<8x32xbf16>
    %cst_72 = arith.constant dense<0.000000e+00> : vector<8x128xf32>
    %204 = tpu.matmul %203, %174, %cst_72 {dimension_numbers = #tpu.dot_dimension_numbers<[1], [0], [0], [1], [0, 0, 1, 1], [], []>} : vector<8x32xbf16>, vector<32x128xbf16>, vector<8x128xf32> -> vector<8x128xf32>
    %205 = arith.addf %202, %204 : vector<8x128xf32>
    %206 = arith.negf %205 : vector<8x128xf32>
    %207 = math.exp %206 : vector<8x128xf32>
    %cst_73 = arith.constant 1.000000e+00 : f32
    %208 = vector.broadcast %cst_73 : f32 to vector<8x128xf32>
    %209 = arith.addf %208, %207 : vector<8x128xf32>
    %210 = arith.divf %208, %209 : vector<8x128xf32>
    %211 = vector.extract_strided_slice %210 {offsets = [0, 0], sizes = [8, 32], strides = [1, 1]} : vector<8x128xf32> to vector<8x32xf32>
    %212 = vector.extract_strided_slice %210 {offsets = [0, 32], sizes = [8, 32], strides = [1, 1]} : vector<8x128xf32> to vector<8x32xf32>
    %213 = vector.extract_strided_slice %210 {offsets = [0, 96], sizes = [8, 32], strides = [1, 1]} : vector<8x128xf32> to vector<8x32xf32>
    %214 = vector.extract_strided_slice %205 {offsets = [0, 64], sizes = [8, 32], strides = [1, 1]} : vector<8x128xf32> to vector<8x32xf32>
    %215 = math.tanh %214 : vector<8x32xf32>
    %216 = arith.mulf %212, %199 : vector<8x32xf32>
    %217 = arith.mulf %211, %215 : vector<8x32xf32>
    %218 = arith.addf %216, %217 : vector<8x32xf32>
    %219 = math.tanh %218 : vector<8x32xf32>
    %220 = arith.mulf %213, %219 : vector<8x32xf32>
    %c16_74 = arith.constant 16 : index
    %c0_75 = arith.constant 0 : index
    %221 = vector.load %arg19[%c16_74, %c0_75] : memref<64x128xf32, #tpu.memory_space<vmem>>, vector<8x128xf32>
    %222 = arith.truncf %220 : vector<8x32xf32> to vector<8x32xbf16>
    %cst_76 = arith.constant dense<0.000000e+00> : vector<8x128xf32>
    %223 = tpu.matmul %222, %174, %cst_76 {dimension_numbers = #tpu.dot_dimension_numbers<[1], [0], [0], [1], [0, 0, 1, 1], [], []>} : vector<8x32xbf16>, vector<32x128xbf16>, vector<8x128xf32> -> vector<8x128xf32>
    %224 = arith.addf %221, %223 : vector<8x128xf32>
    %225 = arith.negf %224 : vector<8x128xf32>
    %226 = math.exp %225 : vector<8x128xf32>
    %cst_77 = arith.constant 1.000000e+00 : f32
    %227 = vector.broadcast %cst_77 : f32 to vector<8x128xf32>
    %228 = arith.addf %227, %226 : vector<8x128xf32>
    %229 = arith.divf %227, %228 : vector<8x128xf32>
    %230 = vector.extract_strided_slice %229 {offsets = [0, 0], sizes = [8, 32], strides = [1, 1]} : vector<8x128xf32> to vector<8x32xf32>
    %231 = vector.extract_strided_slice %229 {offsets = [0, 32], sizes = [8, 32], strides = [1, 1]} : vector<8x128xf32> to vector<8x32xf32>
    %232 = vector.extract_strided_slice %229 {offsets = [0, 96], sizes = [8, 32], strides = [1, 1]} : vector<8x128xf32> to vector<8x32xf32>
    %233 = vector.extract_strided_slice %224 {offsets = [0, 64], sizes = [8, 32], strides = [1, 1]} : vector<8x128xf32> to vector<8x32xf32>
    %234 = math.tanh %233 : vector<8x32xf32>
    %235 = arith.mulf %231, %218 : vector<8x32xf32>
    %236 = arith.mulf %230, %234 : vector<8x32xf32>
    %237 = arith.addf %235, %236 : vector<8x32xf32>
    %238 = math.tanh %237 : vector<8x32xf32>
    %239 = arith.mulf %232, %238 : vector<8x32xf32>
    %c24_78 = arith.constant 24 : index
    %c0_79 = arith.constant 0 : index
    %240 = vector.load %arg19[%c24_78, %c0_79] : memref<64x128xf32, #tpu.memory_space<vmem>>, vector<8x128xf32>
    %241 = arith.truncf %239 : vector<8x32xf32> to vector<8x32xbf16>
    %cst_80 = arith.constant dense<0.000000e+00> : vector<8x128xf32>
    %242 = tpu.matmul %241, %174, %cst_80 {dimension_numbers = #tpu.dot_dimension_numbers<[1], [0], [0], [1], [0, 0, 1, 1], [], []>} : vector<8x32xbf16>, vector<32x128xbf16>, vector<8x128xf32> -> vector<8x128xf32>
    %243 = arith.addf %240, %242 : vector<8x128xf32>
    %244 = arith.negf %243 : vector<8x128xf32>
    %245 = math.exp %244 : vector<8x128xf32>
    %cst_81 = arith.constant 1.000000e+00 : f32
    %246 = vector.broadcast %cst_81 : f32 to vector<8x128xf32>
    %247 = arith.addf %246, %245 : vector<8x128xf32>
    %248 = arith.divf %246, %247 : vector<8x128xf32>
    %249 = vector.extract_strided_slice %248 {offsets = [0, 0], sizes = [8, 32], strides = [1, 1]} : vector<8x128xf32> to vector<8x32xf32>
    %250 = vector.extract_strided_slice %248 {offsets = [0, 32], sizes = [8, 32], strides = [1, 1]} : vector<8x128xf32> to vector<8x32xf32>
    %251 = vector.extract_strided_slice %248 {offsets = [0, 96], sizes = [8, 32], strides = [1, 1]} : vector<8x128xf32> to vector<8x32xf32>
    %252 = vector.extract_strided_slice %243 {offsets = [0, 64], sizes = [8, 32], strides = [1, 1]} : vector<8x128xf32> to vector<8x32xf32>
    %253 = math.tanh %252 : vector<8x32xf32>
    %254 = arith.mulf %250, %237 : vector<8x32xf32>
    %255 = arith.mulf %249, %253 : vector<8x32xf32>
    %256 = arith.addf %254, %255 : vector<8x32xf32>
    %257 = math.tanh %256 : vector<8x32xf32>
    %258 = arith.mulf %251, %257 : vector<8x32xf32>
    %c32_82 = arith.constant 32 : index
    %c0_83 = arith.constant 0 : index
    %259 = vector.load %arg19[%c32_82, %c0_83] : memref<64x128xf32, #tpu.memory_space<vmem>>, vector<8x128xf32>
    %260 = arith.truncf %258 : vector<8x32xf32> to vector<8x32xbf16>
    %cst_84 = arith.constant dense<0.000000e+00> : vector<8x128xf32>
    %261 = tpu.matmul %260, %174, %cst_84 {dimension_numbers = #tpu.dot_dimension_numbers<[1], [0], [0], [1], [0, 0, 1, 1], [], []>} : vector<8x32xbf16>, vector<32x128xbf16>, vector<8x128xf32> -> vector<8x128xf32>
    %262 = arith.addf %259, %261 : vector<8x128xf32>
    %263 = arith.negf %262 : vector<8x128xf32>
    %264 = math.exp %263 : vector<8x128xf32>
    %cst_85 = arith.constant 1.000000e+00 : f32
    %265 = vector.broadcast %cst_85 : f32 to vector<8x128xf32>
    %266 = arith.addf %265, %264 : vector<8x128xf32>
    %267 = arith.divf %265, %266 : vector<8x128xf32>
    %268 = vector.extract_strided_slice %267 {offsets = [0, 0], sizes = [8, 32], strides = [1, 1]} : vector<8x128xf32> to vector<8x32xf32>
    %269 = vector.extract_strided_slice %267 {offsets = [0, 32], sizes = [8, 32], strides = [1, 1]} : vector<8x128xf32> to vector<8x32xf32>
    %270 = vector.extract_strided_slice %267 {offsets = [0, 96], sizes = [8, 32], strides = [1, 1]} : vector<8x128xf32> to vector<8x32xf32>
    %271 = vector.extract_strided_slice %262 {offsets = [0, 64], sizes = [8, 32], strides = [1, 1]} : vector<8x128xf32> to vector<8x32xf32>
    %272 = math.tanh %271 : vector<8x32xf32>
    %273 = arith.mulf %269, %256 : vector<8x32xf32>
    %274 = arith.mulf %268, %272 : vector<8x32xf32>
    %275 = arith.addf %273, %274 : vector<8x32xf32>
    %276 = math.tanh %275 : vector<8x32xf32>
    %277 = arith.mulf %270, %276 : vector<8x32xf32>
    %c40_86 = arith.constant 40 : index
    %c0_87 = arith.constant 0 : index
    %278 = vector.load %arg19[%c40_86, %c0_87] : memref<64x128xf32, #tpu.memory_space<vmem>>, vector<8x128xf32>
    %279 = arith.truncf %277 : vector<8x32xf32> to vector<8x32xbf16>
    %cst_88 = arith.constant dense<0.000000e+00> : vector<8x128xf32>
    %280 = tpu.matmul %279, %174, %cst_88 {dimension_numbers = #tpu.dot_dimension_numbers<[1], [0], [0], [1], [0, 0, 1, 1], [], []>} : vector<8x32xbf16>, vector<32x128xbf16>, vector<8x128xf32> -> vector<8x128xf32>
    %281 = arith.addf %278, %280 : vector<8x128xf32>
    %282 = arith.negf %281 : vector<8x128xf32>
    %283 = math.exp %282 : vector<8x128xf32>
    %cst_89 = arith.constant 1.000000e+00 : f32
    %284 = vector.broadcast %cst_89 : f32 to vector<8x128xf32>
    %285 = arith.addf %284, %283 : vector<8x128xf32>
    %286 = arith.divf %284, %285 : vector<8x128xf32>
    %287 = vector.extract_strided_slice %286 {offsets = [0, 0], sizes = [8, 32], strides = [1, 1]} : vector<8x128xf32> to vector<8x32xf32>
    %288 = vector.extract_strided_slice %286 {offsets = [0, 32], sizes = [8, 32], strides = [1, 1]} : vector<8x128xf32> to vector<8x32xf32>
    %289 = vector.extract_strided_slice %286 {offsets = [0, 96], sizes = [8, 32], strides = [1, 1]} : vector<8x128xf32> to vector<8x32xf32>
    %290 = vector.extract_strided_slice %281 {offsets = [0, 64], sizes = [8, 32], strides = [1, 1]} : vector<8x128xf32> to vector<8x32xf32>
    %291 = math.tanh %290 : vector<8x32xf32>
    %292 = arith.mulf %288, %275 : vector<8x32xf32>
    %293 = arith.mulf %287, %291 : vector<8x32xf32>
    %294 = arith.addf %292, %293 : vector<8x32xf32>
    %295 = math.tanh %294 : vector<8x32xf32>
    %296 = arith.mulf %289, %295 : vector<8x32xf32>
    %c48_90 = arith.constant 48 : index
    %c0_91 = arith.constant 0 : index
    %297 = vector.load %arg19[%c48_90, %c0_91] : memref<64x128xf32, #tpu.memory_space<vmem>>, vector<8x128xf32>
    %298 = arith.truncf %296 : vector<8x32xf32> to vector<8x32xbf16>
    %cst_92 = arith.constant dense<0.000000e+00> : vector<8x128xf32>
    %299 = tpu.matmul %298, %174, %cst_92 {dimension_numbers = #tpu.dot_dimension_numbers<[1], [0], [0], [1], [0, 0, 1, 1], [], []>} : vector<8x32xbf16>, vector<32x128xbf16>, vector<8x128xf32> -> vector<8x128xf32>
    %300 = arith.addf %297, %299 : vector<8x128xf32>
    %301 = arith.negf %300 : vector<8x128xf32>
    %302 = math.exp %301 : vector<8x128xf32>
    %cst_93 = arith.constant 1.000000e+00 : f32
    %303 = vector.broadcast %cst_93 : f32 to vector<8x128xf32>
    %304 = arith.addf %303, %302 : vector<8x128xf32>
    %305 = arith.divf %303, %304 : vector<8x128xf32>
    %306 = vector.extract_strided_slice %305 {offsets = [0, 0], sizes = [8, 32], strides = [1, 1]} : vector<8x128xf32> to vector<8x32xf32>
    %307 = vector.extract_strided_slice %305 {offsets = [0, 32], sizes = [8, 32], strides = [1, 1]} : vector<8x128xf32> to vector<8x32xf32>
    %308 = vector.extract_strided_slice %305 {offsets = [0, 96], sizes = [8, 32], strides = [1, 1]} : vector<8x128xf32> to vector<8x32xf32>
    %309 = vector.extract_strided_slice %300 {offsets = [0, 64], sizes = [8, 32], strides = [1, 1]} : vector<8x128xf32> to vector<8x32xf32>
    %310 = math.tanh %309 : vector<8x32xf32>
    %311 = arith.mulf %307, %294 : vector<8x32xf32>
    %312 = arith.mulf %306, %310 : vector<8x32xf32>
    %313 = arith.addf %311, %312 : vector<8x32xf32>
    %314 = math.tanh %313 : vector<8x32xf32>
    %315 = arith.mulf %308, %314 : vector<8x32xf32>
    %c56_94 = arith.constant 56 : index
    %c0_95 = arith.constant 0 : index
    %316 = vector.load %arg19[%c56_94, %c0_95] : memref<64x128xf32, #tpu.memory_space<vmem>>, vector<8x128xf32>
    %317 = arith.truncf %315 : vector<8x32xf32> to vector<8x32xbf16>
    %cst_96 = arith.constant dense<0.000000e+00> : vector<8x128xf32>
    %318 = tpu.matmul %317, %174, %cst_96 {dimension_numbers = #tpu.dot_dimension_numbers<[1], [0], [0], [1], [0, 0, 1, 1], [], []>} : vector<8x32xbf16>, vector<32x128xbf16>, vector<8x128xf32> -> vector<8x128xf32>
    %319 = arith.addf %316, %318 : vector<8x128xf32>
    %320 = arith.negf %319 : vector<8x128xf32>
    %321 = math.exp %320 : vector<8x128xf32>
    %cst_97 = arith.constant 1.000000e+00 : f32
    %322 = vector.broadcast %cst_97 : f32 to vector<8x128xf32>
    %323 = arith.addf %322, %321 : vector<8x128xf32>
    %324 = arith.divf %322, %323 : vector<8x128xf32>
    %325 = vector.extract_strided_slice %324 {offsets = [0, 0], sizes = [8, 32], strides = [1, 1]} : vector<8x128xf32> to vector<8x32xf32>
    %326 = vector.extract_strided_slice %324 {offsets = [0, 32], sizes = [8, 32], strides = [1, 1]} : vector<8x128xf32> to vector<8x32xf32>
    %327 = vector.extract_strided_slice %324 {offsets = [0, 96], sizes = [8, 32], strides = [1, 1]} : vector<8x128xf32> to vector<8x32xf32>
    %328 = vector.extract_strided_slice %319 {offsets = [0, 64], sizes = [8, 32], strides = [1, 1]} : vector<8x128xf32> to vector<8x32xf32>
    %329 = math.tanh %328 : vector<8x32xf32>
    %330 = arith.mulf %326, %313 : vector<8x32xf32>
    %331 = arith.mulf %325, %329 : vector<8x32xf32>
    %332 = arith.addf %330, %331 : vector<8x32xf32>
    %333 = math.tanh %332 : vector<8x32xf32>
    %334 = arith.mulf %327, %333 : vector<8x32xf32>
    %335 = arith.truncf %334 : vector<8x32xf32> to vector<8x32xbf16>
    %c0_98 = arith.constant 0 : index
    %c0_99 = arith.constant 0 : index
    %336 = vector.load %arg8[%c0_98, %c0_99] : memref<32x128xbf16, #tpu.memory_space<vmem>>, vector<32x128xbf16>
    %cst_100 = arith.constant dense<0.000000e+00> : vector<8x128xf32>
    %337 = tpu.matmul %335, %336, %cst_100 {dimension_numbers = #tpu.dot_dimension_numbers<[1], [0], [0], [1], [0, 0, 1, 1], [], []>} : vector<8x32xbf16>, vector<32x128xbf16>, vector<8x128xf32> -> vector<8x128xf32>
    %c0_101 = arith.constant 0 : index
    %c0_102 = arith.constant 0 : index
    %338 = vector.load %arg10[%c0_101, %c0_102] : memref<1x128xf32, #tpu.memory_space<vmem>>, vector<1x128xf32>
    %339 = vector.broadcast %338 : vector<1x128xf32> to vector<8x128xf32>
    %340 = arith.addf %337, %339 : vector<8x128xf32>
    %c0_103 = arith.constant 0 : index
    %c0_104 = arith.constant 0 : index
    %341 = vector.load %arg9[%c0_103, %c0_104] : memref<32x128xbf16, #tpu.memory_space<vmem>>, vector<32x128xbf16>
    %cst_105 = arith.constant 0.000000e+00 : f32
    %342 = vector.broadcast %cst_105 : f32 to vector<8x32xf32>
    %cst_106 = arith.constant 0.000000e+00 : f32
    %343 = vector.broadcast %cst_106 : f32 to vector<8x32xf32>
    %344 = arith.truncf %342 : vector<8x32xf32> to vector<8x32xbf16>
    %cst_107 = arith.constant dense<0.000000e+00> : vector<8x128xf32>
    %345 = tpu.matmul %344, %341, %cst_107 {dimension_numbers = #tpu.dot_dimension_numbers<[1], [0], [0], [1], [0, 0, 1, 1], [], []>} : vector<8x32xbf16>, vector<32x128xbf16>, vector<8x128xf32> -> vector<8x128xf32>
    %346 = arith.addf %340, %345 : vector<8x128xf32>
    %347 = arith.negf %346 : vector<8x128xf32>
    %348 = math.exp %347 : vector<8x128xf32>
    %cst_108 = arith.constant 1.000000e+00 : f32
    %349 = vector.broadcast %cst_108 : f32 to vector<8x128xf32>
    %350 = arith.addf %349, %348 : vector<8x128xf32>
    %351 = arith.divf %349, %350 : vector<8x128xf32>
    %352 = vector.extract_strided_slice %351 {offsets = [0, 0], sizes = [8, 32], strides = [1, 1]} : vector<8x128xf32> to vector<8x32xf32>
    %353 = vector.extract_strided_slice %351 {offsets = [0, 32], sizes = [8, 32], strides = [1, 1]} : vector<8x128xf32> to vector<8x32xf32>
    %354 = vector.extract_strided_slice %351 {offsets = [0, 96], sizes = [8, 32], strides = [1, 1]} : vector<8x128xf32> to vector<8x32xf32>
    %355 = vector.extract_strided_slice %346 {offsets = [0, 64], sizes = [8, 32], strides = [1, 1]} : vector<8x128xf32> to vector<8x32xf32>
    %356 = math.tanh %355 : vector<8x32xf32>
    %357 = arith.mulf %353, %343 : vector<8x32xf32>
    %358 = arith.mulf %352, %356 : vector<8x32xf32>
    %359 = arith.addf %357, %358 : vector<8x32xf32>
    %360 = math.tanh %359 : vector<8x32xf32>
    %361 = arith.mulf %354, %360 : vector<8x32xf32>
    %c0_109 = arith.constant 0 : index
    %c0_110 = arith.constant 0 : index
    %362 = vector.load %arg17[%c0_109, %c0_110] : memref<64x32xf32, #tpu.memory_space<vmem>>, vector<8x32xf32>
    tpu.vector_store %arg17[%c0_109, %c0_110], %361 {strides = array<i32>} : memref<64x32xf32, #tpu.memory_space<vmem>>, vector<8x32xf32>,
    %363 = arith.truncf %361 : vector<8x32xf32> to vector<8x32xbf16>
    %cst_111 = arith.constant dense<0.000000e+00> : vector<8x128xf32>
    %364 = tpu.matmul %363, %341, %cst_111 {dimension_numbers = #tpu.dot_dimension_numbers<[1], [0], [0], [1], [0, 0, 1, 1], [], []>} : vector<8x32xbf16>, vector<32x128xbf16>, vector<8x128xf32> -> vector<8x128xf32>
    %365 = arith.addf %340, %364 : vector<8x128xf32>
    %366 = arith.negf %365 : vector<8x128xf32>
    %367 = math.exp %366 : vector<8x128xf32>
    %cst_112 = arith.constant 1.000000e+00 : f32
    %368 = vector.broadcast %cst_112 : f32 to vector<8x128xf32>
    %369 = arith.addf %368, %367 : vector<8x128xf32>
    %370 = arith.divf %368, %369 : vector<8x128xf32>
    %371 = vector.extract_strided_slice %370 {offsets = [0, 0], sizes = [8, 32], strides = [1, 1]} : vector<8x128xf32> to vector<8x32xf32>
    %372 = vector.extract_strided_slice %370 {offsets = [0, 32], sizes = [8, 32], strides = [1, 1]} : vector<8x128xf32> to vector<8x32xf32>
    %373 = vector.extract_strided_slice %370 {offsets = [0, 96], sizes = [8, 32], strides = [1, 1]} : vector<8x128xf32> to vector<8x32xf32>
    %374 = vector.extract_strided_slice %365 {offsets = [0, 64], sizes = [8, 32], strides = [1, 1]} : vector<8x128xf32> to vector<8x32xf32>
    %375 = math.tanh %374 : vector<8x32xf32>
    %376 = arith.mulf %372, %359 : vector<8x32xf32>
    %377 = arith.mulf %371, %375 : vector<8x32xf32>
    %378 = arith.addf %376, %377 : vector<8x32xf32>
    %379 = math.tanh %378 : vector<8x32xf32>
    %380 = arith.mulf %373, %379 : vector<8x32xf32>
    %c8_113 = arith.constant 8 : index
    %c0_114 = arith.constant 0 : index
    %381 = vector.load %arg17[%c8_113, %c0_114] : memref<64x32xf32, #tpu.memory_space<vmem>>, vector<8x32xf32>
    tpu.vector_store %arg17[%c8_113, %c0_114], %380 {strides = array<i32>} : memref<64x32xf32, #tpu.memory_space<vmem>>, vector<8x32xf32>,
    %382 = arith.truncf %380 : vector<8x32xf32> to vector<8x32xbf16>
    %cst_115 = arith.constant dense<0.000000e+00> : vector<8x128xf32>
    %383 = tpu.matmul %382, %341, %cst_115 {dimension_numbers = #tpu.dot_dimension_numbers<[1], [0], [0], [1], [0, 0, 1, 1], [], []>} : vector<8x32xbf16>, vector<32x128xbf16>, vector<8x128xf32> -> vector<8x128xf32>
    %384 = arith.addf %340, %383 : vector<8x128xf32>
    %385 = arith.negf %384 : vector<8x128xf32>
    %386 = math.exp %385 : vector<8x128xf32>
    %cst_116 = arith.constant 1.000000e+00 : f32
    %387 = vector.broadcast %cst_116 : f32 to vector<8x128xf32>
    %388 = arith.addf %387, %386 : vector<8x128xf32>
    %389 = arith.divf %387, %388 : vector<8x128xf32>
    %390 = vector.extract_strided_slice %389 {offsets = [0, 0], sizes = [8, 32], strides = [1, 1]} : vector<8x128xf32> to vector<8x32xf32>
    %391 = vector.extract_strided_slice %389 {offsets = [0, 32], sizes = [8, 32], strides = [1, 1]} : vector<8x128xf32> to vector<8x32xf32>
    %392 = vector.extract_strided_slice %389 {offsets = [0, 96], sizes = [8, 32], strides = [1, 1]} : vector<8x128xf32> to vector<8x32xf32>
    %393 = vector.extract_strided_slice %384 {offsets = [0, 64], sizes = [8, 32], strides = [1, 1]} : vector<8x128xf32> to vector<8x32xf32>
    %394 = math.tanh %393 : vector<8x32xf32>
    %395 = arith.mulf %391, %378 : vector<8x32xf32>
    %396 = arith.mulf %390, %394 : vector<8x32xf32>
    %397 = arith.addf %395, %396 : vector<8x32xf32>
    %398 = math.tanh %397 : vector<8x32xf32>
    %399 = arith.mulf %392, %398 : vector<8x32xf32>
    %c16_117 = arith.constant 16 : index
    %c0_118 = arith.constant 0 : index
    %400 = vector.load %arg17[%c16_117, %c0_118] : memref<64x32xf32, #tpu.memory_space<vmem>>, vector<8x32xf32>
    tpu.vector_store %arg17[%c16_117, %c0_118], %399 {strides = array<i32>} : memref<64x32xf32, #tpu.memory_space<vmem>>, vector<8x32xf32>,
    %401 = arith.truncf %399 : vector<8x32xf32> to vector<8x32xbf16>
    %cst_119 = arith.constant dense<0.000000e+00> : vector<8x128xf32>
    %402 = tpu.matmul %401, %341, %cst_119 {dimension_numbers = #tpu.dot_dimension_numbers<[1], [0], [0], [1], [0, 0, 1, 1], [], []>} : vector<8x32xbf16>, vector<32x128xbf16>, vector<8x128xf32> -> vector<8x128xf32>
    %403 = arith.addf %340, %402 : vector<8x128xf32>
    %404 = arith.negf %403 : vector<8x128xf32>
    %405 = math.exp %404 : vector<8x128xf32>
    %cst_120 = arith.constant 1.000000e+00 : f32
    %406 = vector.broadcast %cst_120 : f32 to vector<8x128xf32>
    %407 = arith.addf %406, %405 : vector<8x128xf32>
    %408 = arith.divf %406, %407 : vector<8x128xf32>
    %409 = vector.extract_strided_slice %408 {offsets = [0, 0], sizes = [8, 32], strides = [1, 1]} : vector<8x128xf32> to vector<8x32xf32>
    %410 = vector.extract_strided_slice %408 {offsets = [0, 32], sizes = [8, 32], strides = [1, 1]} : vector<8x128xf32> to vector<8x32xf32>
    %411 = vector.extract_strided_slice %408 {offsets = [0, 96], sizes = [8, 32], strides = [1, 1]} : vector<8x128xf32> to vector<8x32xf32>
    %412 = vector.extract_strided_slice %403 {offsets = [0, 64], sizes = [8, 32], strides = [1, 1]} : vector<8x128xf32> to vector<8x32xf32>
    %413 = math.tanh %412 : vector<8x32xf32>
    %414 = arith.mulf %410, %397 : vector<8x32xf32>
    %415 = arith.mulf %409, %413 : vector<8x32xf32>
    %416 = arith.addf %414, %415 : vector<8x32xf32>
    %417 = math.tanh %416 : vector<8x32xf32>
    %418 = arith.mulf %411, %417 : vector<8x32xf32>
    %c24_121 = arith.constant 24 : index
    %c0_122 = arith.constant 0 : index
    %419 = vector.load %arg17[%c24_121, %c0_122] : memref<64x32xf32, #tpu.memory_space<vmem>>, vector<8x32xf32>
    tpu.vector_store %arg17[%c24_121, %c0_122], %418 {strides = array<i32>} : memref<64x32xf32, #tpu.memory_space<vmem>>, vector<8x32xf32>,
    %420 = arith.truncf %418 : vector<8x32xf32> to vector<8x32xbf16>
    %cst_123 = arith.constant dense<0.000000e+00> : vector<8x128xf32>
    %421 = tpu.matmul %420, %341, %cst_123 {dimension_numbers = #tpu.dot_dimension_numbers<[1], [0], [0], [1], [0, 0, 1, 1], [], []>} : vector<8x32xbf16>, vector<32x128xbf16>, vector<8x128xf32> -> vector<8x128xf32>
    %422 = arith.addf %340, %421 : vector<8x128xf32>
    %423 = arith.negf %422 : vector<8x128xf32>
    %424 = math.exp %423 : vector<8x128xf32>
    %cst_124 = arith.constant 1.000000e+00 : f32
    %425 = vector.broadcast %cst_124 : f32 to vector<8x128xf32>
    %426 = arith.addf %425, %424 : vector<8x128xf32>
    %427 = arith.divf %425, %426 : vector<8x128xf32>
    %428 = vector.extract_strided_slice %427 {offsets = [0, 0], sizes = [8, 32], strides = [1, 1]} : vector<8x128xf32> to vector<8x32xf32>
    %429 = vector.extract_strided_slice %427 {offsets = [0, 32], sizes = [8, 32], strides = [1, 1]} : vector<8x128xf32> to vector<8x32xf32>
    %430 = vector.extract_strided_slice %427 {offsets = [0, 96], sizes = [8, 32], strides = [1, 1]} : vector<8x128xf32> to vector<8x32xf32>
    %431 = vector.extract_strided_slice %422 {offsets = [0, 64], sizes = [8, 32], strides = [1, 1]} : vector<8x128xf32> to vector<8x32xf32>
    %432 = math.tanh %431 : vector<8x32xf32>
    %433 = arith.mulf %429, %416 : vector<8x32xf32>
    %434 = arith.mulf %428, %432 : vector<8x32xf32>
    %435 = arith.addf %433, %434 : vector<8x32xf32>
    %436 = math.tanh %435 : vector<8x32xf32>
    %437 = arith.mulf %430, %436 : vector<8x32xf32>
    %c32_125 = arith.constant 32 : index
    %c0_126 = arith.constant 0 : index
    %438 = vector.load %arg17[%c32_125, %c0_126] : memref<64x32xf32, #tpu.memory_space<vmem>>, vector<8x32xf32>
    tpu.vector_store %arg17[%c32_125, %c0_126], %437 {strides = array<i32>} : memref<64x32xf32, #tpu.memory_space<vmem>>, vector<8x32xf32>,
    %439 = arith.truncf %437 : vector<8x32xf32> to vector<8x32xbf16>
    %cst_127 = arith.constant dense<0.000000e+00> : vector<8x128xf32>
    %440 = tpu.matmul %439, %341, %cst_127 {dimension_numbers = #tpu.dot_dimension_numbers<[1], [0], [0], [1], [0, 0, 1, 1], [], []>} : vector<8x32xbf16>, vector<32x128xbf16>, vector<8x128xf32> -> vector<8x128xf32>
    %441 = arith.addf %340, %440 : vector<8x128xf32>
    %442 = arith.negf %441 : vector<8x128xf32>
    %443 = math.exp %442 : vector<8x128xf32>
    %cst_128 = arith.constant 1.000000e+00 : f32
    %444 = vector.broadcast %cst_128 : f32 to vector<8x128xf32>
    %445 = arith.addf %444, %443 : vector<8x128xf32>
    %446 = arith.divf %444, %445 : vector<8x128xf32>
    %447 = vector.extract_strided_slice %446 {offsets = [0, 0], sizes = [8, 32], strides = [1, 1]} : vector<8x128xf32> to vector<8x32xf32>
    %448 = vector.extract_strided_slice %446 {offsets = [0, 32], sizes = [8, 32], strides = [1, 1]} : vector<8x128xf32> to vector<8x32xf32>
    %449 = vector.extract_strided_slice %446 {offsets = [0, 96], sizes = [8, 32], strides = [1, 1]} : vector<8x128xf32> to vector<8x32xf32>
    %450 = vector.extract_strided_slice %441 {offsets = [0, 64], sizes = [8, 32], strides = [1, 1]} : vector<8x128xf32> to vector<8x32xf32>
    %451 = math.tanh %450 : vector<8x32xf32>
    %452 = arith.mulf %448, %435 : vector<8x32xf32>
    %453 = arith.mulf %447, %451 : vector<8x32xf32>
    %454 = arith.addf %452, %453 : vector<8x32xf32>
    %455 = math.tanh %454 : vector<8x32xf32>
    %456 = arith.mulf %449, %455 : vector<8x32xf32>
    %c40_129 = arith.constant 40 : index
    %c0_130 = arith.constant 0 : index
    %457 = vector.load %arg17[%c40_129, %c0_130] : memref<64x32xf32, #tpu.memory_space<vmem>>, vector<8x32xf32>
    tpu.vector_store %arg17[%c40_129, %c0_130], %456 {strides = array<i32>} : memref<64x32xf32, #tpu.memory_space<vmem>>, vector<8x32xf32>,
    %458 = arith.truncf %456 : vector<8x32xf32> to vector<8x32xbf16>
    %cst_131 = arith.constant dense<0.000000e+00> : vector<8x128xf32>
    %459 = tpu.matmul %458, %341, %cst_131 {dimension_numbers = #tpu.dot_dimension_numbers<[1], [0], [0], [1], [0, 0, 1, 1], [], []>} : vector<8x32xbf16>, vector<32x128xbf16>, vector<8x128xf32> -> vector<8x128xf32>
    %460 = arith.addf %340, %459 : vector<8x128xf32>
    %461 = arith.negf %460 : vector<8x128xf32>
    %462 = math.exp %461 : vector<8x128xf32>
    %cst_132 = arith.constant 1.000000e+00 : f32
    %463 = vector.broadcast %cst_132 : f32 to vector<8x128xf32>
    %464 = arith.addf %463, %462 : vector<8x128xf32>
    %465 = arith.divf %463, %464 : vector<8x128xf32>
    %466 = vector.extract_strided_slice %465 {offsets = [0, 0], sizes = [8, 32], strides = [1, 1]} : vector<8x128xf32> to vector<8x32xf32>
    %467 = vector.extract_strided_slice %465 {offsets = [0, 32], sizes = [8, 32], strides = [1, 1]} : vector<8x128xf32> to vector<8x32xf32>
    %468 = vector.extract_strided_slice %465 {offsets = [0, 96], sizes = [8, 32], strides = [1, 1]} : vector<8x128xf32> to vector<8x32xf32>
    %469 = vector.extract_strided_slice %460 {offsets = [0, 64], sizes = [8, 32], strides = [1, 1]} : vector<8x128xf32> to vector<8x32xf32>
    %470 = math.tanh %469 : vector<8x32xf32>
    %471 = arith.mulf %467, %454 : vector<8x32xf32>
    %472 = arith.mulf %466, %470 : vector<8x32xf32>
    %473 = arith.addf %471, %472 : vector<8x32xf32>
    %474 = math.tanh %473 : vector<8x32xf32>
    %475 = arith.mulf %468, %474 : vector<8x32xf32>
    %c48_133 = arith.constant 48 : index
    %c0_134 = arith.constant 0 : index
    %476 = vector.load %arg17[%c48_133, %c0_134] : memref<64x32xf32, #tpu.memory_space<vmem>>, vector<8x32xf32>
    tpu.vector_store %arg17[%c48_133, %c0_134], %475 {strides = array<i32>} : memref<64x32xf32, #tpu.memory_space<vmem>>, vector<8x32xf32>,
    %477 = arith.truncf %475 : vector<8x32xf32> to vector<8x32xbf16>
    %cst_135 = arith.constant dense<0.000000e+00> : vector<8x128xf32>
    %478 = tpu.matmul %477, %341, %cst_135 {dimension_numbers = #tpu.dot_dimension_numbers<[1], [0], [0], [1], [0, 0, 1, 1], [], []>} : vector<8x32xbf16>, vector<32x128xbf16>, vector<8x128xf32> -> vector<8x128xf32>
    %479 = arith.addf %340, %478 : vector<8x128xf32>
    %480 = arith.negf %479 : vector<8x128xf32>
    %481 = math.exp %480 : vector<8x128xf32>
    %cst_136 = arith.constant 1.000000e+00 : f32
    %482 = vector.broadcast %cst_136 : f32 to vector<8x128xf32>
    %483 = arith.addf %482, %481 : vector<8x128xf32>
    %484 = arith.divf %482, %483 : vector<8x128xf32>
    %485 = vector.extract_strided_slice %484 {offsets = [0, 0], sizes = [8, 32], strides = [1, 1]} : vector<8x128xf32> to vector<8x32xf32>
    %486 = vector.extract_strided_slice %484 {offsets = [0, 32], sizes = [8, 32], strides = [1, 1]} : vector<8x128xf32> to vector<8x32xf32>
    %487 = vector.extract_strided_slice %484 {offsets = [0, 96], sizes = [8, 32], strides = [1, 1]} : vector<8x128xf32> to vector<8x32xf32>
    %488 = vector.extract_strided_slice %479 {offsets = [0, 64], sizes = [8, 32], strides = [1, 1]} : vector<8x128xf32> to vector<8x32xf32>
    %489 = math.tanh %488 : vector<8x32xf32>
    %490 = arith.mulf %486, %473 : vector<8x32xf32>
    %491 = arith.mulf %485, %489 : vector<8x32xf32>
    %492 = arith.addf %490, %491 : vector<8x32xf32>
    %493 = math.tanh %492 : vector<8x32xf32>
    %494 = arith.mulf %487, %493 : vector<8x32xf32>
    %c56_137 = arith.constant 56 : index
    %c0_138 = arith.constant 0 : index
    %495 = vector.load %arg17[%c56_137, %c0_138] : memref<64x32xf32, #tpu.memory_space<vmem>>, vector<8x32xf32>
    tpu.vector_store %arg17[%c56_137, %c0_138], %494 {strides = array<i32>} : memref<64x32xf32, #tpu.memory_space<vmem>>, vector<8x32xf32>,
    %c0_139 = arith.constant 0 : index
    %c0_140 = arith.constant 0 : index
    %496 = vector.load %arg11[%c0_139, %c0_140] : memref<32x128xbf16, #tpu.memory_space<vmem>>, vector<32x128xbf16>
    %c0_141 = arith.constant 0 : index
    %c0_142 = arith.constant 0 : index
    %497 = vector.load %arg13[%c0_141, %c0_142] : memref<1x128xf32, #tpu.memory_space<vmem>>, vector<1x128xf32>
    %c0_143 = arith.constant 0 : index
    %c0_144 = arith.constant 0 : index
    %498 = vector.load %arg12[%c0_143, %c0_144] : memref<32x128xbf16, #tpu.memory_space<vmem>>, vector<32x128xbf16>
    %cst_145 = arith.constant 0.000000e+00 : f32
    %499 = vector.broadcast %cst_145 : f32 to vector<8x32xf32>
    %cst_146 = arith.constant 0.000000e+00 : f32
    %500 = vector.broadcast %cst_146 : f32 to vector<8x32xf32>
    %c0_147 = arith.constant 0 : index
    %c0_148 = arith.constant 0 : index
    %501 = vector.load %arg17[%c0_147, %c0_148] : memref<64x32xf32, #tpu.memory_space<vmem>>, vector<64x32xf32>
    %502 = arith.truncf %501 : vector<64x32xf32> to vector<64x32xbf16>
    %cst_149 = arith.constant dense<0.000000e+00> : vector<64x128xf32>
    %503 = tpu.matmul %502, %496, %cst_149 {dimension_numbers = #tpu.dot_dimension_numbers<[1], [0], [0], [1], [0, 0, 1, 1], [], []>} : vector<64x32xbf16>, vector<32x128xbf16>, vector<64x128xf32> -> vector<64x128xf32>
    %504 = vector.broadcast %497 : vector<1x128xf32> to vector<64x128xf32>
    %505 = arith.addf %503, %504 : vector<64x128xf32>
    %c0_150 = arith.constant 0 : index
    %c0_151 = arith.constant 0 : index
    %506 = vector.load %arg19[%c0_150, %c0_151] : memref<64x128xf32, #tpu.memory_space<vmem>>, vector<64x128xf32>
    tpu.vector_store %arg19[%c0_150, %c0_151], %505 {strides = array<i32>} : memref<64x128xf32, #tpu.memory_space<vmem>>, vector<64x128xf32>,
    %c0_152 = arith.constant 0 : index
    %c0_153 = arith.constant 0 : index
    %507 = vector.load %arg19[%c0_152, %c0_153] : memref<64x128xf32, #tpu.memory_space<vmem>>, vector<8x128xf32>
    %508 = arith.truncf %499 : vector<8x32xf32> to vector<8x32xbf16>
    %cst_154 = arith.constant dense<0.000000e+00> : vector<8x128xf32>
    %509 = tpu.matmul %508, %498, %cst_154 {dimension_numbers = #tpu.dot_dimension_numbers<[1], [0], [0], [1], [0, 0, 1, 1], [], []>} : vector<8x32xbf16>, vector<32x128xbf16>, vector<8x128xf32> -> vector<8x128xf32>
    %510 = arith.addf %507, %509 : vector<8x128xf32>
    %511 = arith.negf %510 : vector<8x128xf32>
    %512 = math.exp %511 : vector<8x128xf32>
    %cst_155 = arith.constant 1.000000e+00 : f32
    %513 = vector.broadcast %cst_155 : f32 to vector<8x128xf32>
    %514 = arith.addf %513, %512 : vector<8x128xf32>
    %515 = arith.divf %513, %514 : vector<8x128xf32>
    %516 = vector.extract_strided_slice %515 {offsets = [0, 0], sizes = [8, 32], strides = [1, 1]} : vector<8x128xf32> to vector<8x32xf32>
    %517 = vector.extract_strided_slice %515 {offsets = [0, 32], sizes = [8, 32], strides = [1, 1]} : vector<8x128xf32> to vector<8x32xf32>
    %518 = vector.extract_strided_slice %515 {offsets = [0, 96], sizes = [8, 32], strides = [1, 1]} : vector<8x128xf32> to vector<8x32xf32>
    %519 = vector.extract_strided_slice %510 {offsets = [0, 64], sizes = [8, 32], strides = [1, 1]} : vector<8x128xf32> to vector<8x32xf32>
    %520 = math.tanh %519 : vector<8x32xf32>
    %521 = arith.mulf %517, %500 : vector<8x32xf32>
    %522 = arith.mulf %516, %520 : vector<8x32xf32>
    %523 = arith.addf %521, %522 : vector<8x32xf32>
    %524 = math.tanh %523 : vector<8x32xf32>
    %525 = arith.mulf %518, %524 : vector<8x32xf32>
    %c0_156 = arith.constant 0 : index
    %c0_157 = arith.constant 0 : index
    %526 = vector.load %arg18[%c0_156, %c0_157] : memref<64x32xf32, #tpu.memory_space<vmem>>, vector<8x32xf32>
    tpu.vector_store %arg18[%c0_156, %c0_157], %525 {strides = array<i32>} : memref<64x32xf32, #tpu.memory_space<vmem>>, vector<8x32xf32>,
    %c8_158 = arith.constant 8 : index
    %c0_159 = arith.constant 0 : index
    %527 = vector.load %arg19[%c8_158, %c0_159] : memref<64x128xf32, #tpu.memory_space<vmem>>, vector<8x128xf32>
    %528 = arith.truncf %525 : vector<8x32xf32> to vector<8x32xbf16>
    %cst_160 = arith.constant dense<0.000000e+00> : vector<8x128xf32>
    %529 = tpu.matmul %528, %498, %cst_160 {dimension_numbers = #tpu.dot_dimension_numbers<[1], [0], [0], [1], [0, 0, 1, 1], [], []>} : vector<8x32xbf16>, vector<32x128xbf16>, vector<8x128xf32> -> vector<8x128xf32>
    %530 = arith.addf %527, %529 : vector<8x128xf32>
    %531 = arith.negf %530 : vector<8x128xf32>
    %532 = math.exp %531 : vector<8x128xf32>
    %cst_161 = arith.constant 1.000000e+00 : f32
    %533 = vector.broadcast %cst_161 : f32 to vector<8x128xf32>
    %534 = arith.addf %533, %532 : vector<8x128xf32>
    %535 = arith.divf %533, %534 : vector<8x128xf32>
    %536 = vector.extract_strided_slice %535 {offsets = [0, 0], sizes = [8, 32], strides = [1, 1]} : vector<8x128xf32> to vector<8x32xf32>
    %537 = vector.extract_strided_slice %535 {offsets = [0, 32], sizes = [8, 32], strides = [1, 1]} : vector<8x128xf32> to vector<8x32xf32>
    %538 = vector.extract_strided_slice %535 {offsets = [0, 96], sizes = [8, 32], strides = [1, 1]} : vector<8x128xf32> to vector<8x32xf32>
    %539 = vector.extract_strided_slice %530 {offsets = [0, 64], sizes = [8, 32], strides = [1, 1]} : vector<8x128xf32> to vector<8x32xf32>
    %540 = math.tanh %539 : vector<8x32xf32>
    %541 = arith.mulf %537, %523 : vector<8x32xf32>
    %542 = arith.mulf %536, %540 : vector<8x32xf32>
    %543 = arith.addf %541, %542 : vector<8x32xf32>
    %544 = math.tanh %543 : vector<8x32xf32>
    %545 = arith.mulf %538, %544 : vector<8x32xf32>
    %c8_162 = arith.constant 8 : index
    %c0_163 = arith.constant 0 : index
    %546 = vector.load %arg18[%c8_162, %c0_163] : memref<64x32xf32, #tpu.memory_space<vmem>>, vector<8x32xf32>
    tpu.vector_store %arg18[%c8_162, %c0_163], %545 {strides = array<i32>} : memref<64x32xf32, #tpu.memory_space<vmem>>, vector<8x32xf32>,
    %c16_164 = arith.constant 16 : index
    %c0_165 = arith.constant 0 : index
    %547 = vector.load %arg19[%c16_164, %c0_165] : memref<64x128xf32, #tpu.memory_space<vmem>>, vector<8x128xf32>
    %548 = arith.truncf %545 : vector<8x32xf32> to vector<8x32xbf16>
    %cst_166 = arith.constant dense<0.000000e+00> : vector<8x128xf32>
    %549 = tpu.matmul %548, %498, %cst_166 {dimension_numbers = #tpu.dot_dimension_numbers<[1], [0], [0], [1], [0, 0, 1, 1], [], []>} : vector<8x32xbf16>, vector<32x128xbf16>, vector<8x128xf32> -> vector<8x128xf32>
    %550 = arith.addf %547, %549 : vector<8x128xf32>
    %551 = arith.negf %550 : vector<8x128xf32>
    %552 = math.exp %551 : vector<8x128xf32>
    %cst_167 = arith.constant 1.000000e+00 : f32
    %553 = vector.broadcast %cst_167 : f32 to vector<8x128xf32>
    %554 = arith.addf %553, %552 : vector<8x128xf32>
    %555 = arith.divf %553, %554 : vector<8x128xf32>
    %556 = vector.extract_strided_slice %555 {offsets = [0, 0], sizes = [8, 32], strides = [1, 1]} : vector<8x128xf32> to vector<8x32xf32>
    %557 = vector.extract_strided_slice %555 {offsets = [0, 32], sizes = [8, 32], strides = [1, 1]} : vector<8x128xf32> to vector<8x32xf32>
    %558 = vector.extract_strided_slice %555 {offsets = [0, 96], sizes = [8, 32], strides = [1, 1]} : vector<8x128xf32> to vector<8x32xf32>
    %559 = vector.extract_strided_slice %550 {offsets = [0, 64], sizes = [8, 32], strides = [1, 1]} : vector<8x128xf32> to vector<8x32xf32>
    %560 = math.tanh %559 : vector<8x32xf32>
    %561 = arith.mulf %557, %543 : vector<8x32xf32>
    %562 = arith.mulf %556, %560 : vector<8x32xf32>
    %563 = arith.addf %561, %562 : vector<8x32xf32>
    %564 = math.tanh %563 : vector<8x32xf32>
    %565 = arith.mulf %558, %564 : vector<8x32xf32>
    %c16_168 = arith.constant 16 : index
    %c0_169 = arith.constant 0 : index
    %566 = vector.load %arg18[%c16_168, %c0_169] : memref<64x32xf32, #tpu.memory_space<vmem>>, vector<8x32xf32>
    tpu.vector_store %arg18[%c16_168, %c0_169], %565 {strides = array<i32>} : memref<64x32xf32, #tpu.memory_space<vmem>>, vector<8x32xf32>,
    %c24_170 = arith.constant 24 : index
    %c0_171 = arith.constant 0 : index
    %567 = vector.load %arg19[%c24_170, %c0_171] : memref<64x128xf32, #tpu.memory_space<vmem>>, vector<8x128xf32>
    %568 = arith.truncf %565 : vector<8x32xf32> to vector<8x32xbf16>
    %cst_172 = arith.constant dense<0.000000e+00> : vector<8x128xf32>
    %569 = tpu.matmul %568, %498, %cst_172 {dimension_numbers = #tpu.dot_dimension_numbers<[1], [0], [0], [1], [0, 0, 1, 1], [], []>} : vector<8x32xbf16>, vector<32x128xbf16>, vector<8x128xf32> -> vector<8x128xf32>
    %570 = arith.addf %567, %569 : vector<8x128xf32>
    %571 = arith.negf %570 : vector<8x128xf32>
    %572 = math.exp %571 : vector<8x128xf32>
    %cst_173 = arith.constant 1.000000e+00 : f32
    %573 = vector.broadcast %cst_173 : f32 to vector<8x128xf32>
    %574 = arith.addf %573, %572 : vector<8x128xf32>
    %575 = arith.divf %573, %574 : vector<8x128xf32>
    %576 = vector.extract_strided_slice %575 {offsets = [0, 0], sizes = [8, 32], strides = [1, 1]} : vector<8x128xf32> to vector<8x32xf32>
    %577 = vector.extract_strided_slice %575 {offsets = [0, 32], sizes = [8, 32], strides = [1, 1]} : vector<8x128xf32> to vector<8x32xf32>
    %578 = vector.extract_strided_slice %575 {offsets = [0, 96], sizes = [8, 32], strides = [1, 1]} : vector<8x128xf32> to vector<8x32xf32>
    %579 = vector.extract_strided_slice %570 {offsets = [0, 64], sizes = [8, 32], strides = [1, 1]} : vector<8x128xf32> to vector<8x32xf32>
    %580 = math.tanh %579 : vector<8x32xf32>
    %581 = arith.mulf %577, %563 : vector<8x32xf32>
    %582 = arith.mulf %576, %580 : vector<8x32xf32>
    %583 = arith.addf %581, %582 : vector<8x32xf32>
    %584 = math.tanh %583 : vector<8x32xf32>
    %585 = arith.mulf %578, %584 : vector<8x32xf32>
    %c24_174 = arith.constant 24 : index
    %c0_175 = arith.constant 0 : index
    %586 = vector.load %arg18[%c24_174, %c0_175] : memref<64x32xf32, #tpu.memory_space<vmem>>, vector<8x32xf32>
    tpu.vector_store %arg18[%c24_174, %c0_175], %585 {strides = array<i32>} : memref<64x32xf32, #tpu.memory_space<vmem>>, vector<8x32xf32>,
    %c32_176 = arith.constant 32 : index
    %c0_177 = arith.constant 0 : index
    %587 = vector.load %arg19[%c32_176, %c0_177] : memref<64x128xf32, #tpu.memory_space<vmem>>, vector<8x128xf32>
    %588 = arith.truncf %585 : vector<8x32xf32> to vector<8x32xbf16>
    %cst_178 = arith.constant dense<0.000000e+00> : vector<8x128xf32>
    %589 = tpu.matmul %588, %498, %cst_178 {dimension_numbers = #tpu.dot_dimension_numbers<[1], [0], [0], [1], [0, 0, 1, 1], [], []>} : vector<8x32xbf16>, vector<32x128xbf16>, vector<8x128xf32> -> vector<8x128xf32>
    %590 = arith.addf %587, %589 : vector<8x128xf32>
    %591 = arith.negf %590 : vector<8x128xf32>
    %592 = math.exp %591 : vector<8x128xf32>
    %cst_179 = arith.constant 1.000000e+00 : f32
    %593 = vector.broadcast %cst_179 : f32 to vector<8x128xf32>
    %594 = arith.addf %593, %592 : vector<8x128xf32>
    %595 = arith.divf %593, %594 : vector<8x128xf32>
    %596 = vector.extract_strided_slice %595 {offsets = [0, 0], sizes = [8, 32], strides = [1, 1]} : vector<8x128xf32> to vector<8x32xf32>
    %597 = vector.extract_strided_slice %595 {offsets = [0, 32], sizes = [8, 32], strides = [1, 1]} : vector<8x128xf32> to vector<8x32xf32>
    %598 = vector.extract_strided_slice %595 {offsets = [0, 96], sizes = [8, 32], strides = [1, 1]} : vector<8x128xf32> to vector<8x32xf32>
    %599 = vector.extract_strided_slice %590 {offsets = [0, 64], sizes = [8, 32], strides = [1, 1]} : vector<8x128xf32> to vector<8x32xf32>
    %600 = math.tanh %599 : vector<8x32xf32>
    %601 = arith.mulf %597, %583 : vector<8x32xf32>
    %602 = arith.mulf %596, %600 : vector<8x32xf32>
    %603 = arith.addf %601, %602 : vector<8x32xf32>
    %604 = math.tanh %603 : vector<8x32xf32>
    %605 = arith.mulf %598, %604 : vector<8x32xf32>
    %c32_180 = arith.constant 32 : index
    %c0_181 = arith.constant 0 : index
    %606 = vector.load %arg18[%c32_180, %c0_181] : memref<64x32xf32, #tpu.memory_space<vmem>>, vector<8x32xf32>
    tpu.vector_store %arg18[%c32_180, %c0_181], %605 {strides = array<i32>} : memref<64x32xf32, #tpu.memory_space<vmem>>, vector<8x32xf32>,
    %c40_182 = arith.constant 40 : index
    %c0_183 = arith.constant 0 : index
    %607 = vector.load %arg19[%c40_182, %c0_183] : memref<64x128xf32, #tpu.memory_space<vmem>>, vector<8x128xf32>
    %608 = arith.truncf %605 : vector<8x32xf32> to vector<8x32xbf16>
    %cst_184 = arith.constant dense<0.000000e+00> : vector<8x128xf32>
    %609 = tpu.matmul %608, %498, %cst_184 {dimension_numbers = #tpu.dot_dimension_numbers<[1], [0], [0], [1], [0, 0, 1, 1], [], []>} : vector<8x32xbf16>, vector<32x128xbf16>, vector<8x128xf32> -> vector<8x128xf32>
    %610 = arith.addf %607, %609 : vector<8x128xf32>
    %611 = arith.negf %610 : vector<8x128xf32>
    %612 = math.exp %611 : vector<8x128xf32>
    %cst_185 = arith.constant 1.000000e+00 : f32
    %613 = vector.broadcast %cst_185 : f32 to vector<8x128xf32>
    %614 = arith.addf %613, %612 : vector<8x128xf32>
    %615 = arith.divf %613, %614 : vector<8x128xf32>
    %616 = vector.extract_strided_slice %615 {offsets = [0, 0], sizes = [8, 32], strides = [1, 1]} : vector<8x128xf32> to vector<8x32xf32>
    %617 = vector.extract_strided_slice %615 {offsets = [0, 32], sizes = [8, 32], strides = [1, 1]} : vector<8x128xf32> to vector<8x32xf32>
    %618 = vector.extract_strided_slice %615 {offsets = [0, 96], sizes = [8, 32], strides = [1, 1]} : vector<8x128xf32> to vector<8x32xf32>
    %619 = vector.extract_strided_slice %610 {offsets = [0, 64], sizes = [8, 32], strides = [1, 1]} : vector<8x128xf32> to vector<8x32xf32>
    %620 = math.tanh %619 : vector<8x32xf32>
    %621 = arith.mulf %617, %603 : vector<8x32xf32>
    %622 = arith.mulf %616, %620 : vector<8x32xf32>
    %623 = arith.addf %621, %622 : vector<8x32xf32>
    %624 = math.tanh %623 : vector<8x32xf32>
    %625 = arith.mulf %618, %624 : vector<8x32xf32>
    %c40_186 = arith.constant 40 : index
    %c0_187 = arith.constant 0 : index
    %626 = vector.load %arg18[%c40_186, %c0_187] : memref<64x32xf32, #tpu.memory_space<vmem>>, vector<8x32xf32>
    tpu.vector_store %arg18[%c40_186, %c0_187], %625 {strides = array<i32>} : memref<64x32xf32, #tpu.memory_space<vmem>>, vector<8x32xf32>,
    %c48_188 = arith.constant 48 : index
    %c0_189 = arith.constant 0 : index
    %627 = vector.load %arg19[%c48_188, %c0_189] : memref<64x128xf32, #tpu.memory_space<vmem>>, vector<8x128xf32>
    %628 = arith.truncf %625 : vector<8x32xf32> to vector<8x32xbf16>
    %cst_190 = arith.constant dense<0.000000e+00> : vector<8x128xf32>
    %629 = tpu.matmul %628, %498, %cst_190 {dimension_numbers = #tpu.dot_dimension_numbers<[1], [0], [0], [1], [0, 0, 1, 1], [], []>} : vector<8x32xbf16>, vector<32x128xbf16>, vector<8x128xf32> -> vector<8x128xf32>
    %630 = arith.addf %627, %629 : vector<8x128xf32>
    %631 = arith.negf %630 : vector<8x128xf32>
    %632 = math.exp %631 : vector<8x128xf32>
    %cst_191 = arith.constant 1.000000e+00 : f32
    %633 = vector.broadcast %cst_191 : f32 to vector<8x128xf32>
    %634 = arith.addf %633, %632 : vector<8x128xf32>
    %635 = arith.divf %633, %634 : vector<8x128xf32>
    %636 = vector.extract_strided_slice %635 {offsets = [0, 0], sizes = [8, 32], strides = [1, 1]} : vector<8x128xf32> to vector<8x32xf32>
    %637 = vector.extract_strided_slice %635 {offsets = [0, 32], sizes = [8, 32], strides = [1, 1]} : vector<8x128xf32> to vector<8x32xf32>
    %638 = vector.extract_strided_slice %635 {offsets = [0, 96], sizes = [8, 32], strides = [1, 1]} : vector<8x128xf32> to vector<8x32xf32>
    %639 = vector.extract_strided_slice %630 {offsets = [0, 64], sizes = [8, 32], strides = [1, 1]} : vector<8x128xf32> to vector<8x32xf32>
    %640 = math.tanh %639 : vector<8x32xf32>
    %641 = arith.mulf %637, %623 : vector<8x32xf32>
    %642 = arith.mulf %636, %640 : vector<8x32xf32>
    %643 = arith.addf %641, %642 : vector<8x32xf32>
    %644 = math.tanh %643 : vector<8x32xf32>
    %645 = arith.mulf %638, %644 : vector<8x32xf32>
    %c48_192 = arith.constant 48 : index
    %c0_193 = arith.constant 0 : index
    %646 = vector.load %arg18[%c48_192, %c0_193] : memref<64x32xf32, #tpu.memory_space<vmem>>, vector<8x32xf32>
    tpu.vector_store %arg18[%c48_192, %c0_193], %645 {strides = array<i32>} : memref<64x32xf32, #tpu.memory_space<vmem>>, vector<8x32xf32>,
    %c56_194 = arith.constant 56 : index
    %c0_195 = arith.constant 0 : index
    %647 = vector.load %arg19[%c56_194, %c0_195] : memref<64x128xf32, #tpu.memory_space<vmem>>, vector<8x128xf32>
    %648 = arith.truncf %645 : vector<8x32xf32> to vector<8x32xbf16>
    %cst_196 = arith.constant dense<0.000000e+00> : vector<8x128xf32>
    %649 = tpu.matmul %648, %498, %cst_196 {dimension_numbers = #tpu.dot_dimension_numbers<[1], [0], [0], [1], [0, 0, 1, 1], [], []>} : vector<8x32xbf16>, vector<32x128xbf16>, vector<8x128xf32> -> vector<8x128xf32>
    %650 = arith.addf %647, %649 : vector<8x128xf32>
    %651 = arith.negf %650 : vector<8x128xf32>
    %652 = math.exp %651 : vector<8x128xf32>
    %cst_197 = arith.constant 1.000000e+00 : f32
    %653 = vector.broadcast %cst_197 : f32 to vector<8x128xf32>
    %654 = arith.addf %653, %652 : vector<8x128xf32>
    %655 = arith.divf %653, %654 : vector<8x128xf32>
    %656 = vector.extract_strided_slice %655 {offsets = [0, 0], sizes = [8, 32], strides = [1, 1]} : vector<8x128xf32> to vector<8x32xf32>
    %657 = vector.extract_strided_slice %655 {offsets = [0, 32], sizes = [8, 32], strides = [1, 1]} : vector<8x128xf32> to vector<8x32xf32>
    %658 = vector.extract_strided_slice %655 {offsets = [0, 96], sizes = [8, 32], strides = [1, 1]} : vector<8x128xf32> to vector<8x32xf32>
    %659 = vector.extract_strided_slice %650 {offsets = [0, 64], sizes = [8, 32], strides = [1, 1]} : vector<8x128xf32> to vector<8x32xf32>
    %660 = math.tanh %659 : vector<8x32xf32>
    %661 = arith.mulf %657, %643 : vector<8x32xf32>
    %662 = arith.mulf %656, %660 : vector<8x32xf32>
    %663 = arith.addf %661, %662 : vector<8x32xf32>
    %664 = math.tanh %663 : vector<8x32xf32>
    %665 = arith.mulf %658, %664 : vector<8x32xf32>
    %c56_198 = arith.constant 56 : index
    %c0_199 = arith.constant 0 : index
    %666 = vector.load %arg18[%c56_198, %c0_199] : memref<64x32xf32, #tpu.memory_space<vmem>>, vector<8x32xf32>
    tpu.vector_store %arg18[%c56_198, %c0_199], %665 {strides = array<i32>} : memref<64x32xf32, #tpu.memory_space<vmem>>, vector<8x32xf32>,
    %c0_200 = arith.constant 0 : index
    %c0_201 = arith.constant 0 : index
    %667 = vector.load %arg18[%c0_200, %c0_201] : memref<64x32xf32, #tpu.memory_space<vmem>>, vector<64x32xf32>
    %668 = arith.truncf %667 : vector<64x32xf32> to vector<64x32xbf16>
    %c0_202 = arith.constant 0 : index
    %c0_203 = arith.constant 0 : index
    %669 = vector.load %arg14[%c0_202, %c0_203] : memref<32x128xbf16, #tpu.memory_space<vmem>>, vector<32x128xbf16>
    %cst_204 = arith.constant dense<0.000000e+00> : vector<64x128xf32>
    %670 = tpu.matmul %668, %669, %cst_204 {dimension_numbers = #tpu.dot_dimension_numbers<[1], [0], [0], [1], [0, 0, 1, 1], [], []>} : vector<64x32xbf16>, vector<32x128xbf16>, vector<64x128xf32> -> vector<64x128xf32>
    %c0_205 = arith.constant 0 : index
    %c0_206 = arith.constant 0 : index
    %671 = vector.load %arg15[%c0_205, %c0_206] : memref<1x128xf32, #tpu.memory_space<vmem>>, vector<1x128xf32>
    %672 = vector.broadcast %671 : vector<1x128xf32> to vector<64x128xf32>
    %673 = arith.addf %670, %672 : vector<64x128xf32>
    %674 = math.tanh %673 : vector<64x128xf32>
    %675 = vector.shape_cast %674 : vector<64x128xf32> to vector<8x8x128xf32>
    %c0_207 = arith.constant 0 : index
    %c0_208 = arith.constant 0 : index
    %c0_209 = arith.constant 0 : index
    %676 = vector.load %arg16[%c0_207, %c0_208, %c0_209] : memref<8x8x128xf32, #tpu.memory_space<vmem>>, vector<8x8x128xf32>
    tpu.vector_store %arg16[%c0_207, %c0_208, %c0_209], %675 {strides = array<i32>} : memref<8x8x128xf32, #tpu.memory_space<vmem>>, vector<8x8x128xf32>,
    return
  }
  func.func @transform_0(%arg0: i32) -> (i32, i32, i32) {
    %c0_i32 = arith.constant 0 : i32
    %c0_i32_0 = arith.constant 0 : i32
    %c0_i32_1 = arith.constant 0 : i32
    return %c0_i32, %arg0, %c0_i32_0 : i32, i32, i32
  }
  func.func @transform_1(%arg0: i32) -> (i32, i32) {
    %c0_i32 = arith.constant 0 : i32
    %c0_i32_0 = arith.constant 0 : i32
    %c0_i32_1 = arith.constant 0 : i32
    return %c0_i32, %c0_i32_0 : i32, i32
  }
  func.func @transform_2(%arg0: i32) -> (i32, i32) {
    %c0_i32 = arith.constant 0 : i32
    %c0_i32_0 = arith.constant 0 : i32
    %c0_i32_1 = arith.constant 0 : i32
    return %c0_i32, %c0_i32_0 : i32, i32
  }
  func.func @transform_3(%arg0: i32) -> (i32, i32) {
    %c0_i32 = arith.constant 0 : i32
    %c0_i32_0 = arith.constant 0 : i32
    %c0_i32_1 = arith.constant 0 : i32
    return %c0_i32, %c0_i32_0 : i32, i32
  }
  func.func @transform_4(%arg0: i32) -> (i32, i32) {
    %c0_i32 = arith.constant 0 : i32
    %c0_i32_0 = arith.constant 0 : i32
    %c0_i32_1 = arith.constant 0 : i32
    return %c0_i32, %c0_i32_0 : i32, i32
  }
  func.func @transform_5(%arg0: i32) -> (i32, i32) {
    %c0_i32 = arith.constant 0 : i32
    %c0_i32_0 = arith.constant 0 : i32
    %c0_i32_1 = arith.constant 0 : i32
    return %c0_i32, %c0_i32_0 : i32, i32
  }
  func.func @transform_6(%arg0: i32) -> (i32, i32) {
    %c0_i32 = arith.constant 0 : i32
    %c0_i32_0 = arith.constant 0 : i32
    %c0_i32_1 = arith.constant 0 : i32
    return %c0_i32, %c0_i32_0 : i32, i32
  }
  func.func @transform_7(%arg0: i32) -> (i32, i32) {
    %c0_i32 = arith.constant 0 : i32
    %c0_i32_0 = arith.constant 0 : i32
    %c0_i32_1 = arith.constant 0 : i32
    return %c0_i32, %c0_i32_0 : i32, i32
  }
  func.func @transform_8(%arg0: i32) -> (i32, i32) {
    %c0_i32 = arith.constant 0 : i32
    %c0_i32_0 = arith.constant 0 : i32
    %c0_i32_1 = arith.constant 0 : i32
    return %c0_i32, %c0_i32_0 : i32, i32
  }
  func.func @transform_9(%arg0: i32) -> (i32, i32) {
    %c0_i32 = arith.constant 0 : i32
    %c0_i32_0 = arith.constant 0 : i32
    %c0_i32_1 = arith.constant 0 : i32
    return %c0_i32, %c0_i32_0 : i32, i32
  }
  func.func @transform_10(%arg0: i32) -> (i32, i32) {
    %c0_i32 = arith.constant 0 : i32
    %c0_i32_0 = arith.constant 0 : i32
    %c0_i32_1 = arith.constant 0 : i32
    return %c0_i32, %c0_i32_0 : i32, i32
  }
  func.func @transform_11(%arg0: i32) -> (i32, i32) {
    %c0_i32 = arith.constant 0 : i32
    %c0_i32_0 = arith.constant 0 : i32
    %c0_i32_1 = arith.constant 0 : i32
    return %c0_i32, %c0_i32_0 : i32, i32
  }
  func.func @transform_12(%arg0: i32) -> (i32, i32) {
    %c0_i32 = arith.constant 0 : i32
    %c0_i32_0 = arith.constant 0 : i32
    %c0_i32_1 = arith.constant 0 : i32
    return %c0_i32, %c0_i32_0 : i32, i32
  }
  func.func @transform_13(%arg0: i32) -> (i32, i32) {
    %c0_i32 = arith.constant 0 : i32
    %c0_i32_0 = arith.constant 0 : i32
    %c0_i32_1 = arith.constant 0 : i32
    return %c0_i32, %c0_i32_0 : i32, i32
  }
  func.func @transform_14(%arg0: i32) -> (i32, i32) {
    %c0_i32 = arith.constant 0 : i32
    %c0_i32_0 = arith.constant 0 : i32
    %c0_i32_1 = arith.constant 0 : i32
    return %c0_i32, %c0_i32_0 : i32, i32
  }
  func.func @transform_15(%arg0: i32) -> (i32, i32, i32) {
    %c0_i32 = arith.constant 0 : i32
    %c0_i32_0 = arith.constant 0 : i32
    %c0_i32_1 = arith.constant 0 : i32
    return %c0_i32, %arg0, %c0_i32_0 : i32, i32, i32
  }
}

module attributes {stable_mosaic.version = 11 : i64} {
  func.func @kernel(%arg0: i32, %arg1: memref<8x8x4xf32, #tpu.memory_space<vmem>>, %arg2: memref<4x128xbf16, #tpu.memory_space<vmem>>, %arg3: memref<32x128xbf16, #tpu.memory_space<vmem>>, %arg4: memref<1x128xf32, #tpu.memory_space<vmem>>, %arg5: memref<32x128xbf16, #tpu.memory_space<vmem>>, %arg6: memref<32x128xbf16, #tpu.memory_space<vmem>>, %arg7: memref<1x128xf32, #tpu.memory_space<vmem>>, %arg8: memref<32x128xbf16, #tpu.memory_space<vmem>>, %arg9: memref<32x128xbf16, #tpu.memory_space<vmem>>, %arg10: memref<1x128xf32, #tpu.memory_space<vmem>>, %arg11: memref<32x128xbf16, #tpu.memory_space<vmem>>, %arg12: memref<32x128xbf16, #tpu.memory_space<vmem>>, %arg13: memref<1x128xf32, #tpu.memory_space<vmem>>, %arg14: memref<32x128xbf16, #tpu.memory_space<vmem>>, %arg15: memref<1x128xf32, #tpu.memory_space<vmem>>, %arg16: memref<8x8x128xf32, #tpu.memory_space<vmem>>, %arg17: memref<64x32xf32, #tpu.memory_space<vmem>>, %arg18: memref<64x32xf32, #tpu.memory_space<vmem>>, %arg19: memref<64x128xf32, #tpu.memory_space<vmem>>) attributes {dimension_semantics = [#tpu.dimension_semantics<parallel>], iteration_bounds = array<i64: 1>, scalar_prefetch = 0 : i64, scratch_operands = 3 : i64, tpu.core_type = #tpu.core_type<tc>, window_params = [{transform_indices = @transform_0, window_bounds = array<i64: 8, 8, 4>}, {pipeline_mode = #tpu.pipeline_mode<synchronous>, transform_indices = @transform_1, window_bounds = array<i64: 4, 128>}, {pipeline_mode = #tpu.pipeline_mode<synchronous>, transform_indices = @transform_2, window_bounds = array<i64: 32, 128>}, {pipeline_mode = #tpu.pipeline_mode<synchronous>, transform_indices = @transform_3, window_bounds = array<i64: 1, 128>}, {pipeline_mode = #tpu.pipeline_mode<synchronous>, transform_indices = @transform_4, window_bounds = array<i64: 32, 128>}, {pipeline_mode = #tpu.pipeline_mode<synchronous>, transform_indices = @transform_5, window_bounds = array<i64: 32, 128>}, {pipeline_mode = #tpu.pipeline_mode<synchronous>, transform_indices = @transform_6, window_bounds = array<i64: 1, 128>}, {pipeline_mode = #tpu.pipeline_mode<synchronous>, transform_indices = @transform_7, window_bounds = array<i64: 32, 128>}, {pipeline_mode = #tpu.pipeline_mode<synchronous>, transform_indices = @transform_8, window_bounds = array<i64: 32, 128>}, {pipeline_mode = #tpu.pipeline_mode<synchronous>, transform_indices = @transform_9, window_bounds = array<i64: 1, 128>}, {pipeline_mode = #tpu.pipeline_mode<synchronous>, transform_indices = @transform_10, window_bounds = array<i64: 32, 128>}, {pipeline_mode = #tpu.pipeline_mode<synchronous>, transform_indices = @transform_11, window_bounds = array<i64: 32, 128>}, {pipeline_mode = #tpu.pipeline_mode<synchronous>, transform_indices = @transform_12, window_bounds = array<i64: 1, 128>}, {pipeline_mode = #tpu.pipeline_mode<synchronous>, transform_indices = @transform_13, window_bounds = array<i64: 32, 128>}, {pipeline_mode = #tpu.pipeline_mode<synchronous>, transform_indices = @transform_14, window_bounds = array<i64: 1, 128>}, {transform_indices = @transform_15, window_bounds = array<i64: 8, 8, 128>}]} {
    %c0 = arith.constant 0 : index
    %c0_0 = arith.constant 0 : index
    %0 = vector.load %arg2[%c0, %c0_0] : memref<4x128xbf16, #tpu.memory_space<vmem>>, vector<4x128xbf16>
    %c0_1 = arith.constant 0 : index
    %c0_2 = arith.constant 0 : index
    %1 = vector.load %arg4[%c0_1, %c0_2] : memref<1x128xf32, #tpu.memory_space<vmem>>, vector<1x128xf32>
    %c0_3 = arith.constant 0 : index
    %c0_4 = arith.constant 0 : index
    %2 = vector.load %arg3[%c0_3, %c0_4] : memref<32x128xbf16, #tpu.memory_space<vmem>>, vector<32x128xbf16>
    %cst = arith.constant 0.000000e+00 : f32
    %3 = vector.broadcast %cst : f32 to vector<8x32xf32>
    %cst_5 = arith.constant 0.000000e+00 : f32
    %4 = vector.broadcast %cst_5 : f32 to vector<8x32xf32>
    %c0_6 = arith.constant 0 : index
    %c0_7 = arith.constant 0 : index
    %c0_8 = arith.constant 0 : index
    %5 = vector.load %arg1[%c0_6, %c0_7, %c0_8] : memref<8x8x4xf32, #tpu.memory_space<vmem>>, vector<8x8x4xf32>
    %6 = vector.shape_cast %5 : vector<8x8x4xf32> to vector<64x4xf32>
    %7 = arith.truncf %6 : vector<64x4xf32> to vector<64x4xbf16>
    %cst_9 = arith.constant dense<0.000000e+00> : vector<64x128xf32>
    %8 = tpu.matmul %7, %0, %cst_9 {dimension_numbers = #tpu.dot_dimension_numbers<[1], [0], [0], [1], [0, 0, 1, 1], [], []>} : vector<64x4xbf16>, vector<4x128xbf16>, vector<64x128xf32> -> vector<64x128xf32>
    %9 = vector.broadcast %1 : vector<1x128xf32> to vector<64x128xf32>
    %10 = arith.addf %8, %9 : vector<64x128xf32>
    %c0_10 = arith.constant 0 : index
    %c0_11 = arith.constant 0 : index
    %11 = vector.load %arg19[%c0_10, %c0_11] : memref<64x128xf32, #tpu.memory_space<vmem>>, vector<64x128xf32>
    tpu.vector_store %arg19[%c0_10, %c0_11], %10 {strides = array<i32>} : memref<64x128xf32, #tpu.memory_space<vmem>>, vector<64x128xf32>,
    %c0_12 = arith.constant 0 : index
    %c0_13 = arith.constant 0 : index
    %12 = vector.load %arg19[%c0_12, %c0_13] : memref<64x128xf32, #tpu.memory_space<vmem>>, vector<8x128xf32>
    %13 = arith.truncf %3 : vector<8x32xf32> to vector<8x32xbf16>
    %cst_14 = arith.constant dense<0.000000e+00> : vector<8x128xf32>
    %14 = tpu.matmul %13, %2, %cst_14 {dimension_numbers = #tpu.dot_dimension_numbers<[1], [0], [0], [1], [0, 0, 1, 1], [], []>} : vector<8x32xbf16>, vector<32x128xbf16>, vector<8x128xf32> -> vector<8x128xf32>
    %15 = arith.addf %12, %14 : vector<8x128xf32>
    %16 = arith.negf %15 : vector<8x128xf32>
    %17 = math.exp %16 : vector<8x128xf32>
    %cst_15 = arith.constant 1.000000e+00 : f32
    %18 = vector.broadcast %cst_15 : f32 to vector<8x128xf32>
    %19 = arith.addf %18, %17 : vector<8x128xf32>
    %20 = arith.divf %18, %19 : vector<8x128xf32>
    %21 = vector.extract_strided_slice %20 {offsets = [0, 0], sizes = [8, 32], strides = [1, 1]} : vector<8x128xf32> to vector<8x32xf32>
    %22 = vector.extract_strided_slice %20 {offsets = [0, 32], sizes = [8, 32], strides = [1, 1]} : vector<8x128xf32> to vector<8x32xf32>
    %23 = vector.extract_strided_slice %20 {offsets = [0, 96], sizes = [8, 32], strides = [1, 1]} : vector<8x128xf32> to vector<8x32xf32>
    %24 = vector.extract_strided_slice %15 {offsets = [0, 64], sizes = [8, 32], strides = [1, 1]} : vector<8x128xf32> to vector<8x32xf32>
    %25 = math.tanh %24 : vector<8x32xf32>
    %26 = arith.mulf %22, %4 : vector<8x32xf32>
    %27 = arith.mulf %21, %25 : vector<8x32xf32>
    %28 = arith.addf %26, %27 : vector<8x32xf32>
    %29 = math.tanh %28 : vector<8x32xf32>
    %30 = arith.mulf %23, %29 : vector<8x32xf32>
    %c0_16 = arith.constant 0 : index
    %c0_17 = arith.constant 0 : index
    %31 = vector.load %arg17[%c0_16, %c0_17] : memref<64x32xf32, #tpu.memory_space<vmem>>, vector<8x32xf32>
    tpu.vector_store %arg17[%c0_16, %c0_17], %30 {strides = array<i32>} : memref<64x32xf32, #tpu.memory_space<vmem>>, vector<8x32xf32>,
    %c8 = arith.constant 8 : index
    %c0_18 = arith.constant 0 : index
    %32 = vector.load %arg19[%c8, %c0_18] : memref<64x128xf32, #tpu.memory_space<vmem>>, vector<8x128xf32>
    %33 = arith.truncf %30 : vector<8x32xf32> to vector<8x32xbf16>
    %cst_19 = arith.constant dense<0.000000e+00> : vector<8x128xf32>
    %34 = tpu.matmul %33, %2, %cst_19 {dimension_numbers = #tpu.dot_dimension_numbers<[1], [0], [0], [1], [0, 0, 1, 1], [], []>} : vector<8x32xbf16>, vector<32x128xbf16>, vector<8x128xf32> -> vector<8x128xf32>
    %35 = arith.addf %32, %34 : vector<8x128xf32>
    %36 = arith.negf %35 : vector<8x128xf32>
    %37 = math.exp %36 : vector<8x128xf32>
    %cst_20 = arith.constant 1.000000e+00 : f32
    %38 = vector.broadcast %cst_20 : f32 to vector<8x128xf32>
    %39 = arith.addf %38, %37 : vector<8x128xf32>
    %40 = arith.divf %38, %39 : vector<8x128xf32>
    %41 = vector.extract_strided_slice %40 {offsets = [0, 0], sizes = [8, 32], strides = [1, 1]} : vector<8x128xf32> to vector<8x32xf32>
    %42 = vector.extract_strided_slice %40 {offsets = [0, 32], sizes = [8, 32], strides = [1, 1]} : vector<8x128xf32> to vector<8x32xf32>
    %43 = vector.extract_strided_slice %40 {offsets = [0, 96], sizes = [8, 32], strides = [1, 1]} : vector<8x128xf32> to vector<8x32xf32>
    %44 = vector.extract_strided_slice %35 {offsets = [0, 64], sizes = [8, 32], strides = [1, 1]} : vector<8x128xf32> to vector<8x32xf32>
    %45 = math.tanh %44 : vector<8x32xf32>
    %46 = arith.mulf %42, %28 : vector<8x32xf32>
    %47 = arith.mulf %41, %45 : vector<8x32xf32>
    %48 = arith.addf %46, %47 : vector<8x32xf32>
    %49 = math.tanh %48 : vector<8x32xf32>
    %50 = arith.mulf %43, %49 : vector<8x32xf32>
    %c8_21 = arith.constant 8 : index
    %c0_22 = arith.constant 0 : index
    %51 = vector.load %arg17[%c8_21, %c0_22] : memref<64x32xf32, #tpu.memory_space<vmem>>, vector<8x32xf32>
    tpu.vector_store %arg17[%c8_21, %c0_22], %50 {strides = array<i32>} : memref<64x32xf32, #tpu.memory_space<vmem>>, vector<8x32xf32>,
    %c16 = arith.constant 16 : index
    %c0_23 = arith.constant 0 : index
    %52 = vector.load %arg19[%c16, %c0_23] : memref<64x128xf32, #tpu.memory_space<vmem>>, vector<8x128xf32>
    %53 = arith.truncf %50 : vector<8x32xf32> to vector<8x32xbf16>
    %cst_24 = arith.constant dense<0.000000e+00> : vector<8x128xf32>
    %54 = tpu.matmul %53, %2, %cst_24 {dimension_numbers = #tpu.dot_dimension_numbers<[1], [0], [0], [1], [0, 0, 1, 1], [], []>} : vector<8x32xbf16>, vector<32x128xbf16>, vector<8x128xf32> -> vector<8x128xf32>
    %55 = arith.addf %52, %54 : vector<8x128xf32>
    %56 = arith.negf %55 : vector<8x128xf32>
    %57 = math.exp %56 : vector<8x128xf32>
    %cst_25 = arith.constant 1.000000e+00 : f32
    %58 = vector.broadcast %cst_25 : f32 to vector<8x128xf32>
    %59 = arith.addf %58, %57 : vector<8x128xf32>
    %60 = arith.divf %58, %59 : vector<8x128xf32>
    %61 = vector.extract_strided_slice %60 {offsets = [0, 0], sizes = [8, 32], strides = [1, 1]} : vector<8x128xf32> to vector<8x32xf32>
    %62 = vector.extract_strided_slice %60 {offsets = [0, 32], sizes = [8, 32], strides = [1, 1]} : vector<8x128xf32> to vector<8x32xf32>
    %63 = vector.extract_strided_slice %60 {offsets = [0, 96], sizes = [8, 32], strides = [1, 1]} : vector<8x128xf32> to vector<8x32xf32>
    %64 = vector.extract_strided_slice %55 {offsets = [0, 64], sizes = [8, 32], strides = [1, 1]} : vector<8x128xf32> to vector<8x32xf32>
    %65 = math.tanh %64 : vector<8x32xf32>
    %66 = arith.mulf %62, %48 : vector<8x32xf32>
    %67 = arith.mulf %61, %65 : vector<8x32xf32>
    %68 = arith.addf %66, %67 : vector<8x32xf32>
    %69 = math.tanh %68 : vector<8x32xf32>
    %70 = arith.mulf %63, %69 : vector<8x32xf32>
    %c16_26 = arith.constant 16 : index
    %c0_27 = arith.constant 0 : index
    %71 = vector.load %arg17[%c16_26, %c0_27] : memref<64x32xf32, #tpu.memory_space<vmem>>, vector<8x32xf32>
    tpu.vector_store %arg17[%c16_26, %c0_27], %70 {strides = array<i32>} : memref<64x32xf32, #tpu.memory_space<vmem>>, vector<8x32xf32>,
    %c24 = arith.constant 24 : index
    %c0_28 = arith.constant 0 : index
    %72 = vector.load %arg19[%c24, %c0_28] : memref<64x128xf32, #tpu.memory_space<vmem>>, vector<8x128xf32>
    %73 = arith.truncf %70 : vector<8x32xf32> to vector<8x32xbf16>
    %cst_29 = arith.constant dense<0.000000e+00> : vector<8x128xf32>
    %74 = tpu.matmul %73, %2, %cst_29 {dimension_numbers = #tpu.dot_dimension_numbers<[1], [0], [0], [1], [0, 0, 1, 1], [], []>} : vector<8x32xbf16>, vector<32x128xbf16>, vector<8x128xf32> -> vector<8x128xf32>
    %75 = arith.addf %72, %74 : vector<8x128xf32>
    %76 = arith.negf %75 : vector<8x128xf32>
    %77 = math.exp %76 : vector<8x128xf32>
    %cst_30 = arith.constant 1.000000e+00 : f32
    %78 = vector.broadcast %cst_30 : f32 to vector<8x128xf32>
    %79 = arith.addf %78, %77 : vector<8x128xf32>
    %80 = arith.divf %78, %79 : vector<8x128xf32>
    %81 = vector.extract_strided_slice %80 {offsets = [0, 0], sizes = [8, 32], strides = [1, 1]} : vector<8x128xf32> to vector<8x32xf32>
    %82 = vector.extract_strided_slice %80 {offsets = [0, 32], sizes = [8, 32], strides = [1, 1]} : vector<8x128xf32> to vector<8x32xf32>
    %83 = vector.extract_strided_slice %80 {offsets = [0, 96], sizes = [8, 32], strides = [1, 1]} : vector<8x128xf32> to vector<8x32xf32>
    %84 = vector.extract_strided_slice %75 {offsets = [0, 64], sizes = [8, 32], strides = [1, 1]} : vector<8x128xf32> to vector<8x32xf32>
    %85 = math.tanh %84 : vector<8x32xf32>
    %86 = arith.mulf %82, %68 : vector<8x32xf32>
    %87 = arith.mulf %81, %85 : vector<8x32xf32>
    %88 = arith.addf %86, %87 : vector<8x32xf32>
    %89 = math.tanh %88 : vector<8x32xf32>
    %90 = arith.mulf %83, %89 : vector<8x32xf32>
    %c24_31 = arith.constant 24 : index
    %c0_32 = arith.constant 0 : index
    %91 = vector.load %arg17[%c24_31, %c0_32] : memref<64x32xf32, #tpu.memory_space<vmem>>, vector<8x32xf32>
    tpu.vector_store %arg17[%c24_31, %c0_32], %90 {strides = array<i32>} : memref<64x32xf32, #tpu.memory_space<vmem>>, vector<8x32xf32>,
    %c32 = arith.constant 32 : index
    %c0_33 = arith.constant 0 : index
    %92 = vector.load %arg19[%c32, %c0_33] : memref<64x128xf32, #tpu.memory_space<vmem>>, vector<8x128xf32>
    %93 = arith.truncf %90 : vector<8x32xf32> to vector<8x32xbf16>
    %cst_34 = arith.constant dense<0.000000e+00> : vector<8x128xf32>
    %94 = tpu.matmul %93, %2, %cst_34 {dimension_numbers = #tpu.dot_dimension_numbers<[1], [0], [0], [1], [0, 0, 1, 1], [], []>} : vector<8x32xbf16>, vector<32x128xbf16>, vector<8x128xf32> -> vector<8x128xf32>
    %95 = arith.addf %92, %94 : vector<8x128xf32>
    %96 = arith.negf %95 : vector<8x128xf32>
    %97 = math.exp %96 : vector<8x128xf32>
    %cst_35 = arith.constant 1.000000e+00 : f32
    %98 = vector.broadcast %cst_35 : f32 to vector<8x128xf32>
    %99 = arith.addf %98, %97 : vector<8x128xf32>
    %100 = arith.divf %98, %99 : vector<8x128xf32>
    %101 = vector.extract_strided_slice %100 {offsets = [0, 0], sizes = [8, 32], strides = [1, 1]} : vector<8x128xf32> to vector<8x32xf32>
    %102 = vector.extract_strided_slice %100 {offsets = [0, 32], sizes = [8, 32], strides = [1, 1]} : vector<8x128xf32> to vector<8x32xf32>
    %103 = vector.extract_strided_slice %100 {offsets = [0, 96], sizes = [8, 32], strides = [1, 1]} : vector<8x128xf32> to vector<8x32xf32>
    %104 = vector.extract_strided_slice %95 {offsets = [0, 64], sizes = [8, 32], strides = [1, 1]} : vector<8x128xf32> to vector<8x32xf32>
    %105 = math.tanh %104 : vector<8x32xf32>
    %106 = arith.mulf %102, %88 : vector<8x32xf32>
    %107 = arith.mulf %101, %105 : vector<8x32xf32>
    %108 = arith.addf %106, %107 : vector<8x32xf32>
    %109 = math.tanh %108 : vector<8x32xf32>
    %110 = arith.mulf %103, %109 : vector<8x32xf32>
    %c32_36 = arith.constant 32 : index
    %c0_37 = arith.constant 0 : index
    %111 = vector.load %arg17[%c32_36, %c0_37] : memref<64x32xf32, #tpu.memory_space<vmem>>, vector<8x32xf32>
    tpu.vector_store %arg17[%c32_36, %c0_37], %110 {strides = array<i32>} : memref<64x32xf32, #tpu.memory_space<vmem>>, vector<8x32xf32>,
    %c40 = arith.constant 40 : index
    %c0_38 = arith.constant 0 : index
    %112 = vector.load %arg19[%c40, %c0_38] : memref<64x128xf32, #tpu.memory_space<vmem>>, vector<8x128xf32>
    %113 = arith.truncf %110 : vector<8x32xf32> to vector<8x32xbf16>
    %cst_39 = arith.constant dense<0.000000e+00> : vector<8x128xf32>
    %114 = tpu.matmul %113, %2, %cst_39 {dimension_numbers = #tpu.dot_dimension_numbers<[1], [0], [0], [1], [0, 0, 1, 1], [], []>} : vector<8x32xbf16>, vector<32x128xbf16>, vector<8x128xf32> -> vector<8x128xf32>
    %115 = arith.addf %112, %114 : vector<8x128xf32>
    %116 = arith.negf %115 : vector<8x128xf32>
    %117 = math.exp %116 : vector<8x128xf32>
    %cst_40 = arith.constant 1.000000e+00 : f32
    %118 = vector.broadcast %cst_40 : f32 to vector<8x128xf32>
    %119 = arith.addf %118, %117 : vector<8x128xf32>
    %120 = arith.divf %118, %119 : vector<8x128xf32>
    %121 = vector.extract_strided_slice %120 {offsets = [0, 0], sizes = [8, 32], strides = [1, 1]} : vector<8x128xf32> to vector<8x32xf32>
    %122 = vector.extract_strided_slice %120 {offsets = [0, 32], sizes = [8, 32], strides = [1, 1]} : vector<8x128xf32> to vector<8x32xf32>
    %123 = vector.extract_strided_slice %120 {offsets = [0, 96], sizes = [8, 32], strides = [1, 1]} : vector<8x128xf32> to vector<8x32xf32>
    %124 = vector.extract_strided_slice %115 {offsets = [0, 64], sizes = [8, 32], strides = [1, 1]} : vector<8x128xf32> to vector<8x32xf32>
    %125 = math.tanh %124 : vector<8x32xf32>
    %126 = arith.mulf %122, %108 : vector<8x32xf32>
    %127 = arith.mulf %121, %125 : vector<8x32xf32>
    %128 = arith.addf %126, %127 : vector<8x32xf32>
    %129 = math.tanh %128 : vector<8x32xf32>
    %130 = arith.mulf %123, %129 : vector<8x32xf32>
    %c40_41 = arith.constant 40 : index
    %c0_42 = arith.constant 0 : index
    %131 = vector.load %arg17[%c40_41, %c0_42] : memref<64x32xf32, #tpu.memory_space<vmem>>, vector<8x32xf32>
    tpu.vector_store %arg17[%c40_41, %c0_42], %130 {strides = array<i32>} : memref<64x32xf32, #tpu.memory_space<vmem>>, vector<8x32xf32>,
    %c48 = arith.constant 48 : index
    %c0_43 = arith.constant 0 : index
    %132 = vector.load %arg19[%c48, %c0_43] : memref<64x128xf32, #tpu.memory_space<vmem>>, vector<8x128xf32>
    %133 = arith.truncf %130 : vector<8x32xf32> to vector<8x32xbf16>
    %cst_44 = arith.constant dense<0.000000e+00> : vector<8x128xf32>
    %134 = tpu.matmul %133, %2, %cst_44 {dimension_numbers = #tpu.dot_dimension_numbers<[1], [0], [0], [1], [0, 0, 1, 1], [], []>} : vector<8x32xbf16>, vector<32x128xbf16>, vector<8x128xf32> -> vector<8x128xf32>
    %135 = arith.addf %132, %134 : vector<8x128xf32>
    %136 = arith.negf %135 : vector<8x128xf32>
    %137 = math.exp %136 : vector<8x128xf32>
    %cst_45 = arith.constant 1.000000e+00 : f32
    %138 = vector.broadcast %cst_45 : f32 to vector<8x128xf32>
    %139 = arith.addf %138, %137 : vector<8x128xf32>
    %140 = arith.divf %138, %139 : vector<8x128xf32>
    %141 = vector.extract_strided_slice %140 {offsets = [0, 0], sizes = [8, 32], strides = [1, 1]} : vector<8x128xf32> to vector<8x32xf32>
    %142 = vector.extract_strided_slice %140 {offsets = [0, 32], sizes = [8, 32], strides = [1, 1]} : vector<8x128xf32> to vector<8x32xf32>
    %143 = vector.extract_strided_slice %140 {offsets = [0, 96], sizes = [8, 32], strides = [1, 1]} : vector<8x128xf32> to vector<8x32xf32>
    %144 = vector.extract_strided_slice %135 {offsets = [0, 64], sizes = [8, 32], strides = [1, 1]} : vector<8x128xf32> to vector<8x32xf32>
    %145 = math.tanh %144 : vector<8x32xf32>
    %146 = arith.mulf %142, %128 : vector<8x32xf32>
    %147 = arith.mulf %141, %145 : vector<8x32xf32>
    %148 = arith.addf %146, %147 : vector<8x32xf32>
    %149 = math.tanh %148 : vector<8x32xf32>
    %150 = arith.mulf %143, %149 : vector<8x32xf32>
    %c48_46 = arith.constant 48 : index
    %c0_47 = arith.constant 0 : index
    %151 = vector.load %arg17[%c48_46, %c0_47] : memref<64x32xf32, #tpu.memory_space<vmem>>, vector<8x32xf32>
    tpu.vector_store %arg17[%c48_46, %c0_47], %150 {strides = array<i32>} : memref<64x32xf32, #tpu.memory_space<vmem>>, vector<8x32xf32>,
    %c56 = arith.constant 56 : index
    %c0_48 = arith.constant 0 : index
    %152 = vector.load %arg19[%c56, %c0_48] : memref<64x128xf32, #tpu.memory_space<vmem>>, vector<8x128xf32>
    %153 = arith.truncf %150 : vector<8x32xf32> to vector<8x32xbf16>
    %cst_49 = arith.constant dense<0.000000e+00> : vector<8x128xf32>
    %154 = tpu.matmul %153, %2, %cst_49 {dimension_numbers = #tpu.dot_dimension_numbers<[1], [0], [0], [1], [0, 0, 1, 1], [], []>} : vector<8x32xbf16>, vector<32x128xbf16>, vector<8x128xf32> -> vector<8x128xf32>
    %155 = arith.addf %152, %154 : vector<8x128xf32>
    %156 = arith.negf %155 : vector<8x128xf32>
    %157 = math.exp %156 : vector<8x128xf32>
    %cst_50 = arith.constant 1.000000e+00 : f32
    %158 = vector.broadcast %cst_50 : f32 to vector<8x128xf32>
    %159 = arith.addf %158, %157 : vector<8x128xf32>
    %160 = arith.divf %158, %159 : vector<8x128xf32>
    %161 = vector.extract_strided_slice %160 {offsets = [0, 0], sizes = [8, 32], strides = [1, 1]} : vector<8x128xf32> to vector<8x32xf32>
    %162 = vector.extract_strided_slice %160 {offsets = [0, 32], sizes = [8, 32], strides = [1, 1]} : vector<8x128xf32> to vector<8x32xf32>
    %163 = vector.extract_strided_slice %160 {offsets = [0, 96], sizes = [8, 32], strides = [1, 1]} : vector<8x128xf32> to vector<8x32xf32>
    %164 = vector.extract_strided_slice %155 {offsets = [0, 64], sizes = [8, 32], strides = [1, 1]} : vector<8x128xf32> to vector<8x32xf32>
    %165 = math.tanh %164 : vector<8x32xf32>
    %166 = arith.mulf %162, %148 : vector<8x32xf32>
    %167 = arith.mulf %161, %165 : vector<8x32xf32>
    %168 = arith.addf %166, %167 : vector<8x32xf32>
    %169 = math.tanh %168 : vector<8x32xf32>
    %170 = arith.mulf %163, %169 : vector<8x32xf32>
    %c56_51 = arith.constant 56 : index
    %c0_52 = arith.constant 0 : index
    %171 = vector.load %arg17[%c56_51, %c0_52] : memref<64x32xf32, #tpu.memory_space<vmem>>, vector<8x32xf32>
    tpu.vector_store %arg17[%c56_51, %c0_52], %170 {strides = array<i32>} : memref<64x32xf32, #tpu.memory_space<vmem>>, vector<8x32xf32>,
    %c0_53 = arith.constant 0 : index
    %c0_54 = arith.constant 0 : index
    %172 = vector.load %arg5[%c0_53, %c0_54] : memref<32x128xbf16, #tpu.memory_space<vmem>>, vector<32x128xbf16>
    %c0_55 = arith.constant 0 : index
    %c0_56 = arith.constant 0 : index
    %173 = vector.load %arg7[%c0_55, %c0_56] : memref<1x128xf32, #tpu.memory_space<vmem>>, vector<1x128xf32>
    %c0_57 = arith.constant 0 : index
    %c0_58 = arith.constant 0 : index
    %174 = vector.load %arg6[%c0_57, %c0_58] : memref<32x128xbf16, #tpu.memory_space<vmem>>, vector<32x128xbf16>
    %cst_59 = arith.constant 0.000000e+00 : f32
    %175 = vector.broadcast %cst_59 : f32 to vector<8x32xf32>
    %cst_60 = arith.constant 0.000000e+00 : f32
    %176 = vector.broadcast %cst_60 : f32 to vector<8x32xf32>
    %c0_61 = arith.constant 0 : index
    %c0_62 = arith.constant 0 : index
    %177 = vector.load %arg17[%c0_61, %c0_62] : memref<64x32xf32, #tpu.memory_space<vmem>>, vector<64x32xf32>
    %178 = arith.truncf %177 : vector<64x32xf32> to vector<64x32xbf16>
    %cst_63 = arith.constant dense<0.000000e+00> : vector<64x128xf32>
    %179 = tpu.matmul %178, %172, %cst_63 {dimension_numbers = #tpu.dot_dimension_numbers<[1], [0], [0], [1], [0, 0, 1, 1], [], []>} : vector<64x32xbf16>, vector<32x128xbf16>, vector<64x128xf32> -> vector<64x128xf32>
    %180 = vector.broadcast %173 : vector<1x128xf32> to vector<64x128xf32>
    %181 = arith.addf %179, %180 : vector<64x128xf32>
    %c0_64 = arith.constant 0 : index
    %c0_65 = arith.constant 0 : index
    %182 = vector.load %arg19[%c0_64, %c0_65] : memref<64x128xf32, #tpu.memory_space<vmem>>, vector<64x128xf32>
    tpu.vector_store %arg19[%c0_64, %c0_65], %181 {strides = array<i32>} : memref<64x128xf32, #tpu.memory_space<vmem>>, vector<64x128xf32>,
    %c0_66 = arith.constant 0 : index
    %c0_67 = arith.constant 0 : index
    %183 = vector.load %arg19[%c0_66, %c0_67] : memref<64x128xf32, #tpu.memory_space<vmem>>, vector<8x128xf32>
    %184 = arith.truncf %175 : vector<8x32xf32> to vector<8x32xbf16>
    %cst_68 = arith.constant dense<0.000000e+00> : vector<8x128xf32>
    %185 = tpu.matmul %184, %174, %cst_68 {dimension_numbers = #tpu.dot_dimension_numbers<[1], [0], [0], [1], [0, 0, 1, 1], [], []>} : vector<8x32xbf16>, vector<32x128xbf16>, vector<8x128xf32> -> vector<8x128xf32>
    %186 = arith.addf %183, %185 : vector<8x128xf32>
    %187 = arith.negf %186 : vector<8x128xf32>
    %188 = math.exp %187 : vector<8x128xf32>
    %cst_69 = arith.constant 1.000000e+00 : f32
    %189 = vector.broadcast %cst_69 : f32 to vector<8x128xf32>
    %190 = arith.addf %189, %188 : vector<8x128xf32>
    %191 = arith.divf %189, %190 : vector<8x128xf32>
    %192 = vector.extract_strided_slice %191 {offsets = [0, 0], sizes = [8, 32], strides = [1, 1]} : vector<8x128xf32> to vector<8x32xf32>
    %193 = vector.extract_strided_slice %191 {offsets = [0, 32], sizes = [8, 32], strides = [1, 1]} : vector<8x128xf32> to vector<8x32xf32>
    %194 = vector.extract_strided_slice %191 {offsets = [0, 96], sizes = [8, 32], strides = [1, 1]} : vector<8x128xf32> to vector<8x32xf32>
    %195 = vector.extract_strided_slice %186 {offsets = [0, 64], sizes = [8, 32], strides = [1, 1]} : vector<8x128xf32> to vector<8x32xf32>
    %196 = math.tanh %195 : vector<8x32xf32>
    %197 = arith.mulf %193, %176 : vector<8x32xf32>
    %198 = arith.mulf %192, %196 : vector<8x32xf32>
    %199 = arith.addf %197, %198 : vector<8x32xf32>
    %200 = math.tanh %199 : vector<8x32xf32>
    %201 = arith.mulf %194, %200 : vector<8x32xf32>
    %c8_70 = arith.constant 8 : index
    %c0_71 = arith.constant 0 : index
    %202 = vector.load %arg19[%c8_70, %c0_71] : memref<64x128xf32, #tpu.memory_space<vmem>>, vector<8x128xf32>
    %203 = arith.truncf %201 : vector<8x32xf32> to vector<8x32xbf16>
    %cst_72 = arith.constant dense<0.000000e+00> : vector<8x128xf32>
    %204 = tpu.matmul %203, %174, %cst_72 {dimension_numbers = #tpu.dot_dimension_numbers<[1], [0], [0], [1], [0, 0, 1, 1], [], []>} : vector<8x32xbf16>, vector<32x128xbf16>, vector<8x128xf32> -> vector<8x128xf32>
    %205 = arith.addf %202, %204 : vector<8x128xf32>
    %206 = arith.negf %205 : vector<8x128xf32>
    %207 = math.exp %206 : vector<8x128xf32>
    %cst_73 = arith.constant 1.000000e+00 : f32
    %208 = vector.broadcast %cst_73 : f32 to vector<8x128xf32>
    %209 = arith.addf %208, %207 : vector<8x128xf32>
    %210 = arith.divf %208, %209 : vector<8x128xf32>
    %211 = vector.extract_strided_slice %210 {offsets = [0, 0], sizes = [8, 32], strides = [1, 1]} : vector<8x128xf32> to vector<8x32xf32>
    %212 = vector.extract_strided_slice %210 {offsets = [0, 32], sizes = [8, 32], strides = [1, 1]} : vector<8x128xf32> to vector<8x32xf32>
    %213 = vector.extract_strided_slice %210 {offsets = [0, 96], sizes = [8, 32], strides = [1, 1]} : vector<8x128xf32> to vector<8x32xf32>
    %214 = vector.extract_strided_slice %205 {offsets = [0, 64], sizes = [8, 32], strides = [1, 1]} : vector<8x128xf32> to vector<8x32xf32>
    %215 = math.tanh %214 : vector<8x32xf32>
    %216 = arith.mulf %212, %199 : vector<8x32xf32>
    %217 = arith.mulf %211, %215 : vector<8x32xf32>
    %218 = arith.addf %216, %217 : vector<8x32xf32>
    %219 = math.tanh %218 : vector<8x32xf32>
    %220 = arith.mulf %213, %219 : vector<8x32xf32>
    %c16_74 = arith.constant 16 : index
    %c0_75 = arith.constant 0 : index
    %221 = vector.load %arg19[%c16_74, %c0_75] : memref<64x128xf32, #tpu.memory_space<vmem>>, vector<8x128xf32>
    %222 = arith.truncf %220 : vector<8x32xf32> to vector<8x32xbf16>
    %cst_76 = arith.constant dense<0.000000e+00> : vector<8x128xf32>
    %223 = tpu.matmul %222, %174, %cst_76 {dimension_numbers = #tpu.dot_dimension_numbers<[1], [0], [0], [1], [0, 0, 1, 1], [], []>} : vector<8x32xbf16>, vector<32x128xbf16>, vector<8x128xf32> -> vector<8x128xf32>
    %224 = arith.addf %221, %223 : vector<8x128xf32>
    %225 = arith.negf %224 : vector<8x128xf32>
    %226 = math.exp %225 : vector<8x128xf32>
    %cst_77 = arith.constant 1.000000e+00 : f32
    %227 = vector.broadcast %cst_77 : f32 to vector<8x128xf32>
    %228 = arith.addf %227, %226 : vector<8x128xf32>
    %229 = arith.divf %227, %228 : vector<8x128xf32>
    %230 = vector.extract_strided_slice %229 {offsets = [0, 0], sizes = [8, 32], strides = [1, 1]} : vector<8x128xf32> to vector<8x32xf32>
    %231 = vector.extract_strided_slice %229 {offsets = [0, 32], sizes = [8, 32], strides = [1, 1]} : vector<8x128xf32> to vector<8x32xf32>
    %232 = vector.extract_strided_slice %229 {offsets = [0, 96], sizes = [8, 32], strides = [1, 1]} : vector<8x128xf32> to vector<8x32xf32>
    %233 = vector.extract_strided_slice %224 {offsets = [0, 64], sizes = [8, 32], strides = [1, 1]} : vector<8x128xf32> to vector<8x32xf32>
    %234 = math.tanh %233 : vector<8x32xf32>
    %235 = arith.mulf %231, %218 : vector<8x32xf32>
    %236 = arith.mulf %230, %234 : vector<8x32xf32>
    %237 = arith.addf %235, %236 : vector<8x32xf32>
    %238 = math.tanh %237 : vector<8x32xf32>
    %239 = arith.mulf %232, %238 : vector<8x32xf32>
    %c24_78 = arith.constant 24 : index
    %c0_79 = arith.constant 0 : index
    %240 = vector.load %arg19[%c24_78, %c0_79] : memref<64x128xf32, #tpu.memory_space<vmem>>, vector<8x128xf32>
    %241 = arith.truncf %239 : vector<8x32xf32> to vector<8x32xbf16>
    %cst_80 = arith.constant dense<0.000000e+00> : vector<8x128xf32>
    %242 = tpu.matmul %241, %174, %cst_80 {dimension_numbers = #tpu.dot_dimension_numbers<[1], [0], [0], [1], [0, 0, 1, 1], [], []>} : vector<8x32xbf16>, vector<32x128xbf16>, vector<8x128xf32> -> vector<8x128xf32>
    %243 = arith.addf %240, %242 : vector<8x128xf32>
    %244 = arith.negf %243 : vector<8x128xf32>
    %245 = math.exp %244 : vector<8x128xf32>
    %cst_81 = arith.constant 1.000000e+00 : f32
    %246 = vector.broadcast %cst_81 : f32 to vector<8x128xf32>
    %247 = arith.addf %246, %245 : vector<8x128xf32>
    %248 = arith.divf %246, %247 : vector<8x128xf32>
    %249 = vector.extract_strided_slice %248 {offsets = [0, 0], sizes = [8, 32], strides = [1, 1]} : vector<8x128xf32> to vector<8x32xf32>
    %250 = vector.extract_strided_slice %248 {offsets = [0, 32], sizes = [8, 32], strides = [1, 1]} : vector<8x128xf32> to vector<8x32xf32>
    %251 = vector.extract_strided_slice %248 {offsets = [0, 96], sizes = [8, 32], strides = [1, 1]} : vector<8x128xf32> to vector<8x32xf32>
    %252 = vector.extract_strided_slice %243 {offsets = [0, 64], sizes = [8, 32], strides = [1, 1]} : vector<8x128xf32> to vector<8x32xf32>
    %253 = math.tanh %252 : vector<8x32xf32>
    %254 = arith.mulf %250, %237 : vector<8x32xf32>
    %255 = arith.mulf %249, %253 : vector<8x32xf32>
    %256 = arith.addf %254, %255 : vector<8x32xf32>
    %257 = math.tanh %256 : vector<8x32xf32>
    %258 = arith.mulf %251, %257 : vector<8x32xf32>
    %c32_82 = arith.constant 32 : index
    %c0_83 = arith.constant 0 : index
    %259 = vector.load %arg19[%c32_82, %c0_83] : memref<64x128xf32, #tpu.memory_space<vmem>>, vector<8x128xf32>
    %260 = arith.truncf %258 : vector<8x32xf32> to vector<8x32xbf16>
    %cst_84 = arith.constant dense<0.000000e+00> : vector<8x128xf32>
    %261 = tpu.matmul %260, %174, %cst_84 {dimension_numbers = #tpu.dot_dimension_numbers<[1], [0], [0], [1], [0, 0, 1, 1], [], []>} : vector<8x32xbf16>, vector<32x128xbf16>, vector<8x128xf32> -> vector<8x128xf32>
    %262 = arith.addf %259, %261 : vector<8x128xf32>
    %263 = arith.negf %262 : vector<8x128xf32>
    %264 = math.exp %263 : vector<8x128xf32>
    %cst_85 = arith.constant 1.000000e+00 : f32
    %265 = vector.broadcast %cst_85 : f32 to vector<8x128xf32>
    %266 = arith.addf %265, %264 : vector<8x128xf32>
    %267 = arith.divf %265, %266 : vector<8x128xf32>
    %268 = vector.extract_strided_slice %267 {offsets = [0, 0], sizes = [8, 32], strides = [1, 1]} : vector<8x128xf32> to vector<8x32xf32>
    %269 = vector.extract_strided_slice %267 {offsets = [0, 32], sizes = [8, 32], strides = [1, 1]} : vector<8x128xf32> to vector<8x32xf32>
    %270 = vector.extract_strided_slice %267 {offsets = [0, 96], sizes = [8, 32], strides = [1, 1]} : vector<8x128xf32> to vector<8x32xf32>
    %271 = vector.extract_strided_slice %262 {offsets = [0, 64], sizes = [8, 32], strides = [1, 1]} : vector<8x128xf32> to vector<8x32xf32>
    %272 = math.tanh %271 : vector<8x32xf32>
    %273 = arith.mulf %269, %256 : vector<8x32xf32>
    %274 = arith.mulf %268, %272 : vector<8x32xf32>
    %275 = arith.addf %273, %274 : vector<8x32xf32>
    %276 = math.tanh %275 : vector<8x32xf32>
    %277 = arith.mulf %270, %276 : vector<8x32xf32>
    %c40_86 = arith.constant 40 : index
    %c0_87 = arith.constant 0 : index
    %278 = vector.load %arg19[%c40_86, %c0_87] : memref<64x128xf32, #tpu.memory_space<vmem>>, vector<8x128xf32>
    %279 = arith.truncf %277 : vector<8x32xf32> to vector<8x32xbf16>
    %cst_88 = arith.constant dense<0.000000e+00> : vector<8x128xf32>
    %280 = tpu.matmul %279, %174, %cst_88 {dimension_numbers = #tpu.dot_dimension_numbers<[1], [0], [0], [1], [0, 0, 1, 1], [], []>} : vector<8x32xbf16>, vector<32x128xbf16>, vector<8x128xf32> -> vector<8x128xf32>
    %281 = arith.addf %278, %280 : vector<8x128xf32>
    %282 = arith.negf %281 : vector<8x128xf32>
    %283 = math.exp %282 : vector<8x128xf32>
    %cst_89 = arith.constant 1.000000e+00 : f32
    %284 = vector.broadcast %cst_89 : f32 to vector<8x128xf32>
    %285 = arith.addf %284, %283 : vector<8x128xf32>
    %286 = arith.divf %284, %285 : vector<8x128xf32>
    %287 = vector.extract_strided_slice %286 {offsets = [0, 0], sizes = [8, 32], strides = [1, 1]} : vector<8x128xf32> to vector<8x32xf32>
    %288 = vector.extract_strided_slice %286 {offsets = [0, 32], sizes = [8, 32], strides = [1, 1]} : vector<8x128xf32> to vector<8x32xf32>
    %289 = vector.extract_strided_slice %286 {offsets = [0, 96], sizes = [8, 32], strides = [1, 1]} : vector<8x128xf32> to vector<8x32xf32>
    %290 = vector.extract_strided_slice %281 {offsets = [0, 64], sizes = [8, 32], strides = [1, 1]} : vector<8x128xf32> to vector<8x32xf32>
    %291 = math.tanh %290 : vector<8x32xf32>
    %292 = arith.mulf %288, %275 : vector<8x32xf32>
    %293 = arith.mulf %287, %291 : vector<8x32xf32>
    %294 = arith.addf %292, %293 : vector<8x32xf32>
    %295 = math.tanh %294 : vector<8x32xf32>
    %296 = arith.mulf %289, %295 : vector<8x32xf32>
    %c48_90 = arith.constant 48 : index
    %c0_91 = arith.constant 0 : index
    %297 = vector.load %arg19[%c48_90, %c0_91] : memref<64x128xf32, #tpu.memory_space<vmem>>, vector<8x128xf32>
    %298 = arith.truncf %296 : vector<8x32xf32> to vector<8x32xbf16>
    %cst_92 = arith.constant dense<0.000000e+00> : vector<8x128xf32>
    %299 = tpu.matmul %298, %174, %cst_92 {dimension_numbers = #tpu.dot_dimension_numbers<[1], [0], [0], [1], [0, 0, 1, 1], [], []>} : vector<8x32xbf16>, vector<32x128xbf16>, vector<8x128xf32> -> vector<8x128xf32>
    %300 = arith.addf %297, %299 : vector<8x128xf32>
    %301 = arith.negf %300 : vector<8x128xf32>
    %302 = math.exp %301 : vector<8x128xf32>
    %cst_93 = arith.constant 1.000000e+00 : f32
    %303 = vector.broadcast %cst_93 : f32 to vector<8x128xf32>
    %304 = arith.addf %303, %302 : vector<8x128xf32>
    %305 = arith.divf %303, %304 : vector<8x128xf32>
    %306 = vector.extract_strided_slice %305 {offsets = [0, 0], sizes = [8, 32], strides = [1, 1]} : vector<8x128xf32> to vector<8x32xf32>
    %307 = vector.extract_strided_slice %305 {offsets = [0, 32], sizes = [8, 32], strides = [1, 1]} : vector<8x128xf32> to vector<8x32xf32>
    %308 = vector.extract_strided_slice %305 {offsets = [0, 96], sizes = [8, 32], strides = [1, 1]} : vector<8x128xf32> to vector<8x32xf32>
    %309 = vector.extract_strided_slice %300 {offsets = [0, 64], sizes = [8, 32], strides = [1, 1]} : vector<8x128xf32> to vector<8x32xf32>
    %310 = math.tanh %309 : vector<8x32xf32>
    %311 = arith.mulf %307, %294 : vector<8x32xf32>
    %312 = arith.mulf %306, %310 : vector<8x32xf32>
    %313 = arith.addf %311, %312 : vector<8x32xf32>
    %314 = math.tanh %313 : vector<8x32xf32>
    %315 = arith.mulf %308, %314 : vector<8x32xf32>
    %c56_94 = arith.constant 56 : index
    %c0_95 = arith.constant 0 : index
    %316 = vector.load %arg19[%c56_94, %c0_95] : memref<64x128xf32, #tpu.memory_space<vmem>>, vector<8x128xf32>
    %317 = arith.truncf %315 : vector<8x32xf32> to vector<8x32xbf16>
    %cst_96 = arith.constant dense<0.000000e+00> : vector<8x128xf32>
    %318 = tpu.matmul %317, %174, %cst_96 {dimension_numbers = #tpu.dot_dimension_numbers<[1], [0], [0], [1], [0, 0, 1, 1], [], []>} : vector<8x32xbf16>, vector<32x128xbf16>, vector<8x128xf32> -> vector<8x128xf32>
    %319 = arith.addf %316, %318 : vector<8x128xf32>
    %320 = arith.negf %319 : vector<8x128xf32>
    %321 = math.exp %320 : vector<8x128xf32>
    %cst_97 = arith.constant 1.000000e+00 : f32
    %322 = vector.broadcast %cst_97 : f32 to vector<8x128xf32>
    %323 = arith.addf %322, %321 : vector<8x128xf32>
    %324 = arith.divf %322, %323 : vector<8x128xf32>
    %325 = vector.extract_strided_slice %324 {offsets = [0, 0], sizes = [8, 32], strides = [1, 1]} : vector<8x128xf32> to vector<8x32xf32>
    %326 = vector.extract_strided_slice %324 {offsets = [0, 32], sizes = [8, 32], strides = [1, 1]} : vector<8x128xf32> to vector<8x32xf32>
    %327 = vector.extract_strided_slice %324 {offsets = [0, 96], sizes = [8, 32], strides = [1, 1]} : vector<8x128xf32> to vector<8x32xf32>
    %328 = vector.extract_strided_slice %319 {offsets = [0, 64], sizes = [8, 32], strides = [1, 1]} : vector<8x128xf32> to vector<8x32xf32>
    %329 = math.tanh %328 : vector<8x32xf32>
    %330 = arith.mulf %326, %313 : vector<8x32xf32>
    %331 = arith.mulf %325, %329 : vector<8x32xf32>
    %332 = arith.addf %330, %331 : vector<8x32xf32>
    %333 = math.tanh %332 : vector<8x32xf32>
    %334 = arith.mulf %327, %333 : vector<8x32xf32>
    %335 = arith.truncf %334 : vector<8x32xf32> to vector<8x32xbf16>
    %c0_98 = arith.constant 0 : index
    %c0_99 = arith.constant 0 : index
    %336 = vector.load %arg8[%c0_98, %c0_99] : memref<32x128xbf16, #tpu.memory_space<vmem>>, vector<32x128xbf16>
    %cst_100 = arith.constant dense<0.000000e+00> : vector<8x128xf32>
    %337 = tpu.matmul %335, %336, %cst_100 {dimension_numbers = #tpu.dot_dimension_numbers<[1], [0], [0], [1], [0, 0, 1, 1], [], []>} : vector<8x32xbf16>, vector<32x128xbf16>, vector<8x128xf32> -> vector<8x128xf32>
    %c0_101 = arith.constant 0 : index
    %c0_102 = arith.constant 0 : index
    %338 = vector.load %arg10[%c0_101, %c0_102] : memref<1x128xf32, #tpu.memory_space<vmem>>, vector<1x128xf32>
    %339 = vector.broadcast %338 : vector<1x128xf32> to vector<8x128xf32>
    %340 = arith.addf %337, %339 : vector<8x128xf32>
    %c0_103 = arith.constant 0 : index
    %c0_104 = arith.constant 0 : index
    %341 = vector.load %arg9[%c0_103, %c0_104] : memref<32x128xbf16, #tpu.memory_space<vmem>>, vector<32x128xbf16>
    %cst_105 = arith.constant 0.000000e+00 : f32
    %342 = vector.broadcast %cst_105 : f32 to vector<8x32xf32>
    %cst_106 = arith.constant 0.000000e+00 : f32
    %343 = vector.broadcast %cst_106 : f32 to vector<8x32xf32>
    %344 = arith.truncf %342 : vector<8x32xf32> to vector<8x32xbf16>
    %cst_107 = arith.constant dense<0.000000e+00> : vector<8x128xf32>
    %345 = tpu.matmul %344, %341, %cst_107 {dimension_numbers = #tpu.dot_dimension_numbers<[1], [0], [0], [1], [0, 0, 1, 1], [], []>} : vector<8x32xbf16>, vector<32x128xbf16>, vector<8x128xf32> -> vector<8x128xf32>
    %346 = arith.addf %340, %345 : vector<8x128xf32>
    %347 = arith.negf %346 : vector<8x128xf32>
    %348 = math.exp %347 : vector<8x128xf32>
    %cst_108 = arith.constant 1.000000e+00 : f32
    %349 = vector.broadcast %cst_108 : f32 to vector<8x128xf32>
    %350 = arith.addf %349, %348 : vector<8x128xf32>
    %351 = arith.divf %349, %350 : vector<8x128xf32>
    %352 = vector.extract_strided_slice %351 {offsets = [0, 0], sizes = [8, 32], strides = [1, 1]} : vector<8x128xf32> to vector<8x32xf32>
    %353 = vector.extract_strided_slice %351 {offsets = [0, 32], sizes = [8, 32], strides = [1, 1]} : vector<8x128xf32> to vector<8x32xf32>
    %354 = vector.extract_strided_slice %351 {offsets = [0, 96], sizes = [8, 32], strides = [1, 1]} : vector<8x128xf32> to vector<8x32xf32>
    %355 = vector.extract_strided_slice %346 {offsets = [0, 64], sizes = [8, 32], strides = [1, 1]} : vector<8x128xf32> to vector<8x32xf32>
    %356 = math.tanh %355 : vector<8x32xf32>
    %357 = arith.mulf %353, %343 : vector<8x32xf32>
    %358 = arith.mulf %352, %356 : vector<8x32xf32>
    %359 = arith.addf %357, %358 : vector<8x32xf32>
    %360 = math.tanh %359 : vector<8x32xf32>
    %361 = arith.mulf %354, %360 : vector<8x32xf32>
    %c0_109 = arith.constant 0 : index
    %c0_110 = arith.constant 0 : index
    %362 = vector.load %arg17[%c0_109, %c0_110] : memref<64x32xf32, #tpu.memory_space<vmem>>, vector<8x32xf32>
    tpu.vector_store %arg17[%c0_109, %c0_110], %361 {strides = array<i32>} : memref<64x32xf32, #tpu.memory_space<vmem>>, vector<8x32xf32>,
    %363 = arith.truncf %361 : vector<8x32xf32> to vector<8x32xbf16>
    %cst_111 = arith.constant dense<0.000000e+00> : vector<8x128xf32>
    %364 = tpu.matmul %363, %341, %cst_111 {dimension_numbers = #tpu.dot_dimension_numbers<[1], [0], [0], [1], [0, 0, 1, 1], [], []>} : vector<8x32xbf16>, vector<32x128xbf16>, vector<8x128xf32> -> vector<8x128xf32>
    %365 = arith.addf %340, %364 : vector<8x128xf32>
    %366 = arith.negf %365 : vector<8x128xf32>
    %367 = math.exp %366 : vector<8x128xf32>
    %cst_112 = arith.constant 1.000000e+00 : f32
    %368 = vector.broadcast %cst_112 : f32 to vector<8x128xf32>
    %369 = arith.addf %368, %367 : vector<8x128xf32>
    %370 = arith.divf %368, %369 : vector<8x128xf32>
    %371 = vector.extract_strided_slice %370 {offsets = [0, 0], sizes = [8, 32], strides = [1, 1]} : vector<8x128xf32> to vector<8x32xf32>
    %372 = vector.extract_strided_slice %370 {offsets = [0, 32], sizes = [8, 32], strides = [1, 1]} : vector<8x128xf32> to vector<8x32xf32>
    %373 = vector.extract_strided_slice %370 {offsets = [0, 96], sizes = [8, 32], strides = [1, 1]} : vector<8x128xf32> to vector<8x32xf32>
    %374 = vector.extract_strided_slice %365 {offsets = [0, 64], sizes = [8, 32], strides = [1, 1]} : vector<8x128xf32> to vector<8x32xf32>
    %375 = math.tanh %374 : vector<8x32xf32>
    %376 = arith.mulf %372, %359 : vector<8x32xf32>
    %377 = arith.mulf %371, %375 : vector<8x32xf32>
    %378 = arith.addf %376, %377 : vector<8x32xf32>
    %379 = math.tanh %378 : vector<8x32xf32>
    %380 = arith.mulf %373, %379 : vector<8x32xf32>
    %c8_113 = arith.constant 8 : index
    %c0_114 = arith.constant 0 : index
    %381 = vector.load %arg17[%c8_113, %c0_114] : memref<64x32xf32, #tpu.memory_space<vmem>>, vector<8x32xf32>
    tpu.vector_store %arg17[%c8_113, %c0_114], %380 {strides = array<i32>} : memref<64x32xf32, #tpu.memory_space<vmem>>, vector<8x32xf32>,
    %382 = arith.truncf %380 : vector<8x32xf32> to vector<8x32xbf16>
    %cst_115 = arith.constant dense<0.000000e+00> : vector<8x128xf32>
    %383 = tpu.matmul %382, %341, %cst_115 {dimension_numbers = #tpu.dot_dimension_numbers<[1], [0], [0], [1], [0, 0, 1, 1], [], []>} : vector<8x32xbf16>, vector<32x128xbf16>, vector<8x128xf32> -> vector<8x128xf32>
    %384 = arith.addf %340, %383 : vector<8x128xf32>
    %385 = arith.negf %384 : vector<8x128xf32>
    %386 = math.exp %385 : vector<8x128xf32>
    %cst_116 = arith.constant 1.000000e+00 : f32
    %387 = vector.broadcast %cst_116 : f32 to vector<8x128xf32>
    %388 = arith.addf %387, %386 : vector<8x128xf32>
    %389 = arith.divf %387, %388 : vector<8x128xf32>
    %390 = vector.extract_strided_slice %389 {offsets = [0, 0], sizes = [8, 32], strides = [1, 1]} : vector<8x128xf32> to vector<8x32xf32>
    %391 = vector.extract_strided_slice %389 {offsets = [0, 32], sizes = [8, 32], strides = [1, 1]} : vector<8x128xf32> to vector<8x32xf32>
    %392 = vector.extract_strided_slice %389 {offsets = [0, 96], sizes = [8, 32], strides = [1, 1]} : vector<8x128xf32> to vector<8x32xf32>
    %393 = vector.extract_strided_slice %384 {offsets = [0, 64], sizes = [8, 32], strides = [1, 1]} : vector<8x128xf32> to vector<8x32xf32>
    %394 = math.tanh %393 : vector<8x32xf32>
    %395 = arith.mulf %391, %378 : vector<8x32xf32>
    %396 = arith.mulf %390, %394 : vector<8x32xf32>
    %397 = arith.addf %395, %396 : vector<8x32xf32>
    %398 = math.tanh %397 : vector<8x32xf32>
    %399 = arith.mulf %392, %398 : vector<8x32xf32>
    %c16_117 = arith.constant 16 : index
    %c0_118 = arith.constant 0 : index
    %400 = vector.load %arg17[%c16_117, %c0_118] : memref<64x32xf32, #tpu.memory_space<vmem>>, vector<8x32xf32>
    tpu.vector_store %arg17[%c16_117, %c0_118], %399 {strides = array<i32>} : memref<64x32xf32, #tpu.memory_space<vmem>>, vector<8x32xf32>,
    %401 = arith.truncf %399 : vector<8x32xf32> to vector<8x32xbf16>
    %cst_119 = arith.constant dense<0.000000e+00> : vector<8x128xf32>
    %402 = tpu.matmul %401, %341, %cst_119 {dimension_numbers = #tpu.dot_dimension_numbers<[1], [0], [0], [1], [0, 0, 1, 1], [], []>} : vector<8x32xbf16>, vector<32x128xbf16>, vector<8x128xf32> -> vector<8x128xf32>
    %403 = arith.addf %340, %402 : vector<8x128xf32>
    %404 = arith.negf %403 : vector<8x128xf32>
    %405 = math.exp %404 : vector<8x128xf32>
    %cst_120 = arith.constant 1.000000e+00 : f32
    %406 = vector.broadcast %cst_120 : f32 to vector<8x128xf32>
    %407 = arith.addf %406, %405 : vector<8x128xf32>
    %408 = arith.divf %406, %407 : vector<8x128xf32>
    %409 = vector.extract_strided_slice %408 {offsets = [0, 0], sizes = [8, 32], strides = [1, 1]} : vector<8x128xf32> to vector<8x32xf32>
    %410 = vector.extract_strided_slice %408 {offsets = [0, 32], sizes = [8, 32], strides = [1, 1]} : vector<8x128xf32> to vector<8x32xf32>
    %411 = vector.extract_strided_slice %408 {offsets = [0, 96], sizes = [8, 32], strides = [1, 1]} : vector<8x128xf32> to vector<8x32xf32>
    %412 = vector.extract_strided_slice %403 {offsets = [0, 64], sizes = [8, 32], strides = [1, 1]} : vector<8x128xf32> to vector<8x32xf32>
    %413 = math.tanh %412 : vector<8x32xf32>
    %414 = arith.mulf %410, %397 : vector<8x32xf32>
    %415 = arith.mulf %409, %413 : vector<8x32xf32>
    %416 = arith.addf %414, %415 : vector<8x32xf32>
    %417 = math.tanh %416 : vector<8x32xf32>
    %418 = arith.mulf %411, %417 : vector<8x32xf32>
    %c24_121 = arith.constant 24 : index
    %c0_122 = arith.constant 0 : index
    %419 = vector.load %arg17[%c24_121, %c0_122] : memref<64x32xf32, #tpu.memory_space<vmem>>, vector<8x32xf32>
    tpu.vector_store %arg17[%c24_121, %c0_122], %418 {strides = array<i32>} : memref<64x32xf32, #tpu.memory_space<vmem>>, vector<8x32xf32>,
    %420 = arith.truncf %418 : vector<8x32xf32> to vector<8x32xbf16>
    %cst_123 = arith.constant dense<0.000000e+00> : vector<8x128xf32>
    %421 = tpu.matmul %420, %341, %cst_123 {dimension_numbers = #tpu.dot_dimension_numbers<[1], [0], [0], [1], [0, 0, 1, 1], [], []>} : vector<8x32xbf16>, vector<32x128xbf16>, vector<8x128xf32> -> vector<8x128xf32>
    %422 = arith.addf %340, %421 : vector<8x128xf32>
    %423 = arith.negf %422 : vector<8x128xf32>
    %424 = math.exp %423 : vector<8x128xf32>
    %cst_124 = arith.constant 1.000000e+00 : f32
    %425 = vector.broadcast %cst_124 : f32 to vector<8x128xf32>
    %426 = arith.addf %425, %424 : vector<8x128xf32>
    %427 = arith.divf %425, %426 : vector<8x128xf32>
    %428 = vector.extract_strided_slice %427 {offsets = [0, 0], sizes = [8, 32], strides = [1, 1]} : vector<8x128xf32> to vector<8x32xf32>
    %429 = vector.extract_strided_slice %427 {offsets = [0, 32], sizes = [8, 32], strides = [1, 1]} : vector<8x128xf32> to vector<8x32xf32>
    %430 = vector.extract_strided_slice %427 {offsets = [0, 96], sizes = [8, 32], strides = [1, 1]} : vector<8x128xf32> to vector<8x32xf32>
    %431 = vector.extract_strided_slice %422 {offsets = [0, 64], sizes = [8, 32], strides = [1, 1]} : vector<8x128xf32> to vector<8x32xf32>
    %432 = math.tanh %431 : vector<8x32xf32>
    %433 = arith.mulf %429, %416 : vector<8x32xf32>
    %434 = arith.mulf %428, %432 : vector<8x32xf32>
    %435 = arith.addf %433, %434 : vector<8x32xf32>
    %436 = math.tanh %435 : vector<8x32xf32>
    %437 = arith.mulf %430, %436 : vector<8x32xf32>
    %c32_125 = arith.constant 32 : index
    %c0_126 = arith.constant 0 : index
    %438 = vector.load %arg17[%c32_125, %c0_126] : memref<64x32xf32, #tpu.memory_space<vmem>>, vector<8x32xf32>
    tpu.vector_store %arg17[%c32_125, %c0_126], %437 {strides = array<i32>} : memref<64x32xf32, #tpu.memory_space<vmem>>, vector<8x32xf32>,
    %439 = arith.truncf %437 : vector<8x32xf32> to vector<8x32xbf16>
    %cst_127 = arith.constant dense<0.000000e+00> : vector<8x128xf32>
    %440 = tpu.matmul %439, %341, %cst_127 {dimension_numbers = #tpu.dot_dimension_numbers<[1], [0], [0], [1], [0, 0, 1, 1], [], []>} : vector<8x32xbf16>, vector<32x128xbf16>, vector<8x128xf32> -> vector<8x128xf32>
    %441 = arith.addf %340, %440 : vector<8x128xf32>
    %442 = arith.negf %441 : vector<8x128xf32>
    %443 = math.exp %442 : vector<8x128xf32>
    %cst_128 = arith.constant 1.000000e+00 : f32
    %444 = vector.broadcast %cst_128 : f32 to vector<8x128xf32>
    %445 = arith.addf %444, %443 : vector<8x128xf32>
    %446 = arith.divf %444, %445 : vector<8x128xf32>
    %447 = vector.extract_strided_slice %446 {offsets = [0, 0], sizes = [8, 32], strides = [1, 1]} : vector<8x128xf32> to vector<8x32xf32>
    %448 = vector.extract_strided_slice %446 {offsets = [0, 32], sizes = [8, 32], strides = [1, 1]} : vector<8x128xf32> to vector<8x32xf32>
    %449 = vector.extract_strided_slice %446 {offsets = [0, 96], sizes = [8, 32], strides = [1, 1]} : vector<8x128xf32> to vector<8x32xf32>
    %450 = vector.extract_strided_slice %441 {offsets = [0, 64], sizes = [8, 32], strides = [1, 1]} : vector<8x128xf32> to vector<8x32xf32>
    %451 = math.tanh %450 : vector<8x32xf32>
    %452 = arith.mulf %448, %435 : vector<8x32xf32>
    %453 = arith.mulf %447, %451 : vector<8x32xf32>
    %454 = arith.addf %452, %453 : vector<8x32xf32>
    %455 = math.tanh %454 : vector<8x32xf32>
    %456 = arith.mulf %449, %455 : vector<8x32xf32>
    %c40_129 = arith.constant 40 : index
    %c0_130 = arith.constant 0 : index
    %457 = vector.load %arg17[%c40_129, %c0_130] : memref<64x32xf32, #tpu.memory_space<vmem>>, vector<8x32xf32>
    tpu.vector_store %arg17[%c40_129, %c0_130], %456 {strides = array<i32>} : memref<64x32xf32, #tpu.memory_space<vmem>>, vector<8x32xf32>,
    %458 = arith.truncf %456 : vector<8x32xf32> to vector<8x32xbf16>
    %cst_131 = arith.constant dense<0.000000e+00> : vector<8x128xf32>
    %459 = tpu.matmul %458, %341, %cst_131 {dimension_numbers = #tpu.dot_dimension_numbers<[1], [0], [0], [1], [0, 0, 1, 1], [], []>} : vector<8x32xbf16>, vector<32x128xbf16>, vector<8x128xf32> -> vector<8x128xf32>
    %460 = arith.addf %340, %459 : vector<8x128xf32>
    %461 = arith.negf %460 : vector<8x128xf32>
    %462 = math.exp %461 : vector<8x128xf32>
    %cst_132 = arith.constant 1.000000e+00 : f32
    %463 = vector.broadcast %cst_132 : f32 to vector<8x128xf32>
    %464 = arith.addf %463, %462 : vector<8x128xf32>
    %465 = arith.divf %463, %464 : vector<8x128xf32>
    %466 = vector.extract_strided_slice %465 {offsets = [0, 0], sizes = [8, 32], strides = [1, 1]} : vector<8x128xf32> to vector<8x32xf32>
    %467 = vector.extract_strided_slice %465 {offsets = [0, 32], sizes = [8, 32], strides = [1, 1]} : vector<8x128xf32> to vector<8x32xf32>
    %468 = vector.extract_strided_slice %465 {offsets = [0, 96], sizes = [8, 32], strides = [1, 1]} : vector<8x128xf32> to vector<8x32xf32>
    %469 = vector.extract_strided_slice %460 {offsets = [0, 64], sizes = [8, 32], strides = [1, 1]} : vector<8x128xf32> to vector<8x32xf32>
    %470 = math.tanh %469 : vector<8x32xf32>
    %471 = arith.mulf %467, %454 : vector<8x32xf32>
    %472 = arith.mulf %466, %470 : vector<8x32xf32>
    %473 = arith.addf %471, %472 : vector<8x32xf32>
    %474 = math.tanh %473 : vector<8x32xf32>
    %475 = arith.mulf %468, %474 : vector<8x32xf32>
    %c48_133 = arith.constant 48 : index
    %c0_134 = arith.constant 0 : index
    %476 = vector.load %arg17[%c48_133, %c0_134] : memref<64x32xf32, #tpu.memory_space<vmem>>, vector<8x32xf32>
    tpu.vector_store %arg17[%c48_133, %c0_134], %475 {strides = array<i32>} : memref<64x32xf32, #tpu.memory_space<vmem>>, vector<8x32xf32>,
    %477 = arith.truncf %475 : vector<8x32xf32> to vector<8x32xbf16>
    %cst_135 = arith.constant dense<0.000000e+00> : vector<8x128xf32>
    %478 = tpu.matmul %477, %341, %cst_135 {dimension_numbers = #tpu.dot_dimension_numbers<[1], [0], [0], [1], [0, 0, 1, 1], [], []>} : vector<8x32xbf16>, vector<32x128xbf16>, vector<8x128xf32> -> vector<8x128xf32>
    %479 = arith.addf %340, %478 : vector<8x128xf32>
    %480 = arith.negf %479 : vector<8x128xf32>
    %481 = math.exp %480 : vector<8x128xf32>
    %cst_136 = arith.constant 1.000000e+00 : f32
    %482 = vector.broadcast %cst_136 : f32 to vector<8x128xf32>
    %483 = arith.addf %482, %481 : vector<8x128xf32>
    %484 = arith.divf %482, %483 : vector<8x128xf32>
    %485 = vector.extract_strided_slice %484 {offsets = [0, 0], sizes = [8, 32], strides = [1, 1]} : vector<8x128xf32> to vector<8x32xf32>
    %486 = vector.extract_strided_slice %484 {offsets = [0, 32], sizes = [8, 32], strides = [1, 1]} : vector<8x128xf32> to vector<8x32xf32>
    %487 = vector.extract_strided_slice %484 {offsets = [0, 96], sizes = [8, 32], strides = [1, 1]} : vector<8x128xf32> to vector<8x32xf32>
    %488 = vector.extract_strided_slice %479 {offsets = [0, 64], sizes = [8, 32], strides = [1, 1]} : vector<8x128xf32> to vector<8x32xf32>
    %489 = math.tanh %488 : vector<8x32xf32>
    %490 = arith.mulf %486, %473 : vector<8x32xf32>
    %491 = arith.mulf %485, %489 : vector<8x32xf32>
    %492 = arith.addf %490, %491 : vector<8x32xf32>
    %493 = math.tanh %492 : vector<8x32xf32>
    %494 = arith.mulf %487, %493 : vector<8x32xf32>
    %c56_137 = arith.constant 56 : index
    %c0_138 = arith.constant 0 : index
    %495 = vector.load %arg17[%c56_137, %c0_138] : memref<64x32xf32, #tpu.memory_space<vmem>>, vector<8x32xf32>
    tpu.vector_store %arg17[%c56_137, %c0_138], %494 {strides = array<i32>} : memref<64x32xf32, #tpu.memory_space<vmem>>, vector<8x32xf32>,
    %c0_139 = arith.constant 0 : index
    %c0_140 = arith.constant 0 : index
    %496 = vector.load %arg11[%c0_139, %c0_140] : memref<32x128xbf16, #tpu.memory_space<vmem>>, vector<32x128xbf16>
    %c0_141 = arith.constant 0 : index
    %c0_142 = arith.constant 0 : index
    %497 = vector.load %arg13[%c0_141, %c0_142] : memref<1x128xf32, #tpu.memory_space<vmem>>, vector<1x128xf32>
    %c0_143 = arith.constant 0 : index
    %c0_144 = arith.constant 0 : index
    %498 = vector.load %arg12[%c0_143, %c0_144] : memref<32x128xbf16, #tpu.memory_space<vmem>>, vector<32x128xbf16>
    %cst_145 = arith.constant 0.000000e+00 : f32
    %499 = vector.broadcast %cst_145 : f32 to vector<8x32xf32>
    %cst_146 = arith.constant 0.000000e+00 : f32
    %500 = vector.broadcast %cst_146 : f32 to vector<8x32xf32>
    %c0_147 = arith.constant 0 : index
    %c0_148 = arith.constant 0 : index
    %501 = vector.load %arg17[%c0_147, %c0_148] : memref<64x32xf32, #tpu.memory_space<vmem>>, vector<64x32xf32>
    %502 = arith.truncf %501 : vector<64x32xf32> to vector<64x32xbf16>
    %cst_149 = arith.constant dense<0.000000e+00> : vector<64x128xf32>
    %503 = tpu.matmul %502, %496, %cst_149 {dimension_numbers = #tpu.dot_dimension_numbers<[1], [0], [0], [1], [0, 0, 1, 1], [], []>} : vector<64x32xbf16>, vector<32x128xbf16>, vector<64x128xf32> -> vector<64x128xf32>
    %504 = vector.broadcast %497 : vector<1x128xf32> to vector<64x128xf32>
    %505 = arith.addf %503, %504 : vector<64x128xf32>
    %c0_150 = arith.constant 0 : index
    %c0_151 = arith.constant 0 : index
    %506 = vector.load %arg19[%c0_150, %c0_151] : memref<64x128xf32, #tpu.memory_space<vmem>>, vector<64x128xf32>
    tpu.vector_store %arg19[%c0_150, %c0_151], %505 {strides = array<i32>} : memref<64x128xf32, #tpu.memory_space<vmem>>, vector<64x128xf32>,
    %c0_152 = arith.constant 0 : index
    %c0_153 = arith.constant 0 : index
    %507 = vector.load %arg19[%c0_152, %c0_153] : memref<64x128xf32, #tpu.memory_space<vmem>>, vector<8x128xf32>
    %508 = arith.truncf %499 : vector<8x32xf32> to vector<8x32xbf16>
    %cst_154 = arith.constant dense<0.000000e+00> : vector<8x128xf32>
    %509 = tpu.matmul %508, %498, %cst_154 {dimension_numbers = #tpu.dot_dimension_numbers<[1], [0], [0], [1], [0, 0, 1, 1], [], []>} : vector<8x32xbf16>, vector<32x128xbf16>, vector<8x128xf32> -> vector<8x128xf32>
    %510 = arith.addf %507, %509 : vector<8x128xf32>
    %511 = arith.negf %510 : vector<8x128xf32>
    %512 = math.exp %511 : vector<8x128xf32>
    %cst_155 = arith.constant 1.000000e+00 : f32
    %513 = vector.broadcast %cst_155 : f32 to vector<8x128xf32>
    %514 = arith.addf %513, %512 : vector<8x128xf32>
    %515 = arith.divf %513, %514 : vector<8x128xf32>
    %516 = vector.extract_strided_slice %515 {offsets = [0, 0], sizes = [8, 32], strides = [1, 1]} : vector<8x128xf32> to vector<8x32xf32>
    %517 = vector.extract_strided_slice %515 {offsets = [0, 32], sizes = [8, 32], strides = [1, 1]} : vector<8x128xf32> to vector<8x32xf32>
    %518 = vector.extract_strided_slice %515 {offsets = [0, 96], sizes = [8, 32], strides = [1, 1]} : vector<8x128xf32> to vector<8x32xf32>
    %519 = vector.extract_strided_slice %510 {offsets = [0, 64], sizes = [8, 32], strides = [1, 1]} : vector<8x128xf32> to vector<8x32xf32>
    %520 = math.tanh %519 : vector<8x32xf32>
    %521 = arith.mulf %517, %500 : vector<8x32xf32>
    %522 = arith.mulf %516, %520 : vector<8x32xf32>
    %523 = arith.addf %521, %522 : vector<8x32xf32>
    %524 = math.tanh %523 : vector<8x32xf32>
    %525 = arith.mulf %518, %524 : vector<8x32xf32>
    %c0_156 = arith.constant 0 : index
    %c0_157 = arith.constant 0 : index
    %526 = vector.load %arg18[%c0_156, %c0_157] : memref<64x32xf32, #tpu.memory_space<vmem>>, vector<8x32xf32>
    tpu.vector_store %arg18[%c0_156, %c0_157], %525 {strides = array<i32>} : memref<64x32xf32, #tpu.memory_space<vmem>>, vector<8x32xf32>,
    %c8_158 = arith.constant 8 : index
    %c0_159 = arith.constant 0 : index
    %527 = vector.load %arg19[%c8_158, %c0_159] : memref<64x128xf32, #tpu.memory_space<vmem>>, vector<8x128xf32>
    %528 = arith.truncf %525 : vector<8x32xf32> to vector<8x32xbf16>
    %cst_160 = arith.constant dense<0.000000e+00> : vector<8x128xf32>
    %529 = tpu.matmul %528, %498, %cst_160 {dimension_numbers = #tpu.dot_dimension_numbers<[1], [0], [0], [1], [0, 0, 1, 1], [], []>} : vector<8x32xbf16>, vector<32x128xbf16>, vector<8x128xf32> -> vector<8x128xf32>
    %530 = arith.addf %527, %529 : vector<8x128xf32>
    %531 = arith.negf %530 : vector<8x128xf32>
    %532 = math.exp %531 : vector<8x128xf32>
    %cst_161 = arith.constant 1.000000e+00 : f32
    %533 = vector.broadcast %cst_161 : f32 to vector<8x128xf32>
    %534 = arith.addf %533, %532 : vector<8x128xf32>
    %535 = arith.divf %533, %534 : vector<8x128xf32>
    %536 = vector.extract_strided_slice %535 {offsets = [0, 0], sizes = [8, 32], strides = [1, 1]} : vector<8x128xf32> to vector<8x32xf32>
    %537 = vector.extract_strided_slice %535 {offsets = [0, 32], sizes = [8, 32], strides = [1, 1]} : vector<8x128xf32> to vector<8x32xf32>
    %538 = vector.extract_strided_slice %535 {offsets = [0, 96], sizes = [8, 32], strides = [1, 1]} : vector<8x128xf32> to vector<8x32xf32>
    %539 = vector.extract_strided_slice %530 {offsets = [0, 64], sizes = [8, 32], strides = [1, 1]} : vector<8x128xf32> to vector<8x32xf32>
    %540 = math.tanh %539 : vector<8x32xf32>
    %541 = arith.mulf %537, %523 : vector<8x32xf32>
    %542 = arith.mulf %536, %540 : vector<8x32xf32>
    %543 = arith.addf %541, %542 : vector<8x32xf32>
    %544 = math.tanh %543 : vector<8x32xf32>
    %545 = arith.mulf %538, %544 : vector<8x32xf32>
    %c8_162 = arith.constant 8 : index
    %c0_163 = arith.constant 0 : index
    %546 = vector.load %arg18[%c8_162, %c0_163] : memref<64x32xf32, #tpu.memory_space<vmem>>, vector<8x32xf32>
    tpu.vector_store %arg18[%c8_162, %c0_163], %545 {strides = array<i32>} : memref<64x32xf32, #tpu.memory_space<vmem>>, vector<8x32xf32>,
    %c16_164 = arith.constant 16 : index
    %c0_165 = arith.constant 0 : index
    %547 = vector.load %arg19[%c16_164, %c0_165] : memref<64x128xf32, #tpu.memory_space<vmem>>, vector<8x128xf32>
    %548 = arith.truncf %545 : vector<8x32xf32> to vector<8x32xbf16>
    %cst_166 = arith.constant dense<0.000000e+00> : vector<8x128xf32>
    %549 = tpu.matmul %548, %498, %cst_166 {dimension_numbers = #tpu.dot_dimension_numbers<[1], [0], [0], [1], [0, 0, 1, 1], [], []>} : vector<8x32xbf16>, vector<32x128xbf16>, vector<8x128xf32> -> vector<8x128xf32>
    %550 = arith.addf %547, %549 : vector<8x128xf32>
    %551 = arith.negf %550 : vector<8x128xf32>
    %552 = math.exp %551 : vector<8x128xf32>
    %cst_167 = arith.constant 1.000000e+00 : f32
    %553 = vector.broadcast %cst_167 : f32 to vector<8x128xf32>
    %554 = arith.addf %553, %552 : vector<8x128xf32>
    %555 = arith.divf %553, %554 : vector<8x128xf32>
    %556 = vector.extract_strided_slice %555 {offsets = [0, 0], sizes = [8, 32], strides = [1, 1]} : vector<8x128xf32> to vector<8x32xf32>
    %557 = vector.extract_strided_slice %555 {offsets = [0, 32], sizes = [8, 32], strides = [1, 1]} : vector<8x128xf32> to vector<8x32xf32>
    %558 = vector.extract_strided_slice %555 {offsets = [0, 96], sizes = [8, 32], strides = [1, 1]} : vector<8x128xf32> to vector<8x32xf32>
    %559 = vector.extract_strided_slice %550 {offsets = [0, 64], sizes = [8, 32], strides = [1, 1]} : vector<8x128xf32> to vector<8x32xf32>
    %560 = math.tanh %559 : vector<8x32xf32>
    %561 = arith.mulf %557, %543 : vector<8x32xf32>
    %562 = arith.mulf %556, %560 : vector<8x32xf32>
    %563 = arith.addf %561, %562 : vector<8x32xf32>
    %564 = math.tanh %563 : vector<8x32xf32>
    %565 = arith.mulf %558, %564 : vector<8x32xf32>
    %c16_168 = arith.constant 16 : index
    %c0_169 = arith.constant 0 : index
    %566 = vector.load %arg18[%c16_168, %c0_169] : memref<64x32xf32, #tpu.memory_space<vmem>>, vector<8x32xf32>
    tpu.vector_store %arg18[%c16_168, %c0_169], %565 {strides = array<i32>} : memref<64x32xf32, #tpu.memory_space<vmem>>, vector<8x32xf32>,
    %c24_170 = arith.constant 24 : index
    %c0_171 = arith.constant 0 : index
    %567 = vector.load %arg19[%c24_170, %c0_171] : memref<64x128xf32, #tpu.memory_space<vmem>>, vector<8x128xf32>
    %568 = arith.truncf %565 : vector<8x32xf32> to vector<8x32xbf16>
    %cst_172 = arith.constant dense<0.000000e+00> : vector<8x128xf32>
    %569 = tpu.matmul %568, %498, %cst_172 {dimension_numbers = #tpu.dot_dimension_numbers<[1], [0], [0], [1], [0, 0, 1, 1], [], []>} : vector<8x32xbf16>, vector<32x128xbf16>, vector<8x128xf32> -> vector<8x128xf32>
    %570 = arith.addf %567, %569 : vector<8x128xf32>
    %571 = arith.negf %570 : vector<8x128xf32>
    %572 = math.exp %571 : vector<8x128xf32>
    %cst_173 = arith.constant 1.000000e+00 : f32
    %573 = vector.broadcast %cst_173 : f32 to vector<8x128xf32>
    %574 = arith.addf %573, %572 : vector<8x128xf32>
    %575 = arith.divf %573, %574 : vector<8x128xf32>
    %576 = vector.extract_strided_slice %575 {offsets = [0, 0], sizes = [8, 32], strides = [1, 1]} : vector<8x128xf32> to vector<8x32xf32>
    %577 = vector.extract_strided_slice %575 {offsets = [0, 32], sizes = [8, 32], strides = [1, 1]} : vector<8x128xf32> to vector<8x32xf32>
    %578 = vector.extract_strided_slice %575 {offsets = [0, 96], sizes = [8, 32], strides = [1, 1]} : vector<8x128xf32> to vector<8x32xf32>
    %579 = vector.extract_strided_slice %570 {offsets = [0, 64], sizes = [8, 32], strides = [1, 1]} : vector<8x128xf32> to vector<8x32xf32>
    %580 = math.tanh %579 : vector<8x32xf32>
    %581 = arith.mulf %577, %563 : vector<8x32xf32>
    %582 = arith.mulf %576, %580 : vector<8x32xf32>
    %583 = arith.addf %581, %582 : vector<8x32xf32>
    %584 = math.tanh %583 : vector<8x32xf32>
    %585 = arith.mulf %578, %584 : vector<8x32xf32>
    %c24_174 = arith.constant 24 : index
    %c0_175 = arith.constant 0 : index
    %586 = vector.load %arg18[%c24_174, %c0_175] : memref<64x32xf32, #tpu.memory_space<vmem>>, vector<8x32xf32>
    tpu.vector_store %arg18[%c24_174, %c0_175], %585 {strides = array<i32>} : memref<64x32xf32, #tpu.memory_space<vmem>>, vector<8x32xf32>,
    %c32_176 = arith.constant 32 : index
    %c0_177 = arith.constant 0 : index
    %587 = vector.load %arg19[%c32_176, %c0_177] : memref<64x128xf32, #tpu.memory_space<vmem>>, vector<8x128xf32>
    %588 = arith.truncf %585 : vector<8x32xf32> to vector<8x32xbf16>
    %cst_178 = arith.constant dense<0.000000e+00> : vector<8x128xf32>
    %589 = tpu.matmul %588, %498, %cst_178 {dimension_numbers = #tpu.dot_dimension_numbers<[1], [0], [0], [1], [0, 0, 1, 1], [], []>} : vector<8x32xbf16>, vector<32x128xbf16>, vector<8x128xf32> -> vector<8x128xf32>
    %590 = arith.addf %587, %589 : vector<8x128xf32>
    %591 = arith.negf %590 : vector<8x128xf32>
    %592 = math.exp %591 : vector<8x128xf32>
    %cst_179 = arith.constant 1.000000e+00 : f32
    %593 = vector.broadcast %cst_179 : f32 to vector<8x128xf32>
    %594 = arith.addf %593, %592 : vector<8x128xf32>
    %595 = arith.divf %593, %594 : vector<8x128xf32>
    %596 = vector.extract_strided_slice %595 {offsets = [0, 0], sizes = [8, 32], strides = [1, 1]} : vector<8x128xf32> to vector<8x32xf32>
    %597 = vector.extract_strided_slice %595 {offsets = [0, 32], sizes = [8, 32], strides = [1, 1]} : vector<8x128xf32> to vector<8x32xf32>
    %598 = vector.extract_strided_slice %595 {offsets = [0, 96], sizes = [8, 32], strides = [1, 1]} : vector<8x128xf32> to vector<8x32xf32>
    %599 = vector.extract_strided_slice %590 {offsets = [0, 64], sizes = [8, 32], strides = [1, 1]} : vector<8x128xf32> to vector<8x32xf32>
    %600 = math.tanh %599 : vector<8x32xf32>
    %601 = arith.mulf %597, %583 : vector<8x32xf32>
    %602 = arith.mulf %596, %600 : vector<8x32xf32>
    %603 = arith.addf %601, %602 : vector<8x32xf32>
    %604 = math.tanh %603 : vector<8x32xf32>
    %605 = arith.mulf %598, %604 : vector<8x32xf32>
    %c32_180 = arith.constant 32 : index
    %c0_181 = arith.constant 0 : index
    %606 = vector.load %arg18[%c32_180, %c0_181] : memref<64x32xf32, #tpu.memory_space<vmem>>, vector<8x32xf32>
    tpu.vector_store %arg18[%c32_180, %c0_181], %605 {strides = array<i32>} : memref<64x32xf32, #tpu.memory_space<vmem>>, vector<8x32xf32>,
    %c40_182 = arith.constant 40 : index
    %c0_183 = arith.constant 0 : index
    %607 = vector.load %arg19[%c40_182, %c0_183] : memref<64x128xf32, #tpu.memory_space<vmem>>, vector<8x128xf32>
    %608 = arith.truncf %605 : vector<8x32xf32> to vector<8x32xbf16>
    %cst_184 = arith.constant dense<0.000000e+00> : vector<8x128xf32>
    %609 = tpu.matmul %608, %498, %cst_184 {dimension_numbers = #tpu.dot_dimension_numbers<[1], [0], [0], [1], [0, 0, 1, 1], [], []>} : vector<8x32xbf16>, vector<32x128xbf16>, vector<8x128xf32> -> vector<8x128xf32>
    %610 = arith.addf %607, %609 : vector<8x128xf32>
    %611 = arith.negf %610 : vector<8x128xf32>
    %612 = math.exp %611 : vector<8x128xf32>
    %cst_185 = arith.constant 1.000000e+00 : f32
    %613 = vector.broadcast %cst_185 : f32 to vector<8x128xf32>
    %614 = arith.addf %613, %612 : vector<8x128xf32>
    %615 = arith.divf %613, %614 : vector<8x128xf32>
    %616 = vector.extract_strided_slice %615 {offsets = [0, 0], sizes = [8, 32], strides = [1, 1]} : vector<8x128xf32> to vector<8x32xf32>
    %617 = vector.extract_strided_slice %615 {offsets = [0, 32], sizes = [8, 32], strides = [1, 1]} : vector<8x128xf32> to vector<8x32xf32>
    %618 = vector.extract_strided_slice %615 {offsets = [0, 96], sizes = [8, 32], strides = [1, 1]} : vector<8x128xf32> to vector<8x32xf32>
    %619 = vector.extract_strided_slice %610 {offsets = [0, 64], sizes = [8, 32], strides = [1, 1]} : vector<8x128xf32> to vector<8x32xf32>
    %620 = math.tanh %619 : vector<8x32xf32>
    %621 = arith.mulf %617, %603 : vector<8x32xf32>
    %622 = arith.mulf %616, %620 : vector<8x32xf32>
    %623 = arith.addf %621, %622 : vector<8x32xf32>
    %624 = math.tanh %623 : vector<8x32xf32>
    %625 = arith.mulf %618, %624 : vector<8x32xf32>
    %c40_186 = arith.constant 40 : index
    %c0_187 = arith.constant 0 : index
    %626 = vector.load %arg18[%c40_186, %c0_187] : memref<64x32xf32, #tpu.memory_space<vmem>>, vector<8x32xf32>
    tpu.vector_store %arg18[%c40_186, %c0_187], %625 {strides = array<i32>} : memref<64x32xf32, #tpu.memory_space<vmem>>, vector<8x32xf32>,
    %c48_188 = arith.constant 48 : index
    %c0_189 = arith.constant 0 : index
    %627 = vector.load %arg19[%c48_188, %c0_189] : memref<64x128xf32, #tpu.memory_space<vmem>>, vector<8x128xf32>
    %628 = arith.truncf %625 : vector<8x32xf32> to vector<8x32xbf16>
    %cst_190 = arith.constant dense<0.000000e+00> : vector<8x128xf32>
    %629 = tpu.matmul %628, %498, %cst_190 {dimension_numbers = #tpu.dot_dimension_numbers<[1], [0], [0], [1], [0, 0, 1, 1], [], []>} : vector<8x32xbf16>, vector<32x128xbf16>, vector<8x128xf32> -> vector<8x128xf32>
    %630 = arith.addf %627, %629 : vector<8x128xf32>
    %631 = arith.negf %630 : vector<8x128xf32>
    %632 = math.exp %631 : vector<8x128xf32>
    %cst_191 = arith.constant 1.000000e+00 : f32
    %633 = vector.broadcast %cst_191 : f32 to vector<8x128xf32>
    %634 = arith.addf %633, %632 : vector<8x128xf32>
    %635 = arith.divf %633, %634 : vector<8x128xf32>
    %636 = vector.extract_strided_slice %635 {offsets = [0, 0], sizes = [8, 32], strides = [1, 1]} : vector<8x128xf32> to vector<8x32xf32>
    %637 = vector.extract_strided_slice %635 {offsets = [0, 32], sizes = [8, 32], strides = [1, 1]} : vector<8x128xf32> to vector<8x32xf32>
    %638 = vector.extract_strided_slice %635 {offsets = [0, 96], sizes = [8, 32], strides = [1, 1]} : vector<8x128xf32> to vector<8x32xf32>
    %639 = vector.extract_strided_slice %630 {offsets = [0, 64], sizes = [8, 32], strides = [1, 1]} : vector<8x128xf32> to vector<8x32xf32>
    %640 = math.tanh %639 : vector<8x32xf32>
    %641 = arith.mulf %637, %623 : vector<8x32xf32>
    %642 = arith.mulf %636, %640 : vector<8x32xf32>
    %643 = arith.addf %641, %642 : vector<8x32xf32>
    %644 = math.tanh %643 : vector<8x32xf32>
    %645 = arith.mulf %638, %644 : vector<8x32xf32>
    %c48_192 = arith.constant 48 : index
    %c0_193 = arith.constant 0 : index
    %646 = vector.load %arg18[%c48_192, %c0_193] : memref<64x32xf32, #tpu.memory_space<vmem>>, vector<8x32xf32>
    tpu.vector_store %arg18[%c48_192, %c0_193], %645 {strides = array<i32>} : memref<64x32xf32, #tpu.memory_space<vmem>>, vector<8x32xf32>,
    %c56_194 = arith.constant 56 : index
    %c0_195 = arith.constant 0 : index
    %647 = vector.load %arg19[%c56_194, %c0_195] : memref<64x128xf32, #tpu.memory_space<vmem>>, vector<8x128xf32>
    %648 = arith.truncf %645 : vector<8x32xf32> to vector<8x32xbf16>
    %cst_196 = arith.constant dense<0.000000e+00> : vector<8x128xf32>
    %649 = tpu.matmul %648, %498, %cst_196 {dimension_numbers = #tpu.dot_dimension_numbers<[1], [0], [0], [1], [0, 0, 1, 1], [], []>} : vector<8x32xbf16>, vector<32x128xbf16>, vector<8x128xf32> -> vector<8x128xf32>
    %650 = arith.addf %647, %649 : vector<8x128xf32>
    %651 = arith.negf %650 : vector<8x128xf32>
    %652 = math.exp %651 : vector<8x128xf32>
    %cst_197 = arith.constant 1.000000e+00 : f32
    %653 = vector.broadcast %cst_197 : f32 to vector<8x128xf32>
    %654 = arith.addf %653, %652 : vector<8x128xf32>
    %655 = arith.divf %653, %654 : vector<8x128xf32>
    %656 = vector.extract_strided_slice %655 {offsets = [0, 0], sizes = [8, 32], strides = [1, 1]} : vector<8x128xf32> to vector<8x32xf32>
    %657 = vector.extract_strided_slice %655 {offsets = [0, 32], sizes = [8, 32], strides = [1, 1]} : vector<8x128xf32> to vector<8x32xf32>
    %658 = vector.extract_strided_slice %655 {offsets = [0, 96], sizes = [8, 32], strides = [1, 1]} : vector<8x128xf32> to vector<8x32xf32>
    %659 = vector.extract_strided_slice %650 {offsets = [0, 64], sizes = [8, 32], strides = [1, 1]} : vector<8x128xf32> to vector<8x32xf32>
    %660 = math.tanh %659 : vector<8x32xf32>
    %661 = arith.mulf %657, %643 : vector<8x32xf32>
    %662 = arith.mulf %656, %660 : vector<8x32xf32>
    %663 = arith.addf %661, %662 : vector<8x32xf32>
    %664 = math.tanh %663 : vector<8x32xf32>
    %665 = arith.mulf %658, %664 : vector<8x32xf32>
    %c56_198 = arith.constant 56 : index
    %c0_199 = arith.constant 0 : index
    %666 = vector.load %arg18[%c56_198, %c0_199] : memref<64x32xf32, #tpu.memory_space<vmem>>, vector<8x32xf32>
    tpu.vector_store %arg18[%c56_198, %c0_199], %665 {strides = array<i32>} : memref<64x32xf32, #tpu.memory_space<vmem>>, vector<8x32xf32>,
    %c0_200 = arith.constant 0 : index
    %c0_201 = arith.constant 0 : index
    %667 = vector.load %arg18[%c0_200, %c0_201] : memref<64x32xf32, #tpu.memory_space<vmem>>, vector<64x32xf32>
    %668 = arith.truncf %667 : vector<64x32xf32> to vector<64x32xbf16>
    %c0_202 = arith.constant 0 : index
    %c0_203 = arith.constant 0 : index
    %669 = vector.load %arg14[%c0_202, %c0_203] : memref<32x128xbf16, #tpu.memory_space<vmem>>, vector<32x128xbf16>
    %cst_204 = arith.constant dense<0.000000e+00> : vector<64x128xf32>
    %670 = tpu.matmul %668, %669, %cst_204 {dimension_numbers = #tpu.dot_dimension_numbers<[1], [0], [0], [1], [0, 0, 1, 1], [], []>} : vector<64x32xbf16>, vector<32x128xbf16>, vector<64x128xf32> -> vector<64x128xf32>
    %c0_205 = arith.constant 0 : index
    %c0_206 = arith.constant 0 : index
    %671 = vector.load %arg15[%c0_205, %c0_206] : memref<1x128xf32, #tpu.memory_space<vmem>>, vector<1x128xf32>
    %672 = vector.broadcast %671 : vector<1x128xf32> to vector<64x128xf32>
    %673 = arith.addf %670, %672 : vector<64x128xf32>
    %674 = math.tanh %673 : vector<64x128xf32>
    %675 = vector.shape_cast %674 : vector<64x128xf32> to vector<8x8x128xf32>
    %c0_207 = arith.constant 0 : index
    %c0_208 = arith.constant 0 : index
    %c0_209 = arith.constant 0 : index
    %676 = vector.load %arg16[%c0_207, %c0_208, %c0_209] : memref<8x8x128xf32, #tpu.memory_space<vmem>>, vector<8x8x128xf32>
    tpu.vector_store %arg16[%c0_207, %c0_208, %c0_209], %675 {strides = array<i32>} : memref<8x8x128xf32, #tpu.memory_space<vmem>>, vector<8x8x128xf32>,
    return
  }
  func.func @transform_0(%arg0: i32) -> (i32, i32, i32) {
    %c0_i32 = arith.constant 0 : i32
    %c0_i32_0 = arith.constant 0 : i32
    %c0_i32_1 = arith.constant 0 : i32
    return %c0_i32, %arg0, %c0_i32_0 : i32, i32, i32
  }
  func.func @transform_1(%arg0: i32) -> (i32, i32) {
    %c0_i32 = arith.constant 0 : i32
    %c0_i32_0 = arith.constant 0 : i32
    %c0_i32_1 = arith.constant 0 : i32
    return %c0_i32, %c0_i32_0 : i32, i32
  }
  func.func @transform_2(%arg0: i32) -> (i32, i32) {
    %c0_i32 = arith.constant 0 : i32
    %c0_i32_0 = arith.constant 0 : i32
    %c0_i32_1 = arith.constant 0 : i32
    return %c0_i32, %c0_i32_0 : i32, i32
  }
  func.func @transform_3(%arg0: i32) -> (i32, i32) {
    %c0_i32 = arith.constant 0 : i32
    %c0_i32_0 = arith.constant 0 : i32
    %c0_i32_1 = arith.constant 0 : i32
    return %c0_i32, %c0_i32_0 : i32, i32
  }
  func.func @transform_4(%arg0: i32) -> (i32, i32) {
    %c0_i32 = arith.constant 0 : i32
    %c0_i32_0 = arith.constant 0 : i32
    %c0_i32_1 = arith.constant 0 : i32
    return %c0_i32, %c0_i32_0 : i32, i32
  }
  func.func @transform_5(%arg0: i32) -> (i32, i32) {
    %c0_i32 = arith.constant 0 : i32
    %c0_i32_0 = arith.constant 0 : i32
    %c0_i32_1 = arith.constant 0 : i32
    return %c0_i32, %c0_i32_0 : i32, i32
  }
  func.func @transform_6(%arg0: i32) -> (i32, i32) {
    %c0_i32 = arith.constant 0 : i32
    %c0_i32_0 = arith.constant 0 : i32
    %c0_i32_1 = arith.constant 0 : i32
    return %c0_i32, %c0_i32_0 : i32, i32
  }
  func.func @transform_7(%arg0: i32) -> (i32, i32) {
    %c0_i32 = arith.constant 0 : i32
    %c0_i32_0 = arith.constant 0 : i32
    %c0_i32_1 = arith.constant 0 : i32
    return %c0_i32, %c0_i32_0 : i32, i32
  }
  func.func @transform_8(%arg0: i32) -> (i32, i32) {
    %c0_i32 = arith.constant 0 : i32
    %c0_i32_0 = arith.constant 0 : i32
    %c0_i32_1 = arith.constant 0 : i32
    return %c0_i32, %c0_i32_0 : i32, i32
  }
  func.func @transform_9(%arg0: i32) -> (i32, i32) {
    %c0_i32 = arith.constant 0 : i32
    %c0_i32_0 = arith.constant 0 : i32
    %c0_i32_1 = arith.constant 0 : i32
    return %c0_i32, %c0_i32_0 : i32, i32
  }
  func.func @transform_10(%arg0: i32) -> (i32, i32) {
    %c0_i32 = arith.constant 0 : i32
    %c0_i32_0 = arith.constant 0 : i32
    %c0_i32_1 = arith.constant 0 : i32
    return %c0_i32, %c0_i32_0 : i32, i32
  }
  func.func @transform_11(%arg0: i32) -> (i32, i32) {
    %c0_i32 = arith.constant 0 : i32
    %c0_i32_0 = arith.constant 0 : i32
    %c0_i32_1 = arith.constant 0 : i32
    return %c0_i32, %c0_i32_0 : i32, i32
  }
  func.func @transform_12(%arg0: i32) -> (i32, i32) {
    %c0_i32 = arith.constant 0 : i32
    %c0_i32_0 = arith.constant 0 : i32
    %c0_i32_1 = arith.constant 0 : i32
    return %c0_i32, %c0_i32_0 : i32, i32
  }
  func.func @transform_13(%arg0: i32) -> (i32, i32) {
    %c0_i32 = arith.constant 0 : i32
    %c0_i32_0 = arith.constant 0 : i32
    %c0_i32_1 = arith.constant 0 : i32
    return %c0_i32, %c0_i32_0 : i32, i32
  }
  func.func @transform_14(%arg0: i32) -> (i32, i32) {
    %c0_i32 = arith.constant 0 : i32
    %c0_i32_0 = arith.constant 0 : i32
    %c0_i32_1 = arith.constant 0 : i32
    return %c0_i32, %c0_i32_0 : i32, i32
  }
  func.func @transform_15(%arg0: i32) -> (i32, i32, i32) {
    %c0_i32 = arith.constant 0 : i32
    %c0_i32_0 = arith.constant 0 : i32
    %c0_i32_1 = arith.constant 0 : i32
    return %c0_i32, %arg0, %c0_i32_0 : i32, i32, i32
  }
}

</mosaic_0001>

<llo_original>
// kernel: lstm_autoencoder_forward.1
$region0: #{lstm_autoencoder_forward.1}
  #allocation0 [shape = 'u32[]', space=smem, size = 0x4, offset = 0x4, fixed_abs, tag = 'smem constant byte address 0x4 - core index']
  #allocation1 [shape = 'u32[144,128]{1,0:T(1,128)}', space=vmem, size = 0x12000, scoped, tag = 'internal scratch']
  #allocation2 [shape = 'f32[64,32]{1,0:T(8,128)}', space=vmem, size = 0x8000, scoped, tag = 'scratch operand']
  #allocation3 [shape = 'f32[64,32]{1,0:T(8,128)}', space=vmem, size = 0x8000, scoped, tag = 'scratch operand']
  #allocation4 [shape = 'f32[64,128]{1,0:T(8,128)}', space=vmem, size = 0x8000, scoped, tag = 'scratch operand']
  %s0 = inlined_call_operand.vmem [shape: f32[8,8,4], index: 0, kind: input, shape index: {}]
  %s1 = inlined_call_operand.hbm [shape: bf16[4,128], index: 1, kind: input, shape index: {}]
  %s2 = inlined_call_operand.hbm [shape: bf16[32,128], index: 2, kind: input, shape index: {}]
  %s3 = inlined_call_operand.hbm [shape: f32[1,128], index: 3, kind: input, shape index: {}]
  %s4 = inlined_call_operand.vmem [shape: bf16[32,128], index: 4, kind: input, shape index: {}]
  %s5 = inlined_call_operand.vmem [shape: bf16[32,128], index: 5, kind: input, shape index: {}]
  %s6 = inlined_call_operand.vmem [shape: f32[1,128], index: 6, kind: input, shape index: {}]
  %s7 = inlined_call_operand.vmem [shape: bf16[32,128], index: 7, kind: input, shape index: {}]
  %s8 = inlined_call_operand.vmem [shape: bf16[32,128], index: 8, kind: input, shape index: {}]
  %s9 = inlined_call_operand.vmem [shape: f32[1,128], index: 9, kind: input, shape index: {}]
  %s10 = inlined_call_operand.vmem [shape: bf16[32,128], index: 10, kind: input, shape index: {}]
  %s11 = inlined_call_operand.vmem [shape: bf16[32,128], index: 11, kind: input, shape index: {}]
  %s12 = inlined_call_operand.vmem [shape: f32[1,128], index: 12, kind: input, shape index: {}]
  %s13 = inlined_call_operand.vmem [shape: bf16[32,128], index: 13, kind: input, shape index: {}]
  %s14 = inlined_call_operand.vmem [shape: f32[1,128], index: 14, kind: input, shape index: {}]
  %s15 = inlined_call_operand.vmem [shape: f32[8,8,128], index: 15, kind: output, shape index: {}]
  %s16 = sld [smem:[#allocation0]]
  $region82: #{lstm_autoencoder_forward.1} parent=0
    _
  %s18 = ssub.s32 1, %s16
  %s19 = scalar_select 0, %s18, %s16
  $region1: #{lstm_autoencoder_forward.1} parent=0
    #allocation5 [shape = 'u8[1024]{0}', space=vmem, size = 0x400, scoped, tag = 'input window, operand 1, single buffered']
    #allocation6 [shape = 's32[1]{0}', space=sflag, size = 0x4, scoped, tag = 'scoped memory for lstm_autoencoder_forward.1']
    #allocation7 [shape = 'u8[8192]{0}', space=vmem, size = 0x2000, scoped, tag = 'input window, operand 2, single buffered']
    #allocation8 [shape = 's32[1]{0}', space=sflag, size = 0x4, scoped, tag = 'scoped memory for lstm_autoencoder_forward.1']
    #allocation9 [shape = 'u8[512]{0}', space=vmem, size = 0x400, scoped, tag = 'input window, operand 3, single buffered']
    %20 = vsyncpa [#allocation6], 0
    %21 = vsyncpa [#allocation8], 0
    // Predicated region
    $region2: #{lstm_autoencoder_forward.1} parent=1 // pred_check
      _
    $region3: #{lstm_autoencoder_forward.1} parent=1 // pred_check_branch
      %23 = sbr.rel (0) target = $region5
    $region4: #{lstm_autoencoder_forward.1} parent=1 // pred_region
      _
    $region5: #{lstm_autoencoder_forward.1} parent=1 // pred_fallthru
      _
    // Predicated region
    $region6: #{lstm_autoencoder_forward.1} parent=1 // pred_check
      _
    $region7: #{lstm_autoencoder_forward.1} parent=1 // pred_check_branch
      %25 = sbr.rel (0) target = $region9
    $region8: #{lstm_autoencoder_forward.1} parent=1 // pred_region
      %s27 = ssub.s32 32, 32
      %28 = vsyncadd [#allocation6], %s27
      %s30 = sshll.u32 [#allocation5], 4
      %s31 = int_to_ptr.vmem [resolvable:$true] %s30
      %33 = dma.hbm_to_vmem [thread:$0]  %s1, 32, %s31, [#allocation6]
    $region9: #{lstm_autoencoder_forward.1} parent=1 // pred_fallthru
      _
    // Predicated region
    $region10: #{lstm_autoencoder_forward.1} parent=1 // pred_check
      _
    $region11: #{lstm_autoencoder_forward.1} parent=1 // pred_check_branch
      %35 = sbr.rel (0) target = $region13
    $region12: #{lstm_autoencoder_forward.1} parent=1 // pred_region
      %s37 = ssub.s32 256, 256
      %38 = vsyncadd [#allocation8], %s37
      %s39 = sshll.u32 [#allocation7], 4
      %s40 = int_to_ptr.vmem [resolvable:$true] %s39
      %45 = dma.hbm_to_vmem [thread:$0]  %s2, 256, %s40, [#allocation8], 64, 64, 4
    $region13: #{lstm_autoencoder_forward.1} parent=1 // pred_fallthru
      _
    // Predicated region
    $region14: #{lstm_autoencoder_forward.1} parent=1 // pred_check
      _
    $region15: #{lstm_autoencoder_forward.1} parent=1 // pred_check_branch
      %47 = sbr.rel (0) target = $region17
    $region16: #{lstm_autoencoder_forward.1} parent=1 // pred_region
      %s49 = ssub.s32 16, 16
      %50 = vsyncadd [#allocation8], %s49
      %s52 = sshll.u32 [#allocation9], 4
      %s53 = int_to_ptr.vmem [resolvable:$true] %s52
      %55 = dma.hbm_to_vmem [thread:$0]  %s3, 16, %s53, [#allocation8]
    $region17: #{lstm_autoencoder_forward.1} parent=1 // pred_fallthru
      _
    // Predicated region
    $region18: #{lstm_autoencoder_forward.1} parent=1 // pred_check
      _
    $region19: #{lstm_autoencoder_forward.1} parent=1 // pred_check_branch
      %57 = sbr.rel (0) target = $region21
    $region20: #{lstm_autoencoder_forward.1} parent=1 // pred_region
      _
    $region21: #{lstm_autoencoder_forward.1} parent=1 // pred_fallthru
      _
    // Predicated region
    $region22: #{lstm_autoencoder_forward.1} parent=1 // pred_check
      _
    $region23: #{lstm_autoencoder_forward.1} parent=1 // pred_check_branch
      %59 = sbr.rel (0) target = $region25
    $region24: #{lstm_autoencoder_forward.1} parent=1 // pred_region
      _
    $region25: #{lstm_autoencoder_forward.1} parent=1 // pred_fallthru
      _
    // Predicated region
    $region26: #{lstm_autoencoder_forward.1} parent=1 // pred_check
      _
    $region27: #{lstm_autoencoder_forward.1} parent=1 // pred_check_branch
      %61 = sbr.rel (0) target = $region29
    $region28: #{lstm_autoencoder_forward.1} parent=1 // pred_region
      _
    $region29: #{lstm_autoencoder_forward.1} parent=1 // pred_fallthru
      _
    // Predicated region
    $region30: #{lstm_autoencoder_forward.1} parent=1 // pred_check
      _
    $region31: #{lstm_autoencoder_forward.1} parent=1 // pred_check_branch
      %63 = sbr.rel (0) target = $region33
    $region32: #{lstm_autoencoder_forward.1} parent=1 // pred_region
      _
    $region33: #{lstm_autoencoder_forward.1} parent=1 // pred_fallthru
      _
    // Predicated region
    $region34: #{lstm_autoencoder_forward.1} parent=1 // pred_check
      _
    $region35: #{lstm_autoencoder_forward.1} parent=1 // pred_check_branch
      %65 = sbr.rel (0) target = $region37
    $region36: #{lstm_autoencoder_forward.1} parent=1 // pred_region
      _
    $region37: #{lstm_autoencoder_forward.1} parent=1 // pred_fallthru
      _
    // Predicated region
    $region38: #{lstm_autoencoder_forward.1} parent=1 // pred_check
      _
    $region39: #{lstm_autoencoder_forward.1} parent=1 // pred_check_branch
      %67 = sbr.rel (0) target = $region41
    $region40: #{lstm_autoencoder_forward.1} parent=1 // pred_region
      _
    $region41: #{lstm_autoencoder_forward.1} parent=1 // pred_fallthru
      _
    // Predicated region
    $region42: #{lstm_autoencoder_forward.1} parent=1 // pred_check
      _
    $region43: #{lstm_autoencoder_forward.1} parent=1 // pred_check_branch
      %69 = sbr.rel (0) target = $region45
    $region44: #{lstm_autoencoder_forward.1} parent=1 // pred_region
      _
    $region45: #{lstm_autoencoder_forward.1} parent=1 // pred_fallthru
      _
    // Predicated region
    $region46: #{lstm_autoencoder_forward.1} parent=1 // pred_check
      _
    $region47: #{lstm_autoencoder_forward.1} parent=1 // pred_check_branch
      %71 = sbr.rel (0) target = $region49
    $region48: #{lstm_autoencoder_forward.1} parent=1 // pred_region
      _
    $region49: #{lstm_autoencoder_forward.1} parent=1 // pred_fallthru
      _
    // Predicated region
    $region50: #{lstm_autoencoder_forward.1} parent=1 // pred_check
      _
    $region51: #{lstm_autoencoder_forward.1} parent=1 // pred_check_branch
      %73 = sbr.rel (0) target = $region53
    $region52: #{lstm_autoencoder_forward.1} parent=1 // pred_region
      _
    $region53: #{lstm_autoencoder_forward.1} parent=1 // pred_fallthru
      _
    // Predicated region
    $region54: #{lstm_autoencoder_forward.1} parent=1 // pred_check
      _
    $region55: #{lstm_autoencoder_forward.1} parent=1 // pred_check_branch
      %75 = sbr.rel (0) target = $region57
    $region56: #{lstm_autoencoder_forward.1} parent=1 // pred_region
      _
    $region57: #{lstm_autoencoder_forward.1} parent=1 // pred_fallthru
      _
    // Predicated region
    $region58: #{lstm_autoencoder_forward.1} parent=1 // pred_check
      _
    $region59: #{lstm_autoencoder_forward.1} parent=1 // pred_check_branch
      %77 = sbr.rel (0) target = $region61
    $region60: #{lstm_autoencoder_forward.1} parent=1 // pred_region
      _
    $region61: #{lstm_autoencoder_forward.1} parent=1 // pred_fallthru
      _
    // Predicated region
    $region62: #{lstm_autoencoder_forward.1} parent=1 // pred_check
      _
    $region63: #{lstm_autoencoder_forward.1} parent=1 // pred_check_branch
      %79 = sbr.rel (0) target = $region65
    $region64: #{lstm_autoencoder_forward.1} parent=1 // pred_region
      %80 = dma.done [#allocation6], 32
    $region65: #{lstm_autoencoder_forward.1} parent=1 // pred_fallthru
      _
    // Predicated region
    $region66: #{lstm_autoencoder_forward.1} parent=1 // pred_check
      _
    $region67: #{lstm_autoencoder_forward.1} parent=1 // pred_check_branch
      %82 = sbr.rel (0) target = $region69
    $region68: #{lstm_autoencoder_forward.1} parent=1 // pred_region
      %83 = dma.done [#allocation8], 256
    $region69: #{lstm_autoencoder_forward.1} parent=1 // pred_fallthru
      _
    // Predicated region
    $region70: #{lstm_autoencoder_forward.1} parent=1 // pred_check
      _
    $region71: #{lstm_autoencoder_forward.1} parent=1 // pred_check_branch
      %85 = sbr.rel (0) target = $region73
    $region72: #{lstm_autoencoder_forward.1} parent=1 // pred_region
      %86 = dma.done [#allocation8], 16
    $region73: #{lstm_autoencoder_forward.1} parent=1 // pred_fallthru
      _
    %v88 = vld [vmem:[#allocation5] sm:$0x3]
    %v89 = vld [vmem:[#allocation9] sm:$0x1]
    %v90 = vld [vmem:[#allocation7] sm:$0xf]
    %v91 = vld [vmem:[#allocation7 + $0x4] sm:$0xf]
    %v92 = vld [vmem:[#allocation7 + $0x8] sm:$0xf]
    %v93 = vld [vmem:[#allocation7 + $0xc] sm:$0xf]
    %v94 = vld [vmem:[%s0] sm:$0xff]
    %v95 = vld [vmem:[%s0 + $0x8] sm:$0xff]
    %v96 = vld [vmem:[%s0 + $0x10] sm:$0xff]
    %v97 = vld [vmem:[%s0 + $0x18] sm:$0xff]
    %v98 = vld [vmem:[%s0 + $0x20] sm:$0xff]
    %v99 = vld [vmem:[%s0 + $0x28] sm:$0xff]
    %v100 = vld [vmem:[%s0 + $0x30] sm:$0xff]
    %v101 = vld [vmem:[%s0 + $0x38] sm:$0xff]
    %v102 = vpack.c.bf16 %v95, %v94
    %v103 = vpack.c.bf16 %v97, %v96
    %v104 = vpack.c.bf16 %v99, %v98
    %v105 = vpack.c.bf16 %v101, %v100
    %v107 = vlaneseq
    %v108 = vshrl.u32 %v107, 7
    %v109 = vsub.s32 0, %v108
    %v110 = vrot.slane %v89, %v109
    %vm112 = vcmask 31744
    %v114 = vsel %vm112, %v102, 0
    %v117 = vsel %vm112, %v103, 0
    %v120 = vsel %vm112, %v104, 0
    %v123 = vsel %vm112, %v105, 0
    %vm125 = vcmask 1041408
    %v127 = vsel %vm125, %v88, 0
    %129 = vmatprep.subr.bf16.mxu0 0
    %130 = vmatpush1.bf16.msra.mxu0 0
    %131 = vmatprep.subr.bf16.mxu0 0
    %132 = vmatpush1.bf16.msra.mxu0 0
    %133 = vmatprep.subr.bf16.mxu0 0
    %134 = vmatpush1.bf16.msra.mxu0 0
    %135 = vmatprep.subr.bf16.mxu0 0
    %136 = vmatpush1.bf16.msra.mxu0 0
    %137 = vmatprep.subr.bf16.mxu0 0
    %138 = vmatpush1.bf16.msra.mxu0 0
    %139 = vmatprep.subr.bf16.mxu0 0
    %140 = vmatpush1.bf16.msra.mxu0 0
    %141 = vmatprep.subr.bf16.mxu0 0
    %142 = vmatpush1.bf16.msra.mxu0 0
    %143 = vmatprep.subr.bf16.mxu0 0
    %144 = vmatpush1.bf16.msra.mxu0 %v127
    %145 = vmatprep.subr.bf16.mxu0 0
    %146 = vmatpush2.bf16.msra.mxu0 0
    %147 = vmatprep.subr.bf16.mxu0 0
    %148 = vmatpush2.bf16.msra.mxu0 0
    %149 = vmatprep.subr.bf16.mxu0 0
    %150 = vmatpush2.bf16.msra.mxu0 0
    %151 = vmatprep.subr.bf16.mxu0 0
    %152 = vmatpush2.bf16.msra.mxu0 0
    %153 = vmatprep.subr.bf16.mxu0 0
    %154 = vmatpush2.bf16.msra.mxu0 0
    %155 = vmatprep.subr.bf16.mxu0 0
    %156 = vmatpush2.bf16.msra.mxu0 0
    %157 = vmatprep.subr.bf16.mxu0 0
    %158 = vmatpush2.bf16.msra.mxu0 0
    %159 = vmatprep.subr.bf16.mxu0 0
    %160 = vmatpush2.bf16.msra.mxu0 0
    %161 = vmatprep.mubr.bf16.mxu0 0
    %162 = vmatmul.mubr.bf16.gmra.mxu0 %v114
    %v163 = vpop.f32.mrf.mxu0
    %v164 = vadd.f32 %v110, %v163
    %v165 = vpop.f32.mrf.mxu0
    %v166 = vpop.f32.mrf.mxu0
    %v167 = vadd.f32 %v110, %v166
    %v168 = vpop.f32.mrf.mxu0
    %169 = vmatprep.mubr.bf16.mxu0 0
    %170 = vmatmul.mubr.bf16.gmra.mxu0 %v117
    %v171 = vpop.f32.mrf.mxu0
    %v172 = vadd.f32 %v110, %v171
    %v173 = vpop.f32.mrf.mxu0
    %v174 = vpop.f32.mrf.mxu0
    %v175 = vadd.f32 %v110, %v174
    %v176 = vpop.f32.mrf.mxu0
    %177 = vmatprep.mubr.bf16.mxu0 0
    %178 = vmatmul.mubr.bf16.gmra.mxu0 %v120
    %v179 = vpop.f32.mrf.mxu0
    %v180 = vadd.f32 %v110, %v179
    %v181 = vpop.f32.mrf.mxu0
    %v182 = vpop.f32.mrf.mxu0
    %v183 = vadd.f32 %v110, %v182
    %v184 = vpop.f32.mrf.mxu0
    %185 = vmatprep.mubr.bf16.mxu0 0
    %186 = vmatmul.mubr.bf16.gmra.mxu0 %v123
    %v187 = vpop.f32.mrf.mxu0
    %v188 = vadd.f32 %v110, %v187
    %v189 = vpop.f32.mrf.mxu0
    %v190 = vpop.f32.mrf.mxu0
    %v191 = vadd.f32 %v110, %v190
    %v192 = vpop.f32.mrf.mxu0
    %193 = vdwg.mxu0
    %194 = vst [vmem:[#allocation4] sm:$0xff] %v164
    %195 = vst [vmem:[#allocation4 + $0x8] sm:$0xff] %v167
    %196 = vst [vmem:[#allocation4 + $0x10] sm:$0xff] %v172
    %197 = vst [vmem:[#allocation4 + $0x18] sm:$0xff] %v175
    %198 = vst [vmem:[#allocation4 + $0x20] sm:$0xff] %v180
    %199 = vst [vmem:[#allocation4 + $0x28] sm:$0xff] %v183
    %200 = vst [vmem:[#allocation4 + $0x30] sm:$0xff] %v188
    %201 = vst [vmem:[#allocation4 + $0x38] sm:$0xff] %v191
    %v202 = vld [vmem:[#allocation4] sm:$0xff]
    %v207 = vunpack.c.l.b16 %v90
    %v208 = vunpack.c.l.b16 %v91
    %v209 = vunpack.c.l.b16 %v92
    %v210 = vunpack.c.l.b16 %v93
    %v211 = vpack.c.b16 %v208, %v207
    %v212 = vpack.c.b16 %v210, %v209
    %vm215 = vcmask 261120
    %v217 = vsel %vm215, 0, 0
    %219 = vmatprep.subr.bf16.mxu0 0
    %220 = vmatpush1.bf16.msra.mxu0 0
    %221 = vmatprep.subr.bf16.mxu0 0
    %222 = vmatpush1.bf16.msra.mxu0 0
    %223 = vmatprep.subr.bf16.mxu0 0
    %224 = vmatpush1.bf16.msra.mxu0 0
    %225 = vmatprep.subr.bf16.mxu0 0
    %226 = vmatpush1.bf16.msra.mxu0 0
    %227 = vmatprep.subr.bf16.mxu0 0
    %228 = vmatpush1.bf16.msra.mxu0 0
    %229 = vmatprep.subr.bf16.mxu0 0
    %230 = vmatpush1.bf16.msra.mxu0 0
    %231 = vmatprep.subr.bf16.mxu0 0
    %232 = vmatpush1.bf16.msra.mxu0 %v212
    %233 = vmatprep.subr.bf16.mxu0 0
    %234 = vmatpush1.bf16.msra.mxu0 %v211
    %235 = vmatprep.subr.bf16.mxu0 0
    %236 = vmatpush2.bf16.msra.mxu0 0
    %237 = vmatprep.subr.bf16.mxu0 0
    %238 = vmatpush2.bf16.msra.mxu0 0
    %239 = vmatprep.subr.bf16.mxu0 0
    %240 = vmatpush2.bf16.msra.mxu0 0
    %241 = vmatprep.subr.bf16.mxu0 0
    %242 = vmatpush2.bf16.msra.mxu0 0
    %243 = vmatprep.subr.bf16.mxu0 0
    %244 = vmatpush2.bf16.msra.mxu0 0
    %245 = vmatprep.subr.bf16.mxu0 0
    %246 = vmatpush2.bf16.msra.mxu0 0
    %247 = vmatprep.subr.bf16.mxu0 0
    %248 = vmatpush2.bf16.msra.mxu0 0
    %249 = vmatprep.subr.bf16.mxu0 0
    %250 = vmatpush2.bf16.msra.mxu0 0
    %251 = vmatprep.mubr.bf16.mxu0 0
    %252 = vmatmul.mubr.bf16.gmra.mxu0 %v217
    %v253 = vpop.f32.mrf.mxu0
    %v254 = vadd.f32 0.0, %v253
    %v255 = vpop.f32.mrf.mxu0
    %v256 = vpop.f32.mrf.mxu0
    %v257 = vpop.f32.mrf.mxu0
    %258 = vdwg.mxu0
    %v259 = vadd.f32 %v202, %v254
    %v260 = vxor.u32 %v259, 2147483648
    %v261 = vmul.f32 %v260, 1.442695
    %v262 = vpow.pop %v261
    %v263 = vadd.f32 %v262, 1.0
    %v264 = vrcp.pop %v263
    %v265 = vmul.f32 1.0, %v264
    %v266 = vtanh.pop %v259
    %v267 = vmul.f32 %v265, 0.0
    %269 = vrot.lane.b32.xlu0 %v266, 64
    %v270 = vpop.permute.xlu0 %269
    %v272 = vmul.f32 %v265, %v270
    %274 = vrot.lane.b32.xlu0 %v272, 32
    %v275 = vpop.permute.xlu0 %274
    %v277 = vadd.f32 %v267, %v275
    %v278 = vtanh.pop %v277
    %280 = vrot.lane.b32.xlu0 %v278, 64
    %v281 = vpop.permute.xlu0 %280
    %v283 = vmul.f32 %v265, %v281
    %285 = vrot.lane.b32.xlu0 %v283, 32
    %v286 = vpop.permute.xlu0 %285
    %288 = vst.msk [vmem:[#allocation2] sm:$0xff] %vm215, %v286
    %v289 = vld [vmem:[#allocation4 + $0x8] sm:$0xff]
    %v290 = vpack.c.bf16 %v283, %v283
    %292 = vrot.lane.b32.xlu0 %v290, 32
    %v293 = vpop.permute.xlu0 %292
    %v295 = vsel %vm215, %v293, 0
    %297 = vmatprep.subr.bf16.mxu0 0
    %298 = vmatpush1.bf16.msra.mxu0 0
    %299 = vmatprep.subr.bf16.mxu0 0
    %300 = vmatpush1.bf16.msra.mxu0 0
    %301 = vmatprep.subr.bf16.mxu0 0
    %302 = vmatpush1.bf16.msra.mxu0 0
    %303 = vmatprep.subr.bf16.mxu0 0
    %304 = vmatpush1.bf16.msra.mxu0 0
    %305 = vmatprep.subr.bf16.mxu0 0
    %306 = vmatpush1.bf16.msra.mxu0 0
    %307 = vmatprep.subr.bf16.mxu0 0
    %308 = vmatpush1.bf16.msra.mxu0 0
    %309 = vmatprep.subr.bf16.mxu0 0
    %310 = vmatpush1.bf16.msra.mxu0 %v212
    %311 = vmatprep.subr.bf16.mxu0 0
    %312 = vmatpush1.bf16.msra.mxu0 %v211
    %313 = vmatprep.subr.bf16.mxu0 0
    %314 = vmatpush2.bf16.msra.mxu0 0
    %315 = vmatprep.subr.bf16.mxu0 0
    %316 = vmatpush2.bf16.msra.mxu0 0
    %317 = vmatprep.subr.bf16.mxu0 0
    %318 = vmatpush2.bf16.msra.mxu0 0
    %319 = vmatprep.subr.bf16.mxu0 0
    %320 = vmatpush2.bf16.msra.mxu0 0
    %321 = vmatprep.subr.bf16.mxu0 0
    %322 = vmatpush2.bf16.msra.mxu0 0
    %323 = vmatprep.subr.bf16.mxu0 0
    %324 = vmatpush2.bf16.msra.mxu0 0
    %325 = vmatprep.subr.bf16.mxu0 0
    %326 = vmatpush2.bf16.msra.mxu0 0
    %327 = vmatprep.subr.bf16.mxu0 0
    %328 = vmatpush2.bf16.msra.mxu0 0
    %329 = vmatprep.mubr.bf16.mxu0 0
    %330 = vmatmul.mubr.bf16.gmra.mxu0 %v295
    %v331 = vpop.f32.mrf.mxu0
    %v332 = vadd.f32 0.0, %v331
    %v333 = vpop.f32.mrf.mxu0
    %v334 = vpop.f32.mrf.mxu0
    %v335 = vpop.f32.mrf.mxu0
    %336 = vdwg.mxu0
    %v337 = vadd.f32 %v289, %v332
    %v338 = vxor.u32 %v337, 2147483648
    %v339 = vmul.f32 %v338, 1.442695
    %v340 = vpow.pop %v339
    %v341 = vadd.f32 %v340, 1.0
    %v342 = vrcp.pop %v341
    %v343 = vmul.f32 1.0, %v342
    %v344 = vtanh.pop %v337
    %v345 = vmul.f32 %v343, %v277
    %347 = vrot.lane.b32.xlu0 %v344, 64
    %v348 = vpop.permute.xlu0 %347
    %v350 = vmul.f32 %v343, %v348
    %352 = vrot.lane.b32.xlu0 %v350, 32
    %v353 = vpop.permute.xlu0 %352
    %v355 = vadd.f32 %v345, %v353
    %v356 = vtanh.pop %v355
    %358 = vrot.lane.b32.xlu0 %v356, 64
    %v359 = vpop.permute.xlu0 %358
    %v361 = vmul.f32 %v343, %v359
    %363 = vrot.lane.b32.xlu0 %v361, 32
    %v364 = vpop.permute.xlu0 %363
    %366 = vst.msk [vmem:[#allocation2 + $0x8] sm:$0xff] %vm215, %v364
    %v367 = vld [vmem:[#allocation4 + $0x10] sm:$0xff]
    %v368 = vpack.c.bf16 %v361, %v361
    %370 = vrot.lane.b32.xlu0 %v368, 32
    %v371 = vpop.permute.xlu0 %370
    %v373 = vsel %vm215, %v371, 0
    %375 = vmatprep.subr.bf16.mxu0 0
    %376 = vmatpush1.bf16.msra.mxu0 0
    %377 = vmatprep.subr.bf16.mxu0 0
    %378 = vmatpush1.bf16.msra.mxu0 0
    %379 = vmatprep.subr.bf16.mxu0 0
    %380 = vmatpush1.bf16.msra.mxu0 0
    %381 = vmatprep.subr.bf16.mxu0 0
    %382 = vmatpush1.bf16.msra.mxu0 0
    %383 = vmatprep.subr.bf16.mxu0 0
    %384 = vmatpush1.bf16.msra.mxu0 0
    %385 = vmatprep.subr.bf16.mxu0 0
    %386 = vmatpush1.bf16.msra.mxu0 0
    %387 = vmatprep.subr.bf16.mxu0 0
    %388 = vmatpush1.bf16.msra.mxu0 %v212
    %389 = vmatprep.subr.bf16.mxu0 0
    %390 = vmatpush1.bf16.msra.mxu0 %v211
    %391 = vmatprep.subr.bf16.mxu0 0
    %392 = vmatpush2.bf16.msra.mxu0 0
    %393 = vmatprep.subr.bf16.mxu0 0
    %394 = vmatpush2.bf16.msra.mxu0 0
    %395 = vmatprep.subr.bf16.mxu0 0
    %396 = vmatpush2.bf16.msra.mxu0 0
    %397 = vmatprep.subr.bf16.mxu0 0
    %398 = vmatpush2.bf16.msra.mxu0 0
    %399 = vmatprep.subr.bf16.mxu0 0
    %400 = vmatpush2.bf16.msra.mxu0 0
    %401 = vmatprep.subr.bf16.mxu0 0
    %402 = vmatpush2.bf16.msra.mxu0 0
    %403 = vmatprep.subr.bf16.mxu0 0
    %404 = vmatpush2.bf16.msra.mxu0 0
    %405 = vmatprep.subr.bf16.mxu0 0
    %406 = vmatpush2.bf16.msra.mxu0 0
    %407 = vmatprep.mubr.bf16.mxu0 0
    %408 = vmatmul.mubr.bf16.gmra.mxu0 %v373
    %v409 = vpop.f32.mrf.mxu0
    %v410 = vadd.f32 0.0, %v409
    %v411 = vpop.f32.mrf.mxu0
    %v412 = vpop.f32.mrf.mxu0
    %v413 = vpop.f32.mrf.mxu0
    %414 = vdwg.mxu0
    %v415 = vadd.f32 %v367, %v410
    %v416 = vxor.u32 %v415, 2147483648
    %v417 = vmul.f32 %v416, 1.442695
    %v418 = vpow.pop %v417
    %v419 = vadd.f32 %v418, 1.0
    %v420 = vrcp.pop %v419
    %v421 = vmul.f32 1.0, %v420
    %v422 = vtanh.pop %v415
    %v423 = vmul.f32 %v421, %v355
    %425 = vrot.lane.b32.xlu0 %v422, 64
    %v426 = vpop.permute.xlu0 %425
    %v428 = vmul.f32 %v421, %v426
    %430 = vrot.lane.b32.xlu0 %v428, 32
    %v431 = vpop.permute.xlu0 %430
    %v433 = vadd.f32 %v423, %v431
    %v434 = vtanh.pop %v433
    %436 = vrot.lane.b32.xlu0 %v434, 64
    %v437 = vpop.permute.xlu0 %436
    %v439 = vmul.f32 %v421, %v437
    %441 = vrot.lane.b32.xlu0 %v439, 32
    %v442 = vpop.permute.xlu0 %441
    %444 = vst.msk [vmem:[#allocation2 + $0x10] sm:$0xff] %vm215, %v442
    %v445 = vld [vmem:[#allocation4 + $0x18] sm:$0xff]
    %v446 = vpack.c.bf16 %v439, %v439
    %448 = vrot.lane.b32.xlu0 %v446, 32
    %v449 = vpop.permute.xlu0 %448
    %v451 = vsel %vm215, %v449, 0
    %453 = vmatprep.subr.bf16.mxu0 0
    %454 = vmatpush1.bf16.msra.mxu0 0
    %455 = vmatprep.subr.bf16.mxu0 0
    %456 = vmatpush1.bf16.msra.mxu0 0
    %457 = vmatprep.subr.bf16.mxu0 0
    %458 = vmatpush1.bf16.msra.mxu0 0
    %459 = vmatprep.subr.bf16.mxu0 0
    %460 = vmatpush1.bf16.msra.mxu0 0
    %461 = vmatprep.subr.bf16.mxu0 0
    %462 = vmatpush1.bf16.msra.mxu0 0
    %463 = vmatprep.subr.bf16.mxu0 0
    %464 = vmatpush1.bf16.msra.mxu0 0
    %465 = vmatprep.subr.bf16.mxu0 0
    %466 = vmatpush1.bf16.msra.mxu0 %v212
    %467 = vmatprep.subr.bf16.mxu0 0
    %468 = vmatpush1.bf16.msra.mxu0 %v211
    %469 = vmatprep.subr.bf16.mxu0 0
    %470 = vmatpush2.bf16.msra.mxu0 0
    %471 = vmatprep.subr.bf16.mxu0 0
    %472 = vmatpush2.bf16.msra.mxu0 0
    %473 = vmatprep.subr.bf16.mxu0 0
    %474 = vmatpush2.bf16.msra.mxu0 0
    %475 = vmatprep.subr.bf16.mxu0 0
    %476 = vmatpush2.bf16.msra.mxu0 0
    %477 = vmatprep.subr.bf16.mxu0 0
    %478 = vmatpush2.bf16.msra.mxu0 0
    %479 = vmatprep.subr.bf16.mxu0 0
    %480 = vmatpush2.bf16.msra.mxu0 0
    %481 = vmatprep.subr.bf16.mxu0 0
    %482 = vmatpush2.bf16.msra.mxu0 0
    %483 = vmatprep.subr.bf16.mxu0 0
    %484 = vmatpush2.bf16.msra.mxu0 0
    %485 = vmatprep.mubr.bf16.mxu0 0
    %486 = vmatmul.mubr.bf16.gmra.mxu0 %v451
    %v487 = vpop.f32.mrf.mxu0
    %v488 = vadd.f32 0.0, %v487
    %v489 = vpop.f32.mrf.mxu0
    %v490 = vpop.f32.mrf.mxu0
    %v491 = vpop.f32.mrf.mxu0
    %492 = vdwg.mxu0
    %v493 = vadd.f32 %v445, %v488
    %v494 = vxor.u32 %v493, 2147483648
    %v495 = vmul.f32 %v494, 1.442695
    %v496 = vpow.pop %v495
    %v497 = vadd.f32 %v496, 1.0
    %v498 = vrcp.pop %v497
    %v499 = vmul.f32 1.0, %v498
    %v500 = vtanh.pop %v493
    %v501 = vmul.f32 %v499, %v433
    %503 = vrot.lane.b32.xlu0 %v500, 64
    %v504 = vpop.permute.xlu0 %503
    %v506 = vmul.f32 %v499, %v504
    %508 = vrot.lane.b32.xlu0 %v506, 32
    %v509 = vpop.permute.xlu0 %508
    %v511 = vadd.f32 %v501, %v509
    %v512 = vtanh.pop %v511
    %514 = vrot.lane.b32.xlu0 %v512, 64
    %v515 = vpop.permute.xlu0 %514
    %v517 = vmul.f32 %v499, %v515
    %519 = vrot.lane.b32.xlu0 %v517, 32
    %v520 = vpop.permute.xlu0 %519
    %522 = vst.msk [vmem:[#allocation2 + $0x18] sm:$0xff] %vm215, %v520
    %v523 = vld [vmem:[#allocation4 + $0x20] sm:$0xff]
    %v524 = vpack.c.bf16 %v517, %v517
    %526 = vrot.lane.b32.xlu0 %v524, 32
    %v527 = vpop.permute.xlu0 %526
    %v529 = vsel %vm215, %v527, 0
    %531 = vmatprep.subr.bf16.mxu0 0
    %532 = vmatpush1.bf16.msra.mxu0 0
    %533 = vmatprep.subr.bf16.mxu0 0
    %534 = vmatpush1.bf16.msra.mxu0 0
    %535 = vmatprep.subr.bf16.mxu0 0
    %536 = vmatpush1.bf16.msra.mxu0 0
    %537 = vmatprep.subr.bf16.mxu0 0
    %538 = vmatpush1.bf16.msra.mxu0 0
    %539 = vmatprep.subr.bf16.mxu0 0
    %540 = vmatpush1.bf16.msra.mxu0 0
    %541 = vmatprep.subr.bf16.mxu0 0
    %542 = vmatpush1.bf16.msra.mxu0 0
    %543 = vmatprep.subr.bf16.mxu0 0
    %544 = vmatpush1.bf16.msra.mxu0 %v212
    %545 = vmatprep.subr.bf16.mxu0 0
    %546 = vmatpush1.bf16.msra.mxu0 %v211
    %547 = vmatprep.subr.bf16.mxu0 0
    %548 = vmatpush2.bf16.msra.mxu0 0
    %549 = vmatprep.subr.bf16.mxu0 0
    %550 = vmatpush2.bf16.msra.mxu0 0
    %551 = vmatprep.subr.bf16.mxu0 0
    %552 = vmatpush2.bf16.msra.mxu0 0
    %553 = vmatprep.subr.bf16.mxu0 0
    %554 = vmatpush2.bf16.msra.mxu0 0
    %555 = vmatprep.subr.bf16.mxu0 0
    %556 = vmatpush2.bf16.msra.mxu0 0
    %557 = vmatprep.subr.bf16.mxu0 0
    %558 = vmatpush2.bf16.msra.mxu0 0
    %559 = vmatprep.subr.bf16.mxu0 0
    %560 = vmatpush2.bf16.msra.mxu0 0
    %561 = vmatprep.subr.bf16.mxu0 0
    %562 = vmatpush2.bf16.msra.mxu0 0
    %563 = vmatprep.mubr.bf16.mxu0 0
    %564 = vmatmul.mubr.bf16.gmra.mxu0 %v529
    %v565 = vpop.f32.mrf.mxu0
    %v566 = vadd.f32 0.0, %v565
    %v567 = vpop.f32.mrf.mxu0
    %v568 = vpop.f32.mrf.mxu0
    %v569 = vpop.f32.mrf.mxu0
    %570 = vdwg.mxu0
    %v571 = vadd.f32 %v523, %v566
    %v572 = vxor.u32 %v571, 2147483648
    %v573 = vmul.f32 %v572, 1.442695
    %v574 = vpow.pop %v573
    %v575 = vadd.f32 %v574, 1.0
    %v576 = vrcp.pop %v575
    %v577 = vmul.f32 1.0, %v576
    %v578 = vtanh.pop %v571
    %v579 = vmul.f32 %v577, %v511
    %581 = vrot.lane.b32.xlu0 %v578, 64
    %v582 = vpop.permute.xlu0 %581
    %v584 = vmul.f32 %v577, %v582
    %586 = vrot.lane.b32.xlu0 %v584, 32
    %v587 = vpop.permute.xlu0 %586
    %v589 = vadd.f32 %v579, %v587
    %v590 = vtanh.pop %v589
    %592 = vrot.lane.b32.xlu0 %v590, 64
    %v593 = vpop.permute.xlu0 %592
    %v595 = vmul.f32 %v577, %v593
    %597 = vrot.lane.b32.xlu0 %v595, 32
    %v598 = vpop.permute.xlu0 %597
    %600 = vst.msk [vmem:[#allocation2 + $0x20] sm:$0xff] %vm215, %v598
    %v601 = vld [vmem:[#allocation4 + $0x28] sm:$0xff]
    %v602 = vpack.c.bf16 %v595, %v595
    %604 = vrot.lane.b32.xlu0 %v602, 32
    %v605 = vpop.permute.xlu0 %604
    %v607 = vsel %vm215, %v605, 0
    %609 = vmatprep.subr.bf16.mxu0 0
    %610 = vmatpush1.bf16.msra.mxu0 0
    %611 = vmatprep.subr.bf16.mxu0 0
    %612 = vmatpush1.bf16.msra.mxu0 0
    %613 = vmatprep.subr.bf16.mxu0 0
    %614 = vmatpush1.bf16.msra.mxu0 0
    %615 = vmatprep.subr.bf16.mxu0 0
    %616 = vmatpush1.bf16.msra.mxu0 0
    %617 = vmatprep.subr.bf16.mxu0 0
    %618 = vmatpush1.bf16.msra.mxu0 0
    %619 = vmatprep.subr.bf16.mxu0 0
    %620 = vmatpush1.bf16.msra.mxu0 0
    %621 = vmatprep.subr.bf16.mxu0 0
    %622 = vmatpush1.bf16.msra.mxu0 %v212
    %623 = vmatprep.subr.bf16.mxu0 0
    %624 = vmatpush1.bf16.msra.mxu0 %v211
    %625 = vmatprep.subr.bf16.mxu0 0
    %626 = vmatpush2.bf16.msra.mxu0 0
    %627 = vmatprep.subr.bf16.mxu0 0
    %628 = vmatpush2.bf16.msra.mxu0 0
    %629 = vmatprep.subr.bf16.mxu0 0
    %630 = vmatpush2.bf16.msra.mxu0 0
    %631 = vmatprep.subr.bf16.mxu0 0
    %632 = vmatpush2.bf16.msra.mxu0 0
    %633 = vmatprep.subr.bf16.mxu0 0
    %634 = vmatpush2.bf16.msra.mxu0 0
    %635 = vmatprep.subr.bf16.mxu0 0
    %636 = vmatpush2.bf16.msra.mxu0 0
    %637 = vmatprep.subr.bf16.mxu0 0
    %638 = vmatpush2.bf16.msra.mxu0 0
    %639 = vmatprep.subr.bf16.mxu0 0
    %640 = vmatpush2.bf16.msra.mxu0 0
    %641 = vmatprep.mubr.bf16.mxu0 0
    %642 = vmatmul.mubr.bf16.gmra.mxu0 %v607
    %v643 = vpop.f32.mrf.mxu0
    %v644 = vadd.f32 0.0, %v643
    %v645 = vpop.f32.mrf.mxu0
    %v646 = vpop.f32.mrf.mxu0
    %v647 = vpop.f32.mrf.mxu0
    %648 = vdwg.mxu0
    %v649 = vadd.f32 %v601, %v644
    %v650 = vxor.u32 %v649, 2147483648
    %v651 = vmul.f32 %v650, 1.442695
    %v652 = vpow.pop %v651
    %v653 = vadd.f32 %v652, 1.0
    %v654 = vrcp.pop %v653
    %v655 = vmul.f32 1.0, %v654
    %v656 = vtanh.pop %v649
    %v657 = vmul.f32 %v655, %v589
    %659 = vrot.lane.b32.xlu0 %v656, 64
    %v660 = vpop.permute.xlu0 %659
    %v662 = vmul.f32 %v655, %v660
    %664 = vrot.lane.b32.xlu0 %v662, 32
    %v665 = vpop.permute.xlu0 %664
    %v667 = vadd.f32 %v657, %v665
    %v668 = vtanh.pop %v667
    %670 = vrot.lane.b32.xlu0 %v668, 64
    %v671 = vpop.permute.xlu0 %670
    %v673 = vmul.f32 %v655, %v671
    %675 = vrot.lane.b32.xlu0 %v673, 32
    %v676 = vpop.permute.xlu0 %675
    %678 = vst.msk [vmem:[#allocation2 + $0x28] sm:$0xff] %vm215, %v676
    %v679 = vld [vmem:[#allocation4 + $0x30] sm:$0xff]
    %v680 = vpack.c.bf16 %v673, %v673
    %682 = vrot.lane.b32.xlu0 %v680, 32
    %v683 = vpop.permute.xlu0 %682
    %v685 = vsel %vm215, %v683, 0
    %687 = vmatprep.subr.bf16.mxu0 0
    %688 = vmatpush1.bf16.msra.mxu0 0
    %689 = vmatprep.subr.bf16.mxu0 0
    %690 = vmatpush1.bf16.msra.mxu0 0
    %691 = vmatprep.subr.bf16.mxu0 0
    %692 = vmatpush1.bf16.msra.mxu0 0
    %693 = vmatprep.subr.bf16.mxu0 0
    %694 = vmatpush1.bf16.msra.mxu0 0
    %695 = vmatprep.subr.bf16.mxu0 0
    %696 = vmatpush1.bf16.msra.mxu0 0
    %697 = vmatprep.subr.bf16.mxu0 0
    %698 = vmatpush1.bf16.msra.mxu0 0
    %699 = vmatprep.subr.bf16.mxu0 0
    %700 = vmatpush1.bf16.msra.mxu0 %v212
    %701 = vmatprep.subr.bf16.mxu0 0
    %702 = vmatpush1.bf16.msra.mxu0 %v211
    %703 = vmatprep.subr.bf16.mxu0 0
    %704 = vmatpush2.bf16.msra.mxu0 0
    %705 = vmatprep.subr.bf16.mxu0 0
    %706 = vmatpush2.bf16.msra.mxu0 0
    %707 = vmatprep.subr.bf16.mxu0 0
    %708 = vmatpush2.bf16.msra.mxu0 0
    %709 = vmatprep.subr.bf16.mxu0 0
    %710 = vmatpush2.bf16.msra.mxu0 0
    %711 = vmatprep.subr.bf16.mxu0 0
    %712 = vmatpush2.bf16.msra.mxu0 0
    %713 = vmatprep.subr.bf16.mxu0 0
    %714 = vmatpush2.bf16.msra.mxu0 0
    %715 = vmatprep.subr.bf16.mxu0 0
    %716 = vmatpush2.bf16.msra.mxu0 0
    %717 = vmatprep.subr.bf16.mxu0 0
    %718 = vmatpush2.bf16.msra.mxu0 0
    %719 = vmatprep.mubr.bf16.mxu0 0
    %720 = vmatmul.mubr.bf16.gmra.mxu0 %v685
    %v721 = vpop.f32.mrf.mxu0
    %v722 = vadd.f32 0.0, %v721
    %v723 = vpop.f32.mrf.mxu0
    %v724 = vpop.f32.mrf.mxu0
    %v725 = vpop.f32.mrf.mxu0
    %726 = vdwg.mxu0
    %v727 = vadd.f32 %v679, %v722
    %v728 = vxor.u32 %v727, 2147483648
    %v729 = vmul.f32 %v728, 1.442695
    %v730 = vpow.pop %v729
    %v731 = vadd.f32 %v730, 1.0
    %v732 = vrcp.pop %v731
    %v733 = vmul.f32 1.0, %v732
    %v734 = vtanh.pop %v727
    %v735 = vmul.f32 %v733, %v667
    %737 = vrot.lane.b32.xlu0 %v734, 64
    %v738 = vpop.permute.xlu0 %737
    %v740 = vmul.f32 %v733, %v738
    %742 = vrot.lane.b32.xlu0 %v740, 32
    %v743 = vpop.permute.xlu0 %742
    %v745 = vadd.f32 %v735, %v743
    %v746 = vtanh.pop %v745
    %748 = vrot.lane.b32.xlu0 %v746, 64
    %v749 = vpop.permute.xlu0 %748
    %v751 = vmul.f32 %v733, %v749
    %753 = vrot.lane.b32.xlu0 %v751, 32
    %v754 = vpop.permute.xlu0 %753
    %756 = vst.msk [vmem:[#allocation2 + $0x30] sm:$0xff] %vm215, %v754
    %v757 = vld [vmem:[#allocation4 + $0x38] sm:$0xff]
    %v758 = vpack.c.bf16 %v751, %v751
    %760 = vrot.lane.b32.xlu0 %v758, 32
    %v761 = vpop.permute.xlu0 %760
    %v763 = vsel %vm215, %v761, 0
    %765 = vmatprep.subr.bf16.mxu0 0
    %766 = vmatpush1.bf16.msra.mxu0 0
    %767 = vmatprep.subr.bf16.mxu0 0
    %768 = vmatpush1.bf16.msra.mxu0 0
    %769 = vmatprep.subr.bf16.mxu0 0
    %770 = vmatpush1.bf16.msra.mxu0 0
    %771 = vmatprep.subr.bf16.mxu0 0
    %772 = vmatpush1.bf16.msra.mxu0 0
    %773 = vmatprep.subr.bf16.mxu0 0
    %774 = vmatpush1.bf16.msra.mxu0 0
    %775 = vmatprep.subr.bf16.mxu0 0
    %776 = vmatpush1.bf16.msra.mxu0 0
    %777 = vmatprep.subr.bf16.mxu0 0
    %778 = vmatpush1.bf16.msra.mxu0 %v212
    %779 = vmatprep.subr.bf16.mxu0 0
    %780 = vmatpush1.bf16.msra.mxu0 %v211
    %781 = vmatprep.subr.bf16.mxu0 0
    %782 = vmatpush2.bf16.msra.mxu0 0
    %783 = vmatprep.subr.bf16.mxu0 0
    %784 = vmatpush2.bf16.msra.mxu0 0
    %785 = vmatprep.subr.bf16.mxu0 0
    %786 = vmatpush2.bf16.msra.mxu0 0
    %787 = vmatprep.subr.bf16.mxu0 0
    %788 = vmatpush2.bf16.msra.mxu0 0
    %789 = vmatprep.subr.bf16.mxu0 0
    %790 = vmatpush2.bf16.msra.mxu0 0
    %791 = vmatprep.subr.bf16.mxu0 0
    %792 = vmatpush2.bf16.msra.mxu0 0
    %793 = vmatprep.subr.bf16.mxu0 0
    %794 = vmatpush2.bf16.msra.mxu0 0
    %795 = vmatprep.subr.bf16.mxu0 0
    %796 = vmatpush2.bf16.msra.mxu0 0
    %797 = vmatprep.mubr.bf16.mxu0 0
    %798 = vmatmul.mubr.bf16.gmra.mxu0 %v763
    %v799 = vpop.f32.mrf.mxu0
    %v800 = vadd.f32 0.0, %v799
    %v801 = vpop.f32.mrf.mxu0
    %v802 = vpop.f32.mrf.mxu0
    %v803 = vpop.f32.mrf.mxu0
    %804 = vdwg.mxu0
    %v805 = vadd.f32 %v757, %v800
    %v806 = vxor.u32 %v805, 2147483648
    %v807 = vmul.f32 %v806, 1.442695
    %v808 = vpow.pop %v807
    %v809 = vadd.f32 %v808, 1.0
    %v810 = vrcp.pop %v809
    %v811 = vmul.f32 1.0, %v810
    %v812 = vtanh.pop %v805
    %v813 = vmul.f32 %v811, %v745
    %815 = vrot.lane.b32.xlu0 %v812, 64
    %v816 = vpop.permute.xlu0 %815
    %v818 = vmul.f32 %v811, %v816
    %820 = vrot.lane.b32.xlu0 %v818, 32
    %v821 = vpop.permute.xlu0 %820
    %v823 = vadd.f32 %v813, %v821
    %v824 = vtanh.pop %v823
    %826 = vrot.lane.b32.xlu0 %v824, 64
    %v827 = vpop.permute.xlu0 %826
    %v829 = vmul.f32 %v811, %v827
    %831 = vrot.lane.b32.xlu0 %v829, 32
    %v832 = vpop.permute.xlu0 %831
    %834 = vst.msk [vmem:[#allocation2 + $0x38] sm:$0xff] %vm215, %v832
    %v835 = vld [vmem:[%s4] sm:$0xf]
    %v836 = vld [vmem:[%s4 + $0x4] sm:$0xf]
    %v837 = vld [vmem:[%s4 + $0x8] sm:$0xf]
    %v838 = vld [vmem:[%s4 + $0xc] sm:$0xf]
    %v839 = vld [vmem:[%s6] sm:$0x1]
    %v840 = vld [vmem:[%s5] sm:$0xf]
    %v841 = vld [vmem:[%s5 + $0x4] sm:$0xf]
    %v842 = vld [vmem:[%s5 + $0x8] sm:$0xf]
    %v843 = vld [vmem:[%s5 + $0xc] sm:$0xf]
    %v844 = vld [vmem:[#allocation2] sm:$0xff]
    %v845 = vld [vmem:[#allocation2 + $0x8] sm:$0xff]
    %v846 = vld [vmem:[#allocation2 + $0x10] sm:$0xff]
    %v847 = vld [vmem:[#allocation2 + $0x18] sm:$0xff]
    %v848 = vld [vmem:[#allocation2 + $0x20] sm:$0xff]
    %v849 = vld [vmem:[#allocation2 + $0x28] sm:$0xff]
    %v850 = vld [vmem:[#allocation2 + $0x30] sm:$0xff]
    %v851 = vld [vmem:[#allocation2 + $0x38] sm:$0xff]
    %v852 = vpack.c.bf16 %v845, %v844
    %v853 = vpack.c.bf16 %v847, %v846
    %v854 = vpack.c.bf16 %v849, %v848
    %v855 = vpack.c.bf16 %v851, %v850
    %v857 = vlaneseq
    %v858 = vshrl.u32 %v857, 7
    %v859 = vsub.s32 0, %v858
    %v860 = vrot.slane %v839, %v859
    %v866 = vunpack.c.l.b16 %v835
    %v867 = vunpack.c.l.b16 %v836
    %v868 = vunpack.c.l.b16 %v837
    %v869 = vunpack.c.l.b16 %v838
    %v870 = vpack.c.b16 %v867, %v866
    %v871 = vpack.c.b16 %v869, %v868
    %v875 = vsel %vm215, %v852, 0
    %v878 = vsel %vm215, %v853, 0
    %v881 = vsel %vm215, %v854, 0
    %v884 = vsel %vm215, %v855, 0
    %886 = vmatprep.subr.bf16.mxu0 0
    %887 = vmatpush1.bf16.msra.mxu0 0
    %888 = vmatprep.subr.bf16.mxu0 0
    %889 = vmatpush1.bf16.msra.mxu0 0
    %890 = vmatprep.subr.bf16.mxu0 0
    %891 = vmatpush1.bf16.msra.mxu0 0
    %892 = vmatprep.subr.bf16.mxu0 0
    %893 = vmatpush1.bf16.msra.mxu0 0
    %894 = vmatprep.subr.bf16.mxu0 0
    %895 = vmatpush1.bf16.msra.mxu0 0
    %896 = vmatprep.subr.bf16.mxu0 0
    %897 = vmatpush1.bf16.msra.mxu0 0
    %898 = vmatprep.subr.bf16.mxu0 0
    %899 = vmatpush1.bf16.msra.mxu0 %v871
    %900 = vmatprep.subr.bf16.mxu0 0
    %901 = vmatpush1.bf16.msra.mxu0 %v870
    %902 = vmatprep.subr.bf16.mxu0 0
    %903 = vmatpush2.bf16.msra.mxu0 0
    %904 = vmatprep.subr.bf16.mxu0 0
    %905 = vmatpush2.bf16.msra.mxu0 0
    %906 = vmatprep.subr.bf16.mxu0 0
    %907 = vmatpush2.bf16.msra.mxu0 0
    %908 = vmatprep.subr.bf16.mxu0 0
    %909 = vmatpush2.bf16.msra.mxu0 0
    %910 = vmatprep.subr.bf16.mxu0 0
    %911 = vmatpush2.bf16.msra.mxu0 0
    %912 = vmatprep.subr.bf16.mxu0 0
    %913 = vmatpush2.bf16.msra.mxu0 0
    %914 = vmatprep.subr.bf16.mxu0 0
    %915 = vmatpush2.bf16.msra.mxu0 0
    %916 = vmatprep.subr.bf16.mxu0 0
    %917 = vmatpush2.bf16.msra.mxu0 0
    %918 = vmatprep.mubr.bf16.mxu0 0
    %919 = vmatmul.mubr.bf16.gmra.mxu0 %v875
    %v920 = vpop.f32.mrf.mxu0
    %v921 = vadd.f32 %v860, %v920
    %v922 = vpop.f32.mrf.mxu0
    %v923 = vpop.f32.mrf.mxu0
    %v924 = vadd.f32 %v860, %v923
    %v925 = vpop.f32.mrf.mxu0
    %926 = vmatprep.mubr.bf16.mxu0 0
    %927 = vmatmul.mubr.bf16.gmra.mxu0 %v878
    %v928 = vpop.f32.mrf.mxu0
    %v929 = vadd.f32 %v860, %v928
    %v930 = vpop.f32.mrf.mxu0
    %v931 = vpop.f32.mrf.mxu0
    %v932 = vadd.f32 %v860, %v931
    %v933 = vpop.f32.mrf.mxu0
    %934 = vmatprep.mubr.bf16.mxu0 0
    %935 = vmatmul.mubr.bf16.gmra.mxu0 %v881
    %v936 = vpop.f32.mrf.mxu0
    %v937 = vadd.f32 %v860, %v936
    %v938 = vpop.f32.mrf.mxu0
    %v939 = vpop.f32.mrf.mxu0
    %v940 = vadd.f32 %v860, %v939
    %v941 = vpop.f32.mrf.mxu0
    %942 = vmatprep.mubr.bf16.mxu0 0
    %943 = vmatmul.mubr.bf16.gmra.mxu0 %v884
    %v944 = vpop.f32.mrf.mxu0
    %v945 = vadd.f32 %v860, %v944
    %v946 = vpop.f32.mrf.mxu0
    %v947 = vpop.f32.mrf.mxu0
    %v948 = vadd.f32 %v860, %v947
    %v949 = vpop.f32.mrf.mxu0
    %950 = vdwg.mxu0
    %951 = vst [vmem:[#allocation4] sm:$0xff] %v921
    %952 = vst [vmem:[#allocation4 + $0x8] sm:$0xff] %v924
    %953 = vst [vmem:[#allocation4 + $0x10] sm:$0xff] %v929
    %954 = vst [vmem:[#allocation4 + $0x18] sm:$0xff] %v932
    %955 = vst [vmem:[#allocation4 + $0x20] sm:$0xff] %v937
    %956 = vst [vmem:[#allocation4 + $0x28] sm:$0xff] %v940
    %957 = vst [vmem:[#allocation4 + $0x30] sm:$0xff] %v945
    %958 = vst [vmem:[#allocation4 + $0x38] sm:$0xff] %v948
    %v959 = vld [vmem:[#allocation4] sm:$0xff]
    %v964 = vunpack.c.l.b16 %v840
    %v965 = vunpack.c.l.b16 %v841
    %v966 = vunpack.c.l.b16 %v842
    %v967 = vunpack.c.l.b16 %v843
    %v968 = vpack.c.b16 %v965, %v964
    %v969 = vpack.c.b16 %v967, %v966
    %972 = vmatprep.subr.bf16.mxu0 0
    %973 = vmatpush1.bf16.msra.mxu0 0
    %974 = vmatprep.subr.bf16.mxu0 0
    %975 = vmatpush1.bf16.msra.mxu0 0
    %976 = vmatprep.subr.bf16.mxu0 0
    %977 = vmatpush1.bf16.msra.mxu0 0
    %978 = vmatprep.subr.bf16.mxu0 0
    %979 = vmatpush1.bf16.msra.mxu0 0
    %980 = vmatprep.subr.bf16.mxu0 0
    %981 = vmatpush1.bf16.msra.mxu0 0
    %982 = vmatprep.subr.bf16.mxu0 0
    %983 = vmatpush1.bf16.msra.mxu0 0
    %984 = vmatprep.subr.bf16.mxu0 0
    %985 = vmatpush1.bf16.msra.mxu0 %v969
    %986 = vmatprep.subr.bf16.mxu0 0
    %987 = vmatpush1.bf16.msra.mxu0 %v968
    %988 = vmatprep.subr.bf16.mxu0 0
    %989 = vmatpush2.bf16.msra.mxu0 0
    %990 = vmatprep.subr.bf16.mxu0 0
    %991 = vmatpush2.bf16.msra.mxu0 0
    %992 = vmatprep.subr.bf16.mxu0 0
    %993 = vmatpush2.bf16.msra.mxu0 0
    %994 = vmatprep.subr.bf16.mxu0 0
    %995 = vmatpush2.bf16.msra.mxu0 0
    %996 = vmatprep.subr.bf16.mxu0 0
    %997 = vmatpush2.bf16.msra.mxu0 0
    %998 = vmatprep.subr.bf16.mxu0 0
    %999 = vmatpush2.bf16.msra.mxu0 0
    %1000 = vmatprep.subr.bf16.mxu0 0
    %1001 = vmatpush2.bf16.msra.mxu0 0
    %1002 = vmatprep.subr.bf16.mxu0 0
    %1003 = vmatpush2.bf16.msra.mxu0 0
    %1004 = vmatprep.mubr.bf16.mxu0 0
    %1005 = vmatmul.mubr.bf16.gmra.mxu0 %v217
    %v1006 = vpop.f32.mrf.mxu0
    %v1007 = vadd.f32 0.0, %v1006
    %v1008 = vpop.f32.mrf.mxu0
    %v1009 = vpop.f32.mrf.mxu0
    %v1010 = vpop.f32.mrf.mxu0
    %1011 = vdwg.mxu0
    %v1012 = vadd.f32 %v959, %v1007
    %v1013 = vxor.u32 %v1012, 2147483648
    %v1014 = vmul.f32 %v1013, 1.442695
    %v1015 = vpow.pop %v1014
    %v1016 = vadd.f32 %v1015, 1.0
    %v1017 = vrcp.pop %v1016
    %v1018 = vmul.f32 1.0, %v1017
    %v1019 = vtanh.pop %v1012
    %v1020 = vmul.f32 %v1018, 0.0
    %1022 = vrot.lane.b32.xlu0 %v1019, 64
    %v1023 = vpop.permute.xlu0 %1022
    %v1025 = vmul.f32 %v1018, %v1023
    %1027 = vrot.lane.b32.xlu0 %v1025, 32
    %v1028 = vpop.permute.xlu0 %1027
    %v1030 = vadd.f32 %v1020, %v1028
    %v1031 = vtanh.pop %v1030
    %1033 = vrot.lane.b32.xlu0 %v1031, 64
    %v1034 = vpop.permute.xlu0 %1033
    %v1036 = vmul.f32 %v1018, %v1034
    %v1037 = vld [vmem:[#allocation4 + $0x8] sm:$0xff]
    %v1038 = vpack.c.bf16 %v1036, %v1036
    %1040 = vrot.lane.b32.xlu0 %v1038, 32
    %v1041 = vpop.permute.xlu0 %1040
    %v1043 = vsel %vm215, %v1041, 0
    %1045 = vmatprep.subr.bf16.mxu0 0
    %1046 = vmatpush1.bf16.msra.mxu0 0
    %1047 = vmatprep.subr.bf16.mxu0 0
    %1048 = vmatpush1.bf16.msra.mxu0 0
    %1049 = vmatprep.subr.bf16.mxu0 0
    %1050 = vmatpush1.bf16.msra.mxu0 0
    %1051 = vmatprep.subr.bf16.mxu0 0
    %1052 = vmatpush1.bf16.msra.mxu0 0
    %1053 = vmatprep.subr.bf16.mxu0 0
    %1054 = vmatpush1.bf16.msra.mxu0 0
    %1055 = vmatprep.subr.bf16.mxu0 0
    %1056 = vmatpush1.bf16.msra.mxu0 0
    %1057 = vmatprep.subr.bf16.mxu0 0
    %1058 = vmatpush1.bf16.msra.mxu0 %v969
    %1059 = vmatprep.subr.bf16.mxu0 0
    %1060 = vmatpush1.bf16.msra.mxu0 %v968
    %1061 = vmatprep.subr.bf16.mxu0 0
    %1062 = vmatpush2.bf16.msra.mxu0 0
    %1063 = vmatprep.subr.bf16.mxu0 0
    %1064 = vmatpush2.bf16.msra.mxu0 0
    %1065 = vmatprep.subr.bf16.mxu0 0
    %1066 = vmatpush2.bf16.msra.mxu0 0
    %1067 = vmatprep.subr.bf16.mxu0 0
    %1068 = vmatpush2.bf16.msra.mxu0 0
    %1069 = vmatprep.subr.bf16.mxu0 0
    %1070 = vmatpush2.bf16.msra.mxu0 0
    %1071 = vmatprep.subr.bf16.mxu0 0
    %1072 = vmatpush2.bf16.msra.mxu0 0
    %1073 = vmatprep.subr.bf16.mxu0 0
    %1074 = vmatpush2.bf16.msra.mxu0 0
    %1075 = vmatprep.subr.bf16.mxu0 0
    %1076 = vmatpush2.bf16.msra.mxu0 0
    %1077 = vmatprep.mubr.bf16.mxu0 0
    %1078 = vmatmul.mubr.bf16.gmra.mxu0 %v1043
    %v1079 = vpop.f32.mrf.mxu0
    %v1080 = vadd.f32 0.0, %v1079
    %v1081 = vpop.f32.mrf.mxu0
    %v1082 = vpop.f32.mrf.mxu0
    %v1083 = vpop.f32.mrf.mxu0
    %1084 = vdwg.mxu0
    %v1085 = vadd.f32 %v1037, %v1080
    %v1086 = vxor.u32 %v1085, 2147483648
    %v1087 = vmul.f32 %v1086, 1.442695
    %v1088 = vpow.pop %v1087
    %v1089 = vadd.f32 %v1088, 1.0
    %v1090 = vrcp.pop %v1089
    %v1091 = vmul.f32 1.0, %v1090
    %v1092 = vtanh.pop %v1085
    %v1093 = vmul.f32 %v1091, %v1030
    %1095 = vrot.lane.b32.xlu0 %v1092, 64
    %v1096 = vpop.permute.xlu0 %1095
    %v1098 = vmul.f32 %v1091, %v1096
    %1100 = vrot.lane.b32.xlu0 %v1098, 32
    %v1101 = vpop.permute.xlu0 %1100
    %v1103 = vadd.f32 %v1093, %v1101
    %v1104 = vtanh.pop %v1103
    %1106 = vrot.lane.b32.xlu0 %v1104, 64
    %v1107 = vpop.permute.xlu0 %1106
    %v1109 = vmul.f32 %v1091, %v1107
    %v1110 = vld [vmem:[#allocation4 + $0x10] sm:$0xff]
    %v1111 = vpack.c.bf16 %v1109, %v1109
    %1113 = vrot.lane.b32.xlu0 %v1111, 32
    %v1114 = vpop.permute.xlu0 %1113
    %v1116 = vsel %vm215, %v1114, 0
    %1118 = vmatprep.subr.bf16.mxu0 0
    %1119 = vmatpush1.bf16.msra.mxu0 0
    %1120 = vmatprep.subr.bf16.mxu0 0
    %1121 = vmatpush1.bf16.msra.mxu0 0
    %1122 = vmatprep.subr.bf16.mxu0 0
    %1123 = vmatpush1.bf16.msra.mxu0 0
    %1124 = vmatprep.subr.bf16.mxu0 0
    %1125 = vmatpush1.bf16.msra.mxu0 0
    %1126 = vmatprep.subr.bf16.mxu0 0
    %1127 = vmatpush1.bf16.msra.mxu0 0
    %1128 = vmatprep.subr.bf16.mxu0 0
    %1129 = vmatpush1.bf16.msra.mxu0 0
    %1130 = vmatprep.subr.bf16.mxu0 0
    %1131 = vmatpush1.bf16.msra.mxu0 %v969
    %1132 = vmatprep.subr.bf16.mxu0 0
    %1133 = vmatpush1.bf16.msra.mxu0 %v968
    %1134 = vmatprep.subr.bf16.mxu0 0
    %1135 = vmatpush2.bf16.msra.mxu0 0
    %1136 = vmatprep.subr.bf16.mxu0 0
    %1137 = vmatpush2.bf16.msra.mxu0 0
    %1138 = vmatprep.subr.bf16.mxu0 0
    %1139 = vmatpush2.bf16.msra.mxu0 0
    %1140 = vmatprep.subr.bf16.mxu0 0
    %1141 = vmatpush2.bf16.msra.mxu0 0
    %1142 = vmatprep.subr.bf16.mxu0 0
    %1143 = vmatpush2.bf16.msra.mxu0 0
    %1144 = vmatprep.subr.bf16.mxu0 0
    %1145 = vmatpush2.bf16.msra.mxu0 0
    %1146 = vmatprep.subr.bf16.mxu0 0
    %1147 = vmatpush2.bf16.msra.mxu0 0
    %1148 = vmatprep.subr.bf16.mxu0 0
    %1149 = vmatpush2.bf16.msra.mxu0 0
    %1150 = vmatprep.mubr.bf16.mxu0 0
    %1151 = vmatmul.mubr.bf16.gmra.mxu0 %v1116
    %v1152 = vpop.f32.mrf.mxu0
    %v1153 = vadd.f32 0.0, %v1152
    %v1154 = vpop.f32.mrf.mxu0
    %v1155 = vpop.f32.mrf.mxu0
    %v1156 = vpop.f32.mrf.mxu0
    %1157 = vdwg.mxu0
    %v1158 = vadd.f32 %v1110, %v1153
    %v1159 = vxor.u32 %v1158, 2147483648
    %v1160 = vmul.f32 %v1159, 1.442695
    %v1161 = vpow.pop %v1160
    %v1162 = vadd.f32 %v1161, 1.0
    %v1163 = vrcp.pop %v1162
    %v1164 = vmul.f32 1.0, %v1163
    %v1165 = vtanh.pop %v1158
    %v1166 = vmul.f32 %v1164, %v1103
    %1168 = vrot.lane.b32.xlu0 %v1165, 64
    %v1169 = vpop.permute.xlu0 %1168
    %v1171 = vmul.f32 %v1164, %v1169
    %1173 = vrot.lane.b32.xlu0 %v1171, 32
    %v1174 = vpop.permute.xlu0 %1173
    %v1176 = vadd.f32 %v1166, %v1174
    %v1177 = vtanh.pop %v1176
    %1179 = vrot.lane.b32.xlu0 %v1177, 64
    %v1180 = vpop.permute.xlu0 %1179
    %v1182 = vmul.f32 %v1164, %v1180
    %v1183 = vld [vmem:[#allocation4 + $0x18] sm:$0xff]
    %v1184 = vpack.c.bf16 %v1182, %v1182
    %1186 = vrot.lane.b32.xlu0 %v1184, 32
    %v1187 = vpop.permute.xlu0 %1186
    %v1189 = vsel %vm215, %v1187, 0
    %1191 = vmatprep.subr.bf16.mxu0 0
    %1192 = vmatpush1.bf16.msra.mxu0 0
    %1193 = vmatprep.subr.bf16.mxu0 0
    %1194 = vmatpush1.bf16.msra.mxu0 0
    %1195 = vmatprep.subr.bf16.mxu0 0
    %1196 = vmatpush1.bf16.msra.mxu0 0
    %1197 = vmatprep.subr.bf16.mxu0 0
    %1198 = vmatpush1.bf16.msra.mxu0 0
    %1199 = vmatprep.subr.bf16.mxu0 0
    %1200 = vmatpush1.bf16.msra.mxu0 0
    %1201 = vmatprep.subr.bf16.mxu0 0
    %1202 = vmatpush1.bf16.msra.mxu0 0
    %1203 = vmatprep.subr.bf16.mxu0 0
    %1204 = vmatpush1.bf16.msra.mxu0 %v969
    %1205 = vmatprep.subr.bf16.mxu0 0
    %1206 = vmatpush1.bf16.msra.mxu0 %v968
    %1207 = vmatprep.subr.bf16.mxu0 0
    %1208 = vmatpush2.bf16.msra.mxu0 0
    %1209 = vmatprep.subr.bf16.mxu0 0
    %1210 = vmatpush2.bf16.msra.mxu0 0
    %1211 = vmatprep.subr.bf16.mxu0 0
    %1212 = vmatpush2.bf16.msra.mxu0 0
    %1213 = vmatprep.subr.bf16.mxu0 0
    %1214 = vmatpush2.bf16.msra.mxu0 0
    %1215 = vmatprep.subr.bf16.mxu0 0
    %1216 = vmatpush2.bf16.msra.mxu0 0
    %1217 = vmatprep.subr.bf16.mxu0 0
    %1218 = vmatpush2.bf16.msra.mxu0 0
    %1219 = vmatprep.subr.bf16.mxu0 0
    %1220 = vmatpush2.bf16.msra.mxu0 0
    %1221 = vmatprep.subr.bf16.mxu0 0
    %1222 = vmatpush2.bf16.msra.mxu0 0
    %1223 = vmatprep.mubr.bf16.mxu0 0
    %1224 = vmatmul.mubr.bf16.gmra.mxu0 %v1189
    %v1225 = vpop.f32.mrf.mxu0
    %v1226 = vadd.f32 0.0, %v1225
    %v1227 = vpop.f32.mrf.mxu0
    %v1228 = vpop.f32.mrf.mxu0
    %v1229 = vpop.f32.mrf.mxu0
    %1230 = vdwg.mxu0
    %v1231 = vadd.f32 %v1183, %v1226
    %v1232 = vxor.u32 %v1231, 2147483648
    %v1233 = vmul.f32 %v1232, 1.442695
    %v1234 = vpow.pop %v1233
    %v1235 = vadd.f32 %v1234, 1.0
    %v1236 = vrcp.pop %v1235
    %v1237 = vmul.f32 1.0, %v1236
    %v1238 = vtanh.pop %v1231
    %v1239 = vmul.f32 %v1237, %v1176
    %1241 = vrot.lane.b32.xlu0 %v1238, 64
    %v1242 = vpop.permute.xlu0 %1241
    %v1244 = vmul.f32 %v1237, %v1242
    %1246 = vrot.lane.b32.xlu0 %v1244, 32
    %v1247 = vpop.permute.xlu0 %1246
    %v1249 = vadd.f32 %v1239, %v1247
    %v1250 = vtanh.pop %v1249
    %1252 = vrot.lane.b32.xlu0 %v1250, 64
    %v1253 = vpop.permute.xlu0 %1252
    %v1255 = vmul.f32 %v1237, %v1253
    %v1256 = vld [vmem:[#allocation4 + $0x20] sm:$0xff]
    %v1257 = vpack.c.bf16 %v1255, %v1255
    %1259 = vrot.lane.b32.xlu0 %v1257, 32
    %v1260 = vpop.permute.xlu0 %1259
    %v1262 = vsel %vm215, %v1260, 0
    %1264 = vmatprep.subr.bf16.mxu0 0
    %1265 = vmatpush1.bf16.msra.mxu0 0
    %1266 = vmatprep.subr.bf16.mxu0 0
    %1267 = vmatpush1.bf16.msra.mxu0 0
    %1268 = vmatprep.subr.bf16.mxu0 0
    %1269 = vmatpush1.bf16.msra.mxu0 0
    %1270 = vmatprep.subr.bf16.mxu0 0
    %1271 = vmatpush1.bf16.msra.mxu0 0
    %1272 = vmatprep.subr.bf16.mxu0 0
    %1273 = vmatpush1.bf16.msra.mxu0 0
    %1274 = vmatprep.subr.bf16.mxu0 0
    %1275 = vmatpush1.bf16.msra.mxu0 0
    %1276 = vmatprep.subr.bf16.mxu0 0
    %1277 = vmatpush1.bf16.msra.mxu0 %v969
    %1278 = vmatprep.subr.bf16.mxu0 0
    %1279 = vmatpush1.bf16.msra.mxu0 %v968
    %1280 = vmatprep.subr.bf16.mxu0 0
    %1281 = vmatpush2.bf16.msra.mxu0 0
    %1282 = vmatprep.subr.bf16.mxu0 0
    %1283 = vmatpush2.bf16.msra.mxu0 0
    %1284 = vmatprep.subr.bf16.mxu0 0
    %1285 = vmatpush2.bf16.msra.mxu0 0
    %1286 = vmatprep.subr.bf16.mxu0 0
    %1287 = vmatpush2.bf16.msra.mxu0 0
    %1288 = vmatprep.subr.bf16.mxu0 0
    %1289 = vmatpush2.bf16.msra.mxu0 0
    %1290 = vmatprep.subr.bf16.mxu0 0
    %1291 = vmatpush2.bf16.msra.mxu0 0
    %1292 = vmatprep.subr.bf16.mxu0 0
    %1293 = vmatpush2.bf16.msra.mxu0 0
    %1294 = vmatprep.subr.bf16.mxu0 0
    %1295 = vmatpush2.bf16.msra.mxu0 0
    %1296 = vmatprep.mubr.bf16.mxu0 0
    %1297 = vmatmul.mubr.bf16.gmra.mxu0 %v1262
    %v1298 = vpop.f32.mrf.mxu0
    %v1299 = vadd.f32 0.0, %v1298
    %v1300 = vpop.f32.mrf.mxu0
    %v1301 = vpop.f32.mrf.mxu0
    %v1302 = vpop.f32.mrf.mxu0
    %1303 = vdwg.mxu0
    %v1304 = vadd.f32 %v1256, %v1299
    %v1305 = vxor.u32 %v1304, 2147483648
    %v1306 = vmul.f32 %v1305, 1.442695
    %v1307 = vpow.pop %v1306
    %v1308 = vadd.f32 %v1307, 1.0
    %v1309 = vrcp.pop %v1308
    %v1310 = vmul.f32 1.0, %v1309
    %v1311 = vtanh.pop %v1304
    %v1312 = vmul.f32 %v1310, %v1249
    %1314 = vrot.lane.b32.xlu0 %v1311, 64
    %v1315 = vpop.permute.xlu0 %1314
    %v1317 = vmul.f32 %v1310, %v1315
    %1319 = vrot.lane.b32.xlu0 %v1317, 32
    %v1320 = vpop.permute.xlu0 %1319
    %v1322 = vadd.f32 %v1312, %v1320
    %v1323 = vtanh.pop %v1322
    %1325 = vrot.lane.b32.xlu0 %v1323, 64
    %v1326 = vpop.permute.xlu0 %1325
    %v1328 = vmul.f32 %v1310, %v1326
    %v1329 = vld [vmem:[#allocation4 + $0x28] sm:$0xff]
    %v1330 = vpack.c.bf16 %v1328, %v1328
    %1332 = vrot.lane.b32.xlu0 %v1330, 32
    %v1333 = vpop.permute.xlu0 %1332
    %v1335 = vsel %vm215, %v1333, 0
    %1337 = vmatprep.subr.bf16.mxu0 0
    %1338 = vmatpush1.bf16.msra.mxu0 0
    %1339 = vmatprep.subr.bf16.mxu0 0
    %1340 = vmatpush1.bf16.msra.mxu0 0
    %1341 = vmatprep.subr.bf16.mxu0 0
    %1342 = vmatpush1.bf16.msra.mxu0 0
    %1343 = vmatprep.subr.bf16.mxu0 0
    %1344 = vmatpush1.bf16.msra.mxu0 0
    %1345 = vmatprep.subr.bf16.mxu0 0
    %1346 = vmatpush1.bf16.msra.mxu0 0
    %1347 = vmatprep.subr.bf16.mxu0 0
    %1348 = vmatpush1.bf16.msra.mxu0 0
    %1349 = vmatprep.subr.bf16.mxu0 0
    %1350 = vmatpush1.bf16.msra.mxu0 %v969
    %1351 = vmatprep.subr.bf16.mxu0 0
    %1352 = vmatpush1.bf16.msra.mxu0 %v968
    %1353 = vmatprep.subr.bf16.mxu0 0
    %1354 = vmatpush2.bf16.msra.mxu0 0
    %1355 = vmatprep.subr.bf16.mxu0 0
    %1356 = vmatpush2.bf16.msra.mxu0 0
    %1357 = vmatprep.subr.bf16.mxu0 0
    %1358 = vmatpush2.bf16.msra.mxu0 0
    %1359 = vmatprep.subr.bf16.mxu0 0
    %1360 = vmatpush2.bf16.msra.mxu0 0
    %1361 = vmatprep.subr.bf16.mxu0 0
    %1362 = vmatpush2.bf16.msra.mxu0 0
    %1363 = vmatprep.subr.bf16.mxu0 0
    %1364 = vmatpush2.bf16.msra.mxu0 0
    %1365 = vmatprep.subr.bf16.mxu0 0
    %1366 = vmatpush2.bf16.msra.mxu0 0
    %1367 = vmatprep.subr.bf16.mxu0 0
    %1368 = vmatpush2.bf16.msra.mxu0 0
    %1369 = vmatprep.mubr.bf16.mxu0 0
    %1370 = vmatmul.mubr.bf16.gmra.mxu0 %v1335
    %v1371 = vpop.f32.mrf.mxu0
    %v1372 = vadd.f32 0.0, %v1371
    %v1373 = vpop.f32.mrf.mxu0
    %v1374 = vpop.f32.mrf.mxu0
    %v1375 = vpop.f32.mrf.mxu0
    %1376 = vdwg.mxu0
    %v1377 = vadd.f32 %v1329, %v1372
    %v1378 = vxor.u32 %v1377, 2147483648
    %v1379 = vmul.f32 %v1378, 1.442695
    %v1380 = vpow.pop %v1379
    %v1381 = vadd.f32 %v1380, 1.0
    %v1382 = vrcp.pop %v1381
    %v1383 = vmul.f32 1.0, %v1382
    %v1384 = vtanh.pop %v1377
    %v1385 = vmul.f32 %v1383, %v1322
    %1387 = vrot.lane.b32.xlu0 %v1384, 64
    %v1388 = vpop.permute.xlu0 %1387
    %v1390 = vmul.f32 %v1383, %v1388
    %1392 = vrot.lane.b32.xlu0 %v1390, 32
    %v1393 = vpop.permute.xlu0 %1392
    %v1395 = vadd.f32 %v1385, %v1393
    %v1396 = vtanh.pop %v1395
    %1398 = vrot.lane.b32.xlu0 %v1396, 64
    %v1399 = vpop.permute.xlu0 %1398
    %v1401 = vmul.f32 %v1383, %v1399
    %v1402 = vld [vmem:[#allocation4 + $0x30] sm:$0xff]
    %v1403 = vpack.c.bf16 %v1401, %v1401
    %1405 = vrot.lane.b32.xlu0 %v1403, 32
    %v1406 = vpop.permute.xlu0 %1405
    %v1408 = vsel %vm215, %v1406, 0
    %1410 = vmatprep.subr.bf16.mxu0 0
    %1411 = vmatpush1.bf16.msra.mxu0 0
    %1412 = vmatprep.subr.bf16.mxu0 0
    %1413 = vmatpush1.bf16.msra.mxu0 0
    %1414 = vmatprep.subr.bf16.mxu0 0
    %1415 = vmatpush1.bf16.msra.mxu0 0
    %1416 = vmatprep.subr.bf16.mxu0 0
    %1417 = vmatpush1.bf16.msra.mxu0 0
    %1418 = vmatprep.subr.bf16.mxu0 0
    %1419 = vmatpush1.bf16.msra.mxu0 0
    %1420 = vmatprep.subr.bf16.mxu0 0
    %1421 = vmatpush1.bf16.msra.mxu0 0
    %1422 = vmatprep.subr.bf16.mxu0 0
    %1423 = vmatpush1.bf16.msra.mxu0 %v969
    %1424 = vmatprep.subr.bf16.mxu0 0
    %1425 = vmatpush1.bf16.msra.mxu0 %v968
    %1426 = vmatprep.subr.bf16.mxu0 0
    %1427 = vmatpush2.bf16.msra.mxu0 0
    %1428 = vmatprep.subr.bf16.mxu0 0
    %1429 = vmatpush2.bf16.msra.mxu0 0
    %1430 = vmatprep.subr.bf16.mxu0 0
    %1431 = vmatpush2.bf16.msra.mxu0 0
    %1432 = vmatprep.subr.bf16.mxu0 0
    %1433 = vmatpush2.bf16.msra.mxu0 0
    %1434 = vmatprep.subr.bf16.mxu0 0
    %1435 = vmatpush2.bf16.msra.mxu0 0
    %1436 = vmatprep.subr.bf16.mxu0 0
    %1437 = vmatpush2.bf16.msra.mxu0 0
    %1438 = vmatprep.subr.bf16.mxu0 0
    %1439 = vmatpush2.bf16.msra.mxu0 0
    %1440 = vmatprep.subr.bf16.mxu0 0
    %1441 = vmatpush2.bf16.msra.mxu0 0
    %1442 = vmatprep.mubr.bf16.mxu0 0
    %1443 = vmatmul.mubr.bf16.gmra.mxu0 %v1408
    %v1444 = vpop.f32.mrf.mxu0
    %v1445 = vadd.f32 0.0, %v1444
    %v1446 = vpop.f32.mrf.mxu0
    %v1447 = vpop.f32.mrf.mxu0
    %v1448 = vpop.f32.mrf.mxu0
    %1449 = vdwg.mxu0
    %v1450 = vadd.f32 %v1402, %v1445
    %v1451 = vxor.u32 %v1450, 2147483648
    %v1452 = vmul.f32 %v1451, 1.442695
    %v1453 = vpow.pop %v1452
    %v1454 = vadd.f32 %v1453, 1.0
    %v1455 = vrcp.pop %v1454
    %v1456 = vmul.f32 1.0, %v1455
    %v1457 = vtanh.pop %v1450
    %v1458 = vmul.f32 %v1456, %v1395
    %1460 = vrot.lane.b32.xlu0 %v1457, 64
    %v1461 = vpop.permute.xlu0 %1460
    %v1463 = vmul.f32 %v1456, %v1461
    %1465 = vrot.lane.b32.xlu0 %v1463, 32
    %v1466 = vpop.permute.xlu0 %1465
    %v1468 = vadd.f32 %v1458, %v1466
    %v1469 = vtanh.pop %v1468
    %1471 = vrot.lane.b32.xlu0 %v1469, 64
    %v1472 = vpop.permute.xlu0 %1471
    %v1474 = vmul.f32 %v1456, %v1472
    %v1475 = vld [vmem:[#allocation4 + $0x38] sm:$0xff]
    %v1476 = vpack.c.bf16 %v1474, %v1474
    %1478 = vrot.lane.b32.xlu0 %v1476, 32
    %v1479 = vpop.permute.xlu0 %1478
    %v1481 = vsel %vm215, %v1479, 0
    %1483 = vmatprep.subr.bf16.mxu0 0
    %1484 = vmatpush1.bf16.msra.mxu0 0
    %1485 = vmatprep.subr.bf16.mxu0 0
    %1486 = vmatpush1.bf16.msra.mxu0 0
    %1487 = vmatprep.subr.bf16.mxu0 0
    %1488 = vmatpush1.bf16.msra.mxu0 0
    %1489 = vmatprep.subr.bf16.mxu0 0
    %1490 = vmatpush1.bf16.msra.mxu0 0
    %1491 = vmatprep.subr.bf16.mxu0 0
    %1492 = vmatpush1.bf16.msra.mxu0 0
    %1493 = vmatprep.subr.bf16.mxu0 0
    %1494 = vmatpush1.bf16.msra.mxu0 0
    %1495 = vmatprep.subr.bf16.mxu0 0
    %1496 = vmatpush1.bf16.msra.mxu0 %v969
    %1497 = vmatprep.subr.bf16.mxu0 0
    %1498 = vmatpush1.bf16.msra.mxu0 %v968
    %1499 = vmatprep.subr.bf16.mxu0 0
    %1500 = vmatpush2.bf16.msra.mxu0 0
    %1501 = vmatprep.subr.bf16.mxu0 0
    %1502 = vmatpush2.bf16.msra.mxu0 0
    %1503 = vmatprep.subr.bf16.mxu0 0
    %1504 = vmatpush2.bf16.msra.mxu0 0
    %1505 = vmatprep.subr.bf16.mxu0 0
    %1506 = vmatpush2.bf16.msra.mxu0 0
    %1507 = vmatprep.subr.bf16.mxu0 0
    %1508 = vmatpush2.bf16.msra.mxu0 0
    %1509 = vmatprep.subr.bf16.mxu0 0
    %1510 = vmatpush2.bf16.msra.mxu0 0
    %1511 = vmatprep.subr.bf16.mxu0 0
    %1512 = vmatpush2.bf16.msra.mxu0 0
    %1513 = vmatprep.subr.bf16.mxu0 0
    %1514 = vmatpush2.bf16.msra.mxu0 0
    %1515 = vmatprep.mubr.bf16.mxu0 0
    %1516 = vmatmul.mubr.bf16.gmra.mxu0 %v1481
    %v1517 = vpop.f32.mrf.mxu0
    %v1518 = vadd.f32 0.0, %v1517
    %v1519 = vpop.f32.mrf.mxu0
    %v1520 = vpop.f32.mrf.mxu0
    %v1521 = vpop.f32.mrf.mxu0
    %1522 = vdwg.mxu0
    %v1523 = vadd.f32 %v1475, %v1518
    %v1524 = vxor.u32 %v1523, 2147483648
    %v1525 = vmul.f32 %v1524, 1.442695
    %v1526 = vpow.pop %v1525
    %v1527 = vadd.f32 %v1526, 1.0
    %v1528 = vrcp.pop %v1527
    %v1529 = vmul.f32 1.0, %v1528
    %v1530 = vtanh.pop %v1523
    %v1531 = vmul.f32 %v1529, %v1468
    %1533 = vrot.lane.b32.xlu0 %v1530, 64
    %v1534 = vpop.permute.xlu0 %1533
    %v1536 = vmul.f32 %v1529, %v1534
    %1538 = vrot.lane.b32.xlu0 %v1536, 32
    %v1539 = vpop.permute.xlu0 %1538
    %v1541 = vadd.f32 %v1531, %v1539
    %v1542 = vtanh.pop %v1541
    %1544 = vrot.lane.b32.xlu0 %v1542, 64
    %v1545 = vpop.permute.xlu0 %1544
    %v1547 = vmul.f32 %v1529, %v1545
    %v1548 = vpack.c.bf16 %v1547, %v1547
    %v1549 = vld [vmem:[%s7] sm:$0xf]
    %v1550 = vld [vmem:[%s7 + $0x4] sm:$0xf]
    %v1551 = vld [vmem:[%s7 + $0x8] sm:$0xf]
    %v1552 = vld [vmem:[%s7 + $0xc] sm:$0xf]
    %v1553 = vld [vmem:[%s9] sm:$0x1]
    %v1555 = vlaneseq
    %v1556 = vshrl.u32 %v1555, 7
    %v1557 = vsub.s32 0, %v1556
    %v1558 = vrot.slane %v1553, %v1557
    %1561 = vrot.lane.b32.xlu0 %v1548, 32
    %v1562 = vpop.permute.xlu0 %1561
    %v1567 = vunpack.c.l.b16 %v1549
    %v1568 = vunpack.c.l.b16 %v1550
    %v1569 = vunpack.c.l.b16 %v1551
    %v1570 = vunpack.c.l.b16 %v1552
    %v1571 = vpack.c.b16 %v1568, %v1567
    %v1572 = vpack.c.b16 %v1570, %v1569
    %v1576 = vsel %vm215, %v1562, 0
    %1578 = vmatprep.subr.bf16.mxu0 0
    %1579 = vmatpush1.bf16.msra.mxu0 0
    %1580 = vmatprep.subr.bf16.mxu0 0
    %1581 = vmatpush1.bf16.msra.mxu0 0
    %1582 = vmatprep.subr.bf16.mxu0 0
    %1583 = vmatpush1.bf16.msra.mxu0 0
    %1584 = vmatprep.subr.bf16.mxu0 0
    %1585 = vmatpush1.bf16.msra.mxu0 0
    %1586 = vmatprep.subr.bf16.mxu0 0
    %1587 = vmatpush1.bf16.msra.mxu0 0
    %1588 = vmatprep.subr.bf16.mxu0 0
    %1589 = vmatpush1.bf16.msra.mxu0 0
    %1590 = vmatprep.subr.bf16.mxu0 0
    %1591 = vmatpush1.bf16.msra.mxu0 %v1572
    %1592 = vmatprep.subr.bf16.mxu0 0
    %1593 = vmatpush1.bf16.msra.mxu0 %v1571
    %1594 = vmatprep.subr.bf16.mxu0 0
    %1595 = vmatpush2.bf16.msra.mxu0 0
    %1596 = vmatprep.subr.bf16.mxu0 0
    %1597 = vmatpush2.bf16.msra.mxu0 0
    %1598 = vmatprep.subr.bf16.mxu0 0
    %1599 = vmatpush2.bf16.msra.mxu0 0
    %1600 = vmatprep.subr.bf16.mxu0 0
    %1601 = vmatpush2.bf16.msra.mxu0 0
    %1602 = vmatprep.subr.bf16.mxu0 0
    %1603 = vmatpush2.bf16.msra.mxu0 0
    %1604 = vmatprep.subr.bf16.mxu0 0
    %1605 = vmatpush2.bf16.msra.mxu0 0
    %1606 = vmatprep.subr.bf16.mxu0 0
    %1607 = vmatpush2.bf16.msra.mxu0 0
    %1608 = vmatprep.subr.bf16.mxu0 0
    %1609 = vmatpush2.bf16.msra.mxu0 0
    %1610 = vmatprep.mubr.bf16.mxu0 0
    %1611 = vmatmul.mubr.bf16.gmra.mxu0 %v1576
    %v1612 = vpop.f32.mrf.mxu0
    %v1613 = vadd.f32 %v1558, %v1612
    %v1614 = vpop.f32.mrf.mxu0
    %v1615 = vpop.f32.mrf.mxu0
    %v1616 = vpop.f32.mrf.mxu0
    %1617 = vdwg.mxu0
    %v1618 = vld [vmem:[%s8] sm:$0xf]
    %v1619 = vld [vmem:[%s8 + $0x4] sm:$0xf]
    %v1620 = vld [vmem:[%s8 + $0x8] sm:$0xf]
    %v1621 = vld [vmem:[%s8 + $0xc] sm:$0xf]
    %v1626 = vunpack.c.l.b16 %v1618
    %v1627 = vunpack.c.l.b16 %v1619
    %v1628 = vunpack.c.l.b16 %v1620
    %v1629 = vunpack.c.l.b16 %v1621
    %v1630 = vpack.c.b16 %v1627, %v1626
    %v1631 = vpack.c.b16 %v1629, %v1628
    %1634 = vmatprep.subr.bf16.mxu0 0
    %1635 = vmatpush1.bf16.msra.mxu0 0
    %1636 = vmatprep.subr.bf16.mxu0 0
    %1637 = vmatpush1.bf16.msra.mxu0 0
    %1638 = vmatprep.subr.bf16.mxu0 0
    %1639 = vmatpush1.bf16.msra.mxu0 0
    %1640 = vmatprep.subr.bf16.mxu0 0
    %1641 = vmatpush1.bf16.msra.mxu0 0
    %1642 = vmatprep.subr.bf16.mxu0 0
    %1643 = vmatpush1.bf16.msra.mxu0 0
    %1644 = vmatprep.subr.bf16.mxu0 0
    %1645 = vmatpush1.bf16.msra.mxu0 0
    %1646 = vmatprep.subr.bf16.mxu0 0
    %1647 = vmatpush1.bf16.msra.mxu0 %v1631
    %1648 = vmatprep.subr.bf16.mxu0 0
    %1649 = vmatpush1.bf16.msra.mxu0 %v1630
    %1650 = vmatprep.subr.bf16.mxu0 0
    %1651 = vmatpush2.bf16.msra.mxu0 0
    %1652 = vmatprep.subr.bf16.mxu0 0
    %1653 = vmatpush2.bf16.msra.mxu0 0
    %1654 = vmatprep.subr.bf16.mxu0 0
    %1655 = vmatpush2.bf16.msra.mxu0 0
    %1656 = vmatprep.subr.bf16.mxu0 0
    %1657 = vmatpush2.bf16.msra.mxu0 0
    %1658 = vmatprep.subr.bf16.mxu0 0
    %1659 = vmatpush2.bf16.msra.mxu0 0
    %1660 = vmatprep.subr.bf16.mxu0 0
    %1661 = vmatpush2.bf16.msra.mxu0 0
    %1662 = vmatprep.subr.bf16.mxu0 0
    %1663 = vmatpush2.bf16.msra.mxu0 0
    %1664 = vmatprep.subr.bf16.mxu0 0
    %1665 = vmatpush2.bf16.msra.mxu0 0
    %1666 = vmatprep.mubr.bf16.mxu0 0
    %1667 = vmatmul.mubr.bf16.gmra.mxu0 %v217
    %v1668 = vpop.f32.mrf.mxu0
    %v1669 = vadd.f32 0.0, %v1668
    %v1670 = vpop.f32.mrf.mxu0
    %v1671 = vpop.f32.mrf.mxu0
    %v1672 = vpop.f32.mrf.mxu0
    %1673 = vdwg.mxu0
    %v1674 = vadd.f32 %v1613, %v1669
    %v1675 = vxor.u32 %v1674, 2147483648
    %v1676 = vmul.f32 %v1675, 1.442695
    %v1677 = vpow.pop %v1676
    %v1678 = vadd.f32 %v1677, 1.0
    %v1679 = vrcp.pop %v1678
    %v1680 = vmul.f32 1.0, %v1679
    %v1681 = vtanh.pop %v1674
    %v1682 = vmul.f32 %v1680, 0.0
    %1684 = vrot.lane.b32.xlu0 %v1681, 64
    %v1685 = vpop.permute.xlu0 %1684
    %v1687 = vmul.f32 %v1680, %v1685
    %1689 = vrot.lane.b32.xlu0 %v1687, 32
    %v1690 = vpop.permute.xlu0 %1689
    %v1692 = vadd.f32 %v1682, %v1690
    %v1693 = vtanh.pop %v1692
    %1695 = vrot.lane.b32.xlu0 %v1693, 64
    %v1696 = vpop.permute.xlu0 %1695
    %v1698 = vmul.f32 %v1680, %v1696
    %1700 = vrot.lane.b32.xlu0 %v1698, 32
    %v1701 = vpop.permute.xlu0 %1700
    %1703 = vst.msk [vmem:[#allocation2] sm:$0xff] %vm215, %v1701
    %v1704 = vpack.c.bf16 %v1698, %v1698
    %1706 = vrot.lane.b32.xlu0 %v1704, 32
    %v1707 = vpop.permute.xlu0 %1706
    %v1709 = vsel %vm215, %v1707, 0
    %1711 = vmatprep.subr.bf16.mxu0 0
    %1712 = vmatpush1.bf16.msra.mxu0 0
    %1713 = vmatprep.subr.bf16.mxu0 0
    %1714 = vmatpush1.bf16.msra.mxu0 0
    %1715 = vmatprep.subr.bf16.mxu0 0
    %1716 = vmatpush1.bf16.msra.mxu0 0
    %1717 = vmatprep.subr.bf16.mxu0 0
    %1718 = vmatpush1.bf16.msra.mxu0 0
    %1719 = vmatprep.subr.bf16.mxu0 0
    %1720 = vmatpush1.bf16.msra.mxu0 0
    %1721 = vmatprep.subr.bf16.mxu0 0
    %1722 = vmatpush1.bf16.msra.mxu0 0
    %1723 = vmatprep.subr.bf16.mxu0 0
    %1724 = vmatpush1.bf16.msra.mxu0 %v1631
    %1725 = vmatprep.subr.bf16.mxu0 0
    %1726 = vmatpush1.bf16.msra.mxu0 %v1630
    %1727 = vmatprep.subr.bf16.mxu0 0
    %1728 = vmatpush2.bf16.msra.mxu0 0
    %1729 = vmatprep.subr.bf16.mxu0 0
    %1730 = vmatpush2.bf16.msra.mxu0 0
    %1731 = vmatprep.subr.bf16.mxu0 0
    %1732 = vmatpush2.bf16.msra.mxu0 0
    %1733 = vmatprep.subr.bf16.mxu0 0
    %1734 = vmatpush2.bf16.msra.mxu0 0
    %1735 = vmatprep.subr.bf16.mxu0 0
    %1736 = vmatpush2.bf16.msra.mxu0 0
    %1737 = vmatprep.subr.bf16.mxu0 0
    %1738 = vmatpush2.bf16.msra.mxu0 0
    %1739 = vmatprep.subr.bf16.mxu0 0
    %1740 = vmatpush2.bf16.msra.mxu0 0
    %1741 = vmatprep.subr.bf16.mxu0 0
    %1742 = vmatpush2.bf16.msra.mxu0 0
    %1743 = vmatprep.mubr.bf16.mxu0 0
    %1744 = vmatmul.mubr.bf16.gmra.mxu0 %v1709
    %v1745 = vpop.f32.mrf.mxu0
    %v1746 = vadd.f32 0.0, %v1745
    %v1747 = vpop.f32.mrf.mxu0
    %v1748 = vpop.f32.mrf.mxu0
    %v1749 = vpop.f32.mrf.mxu0
    %1750 = vdwg.mxu0
    %v1751 = vadd.f32 %v1613, %v1746
    %v1752 = vxor.u32 %v1751, 2147483648
    %v1753 = vmul.f32 %v1752, 1.442695
    %v1754 = vpow.pop %v1753
    %v1755 = vadd.f32 %v1754, 1.0
    %v1756 = vrcp.pop %v1755
    %v1757 = vmul.f32 1.0, %v1756
    %v1758 = vtanh.pop %v1751
    %v1759 = vmul.f32 %v1757, %v1692
    %1761 = vrot.lane.b32.xlu0 %v1758, 64
    %v1762 = vpop.permute.xlu0 %1761
    %v1764 = vmul.f32 %v1757, %v1762
    %1766 = vrot.lane.b32.xlu0 %v1764, 32
    %v1767 = vpop.permute.xlu0 %1766
    %v1769 = vadd.f32 %v1759, %v1767
    %v1770 = vtanh.pop %v1769
    %1772 = vrot.lane.b32.xlu0 %v1770, 64
    %v1773 = vpop.permute.xlu0 %1772
    %v1775 = vmul.f32 %v1757, %v1773
    %1777 = vrot.lane.b32.xlu0 %v1775, 32
    %v1778 = vpop.permute.xlu0 %1777
    %1780 = vst.msk [vmem:[#allocation2 + $0x8] sm:$0xff] %vm215, %v1778
    %v1781 = vpack.c.bf16 %v1775, %v1775
    %1783 = vrot.lane.b32.xlu0 %v1781, 32
    %v1784 = vpop.permute.xlu0 %1783
    %v1786 = vsel %vm215, %v1784, 0
    %1788 = vmatprep.subr.bf16.mxu0 0
    %1789 = vmatpush1.bf16.msra.mxu0 0
    %1790 = vmatprep.subr.bf16.mxu0 0
    %1791 = vmatpush1.bf16.msra.mxu0 0
    %1792 = vmatprep.subr.bf16.mxu0 0
    %1793 = vmatpush1.bf16.msra.mxu0 0
    %1794 = vmatprep.subr.bf16.mxu0 0
    %1795 = vmatpush1.bf16.msra.mxu0 0
    %1796 = vmatprep.subr.bf16.mxu0 0
    %1797 = vmatpush1.bf16.msra.mxu0 0
    %1798 = vmatprep.subr.bf16.mxu0 0
    %1799 = vmatpush1.bf16.msra.mxu0 0
    %1800 = vmatprep.subr.bf16.mxu0 0
    %1801 = vmatpush1.bf16.msra.mxu0 %v1631
    %1802 = vmatprep.subr.bf16.mxu0 0
    %1803 = vmatpush1.bf16.msra.mxu0 %v1630
    %1804 = vmatprep.subr.bf16.mxu0 0
    %1805 = vmatpush2.bf16.msra.mxu0 0
    %1806 = vmatprep.subr.bf16.mxu0 0
    %1807 = vmatpush2.bf16.msra.mxu0 0
    %1808 = vmatprep.subr.bf16.mxu0 0
    %1809 = vmatpush2.bf16.msra.mxu0 0
    %1810 = vmatprep.subr.bf16.mxu0 0
    %1811 = vmatpush2.bf16.msra.mxu0 0
    %1812 = vmatprep.subr.bf16.mxu0 0
    %1813 = vmatpush2.bf16.msra.mxu0 0
    %1814 = vmatprep.subr.bf16.mxu0 0
    %1815 = vmatpush2.bf16.msra.mxu0 0
    %1816 = vmatprep.subr.bf16.mxu0 0
    %1817 = vmatpush2.bf16.msra.mxu0 0
    %1818 = vmatprep.subr.bf16.mxu0 0
    %1819 = vmatpush2.bf16.msra.mxu0 0
    %1820 = vmatprep.mubr.bf16.mxu0 0
    %1821 = vmatmul.mubr.bf16.gmra.mxu0 %v1786
    %v1822 = vpop.f32.mrf.mxu0
    %v1823 = vadd.f32 0.0, %v1822
    %v1824 = vpop.f32.mrf.mxu0
    %v1825 = vpop.f32.mrf.mxu0
    %v1826 = vpop.f32.mrf.mxu0
    %1827 = vdwg.mxu0
    %v1828 = vadd.f32 %v1613, %v1823
    %v1829 = vxor.u32 %v1828, 2147483648
    %v1830 = vmul.f32 %v1829, 1.442695
    %v1831 = vpow.pop %v1830
    %v1832 = vadd.f32 %v1831, 1.0
    %v1833 = vrcp.pop %v1832
    %v1834 = vmul.f32 1.0, %v1833
    %v1835 = vtanh.pop %v1828
    %v1836 = vmul.f32 %v1834, %v1769
    %1838 = vrot.lane.b32.xlu0 %v1835, 64
    %v1839 = vpop.permute.xlu0 %1838
    %v1841 = vmul.f32 %v1834, %v1839
    %1843 = vrot.lane.b32.xlu0 %v1841, 32
    %v1844 = vpop.permute.xlu0 %1843
    %v1846 = vadd.f32 %v1836, %v1844
    %v1847 = vtanh.pop %v1846
    %1849 = vrot.lane.b32.xlu0 %v1847, 64
    %v1850 = vpop.permute.xlu0 %1849
    %v1852 = vmul.f32 %v1834, %v1850
    %1854 = vrot.lane.b32.xlu0 %v1852, 32
    %v1855 = vpop.permute.xlu0 %1854
    %1857 = vst.msk [vmem:[#allocation2 + $0x10] sm:$0xff] %vm215, %v1855
    %v1858 = vpack.c.bf16 %v1852, %v1852
    %1860 = vrot.lane.b32.xlu0 %v1858, 32
    %v1861 = vpop.permute.xlu0 %1860
    %v1863 = vsel %vm215, %v1861, 0
    %1865 = vmatprep.subr.bf16.mxu0 0
    %1866 = vmatpush1.bf16.msra.mxu0 0
    %1867 = vmatprep.subr.bf16.mxu0 0
    %1868 = vmatpush1.bf16.msra.mxu0 0
    %1869 = vmatprep.subr.bf16.mxu0 0
    %1870 = vmatpush1.bf16.msra.mxu0 0
    %1871 = vmatprep.subr.bf16.mxu0 0
    %1872 = vmatpush1.bf16.msra.mxu0 0
    %1873 = vmatprep.subr.bf16.mxu0 0
    %1874 = vmatpush1.bf16.msra.mxu0 0
    %1875 = vmatprep.subr.bf16.mxu0 0
    %1876 = vmatpush1.bf16.msra.mxu0 0
    %1877 = vmatprep.subr.bf16.mxu0 0
    %1878 = vmatpush1.bf16.msra.mxu0 %v1631
    %1879 = vmatprep.subr.bf16.mxu0 0
    %1880 = vmatpush1.bf16.msra.mxu0 %v1630
    %1881 = vmatprep.subr.bf16.mxu0 0
    %1882 = vmatpush2.bf16.msra.mxu0 0
    %1883 = vmatprep.subr.bf16.mxu0 0
    %1884 = vmatpush2.bf16.msra.mxu0 0
    %1885 = vmatprep.subr.bf16.mxu0 0
    %1886 = vmatpush2.bf16.msra.mxu0 0
    %1887 = vmatprep.subr.bf16.mxu0 0
    %1888 = vmatpush2.bf16.msra.mxu0 0
    %1889 = vmatprep.subr.bf16.mxu0 0
    %1890 = vmatpush2.bf16.msra.mxu0 0
    %1891 = vmatprep.subr.bf16.mxu0 0
    %1892 = vmatpush2.bf16.msra.mxu0 0
    %1893 = vmatprep.subr.bf16.mxu0 0
    %1894 = vmatpush2.bf16.msra.mxu0 0
    %1895 = vmatprep.subr.bf16.mxu0 0
    %1896 = vmatpush2.bf16.msra.mxu0 0
    %1897 = vmatprep.mubr.bf16.mxu0 0
    %1898 = vmatmul.mubr.bf16.gmra.mxu0 %v1863
    %v1899 = vpop.f32.mrf.mxu0
    %v1900 = vadd.f32 0.0, %v1899
    %v1901 = vpop.f32.mrf.mxu0
    %v1902 = vpop.f32.mrf.mxu0
    %v1903 = vpop.f32.mrf.mxu0
    %1904 = vdwg.mxu0
    %v1905 = vadd.f32 %v1613, %v1900
    %v1906 = vxor.u32 %v1905, 2147483648
    %v1907 = vmul.f32 %v1906, 1.442695
    %v1908 = vpow.pop %v1907
    %v1909 = vadd.f32 %v1908, 1.0
    %v1910 = vrcp.pop %v1909
    %v1911 = vmul.f32 1.0, %v1910
    %v1912 = vtanh.pop %v1905
    %v1913 = vmul.f32 %v1911, %v1846
    %1915 = vrot.lane.b32.xlu0 %v1912, 64
    %v1916 = vpop.permute.xlu0 %1915
    %v1918 = vmul.f32 %v1911, %v1916
    %1920 = vrot.lane.b32.xlu0 %v1918, 32
    %v1921 = vpop.permute.xlu0 %1920
    %v1923 = vadd.f32 %v1913, %v1921
    %v1924 = vtanh.pop %v1923
    %1926 = vrot.lane.b32.xlu0 %v1924, 64
    %v1927 = vpop.permute.xlu0 %1926
    %v1929 = vmul.f32 %v1911, %v1927
    %1931 = vrot.lane.b32.xlu0 %v1929, 32
    %v1932 = vpop.permute.xlu0 %1931
    %1934 = vst.msk [vmem:[#allocation2 + $0x18] sm:$0xff] %vm215, %v1932
    %v1935 = vpack.c.bf16 %v1929, %v1929
    %1937 = vrot.lane.b32.xlu0 %v1935, 32
    %v1938 = vpop.permute.xlu0 %1937
    %v1940 = vsel %vm215, %v1938, 0
    %1942 = vmatprep.subr.bf16.mxu0 0
    %1943 = vmatpush1.bf16.msra.mxu0 0
    %1944 = vmatprep.subr.bf16.mxu0 0
    %1945 = vmatpush1.bf16.msra.mxu0 0
    %1946 = vmatprep.subr.bf16.mxu0 0
    %1947 = vmatpush1.bf16.msra.mxu0 0
    %1948 = vmatprep.subr.bf16.mxu0 0
    %1949 = vmatpush1.bf16.msra.mxu0 0
    %1950 = vmatprep.subr.bf16.mxu0 0
    %1951 = vmatpush1.bf16.msra.mxu0 0
    %1952 = vmatprep.subr.bf16.mxu0 0
    %1953 = vmatpush1.bf16.msra.mxu0 0
    %1954 = vmatprep.subr.bf16.mxu0 0
    %1955 = vmatpush1.bf16.msra.mxu0 %v1631
    %1956 = vmatprep.subr.bf16.mxu0 0
    %1957 = vmatpush1.bf16.msra.mxu0 %v1630
    %1958 = vmatprep.subr.bf16.mxu0 0
    %1959 = vmatpush2.bf16.msra.mxu0 0
    %1960 = vmatprep.subr.bf16.mxu0 0
    %1961 = vmatpush2.bf16.msra.mxu0 0
    %1962 = vmatprep.subr.bf16.mxu0 0
    %1963 = vmatpush2.bf16.msra.mxu0 0
    %1964 = vmatprep.subr.bf16.mxu0 0
    %1965 = vmatpush2.bf16.msra.mxu0 0
    %1966 = vmatprep.subr.bf16.mxu0 0
    %1967 = vmatpush2.bf16.msra.mxu0 0
    %1968 = vmatprep.subr.bf16.mxu0 0
    %1969 = vmatpush2.bf16.msra.mxu0 0
    %1970 = vmatprep.subr.bf16.mxu0 0
    %1971 = vmatpush2.bf16.msra.mxu0 0
    %1972 = vmatprep.subr.bf16.mxu0 0
    %1973 = vmatpush2.bf16.msra.mxu0 0
    %1974 = vmatprep.mubr.bf16.mxu0 0
    %1975 = vmatmul.mubr.bf16.gmra.mxu0 %v1940
    %v1976 = vpop.f32.mrf.mxu0
    %v1977 = vadd.f32 0.0, %v1976
    %v1978 = vpop.f32.mrf.mxu0
    %v1979 = vpop.f32.mrf.mxu0
    %v1980 = vpop.f32.mrf.mxu0
    %1981 = vdwg.mxu0
    %v1982 = vadd.f32 %v1613, %v1977
    %v1983 = vxor.u32 %v1982, 2147483648
    %v1984 = vmul.f32 %v1983, 1.442695
    %v1985 = vpow.pop %v1984
    %v1986 = vadd.f32 %v1985, 1.0
    %v1987 = vrcp.pop %v1986
    %v1988 = vmul.f32 1.0, %v1987
    %v1989 = vtanh.pop %v1982
    %v1990 = vmul.f32 %v1988, %v1923
    %1992 = vrot.lane.b32.xlu0 %v1989, 64
    %v1993 = vpop.permute.xlu0 %1992
    %v1995 = vmul.f32 %v1988, %v1993
    %1997 = vrot.lane.b32.xlu0 %v1995, 32
    %v1998 = vpop.permute.xlu0 %1997
    %v2000 = vadd.f32 %v1990, %v1998
    %v2001 = vtanh.pop %v2000
    %2003 = vrot.lane.b32.xlu0 %v2001, 64
    %v2004 = vpop.permute.xlu0 %2003
    %v2006 = vmul.f32 %v1988, %v2004
    %2008 = vrot.lane.b32.xlu0 %v2006, 32
    %v2009 = vpop.permute.xlu0 %2008
    %2011 = vst.msk [vmem:[#allocation2 + $0x20] sm:$0xff] %vm215, %v2009
    %v2012 = vpack.c.bf16 %v2006, %v2006
    %2014 = vrot.lane.b32.xlu0 %v2012, 32
    %v2015 = vpop.permute.xlu0 %2014
    %v2017 = vsel %vm215, %v2015, 0
    %2019 = vmatprep.subr.bf16.mxu0 0
    %2020 = vmatpush1.bf16.msra.mxu0 0
    %2021 = vmatprep.subr.bf16.mxu0 0
    %2022 = vmatpush1.bf16.msra.mxu0 0
    %2023 = vmatprep.subr.bf16.mxu0 0
    %2024 = vmatpush1.bf16.msra.mxu0 0
    %2025 = vmatprep.subr.bf16.mxu0 0
    %2026 = vmatpush1.bf16.msra.mxu0 0
    %2027 = vmatprep.subr.bf16.mxu0 0
    %2028 = vmatpush1.bf16.msra.mxu0 0
    %2029 = vmatprep.subr.bf16.mxu0 0
    %2030 = vmatpush1.bf16.msra.mxu0 0
    %2031 = vmatprep.subr.bf16.mxu0 0
    %2032 = vmatpush1.bf16.msra.mxu0 %v1631
    %2033 = vmatprep.subr.bf16.mxu0 0
    %2034 = vmatpush1.bf16.msra.mxu0 %v1630
    %2035 = vmatprep.subr.bf16.mxu0 0
    %2036 = vmatpush2.bf16.msra.mxu0 0
    %2037 = vmatprep.subr.bf16.mxu0 0
    %2038 = vmatpush2.bf16.msra.mxu0 0
    %2039 = vmatprep.subr.bf16.mxu0 0
    %2040 = vmatpush2.bf16.msra.mxu0 0
    %2041 = vmatprep.subr.bf16.mxu0 0
    %2042 = vmatpush2.bf16.msra.mxu0 0
    %2043 = vmatprep.subr.bf16.mxu0 0
    %2044 = vmatpush2.bf16.msra.mxu0 0
    %2045 = vmatprep.subr.bf16.mxu0 0
    %2046 = vmatpush2.bf16.msra.mxu0 0
    %2047 = vmatprep.subr.bf16.mxu0 0
    %2048 = vmatpush2.bf16.msra.mxu0 0
    %2049 = vmatprep.subr.bf16.mxu0 0
    %2050 = vmatpush2.bf16.msra.mxu0 0
    %2051 = vmatprep.mubr.bf16.mxu0 0
    %2052 = vmatmul.mubr.bf16.gmra.mxu0 %v2017
    %v2053 = vpop.f32.mrf.mxu0
    %v2054 = vadd.f32 0.0, %v2053
    %v2055 = vpop.f32.mrf.mxu0
    %v2056 = vpop.f32.mrf.mxu0
    %v2057 = vpop.f32.mrf.mxu0
    %2058 = vdwg.mxu0
    %v2059 = vadd.f32 %v1613, %v2054
    %v2060 = vxor.u32 %v2059, 2147483648
    %v2061 = vmul.f32 %v2060, 1.442695
    %v2062 = vpow.pop %v2061
    %v2063 = vadd.f32 %v2062, 1.0
    %v2064 = vrcp.pop %v2063
    %v2065 = vmul.f32 1.0, %v2064
    %v2066 = vtanh.pop %v2059
    %v2067 = vmul.f32 %v2065, %v2000
    %2069 = vrot.lane.b32.xlu0 %v2066, 64
    %v2070 = vpop.permute.xlu0 %2069
    %v2072 = vmul.f32 %v2065, %v2070
    %2074 = vrot.lane.b32.xlu0 %v2072, 32
    %v2075 = vpop.permute.xlu0 %2074
    %v2077 = vadd.f32 %v2067, %v2075
    %v2078 = vtanh.pop %v2077
    %2080 = vrot.lane.b32.xlu0 %v2078, 64
    %v2081 = vpop.permute.xlu0 %2080
    %v2083 = vmul.f32 %v2065, %v2081
    %2085 = vrot.lane.b32.xlu0 %v2083, 32
    %v2086 = vpop.permute.xlu0 %2085
    %2088 = vst.msk [vmem:[#allocation2 + $0x28] sm:$0xff] %vm215, %v2086
    %v2089 = vpack.c.bf16 %v2083, %v2083
    %2091 = vrot.lane.b32.xlu0 %v2089, 32
    %v2092 = vpop.permute.xlu0 %2091
    %v2094 = vsel %vm215, %v2092, 0
    %2096 = vmatprep.subr.bf16.mxu0 0
    %2097 = vmatpush1.bf16.msra.mxu0 0
    %2098 = vmatprep.subr.bf16.mxu0 0
    %2099 = vmatpush1.bf16.msra.mxu0 0
    %2100 = vmatprep.subr.bf16.mxu0 0
    %2101 = vmatpush1.bf16.msra.mxu0 0
    %2102 = vmatprep.subr.bf16.mxu0 0
    %2103 = vmatpush1.bf16.msra.mxu0 0
    %2104 = vmatprep.subr.bf16.mxu0 0
    %2105 = vmatpush1.bf16.msra.mxu0 0
    %2106 = vmatprep.subr.bf16.mxu0 0
    %2107 = vmatpush1.bf16.msra.mxu0 0
    %2108 = vmatprep.subr.bf16.mxu0 0
    %2109 = vmatpush1.bf16.msra.mxu0 %v1631
    %2110 = vmatprep.subr.bf16.mxu0 0
    %2111 = vmatpush1.bf16.msra.mxu0 %v1630
    %2112 = vmatprep.subr.bf16.mxu0 0
    %2113 = vmatpush2.bf16.msra.mxu0 0
    %2114 = vmatprep.subr.bf16.mxu0 0
    %2115 = vmatpush2.bf16.msra.mxu0 0
    %2116 = vmatprep.subr.bf16.mxu0 0
    %2117 = vmatpush2.bf16.msra.mxu0 0
    %2118 = vmatprep.subr.bf16.mxu0 0
    %2119 = vmatpush2.bf16.msra.mxu0 0
    %2120 = vmatprep.subr.bf16.mxu0 0
    %2121 = vmatpush2.bf16.msra.mxu0 0
    %2122 = vmatprep.subr.bf16.mxu0 0
    %2123 = vmatpush2.bf16.msra.mxu0 0
    %2124 = vmatprep.subr.bf16.mxu0 0
    %2125 = vmatpush2.bf16.msra.mxu0 0
    %2126 = vmatprep.subr.bf16.mxu0 0
    %2127 = vmatpush2.bf16.msra.mxu0 0
    %2128 = vmatprep.mubr.bf16.mxu0 0
    %2129 = vmatmul.mubr.bf16.gmra.mxu0 %v2094
    %v2130 = vpop.f32.mrf.mxu0
    %v2131 = vadd.f32 0.0, %v2130
    %v2132 = vpop.f32.mrf.mxu0
    %v2133 = vpop.f32.mrf.mxu0
    %v2134 = vpop.f32.mrf.mxu0
    %2135 = vdwg.mxu0
    %v2136 = vadd.f32 %v1613, %v2131
    %v2137 = vxor.u32 %v2136, 2147483648
    %v2138 = vmul.f32 %v2137, 1.442695
    %v2139 = vpow.pop %v2138
    %v2140 = vadd.f32 %v2139, 1.0
    %v2141 = vrcp.pop %v2140
    %v2142 = vmul.f32 1.0, %v2141
    %v2143 = vtanh.pop %v2136
    %v2144 = vmul.f32 %v2142, %v2077
    %2146 = vrot.lane.b32.xlu0 %v2143, 64
    %v2147 = vpop.permute.xlu0 %2146
    %v2149 = vmul.f32 %v2142, %v2147
    %2151 = vrot.lane.b32.xlu0 %v2149, 32
    %v2152 = vpop.permute.xlu0 %2151
    %v2154 = vadd.f32 %v2144, %v2152
    %v2155 = vtanh.pop %v2154
    %2157 = vrot.lane.b32.xlu0 %v2155, 64
    %v2158 = vpop.permute.xlu0 %2157
    %v2160 = vmul.f32 %v2142, %v2158
    %2162 = vrot.lane.b32.xlu0 %v2160, 32
    %v2163 = vpop.permute.xlu0 %2162
    %2165 = vst.msk [vmem:[#allocation2 + $0x30] sm:$0xff] %vm215, %v2163
    %v2166 = vpack.c.bf16 %v2160, %v2160
    %2168 = vrot.lane.b32.xlu0 %v2166, 32
    %v2169 = vpop.permute.xlu0 %2168
    %v2171 = vsel %vm215, %v2169, 0
    %2173 = vmatprep.subr.bf16.mxu0 0
    %2174 = vmatpush1.bf16.msra.mxu0 0
    %2175 = vmatprep.subr.bf16.mxu0 0
    %2176 = vmatpush1.bf16.msra.mxu0 0
    %2177 = vmatprep.subr.bf16.mxu0 0
    %2178 = vmatpush1.bf16.msra.mxu0 0
    %2179 = vmatprep.subr.bf16.mxu0 0
    %2180 = vmatpush1.bf16.msra.mxu0 0
    %2181 = vmatprep.subr.bf16.mxu0 0
    %2182 = vmatpush1.bf16.msra.mxu0 0
    %2183 = vmatprep.subr.bf16.mxu0 0
    %2184 = vmatpush1.bf16.msra.mxu0 0
    %2185 = vmatprep.subr.bf16.mxu0 0
    %2186 = vmatpush1.bf16.msra.mxu0 %v1631
    %2187 = vmatprep.subr.bf16.mxu0 0
    %2188 = vmatpush1.bf16.msra.mxu0 %v1630
    %2189 = vmatprep.subr.bf16.mxu0 0
    %2190 = vmatpush2.bf16.msra.mxu0 0
    %2191 = vmatprep.subr.bf16.mxu0 0
    %2192 = vmatpush2.bf16.msra.mxu0 0
    %2193 = vmatprep.subr.bf16.mxu0 0
    %2194 = vmatpush2.bf16.msra.mxu0 0
    %2195 = vmatprep.subr.bf16.mxu0 0
    %2196 = vmatpush2.bf16.msra.mxu0 0
    %2197 = vmatprep.subr.bf16.mxu0 0
    %2198 = vmatpush2.bf16.msra.mxu0 0
    %2199 = vmatprep.subr.bf16.mxu0 0
    %2200 = vmatpush2.bf16.msra.mxu0 0
    %2201 = vmatprep.subr.bf16.mxu0 0
    %2202 = vmatpush2.bf16.msra.mxu0 0
    %2203 = vmatprep.subr.bf16.mxu0 0
    %2204 = vmatpush2.bf16.msra.mxu0 0
    %2205 = vmatprep.mubr.bf16.mxu0 0
    %2206 = vmatmul.mubr.bf16.gmra.mxu0 %v2171
    %v2207 = vpop.f32.mrf.mxu0
    %v2208 = vadd.f32 0.0, %v2207
    %v2209 = vpop.f32.mrf.mxu0
    %v2210 = vpop.f32.mrf.mxu0
    %v2211 = vpop.f32.mrf.mxu0
    %2212 = vdwg.mxu0
    %v2213 = vadd.f32 %v1613, %v2208
    %v2214 = vxor.u32 %v2213, 2147483648
    %v2215 = vmul.f32 %v2214, 1.442695
    %v2216 = vpow.pop %v2215
    %v2217 = vadd.f32 %v2216, 1.0
    %v2218 = vrcp.pop %v2217
    %v2219 = vmul.f32 1.0, %v2218
    %v2220 = vtanh.pop %v2213
    %v2221 = vmul.f32 %v2219, %v2154
    %2223 = vrot.lane.b32.xlu0 %v2220, 64
    %v2224 = vpop.permute.xlu0 %2223
    %v2226 = vmul.f32 %v2219, %v2224
    %2228 = vrot.lane.b32.xlu0 %v2226, 32
    %v2229 = vpop.permute.xlu0 %2228
    %v2231 = vadd.f32 %v2221, %v2229
    %v2232 = vtanh.pop %v2231
    %2234 = vrot.lane.b32.xlu0 %v2232, 64
    %v2235 = vpop.permute.xlu0 %2234
    %v2237 = vmul.f32 %v2219, %v2235
    %2239 = vrot.lane.b32.xlu0 %v2237, 32
    %v2240 = vpop.permute.xlu0 %2239
    %2242 = vst.msk [vmem:[#allocation2 + $0x38] sm:$0xff] %vm215, %v2240
    %v2243 = vld [vmem:[%s10] sm:$0xf]
    %v2244 = vld [vmem:[%s10 + $0x4] sm:$0xf]
    %v2245 = vld [vmem:[%s10 + $0x8] sm:$0xf]
    %v2246 = vld [vmem:[%s10 + $0xc] sm:$0xf]
    %v2247 = vld [vmem:[%s12] sm:$0x1]
    %v2248 = vld [vmem:[%s11] sm:$0xf]
    %v2249 = vld [vmem:[%s11 + $0x4] sm:$0xf]
    %v2250 = vld [vmem:[%s11 + $0x8] sm:$0xf]
    %v2251 = vld [vmem:[%s11 + $0xc] sm:$0xf]
    %v2252 = vld [vmem:[#allocation2] sm:$0xff]
    %v2253 = vld [vmem:[#allocation2 + $0x8] sm:$0xff]
    %v2254 = vld [vmem:[#allocation2 + $0x10] sm:$0xff]
    %v2255 = vld [vmem:[#allocation2 + $0x18] sm:$0xff]
    %v2256 = vld [vmem:[#allocation2 + $0x20] sm:$0xff]
    %v2257 = vld [vmem:[#allocation2 + $0x28] sm:$0xff]
    %v2258 = vld [vmem:[#allocation2 + $0x30] sm:$0xff]
    %v2259 = vld [vmem:[#allocation2 + $0x38] sm:$0xff]
    %v2260 = vpack.c.bf16 %v2253, %v2252
    %v2261 = vpack.c.bf16 %v2255, %v2254
    %v2262 = vpack.c.bf16 %v2257, %v2256
    %v2263 = vpack.c.bf16 %v2259, %v2258
    %v2265 = vlaneseq
    %v2266 = vshrl.u32 %v2265, 7
    %v2267 = vsub.s32 0, %v2266
    %v2268 = vrot.slane %v2247, %v2267
    %v2274 = vunpack.c.l.b16 %v2243
    %v2275 = vunpack.c.l.b16 %v2244
    %v2276 = vunpack.c.l.b16 %v2245
    %v2277 = vunpack.c.l.b16 %v2246
    %v2278 = vpack.c.b16 %v2275, %v2274
    %v2279 = vpack.c.b16 %v2277, %v2276
    %v2283 = vsel %vm215, %v2260, 0
    %v2286 = vsel %vm215, %v2261, 0
    %v2289 = vsel %vm215, %v2262, 0
    %v2292 = vsel %vm215, %v2263, 0
    %2294 = vmatprep.subr.bf16.mxu0 0
    %2295 = vmatpush1.bf16.msra.mxu0 0
    %2296 = vmatprep.subr.bf16.mxu0 0
    %2297 = vmatpush1.bf16.msra.mxu0 0
    %2298 = vmatprep.subr.bf16.mxu0 0
    %2299 = vmatpush1.bf16.msra.mxu0 0
    %2300 = vmatprep.subr.bf16.mxu0 0
    %2301 = vmatpush1.bf16.msra.mxu0 0
    %2302 = vmatprep.subr.bf16.mxu0 0
    %2303 = vmatpush1.bf16.msra.mxu0 0
    %2304 = vmatprep.subr.bf16.mxu0 0
    %2305 = vmatpush1.bf16.msra.mxu0 0
    %2306 = vmatprep.subr.bf16.mxu0 0
    %2307 = vmatpush1.bf16.msra.mxu0 %v2279
    %2308 = vmatprep.subr.bf16.mxu0 0
    %2309 = vmatpush1.bf16.msra.mxu0 %v2278
    %2310 = vmatprep.subr.bf16.mxu0 0
    %2311 = vmatpush2.bf16.msra.mxu0 0
    %2312 = vmatprep.subr.bf16.mxu0 0
    %2313 = vmatpush2.bf16.msra.mxu0 0
    %2314 = vmatprep.subr.bf16.mxu0 0
    %2315 = vmatpush2.bf16.msra.mxu0 0
    %2316 = vmatprep.subr.bf16.mxu0 0
    %2317 = vmatpush2.bf16.msra.mxu0 0
    %2318 = vmatprep.subr.bf16.mxu0 0
    %2319 = vmatpush2.bf16.msra.mxu0 0
    %2320 = vmatprep.subr.bf16.mxu0 0
    %2321 = vmatpush2.bf16.msra.mxu0 0
    %2322 = vmatprep.subr.bf16.mxu0 0
    %2323 = vmatpush2.bf16.msra.mxu0 0
    %2324 = vmatprep.subr.bf16.mxu0 0
    %2325 = vmatpush2.bf16.msra.mxu0 0
    %2326 = vmatprep.mubr.bf16.mxu0 0
    %2327 = vmatmul.mubr.bf16.gmra.mxu0 %v2283
    %v2328 = vpop.f32.mrf.mxu0
    %v2329 = vadd.f32 %v2268, %v2328
    %v2330 = vpop.f32.mrf.mxu0
    %v2331 = vpop.f32.mrf.mxu0
    %v2332 = vadd.f32 %v2268, %v2331
    %v2333 = vpop.f32.mrf.mxu0
    %2334 = vmatprep.mubr.bf16.mxu0 0
    %2335 = vmatmul.mubr.bf16.gmra.mxu0 %v2286
    %v2336 = vpop.f32.mrf.mxu0
    %v2337 = vadd.f32 %v2268, %v2336
    %v2338 = vpop.f32.mrf.mxu0
    %v2339 = vpop.f32.mrf.mxu0
    %v2340 = vadd.f32 %v2268, %v2339
    %v2341 = vpop.f32.mrf.mxu0
    %2342 = vmatprep.mubr.bf16.mxu0 0
    %2343 = vmatmul.mubr.bf16.gmra.mxu0 %v2289
    %v2344 = vpop.f32.mrf.mxu0
    %v2345 = vadd.f32 %v2268, %v2344
    %v2346 = vpop.f32.mrf.mxu0
    %v2347 = vpop.f32.mrf.mxu0
    %v2348 = vadd.f32 %v2268, %v2347
    %v2349 = vpop.f32.mrf.mxu0
    %2350 = vmatprep.mubr.bf16.mxu0 0
    %2351 = vmatmul.mubr.bf16.gmra.mxu0 %v2292
    %v2352 = vpop.f32.mrf.mxu0
    %v2353 = vadd.f32 %v2268, %v2352
    %v2354 = vpop.f32.mrf.mxu0
    %v2355 = vpop.f32.mrf.mxu0
    %v2356 = vadd.f32 %v2268, %v2355
    %v2357 = vpop.f32.mrf.mxu0
    %2358 = vdwg.mxu0
    %2359 = vst [vmem:[#allocation4] sm:$0xff] %v2329
    %2360 = vst [vmem:[#allocation4 + $0x8] sm:$0xff] %v2332
    %2361 = vst [vmem:[#allocation4 + $0x10] sm:$0xff] %v2337
    %2362 = vst [vmem:[#allocation4 + $0x18] sm:$0xff] %v2340
    %2363 = vst [vmem:[#allocation4 + $0x20] sm:$0xff] %v2345
    %2364 = vst [vmem:[#allocation4 + $0x28] sm:$0xff] %v2348
    %2365 = vst [vmem:[#allocation4 + $0x30] sm:$0xff] %v2353
    %2366 = vst [vmem:[#allocation4 + $0x38] sm:$0xff] %v2356
    %v2367 = vld [vmem:[#allocation4] sm:$0xff]
    %v2372 = vunpack.c.l.b16 %v2248
    %v2373 = vunpack.c.l.b16 %v2249
    %v2374 = vunpack.c.l.b16 %v2250
    %v2375 = vunpack.c.l.b16 %v2251
    %v2376 = vpack.c.b16 %v2373, %v2372
    %v2377 = vpack.c.b16 %v2375, %v2374
    %2380 = vmatprep.subr.bf16.mxu0 0
    %2381 = vmatpush1.bf16.msra.mxu0 0
    %2382 = vmatprep.subr.bf16.mxu0 0
    %2383 = vmatpush1.bf16.msra.mxu0 0
    %2384 = vmatprep.subr.bf16.mxu0 0
    %2385 = vmatpush1.bf16.msra.mxu0 0
    %2386 = vmatprep.subr.bf16.mxu0 0
    %2387 = vmatpush1.bf16.msra.mxu0 0
    %2388 = vmatprep.subr.bf16.mxu0 0
    %2389 = vmatpush1.bf16.msra.mxu0 0
    %2390 = vmatprep.subr.bf16.mxu0 0
    %2391 = vmatpush1.bf16.msra.mxu0 0
    %2392 = vmatprep.subr.bf16.mxu0 0
    %2393 = vmatpush1.bf16.msra.mxu0 %v2377
    %2394 = vmatprep.subr.bf16.mxu0 0
    %2395 = vmatpush1.bf16.msra.mxu0 %v2376
    %2396 = vmatprep.subr.bf16.mxu0 0
    %2397 = vmatpush2.bf16.msra.mxu0 0
    %2398 = vmatprep.subr.bf16.mxu0 0
    %2399 = vmatpush2.bf16.msra.mxu0 0
    %2400 = vmatprep.subr.bf16.mxu0 0
    %2401 = vmatpush2.bf16.msra.mxu0 0
    %2402 = vmatprep.subr.bf16.mxu0 0
    %2403 = vmatpush2.bf16.msra.mxu0 0
    %2404 = vmatprep.subr.bf16.mxu0 0
    %2405 = vmatpush2.bf16.msra.mxu0 0
    %2406 = vmatprep.subr.bf16.mxu0 0
    %2407 = vmatpush2.bf16.msra.mxu0 0
    %2408 = vmatprep.subr.bf16.mxu0 0
    %2409 = vmatpush2.bf16.msra.mxu0 0
    %2410 = vmatprep.subr.bf16.mxu0 0
    %2411 = vmatpush2.bf16.msra.mxu0 0
    %2412 = vmatprep.mubr.bf16.mxu0 0
    %2413 = vmatmul.mubr.bf16.gmra.mxu0 %v217
    %v2414 = vpop.f32.mrf.mxu0
    %v2415 = vadd.f32 0.0, %v2414
    %v2416 = vpop.f32.mrf.mxu0
    %v2417 = vpop.f32.mrf.mxu0
    %v2418 = vpop.f32.mrf.mxu0
    %2419 = vdwg.mxu0
    %v2420 = vadd.f32 %v2367, %v2415
    %v2421 = vxor.u32 %v2420, 2147483648
    %v2422 = vmul.f32 %v2421, 1.442695
    %v2423 = vpow.pop %v2422
    %v2424 = vadd.f32 %v2423, 1.0
    %v2425 = vrcp.pop %v2424
    %v2426 = vmul.f32 1.0, %v2425
    %v2427 = vtanh.pop %v2420
    %v2428 = vmul.f32 %v2426, 0.0
    %2430 = vrot.lane.b32.xlu0 %v2427, 64
    %v2431 = vpop.permute.xlu0 %2430
    %v2433 = vmul.f32 %v2426, %v2431
    %2435 = vrot.lane.b32.xlu0 %v2433, 32
    %v2436 = vpop.permute.xlu0 %2435
    %v2438 = vadd.f32 %v2428, %v2436
    %v2439 = vtanh.pop %v2438
    %2441 = vrot.lane.b32.xlu0 %v2439, 64
    %v2442 = vpop.permute.xlu0 %2441
    %v2444 = vmul.f32 %v2426, %v2442
    %2446 = vrot.lane.b32.xlu0 %v2444, 32
    %v2447 = vpop.permute.xlu0 %2446
    %2449 = vst.msk [vmem:[#allocation3] sm:$0xff] %vm215, %v2447
    %v2450 = vld [vmem:[#allocation4 + $0x8] sm:$0xff]
    %v2451 = vpack.c.bf16 %v2444, %v2444
    %2453 = vrot.lane.b32.xlu0 %v2451, 32
    %v2454 = vpop.permute.xlu0 %2453
    %v2456 = vsel %vm215, %v2454, 0
    %2458 = vmatprep.subr.bf16.mxu0 0
    %2459 = vmatpush1.bf16.msra.mxu0 0
    %2460 = vmatprep.subr.bf16.mxu0 0
    %2461 = vmatpush1.bf16.msra.mxu0 0
    %2462 = vmatprep.subr.bf16.mxu0 0
    %2463 = vmatpush1.bf16.msra.mxu0 0
    %2464 = vmatprep.subr.bf16.mxu0 0
    %2465 = vmatpush1.bf16.msra.mxu0 0
    %2466 = vmatprep.subr.bf16.mxu0 0
    %2467 = vmatpush1.bf16.msra.mxu0 0
    %2468 = vmatprep.subr.bf16.mxu0 0
    %2469 = vmatpush1.bf16.msra.mxu0 0
    %2470 = vmatprep.subr.bf16.mxu0 0
    %2471 = vmatpush1.bf16.msra.mxu0 %v2377
    %2472 = vmatprep.subr.bf16.mxu0 0
    %2473 = vmatpush1.bf16.msra.mxu0 %v2376
    %2474 = vmatprep.subr.bf16.mxu0 0
    %2475 = vmatpush2.bf16.msra.mxu0 0
    %2476 = vmatprep.subr.bf16.mxu0 0
    %2477 = vmatpush2.bf16.msra.mxu0 0
    %2478 = vmatprep.subr.bf16.mxu0 0
    %2479 = vmatpush2.bf16.msra.mxu0 0
    %2480 = vmatprep.subr.bf16.mxu0 0
    %2481 = vmatpush2.bf16.msra.mxu0 0
    %2482 = vmatprep.subr.bf16.mxu0 0
    %2483 = vmatpush2.bf16.msra.mxu0 0
    %2484 = vmatprep.subr.bf16.mxu0 0
    %2485 = vmatpush2.bf16.msra.mxu0 0
    %2486 = vmatprep.subr.bf16.mxu0 0
    %2487 = vmatpush2.bf16.msra.mxu0 0
    %2488 = vmatprep.subr.bf16.mxu0 0
    %2489 = vmatpush2.bf16.msra.mxu0 0
    %2490 = vmatprep.mubr.bf16.mxu0 0
    %2491 = vmatmul.mubr.bf16.gmra.mxu0 %v2456
    %v2492 = vpop.f32.mrf.mxu0
    %v2493 = vadd.f32 0.0, %v2492
    %v2494 = vpop.f32.mrf.mxu0
    %v2495 = vpop.f32.mrf.mxu0
    %v2496 = vpop.f32.mrf.mxu0
    %2497 = vdwg.mxu0
    %v2498 = vadd.f32 %v2450, %v2493
    %v2499 = vxor.u32 %v2498, 2147483648
    %v2500 = vmul.f32 %v2499, 1.442695
    %v2501 = vpow.pop %v2500
    %v2502 = vadd.f32 %v2501, 1.0
    %v2503 = vrcp.pop %v2502
    %v2504 = vmul.f32 1.0, %v2503
    %v2505 = vtanh.pop %v2498
    %v2506 = vmul.f32 %v2504, %v2438
    %2508 = vrot.lane.b32.xlu0 %v2505, 64
    %v2509 = vpop.permute.xlu0 %2508
    %v2511 = vmul.f32 %v2504, %v2509
    %2513 = vrot.lane.b32.xlu0 %v2511, 32
    %v2514 = vpop.permute.xlu0 %2513
    %v2516 = vadd.f32 %v2506, %v2514
    %v2517 = vtanh.pop %v2516
    %2519 = vrot.lane.b32.xlu0 %v2517, 64
    %v2520 = vpop.permute.xlu0 %2519
    %v2522 = vmul.f32 %v2504, %v2520
    %2524 = vrot.lane.b32.xlu0 %v2522, 32
    %v2525 = vpop.permute.xlu0 %2524
    %2527 = vst.msk [vmem:[#allocation3 + $0x8] sm:$0xff] %vm215, %v2525
    %v2528 = vld [vmem:[#allocation4 + $0x10] sm:$0xff]
    %v2529 = vpack.c.bf16 %v2522, %v2522
    %2531 = vrot.lane.b32.xlu0 %v2529, 32
    %v2532 = vpop.permute.xlu0 %2531
    %v2534 = vsel %vm215, %v2532, 0
    %2536 = vmatprep.subr.bf16.mxu0 0
    %2537 = vmatpush1.bf16.msra.mxu0 0
    %2538 = vmatprep.subr.bf16.mxu0 0
    %2539 = vmatpush1.bf16.msra.mxu0 0
    %2540 = vmatprep.subr.bf16.mxu0 0
    %2541 = vmatpush1.bf16.msra.mxu0 0
    %2542 = vmatprep.subr.bf16.mxu0 0
    %2543 = vmatpush1.bf16.msra.mxu0 0
    %2544 = vmatprep.subr.bf16.mxu0 0
    %2545 = vmatpush1.bf16.msra.mxu0 0
    %2546 = vmatprep.subr.bf16.mxu0 0
    %2547 = vmatpush1.bf16.msra.mxu0 0
    %2548 = vmatprep.subr.bf16.mxu0 0
    %2549 = vmatpush1.bf16.msra.mxu0 %v2377
    %2550 = vmatprep.subr.bf16.mxu0 0
    %2551 = vmatpush1.bf16.msra.mxu0 %v2376
    %2552 = vmatprep.subr.bf16.mxu0 0
    %2553 = vmatpush2.bf16.msra.mxu0 0
    %2554 = vmatprep.subr.bf16.mxu0 0
    %2555 = vmatpush2.bf16.msra.mxu0 0
    %2556 = vmatprep.subr.bf16.mxu0 0
    %2557 = vmatpush2.bf16.msra.mxu0 0
    %2558 = vmatprep.subr.bf16.mxu0 0
    %2559 = vmatpush2.bf16.msra.mxu0 0
    %2560 = vmatprep.subr.bf16.mxu0 0
    %2561 = vmatpush2.bf16.msra.mxu0 0
    %2562 = vmatprep.subr.bf16.mxu0 0
    %2563 = vmatpush2.bf16.msra.mxu0 0
    %2564 = vmatprep.subr.bf16.mxu0 0
    %2565 = vmatpush2.bf16.msra.mxu0 0
    %2566 = vmatprep.subr.bf16.mxu0 0
    %2567 = vmatpush2.bf16.msra.mxu0 0
    %2568 = vmatprep.mubr.bf16.mxu0 0
    %2569 = vmatmul.mubr.bf16.gmra.mxu0 %v2534
    %v2570 = vpop.f32.mrf.mxu0
    %v2571 = vadd.f32 0.0, %v2570
    %v2572 = vpop.f32.mrf.mxu0
    %v2573 = vpop.f32.mrf.mxu0
    %v2574 = vpop.f32.mrf.mxu0
    %2575 = vdwg.mxu0
    %v2576 = vadd.f32 %v2528, %v2571
    %v2577 = vxor.u32 %v2576, 2147483648
    %v2578 = vmul.f32 %v2577, 1.442695
    %v2579 = vpow.pop %v2578
    %v2580 = vadd.f32 %v2579, 1.0
    %v2581 = vrcp.pop %v2580
    %v2582 = vmul.f32 1.0, %v2581
    %v2583 = vtanh.pop %v2576
    %v2584 = vmul.f32 %v2582, %v2516
    %2586 = vrot.lane.b32.xlu0 %v2583, 64
    %v2587 = vpop.permute.xlu0 %2586
    %v2589 = vmul.f32 %v2582, %v2587
    %2591 = vrot.lane.b32.xlu0 %v2589, 32
    %v2592 = vpop.permute.xlu0 %2591
    %v2594 = vadd.f32 %v2584, %v2592
    %v2595 = vtanh.pop %v2594
    %2597 = vrot.lane.b32.xlu0 %v2595, 64
    %v2598 = vpop.permute.xlu0 %2597
    %v2600 = vmul.f32 %v2582, %v2598
    %2602 = vrot.lane.b32.xlu0 %v2600, 32
    %v2603 = vpop.permute.xlu0 %2602
    %2605 = vst.msk [vmem:[#allocation3 + $0x10] sm:$0xff] %vm215, %v2603
    %v2606 = vld [vmem:[#allocation4 + $0x18] sm:$0xff]
    %v2607 = vpack.c.bf16 %v2600, %v2600
    %2609 = vrot.lane.b32.xlu0 %v2607, 32
    %v2610 = vpop.permute.xlu0 %2609
    %v2612 = vsel %vm215, %v2610, 0
    %2614 = vmatprep.subr.bf16.mxu0 0
    %2615 = vmatpush1.bf16.msra.mxu0 0
    %2616 = vmatprep.subr.bf16.mxu0 0
    %2617 = vmatpush1.bf16.msra.mxu0 0
    %2618 = vmatprep.subr.bf16.mxu0 0
    %2619 = vmatpush1.bf16.msra.mxu0 0
    %2620 = vmatprep.subr.bf16.mxu0 0
    %2621 = vmatpush1.bf16.msra.mxu0 0
    %2622 = vmatprep.subr.bf16.mxu0 0
    %2623 = vmatpush1.bf16.msra.mxu0 0
    %2624 = vmatprep.subr.bf16.mxu0 0
    %2625 = vmatpush1.bf16.msra.mxu0 0
    %2626 = vmatprep.subr.bf16.mxu0 0
    %2627 = vmatpush1.bf16.msra.mxu0 %v2377
    %2628 = vmatprep.subr.bf16.mxu0 0
    %2629 = vmatpush1.bf16.msra.mxu0 %v2376
    %2630 = vmatprep.subr.bf16.mxu0 0
    %2631 = vmatpush2.bf16.msra.mxu0 0
    %2632 = vmatprep.subr.bf16.mxu0 0
    %2633 = vmatpush2.bf16.msra.mxu0 0
    %2634 = vmatprep.subr.bf16.mxu0 0
    %2635 = vmatpush2.bf16.msra.mxu0 0
    %2636 = vmatprep.subr.bf16.mxu0 0
    %2637 = vmatpush2.bf16.msra.mxu0 0
    %2638 = vmatprep.subr.bf16.mxu0 0
    %2639 = vmatpush2.bf16.msra.mxu0 0
    %2640 = vmatprep.subr.bf16.mxu0 0
    %2641 = vmatpush2.bf16.msra.mxu0 0
    %2642 = vmatprep.subr.bf16.mxu0 0
    %2643 = vmatpush2.bf16.msra.mxu0 0
    %2644 = vmatprep.subr.bf16.mxu0 0
    %2645 = vmatpush2.bf16.msra.mxu0 0
    %2646 = vmatprep.mubr.bf16.mxu0 0
    %2647 = vmatmul.mubr.bf16.gmra.mxu0 %v2612
    %v2648 = vpop.f32.mrf.mxu0
    %v2649 = vadd.f32 0.0, %v2648
    %v2650 = vpop.f32.mrf.mxu0
    %v2651 = vpop.f32.mrf.mxu0
    %v2652 = vpop.f32.mrf.mxu0
    %2653 = vdwg.mxu0
    %v2654 = vadd.f32 %v2606, %v2649
    %v2655 = vxor.u32 %v2654, 2147483648
    %v2656 = vmul.f32 %v2655, 1.442695
    %v2657 = vpow.pop %v2656
    %v2658 = vadd.f32 %v2657, 1.0
    %v2659 = vrcp.pop %v2658
    %v2660 = vmul.f32 1.0, %v2659
    %v2661 = vtanh.pop %v2654
    %v2662 = vmul.f32 %v2660, %v2594
    %2664 = vrot.lane.b32.xlu0 %v2661, 64
    %v2665 = vpop.permute.xlu0 %2664
    %v2667 = vmul.f32 %v2660, %v2665
    %2669 = vrot.lane.b32.xlu0 %v2667, 32
    %v2670 = vpop.permute.xlu0 %2669
    %v2672 = vadd.f32 %v2662, %v2670
    %v2673 = vtanh.pop %v2672
    %2675 = vrot.lane.b32.xlu0 %v2673, 64
    %v2676 = vpop.permute.xlu0 %2675
    %v2678 = vmul.f32 %v2660, %v2676
    %2680 = vrot.lane.b32.xlu0 %v2678, 32
    %v2681 = vpop.permute.xlu0 %2680
    %2683 = vst.msk [vmem:[#allocation3 + $0x18] sm:$0xff] %vm215, %v2681
    %v2684 = vld [vmem:[#allocation4 + $0x20] sm:$0xff]
    %v2685 = vpack.c.bf16 %v2678, %v2678
    %2687 = vrot.lane.b32.xlu0 %v2685, 32
    %v2688 = vpop.permute.xlu0 %2687
    %v2690 = vsel %vm215, %v2688, 0
    %2692 = vmatprep.subr.bf16.mxu0 0
    %2693 = vmatpush1.bf16.msra.mxu0 0
    %2694 = vmatprep.subr.bf16.mxu0 0
    %2695 = vmatpush1.bf16.msra.mxu0 0
    %2696 = vmatprep.subr.bf16.mxu0 0
    %2697 = vmatpush1.bf16.msra.mxu0 0
    %2698 = vmatprep.subr.bf16.mxu0 0
    %2699 = vmatpush1.bf16.msra.mxu0 0
    %2700 = vmatprep.subr.bf16.mxu0 0
    %2701 = vmatpush1.bf16.msra.mxu0 0
    %2702 = vmatprep.subr.bf16.mxu0 0
    %2703 = vmatpush1.bf16.msra.mxu0 0
    %2704 = vmatprep.subr.bf16.mxu0 0
    %2705 = vmatpush1.bf16.msra.mxu0 %v2377
    %2706 = vmatprep.subr.bf16.mxu0 0
    %2707 = vmatpush1.bf16.msra.mxu0 %v2376
    %2708 = vmatprep.subr.bf16.mxu0 0
    %2709 = vmatpush2.bf16.msra.mxu0 0
    %2710 = vmatprep.subr.bf16.mxu0 0
    %2711 = vmatpush2.bf16.msra.mxu0 0
    %2712 = vmatprep.subr.bf16.mxu0 0
    %2713 = vmatpush2.bf16.msra.mxu0 0
    %2714 = vmatprep.subr.bf16.mxu0 0
    %2715 = vmatpush2.bf16.msra.mxu0 0
    %2716 = vmatprep.subr.bf16.mxu0 0
    %2717 = vmatpush2.bf16.msra.mxu0 0
    %2718 = vmatprep.subr.bf16.mxu0 0
    %2719 = vmatpush2.bf16.msra.mxu0 0
    %2720 = vmatprep.subr.bf16.mxu0 0
    %2721 = vmatpush2.bf16.msra.mxu0 0
    %2722 = vmatprep.subr.bf16.mxu0 0
    %2723 = vmatpush2.bf16.msra.mxu0 0
    %2724 = vmatprep.mubr.bf16.mxu0 0
    %2725 = vmatmul.mubr.bf16.gmra.mxu0 %v2690
    %v2726 = vpop.f32.mrf.mxu0
    %v2727 = vadd.f32 0.0, %v2726
    %v2728 = vpop.f32.mrf.mxu0
    %v2729 = vpop.f32.mrf.mxu0
    %v2730 = vpop.f32.mrf.mxu0
    %2731 = vdwg.mxu0
    %v2732 = vadd.f32 %v2684, %v2727
    %v2733 = vxor.u32 %v2732, 2147483648
    %v2734 = vmul.f32 %v2733, 1.442695
    %v2735 = vpow.pop %v2734
    %v2736 = vadd.f32 %v2735, 1.0
    %v2737 = vrcp.pop %v2736
    %v2738 = vmul.f32 1.0, %v2737
    %v2739 = vtanh.pop %v2732
    %v2740 = vmul.f32 %v2738, %v2672
    %2742 = vrot.lane.b32.xlu0 %v2739, 64
    %v2743 = vpop.permute.xlu0 %2742
    %v2745 = vmul.f32 %v2738, %v2743
    %2747 = vrot.lane.b32.xlu0 %v2745, 32
    %v2748 = vpop.permute.xlu0 %2747
    %v2750 = vadd.f32 %v2740, %v2748
    %v2751 = vtanh.pop %v2750
    %2753 = vrot.lane.b32.xlu0 %v2751, 64
    %v2754 = vpop.permute.xlu0 %2753
    %v2756 = vmul.f32 %v2738, %v2754
    %2758 = vrot.lane.b32.xlu0 %v2756, 32
    %v2759 = vpop.permute.xlu0 %2758
    %2761 = vst.msk [vmem:[#allocation3 + $0x20] sm:$0xff] %vm215, %v2759
    %v2762 = vld [vmem:[#allocation4 + $0x28] sm:$0xff]
    %v2763 = vpack.c.bf16 %v2756, %v2756
    %2765 = vrot.lane.b32.xlu0 %v2763, 32
    %v2766 = vpop.permute.xlu0 %2765
    %v2768 = vsel %vm215, %v2766, 0
    %2770 = vmatprep.subr.bf16.mxu0 0
    %2771 = vmatpush1.bf16.msra.mxu0 0
    %2772 = vmatprep.subr.bf16.mxu0 0
    %2773 = vmatpush1.bf16.msra.mxu0 0
    %2774 = vmatprep.subr.bf16.mxu0 0
    %2775 = vmatpush1.bf16.msra.mxu0 0
    %2776 = vmatprep.subr.bf16.mxu0 0
    %2777 = vmatpush1.bf16.msra.mxu0 0
    %2778 = vmatprep.subr.bf16.mxu0 0
    %2779 = vmatpush1.bf16.msra.mxu0 0
    %2780 = vmatprep.subr.bf16.mxu0 0
    %2781 = vmatpush1.bf16.msra.mxu0 0
    %2782 = vmatprep.subr.bf16.mxu0 0
    %2783 = vmatpush1.bf16.msra.mxu0 %v2377
    %2784 = vmatprep.subr.bf16.mxu0 0
    %2785 = vmatpush1.bf16.msra.mxu0 %v2376
    %2786 = vmatprep.subr.bf16.mxu0 0
    %2787 = vmatpush2.bf16.msra.mxu0 0
    %2788 = vmatprep.subr.bf16.mxu0 0
    %2789 = vmatpush2.bf16.msra.mxu0 0
    %2790 = vmatprep.subr.bf16.mxu0 0
    %2791 = vmatpush2.bf16.msra.mxu0 0
    %2792 = vmatprep.subr.bf16.mxu0 0
    %2793 = vmatpush2.bf16.msra.mxu0 0
    %2794 = vmatprep.subr.bf16.mxu0 0
    %2795 = vmatpush2.bf16.msra.mxu0 0
    %2796 = vmatprep.subr.bf16.mxu0 0
    %2797 = vmatpush2.bf16.msra.mxu0 0
    %2798 = vmatprep.subr.bf16.mxu0 0
    %2799 = vmatpush2.bf16.msra.mxu0 0
    %2800 = vmatprep.subr.bf16.mxu0 0
    %2801 = vmatpush2.bf16.msra.mxu0 0
    %2802 = vmatprep.mubr.bf16.mxu0 0
    %2803 = vmatmul.mubr.bf16.gmra.mxu0 %v2768
    %v2804 = vpop.f32.mrf.mxu0
    %v2805 = vadd.f32 0.0, %v2804
    %v2806 = vpop.f32.mrf.mxu0
    %v2807 = vpop.f32.mrf.mxu0
    %v2808 = vpop.f32.mrf.mxu0
    %2809 = vdwg.mxu0
    %v2810 = vadd.f32 %v2762, %v2805
    %v2811 = vxor.u32 %v2810, 2147483648
    %v2812 = vmul.f32 %v2811, 1.442695
    %v2813 = vpow.pop %v2812
    %v2814 = vadd.f32 %v2813, 1.0
    %v2815 = vrcp.pop %v2814
    %v2816 = vmul.f32 1.0, %v2815
    %v2817 = vtanh.pop %v2810
    %v2818 = vmul.f32 %v2816, %v2750
    %2820 = vrot.lane.b32.xlu0 %v2817, 64
    %v2821 = vpop.permute.xlu0 %2820
    %v2823 = vmul.f32 %v2816, %v2821
    %2825 = vrot.lane.b32.xlu0 %v2823, 32
    %v2826 = vpop.permute.xlu0 %2825
    %v2828 = vadd.f32 %v2818, %v2826
    %v2829 = vtanh.pop %v2828
    %2831 = vrot.lane.b32.xlu0 %v2829, 64
    %v2832 = vpop.permute.xlu0 %2831
    %v2834 = vmul.f32 %v2816, %v2832
    %2836 = vrot.lane.b32.xlu0 %v2834, 32
    %v2837 = vpop.permute.xlu0 %2836
    %2839 = vst.msk [vmem:[#allocation3 + $0x28] sm:$0xff] %vm215, %v2837
    %v2840 = vld [vmem:[#allocation4 + $0x30] sm:$0xff]
    %v2841 = vpack.c.bf16 %v2834, %v2834
    %2843 = vrot.lane.b32.xlu0 %v2841, 32
    %v2844 = vpop.permute.xlu0 %2843
    %v2846 = vsel %vm215, %v2844, 0
    %2848 = vmatprep.subr.bf16.mxu0 0
    %2849 = vmatpush1.bf16.msra.mxu0 0
    %2850 = vmatprep.subr.bf16.mxu0 0
    %2851 = vmatpush1.bf16.msra.mxu0 0
    %2852 = vmatprep.subr.bf16.mxu0 0
    %2853 = vmatpush1.bf16.msra.mxu0 0
    %2854 = vmatprep.subr.bf16.mxu0 0
    %2855 = vmatpush1.bf16.msra.mxu0 0
    %2856 = vmatprep.subr.bf16.mxu0 0
    %2857 = vmatpush1.bf16.msra.mxu0 0
    %2858 = vmatprep.subr.bf16.mxu0 0
    %2859 = vmatpush1.bf16.msra.mxu0 0
    %2860 = vmatprep.subr.bf16.mxu0 0
    %2861 = vmatpush1.bf16.msra.mxu0 %v2377
    %2862 = vmatprep.subr.bf16.mxu0 0
    %2863 = vmatpush1.bf16.msra.mxu0 %v2376
    %2864 = vmatprep.subr.bf16.mxu0 0
    %2865 = vmatpush2.bf16.msra.mxu0 0
    %2866 = vmatprep.subr.bf16.mxu0 0
    %2867 = vmatpush2.bf16.msra.mxu0 0
    %2868 = vmatprep.subr.bf16.mxu0 0
    %2869 = vmatpush2.bf16.msra.mxu0 0
    %2870 = vmatprep.subr.bf16.mxu0 0
    %2871 = vmatpush2.bf16.msra.mxu0 0
    %2872 = vmatprep.subr.bf16.mxu0 0
    %2873 = vmatpush2.bf16.msra.mxu0 0
    %2874 = vmatprep.subr.bf16.mxu0 0
    %2875 = vmatpush2.bf16.msra.mxu0 0
    %2876 = vmatprep.subr.bf16.mxu0 0
    %2877 = vmatpush2.bf16.msra.mxu0 0
    %2878 = vmatprep.subr.bf16.mxu0 0
    %2879 = vmatpush2.bf16.msra.mxu0 0
    %2880 = vmatprep.mubr.bf16.mxu0 0
    %2881 = vmatmul.mubr.bf16.gmra.mxu0 %v2846
    %v2882 = vpop.f32.mrf.mxu0
    %v2883 = vadd.f32 0.0, %v2882
    %v2884 = vpop.f32.mrf.mxu0
    %v2885 = vpop.f32.mrf.mxu0
    %v2886 = vpop.f32.mrf.mxu0
    %2887 = vdwg.mxu0
    %v2888 = vadd.f32 %v2840, %v2883
    %v2889 = vxor.u32 %v2888, 2147483648
    %v2890 = vmul.f32 %v2889, 1.442695
    %v2891 = vpow.pop %v2890
    %v2892 = vadd.f32 %v2891, 1.0
    %v2893 = vrcp.pop %v2892
    %v2894 = vmul.f32 1.0, %v2893
    %v2895 = vtanh.pop %v2888
    %v2896 = vmul.f32 %v2894, %v2828
    %2898 = vrot.lane.b32.xlu0 %v2895, 64
    %v2899 = vpop.permute.xlu0 %2898
    %v2901 = vmul.f32 %v2894, %v2899
    %2903 = vrot.lane.b32.xlu0 %v2901, 32
    %v2904 = vpop.permute.xlu0 %2903
    %v2906 = vadd.f32 %v2896, %v2904
    %v2907 = vtanh.pop %v2906
    %2909 = vrot.lane.b32.xlu0 %v2907, 64
    %v2910 = vpop.permute.xlu0 %2909
    %v2912 = vmul.f32 %v2894, %v2910
    %2914 = vrot.lane.b32.xlu0 %v2912, 32
    %v2915 = vpop.permute.xlu0 %2914
    %2917 = vst.msk [vmem:[#allocation3 + $0x30] sm:$0xff] %vm215, %v2915
    %v2918 = vld [vmem:[#allocation4 + $0x38] sm:$0xff]
    %v2919 = vpack.c.bf16 %v2912, %v2912
    %2921 = vrot.lane.b32.xlu0 %v2919, 32
    %v2922 = vpop.permute.xlu0 %2921
    %v2924 = vsel %vm215, %v2922, 0
    %2926 = vmatprep.subr.bf16.mxu0 0
    %2927 = vmatpush1.bf16.msra.mxu0 0
    %2928 = vmatprep.subr.bf16.mxu0 0
    %2929 = vmatpush1.bf16.msra.mxu0 0
    %2930 = vmatprep.subr.bf16.mxu0 0
    %2931 = vmatpush1.bf16.msra.mxu0 0
    %2932 = vmatprep.subr.bf16.mxu0 0
    %2933 = vmatpush1.bf16.msra.mxu0 0
    %2934 = vmatprep.subr.bf16.mxu0 0
    %2935 = vmatpush1.bf16.msra.mxu0 0
    %2936 = vmatprep.subr.bf16.mxu0 0
    %2937 = vmatpush1.bf16.msra.mxu0 0
    %2938 = vmatprep.subr.bf16.mxu0 0
    %2939 = vmatpush1.bf16.msra.mxu0 %v2377
    %2940 = vmatprep.subr.bf16.mxu0 0
    %2941 = vmatpush1.bf16.msra.mxu0 %v2376
    %2942 = vmatprep.subr.bf16.mxu0 0
    %2943 = vmatpush2.bf16.msra.mxu0 0
    %2944 = vmatprep.subr.bf16.mxu0 0
    %2945 = vmatpush2.bf16.msra.mxu0 0
    %2946 = vmatprep.subr.bf16.mxu0 0
    %2947 = vmatpush2.bf16.msra.mxu0 0
    %2948 = vmatprep.subr.bf16.mxu0 0
    %2949 = vmatpush2.bf16.msra.mxu0 0
    %2950 = vmatprep.subr.bf16.mxu0 0
    %2951 = vmatpush2.bf16.msra.mxu0 0
    %2952 = vmatprep.subr.bf16.mxu0 0
    %2953 = vmatpush2.bf16.msra.mxu0 0
    %2954 = vmatprep.subr.bf16.mxu0 0
    %2955 = vmatpush2.bf16.msra.mxu0 0
    %2956 = vmatprep.subr.bf16.mxu0 0
    %2957 = vmatpush2.bf16.msra.mxu0 0
    %2958 = vmatprep.mubr.bf16.mxu0 0
    %2959 = vmatmul.mubr.bf16.gmra.mxu0 %v2924
    %v2960 = vpop.f32.mrf.mxu0
    %v2961 = vadd.f32 0.0, %v2960
    %v2962 = vpop.f32.mrf.mxu0
    %v2963 = vpop.f32.mrf.mxu0
    %v2964 = vpop.f32.mrf.mxu0
    %2965 = vdwg.mxu0
    %v2966 = vadd.f32 %v2918, %v2961
    %v2967 = vxor.u32 %v2966, 2147483648
    %v2968 = vmul.f32 %v2967, 1.442695
    %v2969 = vpow.pop %v2968
    %v2970 = vadd.f32 %v2969, 1.0
    %v2971 = vrcp.pop %v2970
    %v2972 = vmul.f32 1.0, %v2971
    %v2973 = vtanh.pop %v2966
    %v2974 = vmul.f32 %v2972, %v2906
    %2976 = vrot.lane.b32.xlu0 %v2973, 64
    %v2977 = vpop.permute.xlu0 %2976
    %v2979 = vmul.f32 %v2972, %v2977
    %2981 = vrot.lane.b32.xlu0 %v2979, 32
    %v2982 = vpop.permute.xlu0 %2981
    %v2984 = vadd.f32 %v2974, %v2982
    %v2985 = vtanh.pop %v2984
    %2987 = vrot.lane.b32.xlu0 %v2985, 64
    %v2988 = vpop.permute.xlu0 %2987
    %v2990 = vmul.f32 %v2972, %v2988
    %2992 = vrot.lane.b32.xlu0 %v2990, 32
    %v2993 = vpop.permute.xlu0 %2992
    %2995 = vst.msk [vmem:[#allocation3 + $0x38] sm:$0xff] %vm215, %v2993
    %v2996 = vld [vmem:[#allocation3] sm:$0xff]
    %v2997 = vld [vmem:[#allocation3 + $0x8] sm:$0xff]
    %v2998 = vld [vmem:[#allocation3 + $0x10] sm:$0xff]
    %v2999 = vld [vmem:[#allocation3 + $0x18] sm:$0xff]
    %v3000 = vld [vmem:[#allocation3 + $0x20] sm:$0xff]
    %v3001 = vld [vmem:[#allocation3 + $0x28] sm:$0xff]
    %v3002 = vld [vmem:[#allocation3 + $0x30] sm:$0xff]
    %v3003 = vld [vmem:[#allocation3 + $0x38] sm:$0xff]
    %v3004 = vpack.c.bf16 %v2997, %v2996
    %v3005 = vpack.c.bf16 %v2999, %v2998
    %v3006 = vpack.c.bf16 %v3001, %v3000
    %v3007 = vpack.c.bf16 %v3003, %v3002
    %v3008 = vld [vmem:[%s13] sm:$0xf]
    %v3009 = vld [vmem:[%s13 + $0x4] sm:$0xf]
    %v3010 = vld [vmem:[%s13 + $0x8] sm:$0xf]
    %v3011 = vld [vmem:[%s13 + $0xc] sm:$0xf]
    %v3012 = vld [vmem:[%s14] sm:$0x1]
    %v3014 = vlaneseq
    %v3015 = vshrl.u32 %v3014, 7
    %v3016 = vsub.s32 0, %v3015
    %v3017 = vrot.slane %v3012, %v3016
    %v3023 = vunpack.c.l.b16 %v3008
    %v3024 = vunpack.c.l.b16 %v3009
    %v3025 = vunpack.c.l.b16 %v3010
    %v3026 = vunpack.c.l.b16 %v3011
    %v3027 = vpack.c.b16 %v3024, %v3023
    %v3028 = vpack.c.b16 %v3026, %v3025
    %v3032 = vsel %vm215, %v3004, 0
    %v3035 = vsel %vm215, %v3005, 0
    %v3038 = vsel %vm215, %v3006, 0
    %v3041 = vsel %vm215, %v3007, 0
    %3043 = vmatprep.subr.bf16.mxu0 0
    %3044 = vmatpush1.bf16.msra.mxu0 0
    %3045 = vmatprep.subr.bf16.mxu0 0
    %3046 = vmatpush1.bf16.msra.mxu0 0
    %3047 = vmatprep.subr.bf16.mxu0 0
    %3048 = vmatpush1.bf16.msra.mxu0 0
    %3049 = vmatprep.subr.bf16.mxu0 0
    %3050 = vmatpush1.bf16.msra.mxu0 0
    %3051 = vmatprep.subr.bf16.mxu0 0
    %3052 = vmatpush1.bf16.msra.mxu0 0
    %3053 = vmatprep.subr.bf16.mxu0 0
    %3054 = vmatpush1.bf16.msra.mxu0 0
    %3055 = vmatprep.subr.bf16.mxu0 0
    %3056 = vmatpush1.bf16.msra.mxu0 %v3028
    %3057 = vmatprep.subr.bf16.mxu0 0
    %3058 = vmatpush1.bf16.msra.mxu0 %v3027
    %3059 = vmatprep.subr.bf16.mxu0 0
    %3060 = vmatpush2.bf16.msra.mxu0 0
    %3061 = vmatprep.subr.bf16.mxu0 0
    %3062 = vmatpush2.bf16.msra.mxu0 0
    %3063 = vmatprep.subr.bf16.mxu0 0
    %3064 = vmatpush2.bf16.msra.mxu0 0
    %3065 = vmatprep.subr.bf16.mxu0 0
    %3066 = vmatpush2.bf16.msra.mxu0 0
    %3067 = vmatprep.subr.bf16.mxu0 0
    %3068 = vmatpush2.bf16.msra.mxu0 0
    %3069 = vmatprep.subr.bf16.mxu0 0
    %3070 = vmatpush2.bf16.msra.mxu0 0
    %3071 = vmatprep.subr.bf16.mxu0 0
    %3072 = vmatpush2.bf16.msra.mxu0 0
    %3073 = vmatprep.subr.bf16.mxu0 0
    %3074 = vmatpush2.bf16.msra.mxu0 0
    %3075 = vmatprep.mubr.bf16.mxu0 0
    %3076 = vmatmul.mubr.bf16.gmra.mxu0 %v3032
    %v3077 = vpop.f32.mrf.mxu0
    %v3078 = vadd.f32 %v3017, %v3077
    %v3079 = vpop.f32.mrf.mxu0
    %v3080 = vpop.f32.mrf.mxu0
    %v3081 = vadd.f32 %v3017, %v3080
    %v3082 = vpop.f32.mrf.mxu0
    %3083 = vmatprep.mubr.bf16.mxu0 0
    %3084 = vmatmul.mubr.bf16.gmra.mxu0 %v3035
    %v3085 = vpop.f32.mrf.mxu0
    %v3086 = vadd.f32 %v3017, %v3085
    %v3087 = vpop.f32.mrf.mxu0
    %v3088 = vpop.f32.mrf.mxu0
    %v3089 = vadd.f32 %v3017, %v3088
    %v3090 = vpop.f32.mrf.mxu0
    %3091 = vmatprep.mubr.bf16.mxu0 0
    %3092 = vmatmul.mubr.bf16.gmra.mxu0 %v3038
    %v3093 = vpop.f32.mrf.mxu0
    %v3094 = vadd.f32 %v3017, %v3093
    %v3095 = vpop.f32.mrf.mxu0
    %v3096 = vpop.f32.mrf.mxu0
    %v3097 = vadd.f32 %v3017, %v3096
    %v3098 = vpop.f32.mrf.mxu0
    %3099 = vmatprep.mubr.bf16.mxu0 0
    %3100 = vmatmul.mubr.bf16.gmra.mxu0 %v3041
    %v3101 = vpop.f32.mrf.mxu0
    %v3102 = vadd.f32 %v3017, %v3101
    %v3103 = vpop.f32.mrf.mxu0
    %v3104 = vpop.f32.mrf.mxu0
    %v3105 = vadd.f32 %v3017, %v3104
    %v3106 = vpop.f32.mrf.mxu0
    %3107 = vdwg.mxu0
    %v3108 = vtanh.pop %v3078
    %v3109 = vtanh.pop %v3081
    %v3110 = vtanh.pop %v3086
    %v3111 = vtanh.pop %v3089
    %v3112 = vtanh.pop %v3094
    %v3113 = vtanh.pop %v3097
    %v3114 = vtanh.pop %v3102
    %v3115 = vtanh.pop %v3105
    %3116 = vst [vmem:[%s15] sm:$0xff] %v3108
    %3117 = vst [vmem:[%s15 + $0x8] sm:$0xff] %v3109
    %3118 = vst [vmem:[%s15 + $0x10] sm:$0xff] %v3110
    %3119 = vst [vmem:[%s15 + $0x18] sm:$0xff] %v3111
    %3120 = vst [vmem:[%s15 + $0x20] sm:$0xff] %v3112
    %3121 = vst [vmem:[%s15 + $0x28] sm:$0xff] %v3113
    %3122 = vst [vmem:[%s15 + $0x30] sm:$0xff] %v3114
    %3123 = vst [vmem:[%s15 + $0x38] sm:$0xff] %v3115
    // Predicated region
    $region74: #{lstm_autoencoder_forward.1} parent=1 // pred_check
      _
    $region75: #{lstm_autoencoder_forward.1} parent=1 // pred_check_branch
      %3125 = sbr.rel (0) target = $region77
    $region76: #{lstm_autoencoder_forward.1} parent=1 // pred_region
      _
    $region77: #{lstm_autoencoder_forward.1} parent=1 // pred_fallthru
      _
    // Predicated region
    $region78: #{lstm_autoencoder_forward.1} parent=1 // pred_check
      _
    $region79: #{lstm_autoencoder_forward.1} parent=1 // pred_check_branch
      %3127 = sbr.rel (0) target = $region81
    $region80: #{lstm_autoencoder_forward.1} parent=1 // pred_region
      _
    $region81: #{lstm_autoencoder_forward.1} parent=1 // pred_fallthru
      _
    %3128 = vsyncpa [#allocation6], 1
    %3129 = vsyncpa [#allocation8], 1

// kernel: lstm_autoencoder_forward.1
$region0: #{lstm_autoencoder_forward.1}
  #allocation0 [shape = 'u32[]', space=smem, size = 0x4, offset = 0x4, fixed_abs, tag = 'smem constant byte address 0x4 - core index']
  #allocation1 [shape = 'u32[144,128]{1,0:T(1,128)}', space=vmem, size = 0x12000, scoped, tag = 'internal scratch']
  #allocation2 [shape = 'f32[64,32]{1,0:T(8,128)}', space=vmem, size = 0x8000, scoped, tag = 'scratch operand']
  #allocation3 [shape = 'f32[64,32]{1,0:T(8,128)}', space=vmem, size = 0x8000, scoped, tag = 'scratch operand']
  #allocation4 [shape = 'f32[64,128]{1,0:T(8,128)}', space=vmem, size = 0x8000, scoped, tag = 'scratch operand']
  %s0 = inlined_call_operand.vmem [shape: f32[8,8,4], index: 0, kind: input, shape index: {}]
  %s1 = inlined_call_operand.hbm [shape: bf16[4,128], index: 1, kind: input, shape index: {}]
  %s2 = inlined_call_operand.hbm [shape: bf16[32,128], index: 2, kind: input, shape index: {}]
  %s3 = inlined_call_operand.hbm [shape: f32[1,128], index: 3, kind: input, shape index: {}]
  %s4 = inlined_call_operand.vmem [shape: bf16[32,128], index: 4, kind: input, shape index: {}]
  %s5 = inlined_call_operand.vmem [shape: bf16[32,128], index: 5, kind: input, shape index: {}]
  %s6 = inlined_call_operand.vmem [shape: f32[1,128], index: 6, kind: input, shape index: {}]
  %s7 = inlined_call_operand.vmem [shape: bf16[32,128], index: 7, kind: input, shape index: {}]
  %s8 = inlined_call_operand.vmem [shape: bf16[32,128], index: 8, kind: input, shape index: {}]
  %s9 = inlined_call_operand.vmem [shape: f32[1,128], index: 9, kind: input, shape index: {}]
  %s10 = inlined_call_operand.vmem [shape: bf16[32,128], index: 10, kind: input, shape index: {}]
  %s11 = inlined_call_operand.vmem [shape: bf16[32,128], index: 11, kind: input, shape index: {}]
  %s12 = inlined_call_operand.vmem [shape: f32[1,128], index: 12, kind: input, shape index: {}]
  %s13 = inlined_call_operand.vmem [shape: bf16[32,128], index: 13, kind: input, shape index: {}]
  %s14 = inlined_call_operand.vmem [shape: f32[1,128], index: 14, kind: input, shape index: {}]
  %s15 = inlined_call_operand.vmem [shape: f32[8,8,128], index: 15, kind: output, shape index: {}]
  %s16 = sld [smem:[#allocation0]]
  $region82: #{lstm_autoencoder_forward.1} parent=0
    _
  %s18 = ssub.s32 1, %s16
  %s19 = scalar_select 0, %s18, %s16
  $region1: #{lstm_autoencoder_forward.1} parent=0
    #allocation5 [shape = 'u8[1024]{0}', space=vmem, size = 0x400, scoped, tag = 'input window, operand 1, single buffered']
    #allocation6 [shape = 's32[1]{0}', space=sflag, size = 0x4, scoped, tag = 'scoped memory for lstm_autoencoder_forward.1']
    #allocation7 [shape = 'u8[8192]{0}', space=vmem, size = 0x2000, scoped, tag = 'input window, operand 2, single buffered']
    #allocation8 [shape = 's32[1]{0}', space=sflag, size = 0x4, scoped, tag = 'scoped memory for lstm_autoencoder_forward.1']
    #allocation9 [shape = 'u8[512]{0}', space=vmem, size = 0x400, scoped, tag = 'input window, operand 3, single buffered']
    %20 = vsyncpa [#allocation6], 0
    %21 = vsyncpa [#allocation8], 0
    // Predicated region
    $region2: #{lstm_autoencoder_forward.1} parent=1 // pred_check
      _
    $region3: #{lstm_autoencoder_forward.1} parent=1 // pred_check_branch
      %23 = sbr.rel (0) target = $region5
    $region4: #{lstm_autoencoder_forward.1} parent=1 // pred_region
      _
    $region5: #{lstm_autoencoder_forward.1} parent=1 // pred_fallthru
      _
    // Predicated region
    $region6: #{lstm_autoencoder_forward.1} parent=1 // pred_check
      _
    $region7: #{lstm_autoencoder_forward.1} parent=1 // pred_check_branch
      %25 = sbr.rel (0) target = $region9
    $region8: #{lstm_autoencoder_forward.1} parent=1 // pred_region
      %s27 = ssub.s32 32, 32
      %28 = vsyncadd [#allocation6], %s27
      %s30 = sshll.u32 [#allocation5], 4
      %s31 = int_to_ptr.vmem [resolvable:$true] %s30
      %33 = dma.hbm_to_vmem [thread:$0]  %s1, 32, %s31, [#allocation6]
    $region9: #{lstm_autoencoder_forward.1} parent=1 // pred_fallthru
      _
    // Predicated region
    $region10: #{lstm_autoencoder_forward.1} parent=1 // pred_check
      _
    $region11: #{lstm_autoencoder_forward.1} parent=1 // pred_check_branch
      %35 = sbr.rel (0) target = $region13
    $region12: #{lstm_autoencoder_forward.1} parent=1 // pred_region
      %s37 = ssub.s32 256, 256
      %38 = vsyncadd [#allocation8], %s37
      %s39 = sshll.u32 [#allocation7], 4
      %s40 = int_to_ptr.vmem [resolvable:$true] %s39
      %45 = dma.hbm_to_vmem [thread:$0]  %s2, 256, %s40, [#allocation8], 64, 64, 4
    $region13: #{lstm_autoencoder_forward.1} parent=1 // pred_fallthru
      _
    // Predicated region
    $region14: #{lstm_autoencoder_forward.1} parent=1 // pred_check
      _
    $region15: #{lstm_autoencoder_forward.1} parent=1 // pred_check_branch
      %47 = sbr.rel (0) target = $region17
    $region16: #{lstm_autoencoder_forward.1} parent=1 // pred_region
      %s49 = ssub.s32 16, 16
      %50 = vsyncadd [#allocation8], %s49
      %s52 = sshll.u32 [#allocation9], 4
      %s53 = int_to_ptr.vmem [resolvable:$true] %s52
      %55 = dma.hbm_to_vmem [thread:$0]  %s3, 16, %s53, [#allocation8]
    $region17: #{lstm_autoencoder_forward.1} parent=1 // pred_fallthru
      _
    // Predicated region
    $region18: #{lstm_autoencoder_forward.1} parent=1 // pred_check
      _
    $region19: #{lstm_autoencoder_forward.1} parent=1 // pred_check_branch
      %57 = sbr.rel (0) target = $region21
    $region20: #{lstm_autoencoder_forward.1} parent=1 // pred_region
      _
    $region21: #{lstm_autoencoder_forward.1} parent=1 // pred_fallthru
      _
    // Predicated region
    $region22: #{lstm_autoencoder_forward.1} parent=1 // pred_check
      _
    $region23: #{lstm_autoencoder_forward.1} parent=1 // pred_check_branch
      %59 = sbr.rel (0) target = $region25
    $region24: #{lstm_autoencoder_forward.1} parent=1 // pred_region
      _
    $region25: #{lstm_autoencoder_forward.1} parent=1 // pred_fallthru
      _
    // Predicated region
    $region26: #{lstm_autoencoder_forward.1} parent=1 // pred_check
      _
    $region27: #{lstm_autoencoder_forward.1} parent=1 // pred_check_branch
      %61 = sbr.rel (0) target = $region29
    $region28: #{lstm_autoencoder_forward.1} parent=1 // pred_region
      _
    $region29: #{lstm_autoencoder_forward.1} parent=1 // pred_fallthru
      _
    // Predicated region
    $region30: #{lstm_autoencoder_forward.1} parent=1 // pred_check
      _
    $region31: #{lstm_autoencoder_forward.1} parent=1 // pred_check_branch
      %63 = sbr.rel (0) target = $region33
    $region32: #{lstm_autoencoder_forward.1} parent=1 // pred_region
      _
    $region33: #{lstm_autoencoder_forward.1} parent=1 // pred_fallthru
      _
    // Predicated region
    $region34: #{lstm_autoencoder_forward.1} parent=1 // pred_check
      _
    $region35: #{lstm_autoencoder_forward.1} parent=1 // pred_check_branch
      %65 = sbr.rel (0) target = $region37
    $region36: #{lstm_autoencoder_forward.1} parent=1 // pred_region
      _
    $region37: #{lstm_autoencoder_forward.1} parent=1 // pred_fallthru
      _
    // Predicated region
    $region38: #{lstm_autoencoder_forward.1} parent=1 // pred_check
      _
    $region39: #{lstm_autoencoder_forward.1} parent=1 // pred_check_branch
      %67 = sbr.rel (0) target = $region41
    $region40: #{lstm_autoencoder_forward.1} parent=1 // pred_region
      _
    $region41: #{lstm_autoencoder_forward.1} parent=1 // pred_fallthru
      _
    // Predicated region
    $region42: #{lstm_autoencoder_forward.1} parent=1 // pred_check
      _
    $region43: #{lstm_autoencoder_forward.1} parent=1 // pred_check_branch
      %69 = sbr.rel (0) target = $region45
    $region44: #{lstm_autoencoder_forward.1} parent=1 // pred_region
      _
    $region45: #{lstm_autoencoder_forward.1} parent=1 // pred_fallthru
      _
    // Predicated region
    $region46: #{lstm_autoencoder_forward.1} parent=1 // pred_check
      _
    $region47: #{lstm_autoencoder_forward.1} parent=1 // pred_check_branch
      %71 = sbr.rel (0) target = $region49
    $region48: #{lstm_autoencoder_forward.1} parent=1 // pred_region
      _
    $region49: #{lstm_autoencoder_forward.1} parent=1 // pred_fallthru
      _
    // Predicated region
    $region50: #{lstm_autoencoder_forward.1} parent=1 // pred_check
      _
    $region51: #{lstm_autoencoder_forward.1} parent=1 // pred_check_branch
      %73 = sbr.rel (0) target = $region53
    $region52: #{lstm_autoencoder_forward.1} parent=1 // pred_region
      _
    $region53: #{lstm_autoencoder_forward.1} parent=1 // pred_fallthru
      _
    // Predicated region
    $region54: #{lstm_autoencoder_forward.1} parent=1 // pred_check
      _
    $region55: #{lstm_autoencoder_forward.1} parent=1 // pred_check_branch
      %75 = sbr.rel (0) target = $region57
    $region56: #{lstm_autoencoder_forward.1} parent=1 // pred_region
      _
    $region57: #{lstm_autoencoder_forward.1} parent=1 // pred_fallthru
      _
    // Predicated region
    $region58: #{lstm_autoencoder_forward.1} parent=1 // pred_check
      _
    $region59: #{lstm_autoencoder_forward.1} parent=1 // pred_check_branch
      %77 = sbr.rel (0) target = $region61
    $region60: #{lstm_autoencoder_forward.1} parent=1 // pred_region
      _
    $region61: #{lstm_autoencoder_forward.1} parent=1 // pred_fallthru
      _
    // Predicated region
    $region62: #{lstm_autoencoder_forward.1} parent=1 // pred_check
      _
    $region63: #{lstm_autoencoder_forward.1} parent=1 // pred_check_branch
      %79 = sbr.rel (0) target = $region65
    $region64: #{lstm_autoencoder_forward.1} parent=1 // pred_region
      %80 = dma.done [#allocation6], 32
    $region65: #{lstm_autoencoder_forward.1} parent=1 // pred_fallthru
      _
    // Predicated region
    $region66: #{lstm_autoencoder_forward.1} parent=1 // pred_check
      _
    $region67: #{lstm_autoencoder_forward.1} parent=1 // pred_check_branch
      %82 = sbr.rel (0) target = $region69
    $region68: #{lstm_autoencoder_forward.1} parent=1 // pred_region
      %83 = dma.done [#allocation8], 256
    $region69: #{lstm_autoencoder_forward.1} parent=1 // pred_fallthru
      _
    // Predicated region
    $region70: #{lstm_autoencoder_forward.1} parent=1 // pred_check
      _
    $region71: #{lstm_autoencoder_forward.1} parent=1 // pred_check_branch
      %85 = sbr.rel (0) target = $region73
    $region72: #{lstm_autoencoder_forward.1} parent=1 // pred_region
      %86 = dma.done [#allocation8], 16
    $region73: #{lstm_autoencoder_forward.1} parent=1 // pred_fallthru
      _
    %v88 = vld [vmem:[#allocation5] sm:$0x3]
    %v89 = vld [vmem:[#allocation9] sm:$0x1]
    %v90 = vld [vmem:[#allocation7] sm:$0xf]
    %v91 = vld [vmem:[#allocation7 + $0x4] sm:$0xf]
    %v92 = vld [vmem:[#allocation7 + $0x8] sm:$0xf]
    %v93 = vld [vmem:[#allocation7 + $0xc] sm:$0xf]
    %v94 = vld [vmem:[%s0] sm:$0xff]
    %v95 = vld [vmem:[%s0 + $0x8] sm:$0xff]
    %v96 = vld [vmem:[%s0 + $0x10] sm:$0xff]
    %v97 = vld [vmem:[%s0 + $0x18] sm:$0xff]
    %v98 = vld [vmem:[%s0 + $0x20] sm:$0xff]
    %v99 = vld [vmem:[%s0 + $0x28] sm:$0xff]
    %v100 = vld [vmem:[%s0 + $0x30] sm:$0xff]
    %v101 = vld [vmem:[%s0 + $0x38] sm:$0xff]
    %v102 = vpack.c.bf16 %v95, %v94
    %v103 = vpack.c.bf16 %v97, %v96
    %v104 = vpack.c.bf16 %v99, %v98
    %v105 = vpack.c.bf16 %v101, %v100
    %v107 = vlaneseq
    %v108 = vshrl.u32 %v107, 7
    %v109 = vsub.s32 0, %v108
    %v110 = vrot.slane %v89, %v109
    %vm112 = vcmask 31744
    %v114 = vsel %vm112, %v102, 0
    %v117 = vsel %vm112, %v103, 0
    %v120 = vsel %vm112, %v104, 0
    %v123 = vsel %vm112, %v105, 0
    %vm125 = vcmask 1041408
    %v127 = vsel %vm125, %v88, 0
    %129 = vmatprep.subr.bf16.mxu0 0
    %130 = vmatpush1.bf16.msra.mxu0 0
    %131 = vmatprep.subr.bf16.mxu0 0
    %132 = vmatpush1.bf16.msra.mxu0 0
    %133 = vmatprep.subr.bf16.mxu0 0
    %134 = vmatpush1.bf16.msra.mxu0 0
    %135 = vmatprep.subr.bf16.mxu0 0
    %136 = vmatpush1.bf16.msra.mxu0 0
    %137 = vmatprep.subr.bf16.mxu0 0
    %138 = vmatpush1.bf16.msra.mxu0 0
    %139 = vmatprep.subr.bf16.mxu0 0
    %140 = vmatpush1.bf16.msra.mxu0 0
    %141 = vmatprep.subr.bf16.mxu0 0
    %142 = vmatpush1.bf16.msra.mxu0 0
    %143 = vmatprep.subr.bf16.mxu0 0
    %144 = vmatpush1.bf16.msra.mxu0 %v127
    %145 = vmatprep.subr.bf16.mxu0 0
    %146 = vmatpush2.bf16.msra.mxu0 0
    %147 = vmatprep.subr.bf16.mxu0 0
    %148 = vmatpush2.bf16.msra.mxu0 0
    %149 = vmatprep.subr.bf16.mxu0 0
    %150 = vmatpush2.bf16.msra.mxu0 0
    %151 = vmatprep.subr.bf16.mxu0 0
    %152 = vmatpush2.bf16.msra.mxu0 0
    %153 = vmatprep.subr.bf16.mxu0 0
    %154 = vmatpush2.bf16.msra.mxu0 0
    %155 = vmatprep.subr.bf16.mxu0 0
    %156 = vmatpush2.bf16.msra.mxu0 0
    %157 = vmatprep.subr.bf16.mxu0 0
    %158 = vmatpush2.bf16.msra.mxu0 0
    %159 = vmatprep.subr.bf16.mxu0 0
    %160 = vmatpush2.bf16.msra.mxu0 0
    %161 = vmatprep.mubr.bf16.mxu0 0
    %162 = vmatmul.mubr.bf16.gmra.mxu0 %v114
    %v163 = vpop.f32.mrf.mxu0
    %v164 = vadd.f32 %v110, %v163
    %v165 = vpop.f32.mrf.mxu0
    %v166 = vpop.f32.mrf.mxu0
    %v167 = vadd.f32 %v110, %v166
    %v168 = vpop.f32.mrf.mxu0
    %169 = vmatprep.mubr.bf16.mxu0 0
    %170 = vmatmul.mubr.bf16.gmra.mxu0 %v117
    %v171 = vpop.f32.mrf.mxu0
    %v172 = vadd.f32 %v110, %v171
    %v173 = vpop.f32.mrf.mxu0
    %v174 = vpop.f32.mrf.mxu0
    %v175 = vadd.f32 %v110, %v174
    %v176 = vpop.f32.mrf.mxu0
    %177 = vmatprep.mubr.bf16.mxu0 0
    %178 = vmatmul.mubr.bf16.gmra.mxu0 %v120
    %v179 = vpop.f32.mrf.mxu0
    %v180 = vadd.f32 %v110, %v179
    %v181 = vpop.f32.mrf.mxu0
    %v182 = vpop.f32.mrf.mxu0
    %v183 = vadd.f32 %v110, %v182
    %v184 = vpop.f32.mrf.mxu0
    %185 = vmatprep.mubr.bf16.mxu0 0
    %186 = vmatmul.mubr.bf16.gmra.mxu0 %v123
    %v187 = vpop.f32.mrf.mxu0
    %v188 = vadd.f32 %v110, %v187
    %v189 = vpop.f32.mrf.mxu0
    %v190 = vpop.f32.mrf.mxu0
    %v191 = vadd.f32 %v110, %v190
    %v192 = vpop.f32.mrf.mxu0
    %193 = vdwg.mxu0
    %194 = vst [vmem:[#allocation4] sm:$0xff] %v164
    %195 = vst [vmem:[#allocation4 + $0x8] sm:$0xff] %v167
    %196 = vst [vmem:[#allocation4 + $0x10] sm:$0xff] %v172
    %197 = vst [vmem:[#allocation4 + $0x18] sm:$0xff] %v175
    %198 = vst [vmem:[#allocation4 + $0x20] sm:$0xff] %v180
    %199 = vst [vmem:[#allocation4 + $0x28] sm:$0xff] %v183
    %200 = vst [vmem:[#allocation4 + $0x30] sm:$0xff] %v188
    %201 = vst [vmem:[#allocation4 + $0x38] sm:$0xff] %v191
    %v202 = vld [vmem:[#allocation4] sm:$0xff]
    %v207 = vunpack.c.l.b16 %v90
    %v208 = vunpack.c.l.b16 %v91
    %v209 = vunpack.c.l.b16 %v92
    %v210 = vunpack.c.l.b16 %v93
    %v211 = vpack.c.b16 %v208, %v207
    %v212 = vpack.c.b16 %v210, %v209
    %vm215 = vcmask 261120
    %v217 = vsel %vm215, 0, 0
    %219 = vmatprep.subr.bf16.mxu0 0
    %220 = vmatpush1.bf16.msra.mxu0 0
    %221 = vmatprep.subr.bf16.mxu0 0
    %222 = vmatpush1.bf16.msra.mxu0 0
    %223 = vmatprep.subr.bf16.mxu0 0
    %224 = vmatpush1.bf16.msra.mxu0 0
    %225 = vmatprep.subr.bf16.mxu0 0
    %226 = vmatpush1.bf16.msra.mxu0 0
    %227 = vmatprep.subr.bf16.mxu0 0
    %228 = vmatpush1.bf16.msra.mxu0 0
    %229 = vmatprep.subr.bf16.mxu0 0
    %230 = vmatpush1.bf16.msra.mxu0 0
    %231 = vmatprep.subr.bf16.mxu0 0
    %232 = vmatpush1.bf16.msra.mxu0 %v212
    %233 = vmatprep.subr.bf16.mxu0 0
    %234 = vmatpush1.bf16.msra.mxu0 %v211
    %235 = vmatprep.subr.bf16.mxu0 0
    %236 = vmatpush2.bf16.msra.mxu0 0
    %237 = vmatprep.subr.bf16.mxu0 0
    %238 = vmatpush2.bf16.msra.mxu0 0
    %239 = vmatprep.subr.bf16.mxu0 0
    %240 = vmatpush2.bf16.msra.mxu0 0
    %241 = vmatprep.subr.bf16.mxu0 0
    %242 = vmatpush2.bf16.msra.mxu0 0
    %243 = vmatprep.subr.bf16.mxu0 0
    %244 = vmatpush2.bf16.msra.mxu0 0
    %245 = vmatprep.subr.bf16.mxu0 0
    %246 = vmatpush2.bf16.msra.mxu0 0
    %247 = vmatprep.subr.bf16.mxu0 0
    %248 = vmatpush2.bf16.msra.mxu0 0
    %249 = vmatprep.subr.bf16.mxu0 0
    %250 = vmatpush2.bf16.msra.mxu0 0
    %251 = vmatprep.mubr.bf16.mxu0 0
    %252 = vmatmul.mubr.bf16.gmra.mxu0 %v217
    %v253 = vpop.f32.mrf.mxu0
    %v254 = vadd.f32 0.0, %v253
    %v255 = vpop.f32.mrf.mxu0
    %v256 = vpop.f32.mrf.mxu0
    %v257 = vpop.f32.mrf.mxu0
    %258 = vdwg.mxu0
    %v259 = vadd.f32 %v202, %v254
    %v260 = vxor.u32 %v259, 2147483648
    %v261 = vmul.f32 %v260, 1.442695
    %v262 = vpow.pop %v261
    %v263 = vadd.f32 %v262, 1.0
    %v264 = vrcp.pop %v263
    %v265 = vmul.f32 1.0, %v264
    %v266 = vtanh.pop %v259
    %v267 = vmul.f32 %v265, 0.0
    %269 = vrot.lane.b32.xlu0 %v266, 64
    %v270 = vpop.permute.xlu0 %269
    %v272 = vmul.f32 %v265, %v270
    %274 = vrot.lane.b32.xlu0 %v272, 32
    %v275 = vpop.permute.xlu0 %274
    %v277 = vadd.f32 %v267, %v275
    %v278 = vtanh.pop %v277
    %280 = vrot.lane.b32.xlu0 %v278, 64
    %v281 = vpop.permute.xlu0 %280
    %v283 = vmul.f32 %v265, %v281
    %285 = vrot.lane.b32.xlu0 %v283, 32
    %v286 = vpop.permute.xlu0 %285
    %288 = vst.msk [vmem:[#allocation2] sm:$0xff] %vm215, %v286
    %v289 = vld [vmem:[#allocation4 + $0x8] sm:$0xff]
    %v290 = vpack.c.bf16 %v283, %v283
    %292 = vrot.lane.b32.xlu0 %v290, 32
    %v293 = vpop.permute.xlu0 %292
    %v295 = vsel %vm215, %v293, 0
    %297 = vmatprep.subr.bf16.mxu0 0
    %298 = vmatpush1.bf16.msra.mxu0 0
    %299 = vmatprep.subr.bf16.mxu0 0
    %300 = vmatpush1.bf16.msra.mxu0 0
    %301 = vmatprep.subr.bf16.mxu0 0
    %302 = vmatpush1.bf16.msra.mxu0 0
    %303 = vmatprep.subr.bf16.mxu0 0
    %304 = vmatpush1.bf16.msra.mxu0 0
    %305 = vmatprep.subr.bf16.mxu0 0
    %306 = vmatpush1.bf16.msra.mxu0 0
    %307 = vmatprep.subr.bf16.mxu0 0
    %308 = vmatpush1.bf16.msra.mxu0 0
    %309 = vmatprep.subr.bf16.mxu0 0
    %310 = vmatpush1.bf16.msra.mxu0 %v212
    %311 = vmatprep.subr.bf16.mxu0 0
    %312 = vmatpush1.bf16.msra.mxu0 %v211
    %313 = vmatprep.subr.bf16.mxu0 0
    %314 = vmatpush2.bf16.msra.mxu0 0
    %315 = vmatprep.subr.bf16.mxu0 0
    %316 = vmatpush2.bf16.msra.mxu0 0
    %317 = vmatprep.subr.bf16.mxu0 0
    %318 = vmatpush2.bf16.msra.mxu0 0
    %319 = vmatprep.subr.bf16.mxu0 0
    %320 = vmatpush2.bf16.msra.mxu0 0
    %321 = vmatprep.subr.bf16.mxu0 0
    %322 = vmatpush2.bf16.msra.mxu0 0
    %323 = vmatprep.subr.bf16.mxu0 0
    %324 = vmatpush2.bf16.msra.mxu0 0
    %325 = vmatprep.subr.bf16.mxu0 0
    %326 = vmatpush2.bf16.msra.mxu0 0
    %327 = vmatprep.subr.bf16.mxu0 0
    %328 = vmatpush2.bf16.msra.mxu0 0
    %329 = vmatprep.mubr.bf16.mxu0 0
    %330 = vmatmul.mubr.bf16.gmra.mxu0 %v295
    %v331 = vpop.f32.mrf.mxu0
    %v332 = vadd.f32 0.0, %v331
    %v333 = vpop.f32.mrf.mxu0
    %v334 = vpop.f32.mrf.mxu0
    %v335 = vpop.f32.mrf.mxu0
    %336 = vdwg.mxu0
    %v337 = vadd.f32 %v289, %v332
    %v338 = vxor.u32 %v337, 2147483648
    %v339 = vmul.f32 %v338, 1.442695
    %v340 = vpow.pop %v339
    %v341 = vadd.f32 %v340, 1.0
    %v342 = vrcp.pop %v341
    %v343 = vmul.f32 1.0, %v342
    %v344 = vtanh.pop %v337
    %v345 = vmul.f32 %v343, %v277
    %347 = vrot.lane.b32.xlu0 %v344, 64
    %v348 = vpop.permute.xlu0 %347
    %v350 = vmul.f32 %v343, %v348
    %352 = vrot.lane.b32.xlu0 %v350, 32
    %v353 = vpop.permute.xlu0 %352
    %v355 = vadd.f32 %v345, %v353
    %v356 = vtanh.pop %v355
    %358 = vrot.lane.b32.xlu0 %v356, 64
    %v359 = vpop.permute.xlu0 %358
    %v361 = vmul.f32 %v343, %v359
    %363 = vrot.lane.b32.xlu0 %v361, 32
    %v364 = vpop.permute.xlu0 %363
    %366 = vst.msk [vmem:[#allocation2 + $0x8] sm:$0xff] %vm215, %v364
    %v367 = vld [vmem:[#allocation4 + $0x10] sm:$0xff]
    %v368 = vpack.c.bf16 %v361, %v361
    %370 = vrot.lane.b32.xlu0 %v368, 32
    %v371 = vpop.permute.xlu0 %370
    %v373 = vsel %vm215, %v371, 0
    %375 = vmatprep.subr.bf16.mxu0 0
    %376 = vmatpush1.bf16.msra.mxu0 0
    %377 = vmatprep.subr.bf16.mxu0 0
    %378 = vmatpush1.bf16.msra.mxu0 0
    %379 = vmatprep.subr.bf16.mxu0 0
    %380 = vmatpush1.bf16.msra.mxu0 0
    %381 = vmatprep.subr.bf16.mxu0 0
    %382 = vmatpush1.bf16.msra.mxu0 0
    %383 = vmatprep.subr.bf16.mxu0 0
    %384 = vmatpush1.bf16.msra.mxu0 0
    %385 = vmatprep.subr.bf16.mxu0 0
    %386 = vmatpush1.bf16.msra.mxu0 0
    %387 = vmatprep.subr.bf16.mxu0 0
    %388 = vmatpush1.bf16.msra.mxu0 %v212
    %389 = vmatprep.subr.bf16.mxu0 0
    %390 = vmatpush1.bf16.msra.mxu0 %v211
    %391 = vmatprep.subr.bf16.mxu0 0
    %392 = vmatpush2.bf16.msra.mxu0 0
    %393 = vmatprep.subr.bf16.mxu0 0
    %394 = vmatpush2.bf16.msra.mxu0 0
    %395 = vmatprep.subr.bf16.mxu0 0
    %396 = vmatpush2.bf16.msra.mxu0 0
    %397 = vmatprep.subr.bf16.mxu0 0
    %398 = vmatpush2.bf16.msra.mxu0 0
    %399 = vmatprep.subr.bf16.mxu0 0
    %400 = vmatpush2.bf16.msra.mxu0 0
    %401 = vmatprep.subr.bf16.mxu0 0
    %402 = vmatpush2.bf16.msra.mxu0 0
    %403 = vmatprep.subr.bf16.mxu0 0
    %404 = vmatpush2.bf16.msra.mxu0 0
    %405 = vmatprep.subr.bf16.mxu0 0
    %406 = vmatpush2.bf16.msra.mxu0 0
    %407 = vmatprep.mubr.bf16.mxu0 0
    %408 = vmatmul.mubr.bf16.gmra.mxu0 %v373
    %v409 = vpop.f32.mrf.mxu0
    %v410 = vadd.f32 0.0, %v409
    %v411 = vpop.f32.mrf.mxu0
    %v412 = vpop.f32.mrf.mxu0
    %v413 = vpop.f32.mrf.mxu0
    %414 = vdwg.mxu0
    %v415 = vadd.f32 %v367, %v410
    %v416 = vxor.u32 %v415, 2147483648
    %v417 = vmul.f32 %v416, 1.442695
    %v418 = vpow.pop %v417
    %v419 = vadd.f32 %v418, 1.0
    %v420 = vrcp.pop %v419
    %v421 = vmul.f32 1.0, %v420
    %v422 = vtanh.pop %v415
    %v423 = vmul.f32 %v421, %v355
    %425 = vrot.lane.b32.xlu0 %v422, 64
    %v426 = vpop.permute.xlu0 %425
    %v428 = vmul.f32 %v421, %v426
    %430 = vrot.lane.b32.xlu0 %v428, 32
    %v431 = vpop.permute.xlu0 %430
    %v433 = vadd.f32 %v423, %v431
    %v434 = vtanh.pop %v433
    %436 = vrot.lane.b32.xlu0 %v434, 64
    %v437 = vpop.permute.xlu0 %436
    %v439 = vmul.f32 %v421, %v437
    %441 = vrot.lane.b32.xlu0 %v439, 32
    %v442 = vpop.permute.xlu0 %441
    %444 = vst.msk [vmem:[#allocation2 + $0x10] sm:$0xff] %vm215, %v442
    %v445 = vld [vmem:[#allocation4 + $0x18] sm:$0xff]
    %v446 = vpack.c.bf16 %v439, %v439
    %448 = vrot.lane.b32.xlu0 %v446, 32
    %v449 = vpop.permute.xlu0 %448
    %v451 = vsel %vm215, %v449, 0
    %453 = vmatprep.subr.bf16.mxu0 0
    %454 = vmatpush1.bf16.msra.mxu0 0
    %455 = vmatprep.subr.bf16.mxu0 0
    %456 = vmatpush1.bf16.msra.mxu0 0
    %457 = vmatprep.subr.bf16.mxu0 0
    %458 = vmatpush1.bf16.msra.mxu0 0
    %459 = vmatprep.subr.bf16.mxu0 0
    %460 = vmatpush1.bf16.msra.mxu0 0
    %461 = vmatprep.subr.bf16.mxu0 0
    %462 = vmatpush1.bf16.msra.mxu0 0
    %463 = vmatprep.subr.bf16.mxu0 0
    %464 = vmatpush1.bf16.msra.mxu0 0
    %465 = vmatprep.subr.bf16.mxu0 0
    %466 = vmatpush1.bf16.msra.mxu0 %v212
    %467 = vmatprep.subr.bf16.mxu0 0
    %468 = vmatpush1.bf16.msra.mxu0 %v211
    %469 = vmatprep.subr.bf16.mxu0 0
    %470 = vmatpush2.bf16.msra.mxu0 0
    %471 = vmatprep.subr.bf16.mxu0 0
    %472 = vmatpush2.bf16.msra.mxu0 0
    %473 = vmatprep.subr.bf16.mxu0 0
    %474 = vmatpush2.bf16.msra.mxu0 0
    %475 = vmatprep.subr.bf16.mxu0 0
    %476 = vmatpush2.bf16.msra.mxu0 0
    %477 = vmatprep.subr.bf16.mxu0 0
    %478 = vmatpush2.bf16.msra.mxu0 0
    %479 = vmatprep.subr.bf16.mxu0 0
    %480 = vmatpush2.bf16.msra.mxu0 0
    %481 = vmatprep.subr.bf16.mxu0 0
    %482 = vmatpush2.bf16.msra.mxu0 0
    %483 = vmatprep.subr.bf16.mxu0 0
    %484 = vmatpush2.bf16.msra.mxu0 0
    %485 = vmatprep.mubr.bf16.mxu0 0
    %486 = vmatmul.mubr.bf16.gmra.mxu0 %v451
    %v487 = vpop.f32.mrf.mxu0
    %v488 = vadd.f32 0.0, %v487
    %v489 = vpop.f32.mrf.mxu0
    %v490 = vpop.f32.mrf.mxu0
    %v491 = vpop.f32.mrf.mxu0
    %492 = vdwg.mxu0
    %v493 = vadd.f32 %v445, %v488
    %v494 = vxor.u32 %v493, 2147483648
    %v495 = vmul.f32 %v494, 1.442695
    %v496 = vpow.pop %v495
    %v497 = vadd.f32 %v496, 1.0
    %v498 = vrcp.pop %v497
    %v499 = vmul.f32 1.0, %v498
    %v500 = vtanh.pop %v493
    %v501 = vmul.f32 %v499, %v433
    %503 = vrot.lane.b32.xlu0 %v500, 64
    %v504 = vpop.permute.xlu0 %503
    %v506 = vmul.f32 %v499, %v504
    %508 = vrot.lane.b32.xlu0 %v506, 32
    %v509 = vpop.permute.xlu0 %508
    %v511 = vadd.f32 %v501, %v509
    %v512 = vtanh.pop %v511
    %514 = vrot.lane.b32.xlu0 %v512, 64
    %v515 = vpop.permute.xlu0 %514
    %v517 = vmul.f32 %v499, %v515
    %519 = vrot.lane.b32.xlu0 %v517, 32
    %v520 = vpop.permute.xlu0 %519
    %522 = vst.msk [vmem:[#allocation2 + $0x18] sm:$0xff] %vm215, %v520
    %v523 = vld [vmem:[#allocation4 + $0x20] sm:$0xff]
    %v524 = vpack.c.bf16 %v517, %v517
    %526 = vrot.lane.b32.xlu0 %v524, 32
    %v527 = vpop.permute.xlu0 %526
    %v529 = vsel %vm215, %v527, 0
    %531 = vmatprep.subr.bf16.mxu0 0
    %532 = vmatpush1.bf16.msra.mxu0 0
    %533 = vmatprep.subr.bf16.mxu0 0
    %534 = vmatpush1.bf16.msra.mxu0 0
    %535 = vmatprep.subr.bf16.mxu0 0
    %536 = vmatpush1.bf16.msra.mxu0 0
    %537 = vmatprep.subr.bf16.mxu0 0
    %538 = vmatpush1.bf16.msra.mxu0 0
    %539 = vmatprep.subr.bf16.mxu0 0
    %540 = vmatpush1.bf16.msra.mxu0 0
    %541 = vmatprep.subr.bf16.mxu0 0
    %542 = vmatpush1.bf16.msra.mxu0 0
    %543 = vmatprep.subr.bf16.mxu0 0
    %544 = vmatpush1.bf16.msra.mxu0 %v212
    %545 = vmatprep.subr.bf16.mxu0 0
    %546 = vmatpush1.bf16.msra.mxu0 %v211
    %547 = vmatprep.subr.bf16.mxu0 0
    %548 = vmatpush2.bf16.msra.mxu0 0
    %549 = vmatprep.subr.bf16.mxu0 0
    %550 = vmatpush2.bf16.msra.mxu0 0
    %551 = vmatprep.subr.bf16.mxu0 0
    %552 = vmatpush2.bf16.msra.mxu0 0
    %553 = vmatprep.subr.bf16.mxu0 0
    %554 = vmatpush2.bf16.msra.mxu0 0
    %555 = vmatprep.subr.bf16.mxu0 0
    %556 = vmatpush2.bf16.msra.mxu0 0
    %557 = vmatprep.subr.bf16.mxu0 0
    %558 = vmatpush2.bf16.msra.mxu0 0
    %559 = vmatprep.subr.bf16.mxu0 0
    %560 = vmatpush2.bf16.msra.mxu0 0
    %561 = vmatprep.subr.bf16.mxu0 0
    %562 = vmatpush2.bf16.msra.mxu0 0
    %563 = vmatprep.mubr.bf16.mxu0 0
    %564 = vmatmul.mubr.bf16.gmra.mxu0 %v529
    %v565 = vpop.f32.mrf.mxu0
    %v566 = vadd.f32 0.0, %v565
    %v567 = vpop.f32.mrf.mxu0
    %v568 = vpop.f32.mrf.mxu0
    %v569 = vpop.f32.mrf.mxu0
    %570 = vdwg.mxu0
    %v571 = vadd.f32 %v523, %v566
    %v572 = vxor.u32 %v571, 2147483648
    %v573 = vmul.f32 %v572, 1.442695
    %v574 = vpow.pop %v573
    %v575 = vadd.f32 %v574, 1.0
    %v576 = vrcp.pop %v575
    %v577 = vmul.f32 1.0, %v576
    %v578 = vtanh.pop %v571
    %v579 = vmul.f32 %v577, %v511
    %581 = vrot.lane.b32.xlu0 %v578, 64
    %v582 = vpop.permute.xlu0 %581
    %v584 = vmul.f32 %v577, %v582
    %586 = vrot.lane.b32.xlu0 %v584, 32
    %v587 = vpop.permute.xlu0 %586
    %v589 = vadd.f32 %v579, %v587
    %v590 = vtanh.pop %v589
    %592 = vrot.lane.b32.xlu0 %v590, 64
    %v593 = vpop.permute.xlu0 %592
    %v595 = vmul.f32 %v577, %v593
    %597 = vrot.lane.b32.xlu0 %v595, 32
    %v598 = vpop.permute.xlu0 %597
    %600 = vst.msk [vmem:[#allocation2 + $0x20] sm:$0xff] %vm215, %v598
    %v601 = vld [vmem:[#allocation4 + $0x28] sm:$0xff]
    %v602 = vpack.c.bf16 %v595, %v595
    %604 = vrot.lane.b32.xlu0 %v602, 32
    %v605 = vpop.permute.xlu0 %604
    %v607 = vsel %vm215, %v605, 0
    %609 = vmatprep.subr.bf16.mxu0 0
    %610 = vmatpush1.bf16.msra.mxu0 0
    %611 = vmatprep.subr.bf16.mxu0 0
    %612 = vmatpush1.bf16.msra.mxu0 0
    %613 = vmatprep.subr.bf16.mxu0 0
    %614 = vmatpush1.bf16.msra.mxu0 0
    %615 = vmatprep.subr.bf16.mxu0 0
    %616 = vmatpush1.bf16.msra.mxu0 0
    %617 = vmatprep.subr.bf16.mxu0 0
    %618 = vmatpush1.bf16.msra.mxu0 0
    %619 = vmatprep.subr.bf16.mxu0 0
    %620 = vmatpush1.bf16.msra.mxu0 0
    %621 = vmatprep.subr.bf16.mxu0 0
    %622 = vmatpush1.bf16.msra.mxu0 %v212
    %623 = vmatprep.subr.bf16.mxu0 0
    %624 = vmatpush1.bf16.msra.mxu0 %v211
    %625 = vmatprep.subr.bf16.mxu0 0
    %626 = vmatpush2.bf16.msra.mxu0 0
    %627 = vmatprep.subr.bf16.mxu0 0
    %628 = vmatpush2.bf16.msra.mxu0 0
    %629 = vmatprep.subr.bf16.mxu0 0
    %630 = vmatpush2.bf16.msra.mxu0 0
    %631 = vmatprep.subr.bf16.mxu0 0
    %632 = vmatpush2.bf16.msra.mxu0 0
    %633 = vmatprep.subr.bf16.mxu0 0
    %634 = vmatpush2.bf16.msra.mxu0 0
    %635 = vmatprep.subr.bf16.mxu0 0
    %636 = vmatpush2.bf16.msra.mxu0 0
    %637 = vmatprep.subr.bf16.mxu0 0
    %638 = vmatpush2.bf16.msra.mxu0 0
    %639 = vmatprep.subr.bf16.mxu0 0
    %640 = vmatpush2.bf16.msra.mxu0 0
    %641 = vmatprep.mubr.bf16.mxu0 0
    %642 = vmatmul.mubr.bf16.gmra.mxu0 %v607
    %v643 = vpop.f32.mrf.mxu0
    %v644 = vadd.f32 0.0, %v643
    %v645 = vpop.f32.mrf.mxu0
    %v646 = vpop.f32.mrf.mxu0
    %v647 = vpop.f32.mrf.mxu0
    %648 = vdwg.mxu0
    %v649 = vadd.f32 %v601, %v644
    %v650 = vxor.u32 %v649, 2147483648
    %v651 = vmul.f32 %v650, 1.442695
    %v652 = vpow.pop %v651
    %v653 = vadd.f32 %v652, 1.0
    %v654 = vrcp.pop %v653
    %v655 = vmul.f32 1.0, %v654
    %v656 = vtanh.pop %v649
    %v657 = vmul.f32 %v655, %v589
    %659 = vrot.lane.b32.xlu0 %v656, 64
    %v660 = vpop.permute.xlu0 %659
    %v662 = vmul.f32 %v655, %v660
    %664 = vrot.lane.b32.xlu0 %v662, 32
    %v665 = vpop.permute.xlu0 %664
    %v667 = vadd.f32 %v657, %v665
    %v668 = vtanh.pop %v667
    %670 = vrot.lane.b32.xlu0 %v668, 64
    %v671 = vpop.permute.xlu0 %670
    %v673 = vmul.f32 %v655, %v671
    %675 = vrot.lane.b32.xlu0 %v673, 32
    %v676 = vpop.permute.xlu0 %675
    %678 = vst.msk [vmem:[#allocation2 + $0x28] sm:$0xff] %vm215, %v676
    %v679 = vld [vmem:[#allocation4 + $0x30] sm:$0xff]
    %v680 = vpack.c.bf16 %v673, %v673
    %682 = vrot.lane.b32.xlu0 %v680, 32
    %v683 = vpop.permute.xlu0 %682
    %v685 = vsel %vm215, %v683, 0
    %687 = vmatprep.subr.bf16.mxu0 0
    %688 = vmatpush1.bf16.msra.mxu0 0
    %689 = vmatprep.subr.bf16.mxu0 0
    %690 = vmatpush1.bf16.msra.mxu0 0
    %691 = vmatprep.subr.bf16.mxu0 0
    %692 = vmatpush1.bf16.msra.mxu0 0
    %693 = vmatprep.subr.bf16.mxu0 0
    %694 = vmatpush1.bf16.msra.mxu0 0
    %695 = vmatprep.subr.bf16.mxu0 0
    %696 = vmatpush1.bf16.msra.mxu0 0
    %697 = vmatprep.subr.bf16.mxu0 0
    %698 = vmatpush1.bf16.msra.mxu0 0
    %699 = vmatprep.subr.bf16.mxu0 0
    %700 = vmatpush1.bf16.msra.mxu0 %v212
    %701 = vmatprep.subr.bf16.mxu0 0
    %702 = vmatpush1.bf16.msra.mxu0 %v211
    %703 = vmatprep.subr.bf16.mxu0 0
    %704 = vmatpush2.bf16.msra.mxu0 0
    %705 = vmatprep.subr.bf16.mxu0 0
    %706 = vmatpush2.bf16.msra.mxu0 0
    %707 = vmatprep.subr.bf16.mxu0 0
    %708 = vmatpush2.bf16.msra.mxu0 0
    %709 = vmatprep.subr.bf16.mxu0 0
    %710 = vmatpush2.bf16.msra.mxu0 0
    %711 = vmatprep.subr.bf16.mxu0 0
    %712 = vmatpush2.bf16.msra.mxu0 0
    %713 = vmatprep.subr.bf16.mxu0 0
    %714 = vmatpush2.bf16.msra.mxu0 0
    %715 = vmatprep.subr.bf16.mxu0 0
    %716 = vmatpush2.bf16.msra.mxu0 0
    %717 = vmatprep.subr.bf16.mxu0 0
    %718 = vmatpush2.bf16.msra.mxu0 0
    %719 = vmatprep.mubr.bf16.mxu0 0
    %720 = vmatmul.mubr.bf16.gmra.mxu0 %v685
    %v721 = vpop.f32.mrf.mxu0
    %v722 = vadd.f32 0.0, %v721
    %v723 = vpop.f32.mrf.mxu0
    %v724 = vpop.f32.mrf.mxu0
    %v725 = vpop.f32.mrf.mxu0
    %726 = vdwg.mxu0
    %v727 = vadd.f32 %v679, %v722
    %v728 = vxor.u32 %v727, 2147483648
    %v729 = vmul.f32 %v728, 1.442695
    %v730 = vpow.pop %v729
    %v731 = vadd.f32 %v730, 1.0
    %v732 = vrcp.pop %v731
    %v733 = vmul.f32 1.0, %v732
    %v734 = vtanh.pop %v727
    %v735 = vmul.f32 %v733, %v667
    %737 = vrot.lane.b32.xlu0 %v734, 64
    %v738 = vpop.permute.xlu0 %737
    %v740 = vmul.f32 %v733, %v738
    %742 = vrot.lane.b32.xlu0 %v740, 32
    %v743 = vpop.permute.xlu0 %742
    %v745 = vadd.f32 %v735, %v743
    %v746 = vtanh.pop %v745
    %748 = vrot.lane.b32.xlu0 %v746, 64
    %v749 = vpop.permute.xlu0 %748
    %v751 = vmul.f32 %v733, %v749
    %753 = vrot.lane.b32.xlu0 %v751, 32
    %v754 = vpop.permute.xlu0 %753
    %756 = vst.msk [vmem:[#allocation2 + $0x30] sm:$0xff] %vm215, %v754
    %v757 = vld [vmem:[#allocation4 + $0x38] sm:$0xff]
    %v758 = vpack.c.bf16 %v751, %v751
    %760 = vrot.lane.b32.xlu0 %v758, 32
    %v761 = vpop.permute.xlu0 %760
    %v763 = vsel %vm215, %v761, 0
    %765 = vmatprep.subr.bf16.mxu0 0
    %766 = vmatpush1.bf16.msra.mxu0 0
    %767 = vmatprep.subr.bf16.mxu0 0
    %768 = vmatpush1.bf16.msra.mxu0 0
    %769 = vmatprep.subr.bf16.mxu0 0
    %770 = vmatpush1.bf16.msra.mxu0 0
    %771 = vmatprep.subr.bf16.mxu0 0
    %772 = vmatpush1.bf16.msra.mxu0 0
    %773 = vmatprep.subr.bf16.mxu0 0
    %774 = vmatpush1.bf16.msra.mxu0 0
    %775 = vmatprep.subr.bf16.mxu0 0
    %776 = vmatpush1.bf16.msra.mxu0 0
    %777 = vmatprep.subr.bf16.mxu0 0
    %778 = vmatpush1.bf16.msra.mxu0 %v212
    %779 = vmatprep.subr.bf16.mxu0 0
    %780 = vmatpush1.bf16.msra.mxu0 %v211
    %781 = vmatprep.subr.bf16.mxu0 0
    %782 = vmatpush2.bf16.msra.mxu0 0
    %783 = vmatprep.subr.bf16.mxu0 0
    %784 = vmatpush2.bf16.msra.mxu0 0
    %785 = vmatprep.subr.bf16.mxu0 0
    %786 = vmatpush2.bf16.msra.mxu0 0
    %787 = vmatprep.subr.bf16.mxu0 0
    %788 = vmatpush2.bf16.msra.mxu0 0
    %789 = vmatprep.subr.bf16.mxu0 0
    %790 = vmatpush2.bf16.msra.mxu0 0
    %791 = vmatprep.subr.bf16.mxu0 0
    %792 = vmatpush2.bf16.msra.mxu0 0
    %793 = vmatprep.subr.bf16.mxu0 0
    %794 = vmatpush2.bf16.msra.mxu0 0
    %795 = vmatprep.subr.bf16.mxu0 0
    %796 = vmatpush2.bf16.msra.mxu0 0
    %797 = vmatprep.mubr.bf16.mxu0 0
    %798 = vmatmul.mubr.bf16.gmra.mxu0 %v763
    %v799 = vpop.f32.mrf.mxu0
    %v800 = vadd.f32 0.0, %v799
    %v801 = vpop.f32.mrf.mxu0
    %v802 = vpop.f32.mrf.mxu0
    %v803 = vpop.f32.mrf.mxu0
    %804 = vdwg.mxu0
    %v805 = vadd.f32 %v757, %v800
    %v806 = vxor.u32 %v805, 2147483648
    %v807 = vmul.f32 %v806, 1.442695
    %v808 = vpow.pop %v807
    %v809 = vadd.f32 %v808, 1.0
    %v810 = vrcp.pop %v809
    %v811 = vmul.f32 1.0, %v810
    %v812 = vtanh.pop %v805
    %v813 = vmul.f32 %v811, %v745
    %815 = vrot.lane.b32.xlu0 %v812, 64
    %v816 = vpop.permute.xlu0 %815
    %v818 = vmul.f32 %v811, %v816
    %820 = vrot.lane.b32.xlu0 %v818, 32
    %v821 = vpop.permute.xlu0 %820
    %v823 = vadd.f32 %v813, %v821
    %v824 = vtanh.pop %v823
    %826 = vrot.lane.b32.xlu0 %v824, 64
    %v827 = vpop.permute.xlu0 %826
    %v829 = vmul.f32 %v811, %v827
    %831 = vrot.lane.b32.xlu0 %v829, 32
    %v832 = vpop.permute.xlu0 %831
    %834 = vst.msk [vmem:[#allocation2 + $0x38] sm:$0xff] %vm215, %v832
    %v835 = vld [vmem:[%s4] sm:$0xf]
    %v836 = vld [vmem:[%s4 + $0x4] sm:$0xf]
    %v837 = vld [vmem:[%s4 + $0x8] sm:$0xf]
    %v838 = vld [vmem:[%s4 + $0xc] sm:$0xf]
    %v839 = vld [vmem:[%s6] sm:$0x1]
    %v840 = vld [vmem:[%s5] sm:$0xf]
    %v841 = vld [vmem:[%s5 + $0x4] sm:$0xf]
    %v842 = vld [vmem:[%s5 + $0x8] sm:$0xf]
    %v843 = vld [vmem:[%s5 + $0xc] sm:$0xf]
    %v844 = vld [vmem:[#allocation2] sm:$0xff]
    %v845 = vld [vmem:[#allocation2 + $0x8] sm:$0xff]
    %v846 = vld [vmem:[#allocation2 + $0x10] sm:$0xff]
    %v847 = vld [vmem:[#allocation2 + $0x18] sm:$0xff]
    %v848 = vld [vmem:[#allocation2 + $0x20] sm:$0xff]
    %v849 = vld [vmem:[#allocation2 + $0x28] sm:$0xff]
    %v850 = vld [vmem:[#allocation2 + $0x30] sm:$0xff]
    %v851 = vld [vmem:[#allocation2 + $0x38] sm:$0xff]
    %v852 = vpack.c.bf16 %v845, %v844
    %v853 = vpack.c.bf16 %v847, %v846
    %v854 = vpack.c.bf16 %v849, %v848
    %v855 = vpack.c.bf16 %v851, %v850
    %v857 = vlaneseq
    %v858 = vshrl.u32 %v857, 7
    %v859 = vsub.s32 0, %v858
    %v860 = vrot.slane %v839, %v859
    %v866 = vunpack.c.l.b16 %v835
    %v867 = vunpack.c.l.b16 %v836
    %v868 = vunpack.c.l.b16 %v837
    %v869 = vunpack.c.l.b16 %v838
    %v870 = vpack.c.b16 %v867, %v866
    %v871 = vpack.c.b16 %v869, %v868
    %v875 = vsel %vm215, %v852, 0
    %v878 = vsel %vm215, %v853, 0
    %v881 = vsel %vm215, %v854, 0
    %v884 = vsel %vm215, %v855, 0
    %886 = vmatprep.subr.bf16.mxu0 0
    %887 = vmatpush1.bf16.msra.mxu0 0
    %888 = vmatprep.subr.bf16.mxu0 0
    %889 = vmatpush1.bf16.msra.mxu0 0
    %890 = vmatprep.subr.bf16.mxu0 0
    %891 = vmatpush1.bf16.msra.mxu0 0
    %892 = vmatprep.subr.bf16.mxu0 0
    %893 = vmatpush1.bf16.msra.mxu0 0
    %894 = vmatprep.subr.bf16.mxu0 0
    %895 = vmatpush1.bf16.msra.mxu0 0
    %896 = vmatprep.subr.bf16.mxu0 0
    %897 = vmatpush1.bf16.msra.mxu0 0
    %898 = vmatprep.subr.bf16.mxu0 0
    %899 = vmatpush1.bf16.msra.mxu0 %v871
    %900 = vmatprep.subr.bf16.mxu0 0
    %901 = vmatpush1.bf16.msra.mxu0 %v870
    %902 = vmatprep.subr.bf16.mxu0 0
    %903 = vmatpush2.bf16.msra.mxu0 0
    %904 = vmatprep.subr.bf16.mxu0 0
    %905 = vmatpush2.bf16.msra.mxu0 0
    %906 = vmatprep.subr.bf16.mxu0 0
    %907 = vmatpush2.bf16.msra.mxu0 0
    %908 = vmatprep.subr.bf16.mxu0 0
    %909 = vmatpush2.bf16.msra.mxu0 0
    %910 = vmatprep.subr.bf16.mxu0 0
    %911 = vmatpush2.bf16.msra.mxu0 0
    %912 = vmatprep.subr.bf16.mxu0 0
    %913 = vmatpush2.bf16.msra.mxu0 0
    %914 = vmatprep.subr.bf16.mxu0 0
    %915 = vmatpush2.bf16.msra.mxu0 0
    %916 = vmatprep.subr.bf16.mxu0 0
    %917 = vmatpush2.bf16.msra.mxu0 0
    %918 = vmatprep.mubr.bf16.mxu0 0
    %919 = vmatmul.mubr.bf16.gmra.mxu0 %v875
    %v920 = vpop.f32.mrf.mxu0
    %v921 = vadd.f32 %v860, %v920
    %v922 = vpop.f32.mrf.mxu0
    %v923 = vpop.f32.mrf.mxu0
    %v924 = vadd.f32 %v860, %v923
    %v925 = vpop.f32.mrf.mxu0
    %926 = vmatprep.mubr.bf16.mxu0 0
    %927 = vmatmul.mubr.bf16.gmra.mxu0 %v878
    %v928 = vpop.f32.mrf.mxu0
    %v929 = vadd.f32 %v860, %v928
    %v930 = vpop.f32.mrf.mxu0
    %v931 = vpop.f32.mrf.mxu0
    %v932 = vadd.f32 %v860, %v931
    %v933 = vpop.f32.mrf.mxu0
    %934 = vmatprep.mubr.bf16.mxu0 0
    %935 = vmatmul.mubr.bf16.gmra.mxu0 %v881
    %v936 = vpop.f32.mrf.mxu0
    %v937 = vadd.f32 %v860, %v936
    %v938 = vpop.f32.mrf.mxu0
    %v939 = vpop.f32.mrf.mxu0
    %v940 = vadd.f32 %v860, %v939
    %v941 = vpop.f32.mrf.mxu0
    %942 = vmatprep.mubr.bf16.mxu0 0
    %943 = vmatmul.mubr.bf16.gmra.mxu0 %v884
    %v944 = vpop.f32.mrf.mxu0
    %v945 = vadd.f32 %v860, %v944
    %v946 = vpop.f32.mrf.mxu0
    %v947 = vpop.f32.mrf.mxu0
    %v948 = vadd.f32 %v860, %v947
    %v949 = vpop.f32.mrf.mxu0
    %950 = vdwg.mxu0
    %951 = vst [vmem:[#allocation4] sm:$0xff] %v921
    %952 = vst [vmem:[#allocation4 + $0x8] sm:$0xff] %v924
    %953 = vst [vmem:[#allocation4 + $0x10] sm:$0xff] %v929
    %954 = vst [vmem:[#allocation4 + $0x18] sm:$0xff] %v932
    %955 = vst [vmem:[#allocation4 + $0x20] sm:$0xff] %v937
    %956 = vst [vmem:[#allocation4 + $0x28] sm:$0xff] %v940
    %957 = vst [vmem:[#allocation4 + $0x30] sm:$0xff] %v945
    %958 = vst [vmem:[#allocation4 + $0x38] sm:$0xff] %v948
    %v959 = vld [vmem:[#allocation4] sm:$0xff]
    %v964 = vunpack.c.l.b16 %v840
    %v965 = vunpack.c.l.b16 %v841
    %v966 = vunpack.c.l.b16 %v842
    %v967 = vunpack.c.l.b16 %v843
    %v968 = vpack.c.b16 %v965, %v964
    %v969 = vpack.c.b16 %v967, %v966
    %972 = vmatprep.subr.bf16.mxu0 0
    %973 = vmatpush1.bf16.msra.mxu0 0
    %974 = vmatprep.subr.bf16.mxu0 0
    %975 = vmatpush1.bf16.msra.mxu0 0
    %976 = vmatprep.subr.bf16.mxu0 0
    %977 = vmatpush1.bf16.msra.mxu0 0
    %978 = vmatprep.subr.bf16.mxu0 0
    %979 = vmatpush1.bf16.msra.mxu0 0
    %980 = vmatprep.subr.bf16.mxu0 0
    %981 = vmatpush1.bf16.msra.mxu0 0
    %982 = vmatprep.subr.bf16.mxu0 0
    %983 = vmatpush1.bf16.msra.mxu0 0
    %984 = vmatprep.subr.bf16.mxu0 0
    %985 = vmatpush1.bf16.msra.mxu0 %v969
    %986 = vmatprep.subr.bf16.mxu0 0
    %987 = vmatpush1.bf16.msra.mxu0 %v968
    %988 = vmatprep.subr.bf16.mxu0 0
    %989 = vmatpush2.bf16.msra.mxu0 0
    %990 = vmatprep.subr.bf16.mxu0 0
    %991 = vmatpush2.bf16.msra.mxu0 0
    %992 = vmatprep.subr.bf16.mxu0 0
    %993 = vmatpush2.bf16.msra.mxu0 0
    %994 = vmatprep.subr.bf16.mxu0 0
    %995 = vmatpush2.bf16.msra.mxu0 0
    %996 = vmatprep.subr.bf16.mxu0 0
    %997 = vmatpush2.bf16.msra.mxu0 0
    %998 = vmatprep.subr.bf16.mxu0 0
    %999 = vmatpush2.bf16.msra.mxu0 0
    %1000 = vmatprep.subr.bf16.mxu0 0
    %1001 = vmatpush2.bf16.msra.mxu0 0
    %1002 = vmatprep.subr.bf16.mxu0 0
    %1003 = vmatpush2.bf16.msra.mxu0 0
    %1004 = vmatprep.mubr.bf16.mxu0 0
    %1005 = vmatmul.mubr.bf16.gmra.mxu0 %v217
    %v1006 = vpop.f32.mrf.mxu0
    %v1007 = vadd.f32 0.0, %v1006
    %v1008 = vpop.f32.mrf.mxu0
    %v1009 = vpop.f32.mrf.mxu0
    %v1010 = vpop.f32.mrf.mxu0
    %1011 = vdwg.mxu0
    %v1012 = vadd.f32 %v959, %v1007
    %v1013 = vxor.u32 %v1012, 2147483648
    %v1014 = vmul.f32 %v1013, 1.442695
    %v1015 = vpow.pop %v1014
    %v1016 = vadd.f32 %v1015, 1.0
    %v1017 = vrcp.pop %v1016
    %v1018 = vmul.f32 1.0, %v1017
    %v1019 = vtanh.pop %v1012
    %v1020 = vmul.f32 %v1018, 0.0
    %1022 = vrot.lane.b32.xlu0 %v1019, 64
    %v1023 = vpop.permute.xlu0 %1022
    %v1025 = vmul.f32 %v1018, %v1023
    %1027 = vrot.lane.b32.xlu0 %v1025, 32
    %v1028 = vpop.permute.xlu0 %1027
    %v1030 = vadd.f32 %v1020, %v1028
    %v1031 = vtanh.pop %v1030
    %1033 = vrot.lane.b32.xlu0 %v1031, 64
    %v1034 = vpop.permute.xlu0 %1033
    %v1036 = vmul.f32 %v1018, %v1034
    %v1037 = vld [vmem:[#allocation4 + $0x8] sm:$0xff]
    %v1038 = vpack.c.bf16 %v1036, %v1036
    %1040 = vrot.lane.b32.xlu0 %v1038, 32
    %v1041 = vpop.permute.xlu0 %1040
    %v1043 = vsel %vm215, %v1041, 0
    %1045 = vmatprep.subr.bf16.mxu0 0
    %1046 = vmatpush1.bf16.msra.mxu0 0
    %1047 = vmatprep.subr.bf16.mxu0 0
    %1048 = vmatpush1.bf16.msra.mxu0 0
    %1049 = vmatprep.subr.bf16.mxu0 0
    %1050 = vmatpush1.bf16.msra.mxu0 0
    %1051 = vmatprep.subr.bf16.mxu0 0
    %1052 = vmatpush1.bf16.msra.mxu0 0
    %1053 = vmatprep.subr.bf16.mxu0 0
    %1054 = vmatpush1.bf16.msra.mxu0 0
    %1055 = vmatprep.subr.bf16.mxu0 0
    %1056 = vmatpush1.bf16.msra.mxu0 0
    %1057 = vmatprep.subr.bf16.mxu0 0
    %1058 = vmatpush1.bf16.msra.mxu0 %v969
    %1059 = vmatprep.subr.bf16.mxu0 0
    %1060 = vmatpush1.bf16.msra.mxu0 %v968
    %1061 = vmatprep.subr.bf16.mxu0 0
    %1062 = vmatpush2.bf16.msra.mxu0 0
    %1063 = vmatprep.subr.bf16.mxu0 0
    %1064 = vmatpush2.bf16.msra.mxu0 0
    %1065 = vmatprep.subr.bf16.mxu0 0
    %1066 = vmatpush2.bf16.msra.mxu0 0
    %1067 = vmatprep.subr.bf16.mxu0 0
    %1068 = vmatpush2.bf16.msra.mxu0 0
    %1069 = vmatprep.subr.bf16.mxu0 0
    %1070 = vmatpush2.bf16.msra.mxu0 0
    %1071 = vmatprep.subr.bf16.mxu0 0
    %1072 = vmatpush2.bf16.msra.mxu0 0
    %1073 = vmatprep.subr.bf16.mxu0 0
    %1074 = vmatpush2.bf16.msra.mxu0 0
    %1075 = vmatprep.subr.bf16.mxu0 0
    %1076 = vmatpush2.bf16.msra.mxu0 0
    %1077 = vmatprep.mubr.bf16.mxu0 0
    %1078 = vmatmul.mubr.bf16.gmra.mxu0 %v1043
    %v1079 = vpop.f32.mrf.mxu0
    %v1080 = vadd.f32 0.0, %v1079
    %v1081 = vpop.f32.mrf.mxu0
    %v1082 = vpop.f32.mrf.mxu0
    %v1083 = vpop.f32.mrf.mxu0
    %1084 = vdwg.mxu0
    %v1085 = vadd.f32 %v1037, %v1080
    %v1086 = vxor.u32 %v1085, 2147483648
    %v1087 = vmul.f32 %v1086, 1.442695
    %v1088 = vpow.pop %v1087
    %v1089 = vadd.f32 %v1088, 1.0
    %v1090 = vrcp.pop %v1089
    %v1091 = vmul.f32 1.0, %v1090
    %v1092 = vtanh.pop %v1085
    %v1093 = vmul.f32 %v1091, %v1030
    %1095 = vrot.lane.b32.xlu0 %v1092, 64
    %v1096 = vpop.permute.xlu0 %1095
    %v1098 = vmul.f32 %v1091, %v1096
    %1100 = vrot.lane.b32.xlu0 %v1098, 32
    %v1101 = vpop.permute.xlu0 %1100
    %v1103 = vadd.f32 %v1093, %v1101
    %v1104 = vtanh.pop %v1103
    %1106 = vrot.lane.b32.xlu0 %v1104, 64
    %v1107 = vpop.permute.xlu0 %1106
    %v1109 = vmul.f32 %v1091, %v1107
    %v1110 = vld [vmem:[#allocation4 + $0x10] sm:$0xff]
    %v1111 = vpack.c.bf16 %v1109, %v1109
    %1113 = vrot.lane.b32.xlu0 %v1111, 32
    %v1114 = vpop.permute.xlu0 %1113
    %v1116 = vsel %vm215, %v1114, 0
    %1118 = vmatprep.subr.bf16.mxu0 0
    %1119 = vmatpush1.bf16.msra.mxu0 0
    %1120 = vmatprep.subr.bf16.mxu0 0
    %1121 = vmatpush1.bf16.msra.mxu0 0
    %1122 = vmatprep.subr.bf16.mxu0 0
    %1123 = vmatpush1.bf16.msra.mxu0 0
    %1124 = vmatprep.subr.bf16.mxu0 0
    %1125 = vmatpush1.bf16.msra.mxu0 0
    %1126 = vmatprep.subr.bf16.mxu0 0
    %1127 = vmatpush1.bf16.msra.mxu0 0
    %1128 = vmatprep.subr.bf16.mxu0 0
    %1129 = vmatpush1.bf16.msra.mxu0 0
    %1130 = vmatprep.subr.bf16.mxu0 0
    %1131 = vmatpush1.bf16.msra.mxu0 %v969
    %1132 = vmatprep.subr.bf16.mxu0 0
    %1133 = vmatpush1.bf16.msra.mxu0 %v968
    %1134 = vmatprep.subr.bf16.mxu0 0
    %1135 = vmatpush2.bf16.msra.mxu0 0
    %1136 = vmatprep.subr.bf16.mxu0 0
    %1137 = vmatpush2.bf16.msra.mxu0 0
    %1138 = vmatprep.subr.bf16.mxu0 0
    %1139 = vmatpush2.bf16.msra.mxu0 0
    %1140 = vmatprep.subr.bf16.mxu0 0
    %1141 = vmatpush2.bf16.msra.mxu0 0
    %1142 = vmatprep.subr.bf16.mxu0 0
    %1143 = vmatpush2.bf16.msra.mxu0 0
    %1144 = vmatprep.subr.bf16.mxu0 0
    %1145 = vmatpush2.bf16.msra.mxu0 0
    %1146 = vmatprep.subr.bf16.mxu0 0
    %1147 = vmatpush2.bf16.msra.mxu0 0
    %1148 = vmatprep.subr.bf16.mxu0 0
    %1149 = vmatpush2.bf16.msra.mxu0 0
    %1150 = vmatprep.mubr.bf16.mxu0 0
    %1151 = vmatmul.mubr.bf16.gmra.mxu0 %v1116
    %v1152 = vpop.f32.mrf.mxu0
    %v1153 = vadd.f32 0.0, %v1152
    %v1154 = vpop.f32.mrf.mxu0
    %v1155 = vpop.f32.mrf.mxu0
    %v1156 = vpop.f32.mrf.mxu0
    %1157 = vdwg.mxu0
    %v1158 = vadd.f32 %v1110, %v1153
    %v1159 = vxor.u32 %v1158, 2147483648
    %v1160 = vmul.f32 %v1159, 1.442695
    %v1161 = vpow.pop %v1160
    %v1162 = vadd.f32 %v1161, 1.0
    %v1163 = vrcp.pop %v1162
    %v1164 = vmul.f32 1.0, %v1163
    %v1165 = vtanh.pop %v1158
    %v1166 = vmul.f32 %v1164, %v1103
    %1168 = vrot.lane.b32.xlu0 %v1165, 64
    %v1169 = vpop.permute.xlu0 %1168
    %v1171 = vmul.f32 %v1164, %v1169
    %1173 = vrot.lane.b32.xlu0 %v1171, 32
    %v1174 = vpop.permute.xlu0 %1173
    %v1176 = vadd.f32 %v1166, %v1174
    %v1177 = vtanh.pop %v1176
    %1179 = vrot.lane.b32.xlu0 %v1177, 64
    %v1180 = vpop.permute.xlu0 %1179
    %v1182 = vmul.f32 %v1164, %v1180
    %v1183 = vld [vmem:[#allocation4 + $0x18] sm:$0xff]
    %v1184 = vpack.c.bf16 %v1182, %v1182
    %1186 = vrot.lane.b32.xlu0 %v1184, 32
    %v1187 = vpop.permute.xlu0 %1186
    %v1189 = vsel %vm215, %v1187, 0
    %1191 = vmatprep.subr.bf16.mxu0 0
    %1192 = vmatpush1.bf16.msra.mxu0 0
    %1193 = vmatprep.subr.bf16.mxu0 0
    %1194 = vmatpush1.bf16.msra.mxu0 0
    %1195 = vmatprep.subr.bf16.mxu0 0
    %1196 = vmatpush1.bf16.msra.mxu0 0
    %1197 = vmatprep.subr.bf16.mxu0 0
    %1198 = vmatpush1.bf16.msra.mxu0 0
    %1199 = vmatprep.subr.bf16.mxu0 0
    %1200 = vmatpush1.bf16.msra.mxu0 0
    %1201 = vmatprep.subr.bf16.mxu0 0
    %1202 = vmatpush1.bf16.msra.mxu0 0
    %1203 = vmatprep.subr.bf16.mxu0 0
    %1204 = vmatpush1.bf16.msra.mxu0 %v969
    %1205 = vmatprep.subr.bf16.mxu0 0
    %1206 = vmatpush1.bf16.msra.mxu0 %v968
    %1207 = vmatprep.subr.bf16.mxu0 0
    %1208 = vmatpush2.bf16.msra.mxu0 0
    %1209 = vmatprep.subr.bf16.mxu0 0
    %1210 = vmatpush2.bf16.msra.mxu0 0
    %1211 = vmatprep.subr.bf16.mxu0 0
    %1212 = vmatpush2.bf16.msra.mxu0 0
    %1213 = vmatprep.subr.bf16.mxu0 0
    %1214 = vmatpush2.bf16.msra.mxu0 0
    %1215 = vmatprep.subr.bf16.mxu0 0
    %1216 = vmatpush2.bf16.msra.mxu0 0
    %1217 = vmatprep.subr.bf16.mxu0 0
    %1218 = vmatpush2.bf16.msra.mxu0 0
    %1219 = vmatprep.subr.bf16.mxu0 0
    %1220 = vmatpush2.bf16.msra.mxu0 0
    %1221 = vmatprep.subr.bf16.mxu0 0
    %1222 = vmatpush2.bf16.msra.mxu0 0
    %1223 = vmatprep.mubr.bf16.mxu0 0
    %1224 = vmatmul.mubr.bf16.gmra.mxu0 %v1189
    %v1225 = vpop.f32.mrf.mxu0
    %v1226 = vadd.f32 0.0, %v1225
    %v1227 = vpop.f32.mrf.mxu0
    %v1228 = vpop.f32.mrf.mxu0
    %v1229 = vpop.f32.mrf.mxu0
    %1230 = vdwg.mxu0
    %v1231 = vadd.f32 %v1183, %v1226
    %v1232 = vxor.u32 %v1231, 2147483648
    %v1233 = vmul.f32 %v1232, 1.442695
    %v1234 = vpow.pop %v1233
    %v1235 = vadd.f32 %v1234, 1.0
    %v1236 = vrcp.pop %v1235
    %v1237 = vmul.f32 1.0, %v1236
    %v1238 = vtanh.pop %v1231
    %v1239 = vmul.f32 %v1237, %v1176
    %1241 = vrot.lane.b32.xlu0 %v1238, 64
    %v1242 = vpop.permute.xlu0 %1241
    %v1244 = vmul.f32 %v1237, %v1242
    %1246 = vrot.lane.b32.xlu0 %v1244, 32
    %v1247 = vpop.permute.xlu0 %1246
    %v1249 = vadd.f32 %v1239, %v1247
    %v1250 = vtanh.pop %v1249
    %1252 = vrot.lane.b32.xlu0 %v1250, 64
    %v1253 = vpop.permute.xlu0 %1252
    %v1255 = vmul.f32 %v1237, %v1253
    %v1256 = vld [vmem:[#allocation4 + $0x20] sm:$0xff]
    %v1257 = vpack.c.bf16 %v1255, %v1255
    %1259 = vrot.lane.b32.xlu0 %v1257, 32
    %v1260 = vpop.permute.xlu0 %1259
    %v1262 = vsel %vm215, %v1260, 0
    %1264 = vmatprep.subr.bf16.mxu0 0
    %1265 = vmatpush1.bf16.msra.mxu0 0
    %1266 = vmatprep.subr.bf16.mxu0 0
    %1267 = vmatpush1.bf16.msra.mxu0 0
    %1268 = vmatprep.subr.bf16.mxu0 0
    %1269 = vmatpush1.bf16.msra.mxu0 0
    %1270 = vmatprep.subr.bf16.mxu0 0
    %1271 = vmatpush1.bf16.msra.mxu0 0
    %1272 = vmatprep.subr.bf16.mxu0 0
    %1273 = vmatpush1.bf16.msra.mxu0 0
    %1274 = vmatprep.subr.bf16.mxu0 0
    %1275 = vmatpush1.bf16.msra.mxu0 0
    %1276 = vmatprep.subr.bf16.mxu0 0
    %1277 = vmatpush1.bf16.msra.mxu0 %v969
    %1278 = vmatprep.subr.bf16.mxu0 0
    %1279 = vmatpush1.bf16.msra.mxu0 %v968
    %1280 = vmatprep.subr.bf16.mxu0 0
    %1281 = vmatpush2.bf16.msra.mxu0 0
    %1282 = vmatprep.subr.bf16.mxu0 0
    %1283 = vmatpush2.bf16.msra.mxu0 0
    %1284 = vmatprep.subr.bf16.mxu0 0
    %1285 = vmatpush2.bf16.msra.mxu0 0
    %1286 = vmatprep.subr.bf16.mxu0 0
    %1287 = vmatpush2.bf16.msra.mxu0 0
    %1288 = vmatprep.subr.bf16.mxu0 0
    %1289 = vmatpush2.bf16.msra.mxu0 0
    %1290 = vmatprep.subr.bf16.mxu0 0
    %1291 = vmatpush2.bf16.msra.mxu0 0
    %1292 = vmatprep.subr.bf16.mxu0 0
    %1293 = vmatpush2.bf16.msra.mxu0 0
    %1294 = vmatprep.subr.bf16.mxu0 0
    %1295 = vmatpush2.bf16.msra.mxu0 0
    %1296 = vmatprep.mubr.bf16.mxu0 0
    %1297 = vmatmul.mubr.bf16.gmra.mxu0 %v1262
    %v1298 = vpop.f32.mrf.mxu0
    %v1299 = vadd.f32 0.0, %v1298
    %v1300 = vpop.f32.mrf.mxu0
    %v1301 = vpop.f32.mrf.mxu0
    %v1302 = vpop.f32.mrf.mxu0
    %1303 = vdwg.mxu0
    %v1304 = vadd.f32 %v1256, %v1299
    %v1305 = vxor.u32 %v1304, 2147483648
    %v1306 = vmul.f32 %v1305, 1.442695
    %v1307 = vpow.pop %v1306
    %v1308 = vadd.f32 %v1307, 1.0
    %v1309 = vrcp.pop %v1308
    %v1310 = vmul.f32 1.0, %v1309
    %v1311 = vtanh.pop %v1304
    %v1312 = vmul.f32 %v1310, %v1249
    %1314 = vrot.lane.b32.xlu0 %v1311, 64
    %v1315 = vpop.permute.xlu0 %1314
    %v1317 = vmul.f32 %v1310, %v1315
    %1319 = vrot.lane.b32.xlu0 %v1317, 32
    %v1320 = vpop.permute.xlu0 %1319
    %v1322 = vadd.f32 %v1312, %v1320
    %v1323 = vtanh.pop %v1322
    %1325 = vrot.lane.b32.xlu0 %v1323, 64
    %v1326 = vpop.permute.xlu0 %1325
    %v1328 = vmul.f32 %v1310, %v1326
    %v1329 = vld [vmem:[#allocation4 + $0x28] sm:$0xff]
    %v1330 = vpack.c.bf16 %v1328, %v1328
    %1332 = vrot.lane.b32.xlu0 %v1330, 32
    %v1333 = vpop.permute.xlu0 %1332
    %v1335 = vsel %vm215, %v1333, 0
    %1337 = vmatprep.subr.bf16.mxu0 0
    %1338 = vmatpush1.bf16.msra.mxu0 0
    %1339 = vmatprep.subr.bf16.mxu0 0
    %1340 = vmatpush1.bf16.msra.mxu0 0
    %1341 = vmatprep.subr.bf16.mxu0 0
    %1342 = vmatpush1.bf16.msra.mxu0 0
    %1343 = vmatprep.subr.bf16.mxu0 0
    %1344 = vmatpush1.bf16.msra.mxu0 0
    %1345 = vmatprep.subr.bf16.mxu0 0
    %1346 = vmatpush1.bf16.msra.mxu0 0
    %1347 = vmatprep.subr.bf16.mxu0 0
    %1348 = vmatpush1.bf16.msra.mxu0 0
    %1349 = vmatprep.subr.bf16.mxu0 0
    %1350 = vmatpush1.bf16.msra.mxu0 %v969
    %1351 = vmatprep.subr.bf16.mxu0 0
    %1352 = vmatpush1.bf16.msra.mxu0 %v968
    %1353 = vmatprep.subr.bf16.mxu0 0
    %1354 = vmatpush2.bf16.msra.mxu0 0
    %1355 = vmatprep.subr.bf16.mxu0 0
    %1356 = vmatpush2.bf16.msra.mxu0 0
    %1357 = vmatprep.subr.bf16.mxu0 0
    %1358 = vmatpush2.bf16.msra.mxu0 0
    %1359 = vmatprep.subr.bf16.mxu0 0
    %1360 = vmatpush2.bf16.msra.mxu0 0
    %1361 = vmatprep.subr.bf16.mxu0 0
    %1362 = vmatpush2.bf16.msra.mxu0 0
    %1363 = vmatprep.subr.bf16.mxu0 0
    %1364 = vmatpush2.bf16.msra.mxu0 0
    %1365 = vmatprep.subr.bf16.mxu0 0
    %1366 = vmatpush2.bf16.msra.mxu0 0
    %1367 = vmatprep.subr.bf16.mxu0 0
    %1368 = vmatpush2.bf16.msra.mxu0 0
    %1369 = vmatprep.mubr.bf16.mxu0 0
    %1370 = vmatmul.mubr.bf16.gmra.mxu0 %v1335
    %v1371 = vpop.f32.mrf.mxu0
    %v1372 = vadd.f32 0.0, %v1371
    %v1373 = vpop.f32.mrf.mxu0
    %v1374 = vpop.f32.mrf.mxu0
    %v1375 = vpop.f32.mrf.mxu0
    %1376 = vdwg.mxu0
    %v1377 = vadd.f32 %v1329, %v1372
    %v1378 = vxor.u32 %v1377, 2147483648
    %v1379 = vmul.f32 %v1378, 1.442695
    %v1380 = vpow.pop %v1379
    %v1381 = vadd.f32 %v1380, 1.0
    %v1382 = vrcp.pop %v1381
    %v1383 = vmul.f32 1.0, %v1382
    %v1384 = vtanh.pop %v1377
    %v1385 = vmul.f32 %v1383, %v1322
    %1387 = vrot.lane.b32.xlu0 %v1384, 64
    %v1388 = vpop.permute.xlu0 %1387
    %v1390 = vmul.f32 %v1383, %v1388
    %1392 = vrot.lane.b32.xlu0 %v1390, 32
    %v1393 = vpop.permute.xlu0 %1392
    %v1395 = vadd.f32 %v1385, %v1393
    %v1396 = vtanh.pop %v1395
    %1398 = vrot.lane.b32.xlu0 %v1396, 64
    %v1399 = vpop.permute.xlu0 %1398
    %v1401 = vmul.f32 %v1383, %v1399
    %v1402 = vld [vmem:[#allocation4 + $0x30] sm:$0xff]
    %v1403 = vpack.c.bf16 %v1401, %v1401
    %1405 = vrot.lane.b32.xlu0 %v1403, 32
    %v1406 = vpop.permute.xlu0 %1405
    %v1408 = vsel %vm215, %v1406, 0
    %1410 = vmatprep.subr.bf16.mxu0 0
    %1411 = vmatpush1.bf16.msra.mxu0 0
    %1412 = vmatprep.subr.bf16.mxu0 0
    %1413 = vmatpush1.bf16.msra.mxu0 0
    %1414 = vmatprep.subr.bf16.mxu0 0
    %1415 = vmatpush1.bf16.msra.mxu0 0
    %1416 = vmatprep.subr.bf16.mxu0 0
    %1417 = vmatpush1.bf16.msra.mxu0 0
    %1418 = vmatprep.subr.bf16.mxu0 0
    %1419 = vmatpush1.bf16.msra.mxu0 0
    %1420 = vmatprep.subr.bf16.mxu0 0
    %1421 = vmatpush1.bf16.msra.mxu0 0
    %1422 = vmatprep.subr.bf16.mxu0 0
    %1423 = vmatpush1.bf16.msra.mxu0 %v969
    %1424 = vmatprep.subr.bf16.mxu0 0
    %1425 = vmatpush1.bf16.msra.mxu0 %v968
    %1426 = vmatprep.subr.bf16.mxu0 0
    %1427 = vmatpush2.bf16.msra.mxu0 0
    %1428 = vmatprep.subr.bf16.mxu0 0
    %1429 = vmatpush2.bf16.msra.mxu0 0
    %1430 = vmatprep.subr.bf16.mxu0 0
    %1431 = vmatpush2.bf16.msra.mxu0 0
    %1432 = vmatprep.subr.bf16.mxu0 0
    %1433 = vmatpush2.bf16.msra.mxu0 0
    %1434 = vmatprep.subr.bf16.mxu0 0
    %1435 = vmatpush2.bf16.msra.mxu0 0
    %1436 = vmatprep.subr.bf16.mxu0 0
    %1437 = vmatpush2.bf16.msra.mxu0 0
    %1438 = vmatprep.subr.bf16.mxu0 0
    %1439 = vmatpush2.bf16.msra.mxu0 0
    %1440 = vmatprep.subr.bf16.mxu0 0
    %1441 = vmatpush2.bf16.msra.mxu0 0
    %1442 = vmatprep.mubr.bf16.mxu0 0
    %1443 = vmatmul.mubr.bf16.gmra.mxu0 %v1408
    %v1444 = vpop.f32.mrf.mxu0
    %v1445 = vadd.f32 0.0, %v1444
    %v1446 = vpop.f32.mrf.mxu0
    %v1447 = vpop.f32.mrf.mxu0
    %v1448 = vpop.f32.mrf.mxu0
    %1449 = vdwg.mxu0
    %v1450 = vadd.f32 %v1402, %v1445
    %v1451 = vxor.u32 %v1450, 2147483648
    %v1452 = vmul.f32 %v1451, 1.442695
    %v1453 = vpow.pop %v1452
    %v1454 = vadd.f32 %v1453, 1.0
    %v1455 = vrcp.pop %v1454
    %v1456 = vmul.f32 1.0, %v1455
    %v1457 = vtanh.pop %v1450
    %v1458 = vmul.f32 %v1456, %v1395
    %1460 = vrot.lane.b32.xlu0 %v1457, 64
    %v1461 = vpop.permute.xlu0 %1460
    %v1463 = vmul.f32 %v1456, %v1461
    %1465 = vrot.lane.b32.xlu0 %v1463, 32
    %v1466 = vpop.permute.xlu0 %1465
    %v1468 = vadd.f32 %v1458, %v1466
    %v1469 = vtanh.pop %v1468
    %1471 = vrot.lane.b32.xlu0 %v1469, 64
    %v1472 = vpop.permute.xlu0 %1471
    %v1474 = vmul.f32 %v1456, %v1472
    %v1475 = vld [vmem:[#allocation4 + $0x38] sm:$0xff]
    %v1476 = vpack.c.bf16 %v1474, %v1474
    %1478 = vrot.lane.b32.xlu0 %v1476, 32
    %v1479 = vpop.permute.xlu0 %1478
    %v1481 = vsel %vm215, %v1479, 0
    %1483 = vmatprep.subr.bf16.mxu0 0
    %1484 = vmatpush1.bf16.msra.mxu0 0
    %1485 = vmatprep.subr.bf16.mxu0 0
    %1486 = vmatpush1.bf16.msra.mxu0 0
    %1487 = vmatprep.subr.bf16.mxu0 0
    %1488 = vmatpush1.bf16.msra.mxu0 0
    %1489 = vmatprep.subr.bf16.mxu0 0
    %1490 = vmatpush1.bf16.msra.mxu0 0
    %1491 = vmatprep.subr.bf16.mxu0 0
    %1492 = vmatpush1.bf16.msra.mxu0 0
    %1493 = vmatprep.subr.bf16.mxu0 0
    %1494 = vmatpush1.bf16.msra.mxu0 0
    %1495 = vmatprep.subr.bf16.mxu0 0
    %1496 = vmatpush1.bf16.msra.mxu0 %v969
    %1497 = vmatprep.subr.bf16.mxu0 0
    %1498 = vmatpush1.bf16.msra.mxu0 %v968
    %1499 = vmatprep.subr.bf16.mxu0 0
    %1500 = vmatpush2.bf16.msra.mxu0 0
    %1501 = vmatprep.subr.bf16.mxu0 0
    %1502 = vmatpush2.bf16.msra.mxu0 0
    %1503 = vmatprep.subr.bf16.mxu0 0
    %1504 = vmatpush2.bf16.msra.mxu0 0
    %1505 = vmatprep.subr.bf16.mxu0 0
    %1506 = vmatpush2.bf16.msra.mxu0 0
    %1507 = vmatprep.subr.bf16.mxu0 0
    %1508 = vmatpush2.bf16.msra.mxu0 0
    %1509 = vmatprep.subr.bf16.mxu0 0
    %1510 = vmatpush2.bf16.msra.mxu0 0
    %1511 = vmatprep.subr.bf16.mxu0 0
    %1512 = vmatpush2.bf16.msra.mxu0 0
    %1513 = vmatprep.subr.bf16.mxu0 0
    %1514 = vmatpush2.bf16.msra.mxu0 0
    %1515 = vmatprep.mubr.bf16.mxu0 0
    %1516 = vmatmul.mubr.bf16.gmra.mxu0 %v1481
    %v1517 = vpop.f32.mrf.mxu0
    %v1518 = vadd.f32 0.0, %v1517
    %v1519 = vpop.f32.mrf.mxu0
    %v1520 = vpop.f32.mrf.mxu0
    %v1521 = vpop.f32.mrf.mxu0
    %1522 = vdwg.mxu0
    %v1523 = vadd.f32 %v1475, %v1518
    %v1524 = vxor.u32 %v1523, 2147483648
    %v1525 = vmul.f32 %v1524, 1.442695
    %v1526 = vpow.pop %v1525
    %v1527 = vadd.f32 %v1526, 1.0
    %v1528 = vrcp.pop %v1527
    %v1529 = vmul.f32 1.0, %v1528
    %v1530 = vtanh.pop %v1523
    %v1531 = vmul.f32 %v1529, %v1468
    %1533 = vrot.lane.b32.xlu0 %v1530, 64
    %v1534 = vpop.permute.xlu0 %1533
    %v1536 = vmul.f32 %v1529, %v1534
    %1538 = vrot.lane.b32.xlu0 %v1536, 32
    %v1539 = vpop.permute.xlu0 %1538
    %v1541 = vadd.f32 %v1531, %v1539
    %v1542 = vtanh.pop %v1541
    %1544 = vrot.lane.b32.xlu0 %v1542, 64
    %v1545 = vpop.permute.xlu0 %1544
    %v1547 = vmul.f32 %v1529, %v1545
    %v1548 = vpack.c.bf16 %v1547, %v1547
    %v1549 = vld [vmem:[%s7] sm:$0xf]
    %v1550 = vld [vmem:[%s7 + $0x4] sm:$0xf]
    %v1551 = vld [vmem:[%s7 + $0x8] sm:$0xf]
    %v1552 = vld [vmem:[%s7 + $0xc] sm:$0xf]
    %v1553 = vld [vmem:[%s9] sm:$0x1]
    %v1555 = vlaneseq
    %v1556 = vshrl.u32 %v1555, 7
    %v1557 = vsub.s32 0, %v1556
    %v1558 = vrot.slane %v1553, %v1557
    %1561 = vrot.lane.b32.xlu0 %v1548, 32
    %v1562 = vpop.permute.xlu0 %1561
    %v1567 = vunpack.c.l.b16 %v1549
    %v1568 = vunpack.c.l.b16 %v1550
    %v1569 = vunpack.c.l.b16 %v1551
    %v1570 = vunpack.c.l.b16 %v1552
    %v1571 = vpack.c.b16 %v1568, %v1567
    %v1572 = vpack.c.b16 %v1570, %v1569
    %v1576 = vsel %vm215, %v1562, 0
    %1578 = vmatprep.subr.bf16.mxu0 0
    %1579 = vmatpush1.bf16.msra.mxu0 0
    %1580 = vmatprep.subr.bf16.mxu0 0
    %1581 = vmatpush1.bf16.msra.mxu0 0
    %1582 = vmatprep.subr.bf16.mxu0 0
    %1583 = vmatpush1.bf16.msra.mxu0 0
    %1584 = vmatprep.subr.bf16.mxu0 0
    %1585 = vmatpush1.bf16.msra.mxu0 0
    %1586 = vmatprep.subr.bf16.mxu0 0
    %1587 = vmatpush1.bf16.msra.mxu0 0
    %1588 = vmatprep.subr.bf16.mxu0 0
    %1589 = vmatpush1.bf16.msra.mxu0 0
    %1590 = vmatprep.subr.bf16.mxu0 0
    %1591 = vmatpush1.bf16.msra.mxu0 %v1572
    %1592 = vmatprep.subr.bf16.mxu0 0
    %1593 = vmatpush1.bf16.msra.mxu0 %v1571
    %1594 = vmatprep.subr.bf16.mxu0 0
    %1595 = vmatpush2.bf16.msra.mxu0 0
    %1596 = vmatprep.subr.bf16.mxu0 0
    %1597 = vmatpush2.bf16.msra.mxu0 0
    %1598 = vmatprep.subr.bf16.mxu0 0
    %1599 = vmatpush2.bf16.msra.mxu0 0
    %1600 = vmatprep.subr.bf16.mxu0 0
    %1601 = vmatpush2.bf16.msra.mxu0 0
    %1602 = vmatprep.subr.bf16.mxu0 0
    %1603 = vmatpush2.bf16.msra.mxu0 0
    %1604 = vmatprep.subr.bf16.mxu0 0
    %1605 = vmatpush2.bf16.msra.mxu0 0
    %1606 = vmatprep.subr.bf16.mxu0 0
    %1607 = vmatpush2.bf16.msra.mxu0 0
    %1608 = vmatprep.subr.bf16.mxu0 0
    %1609 = vmatpush2.bf16.msra.mxu0 0
    %1610 = vmatprep.mubr.bf16.mxu0 0
    %1611 = vmatmul.mubr.bf16.gmra.mxu0 %v1576
    %v1612 = vpop.f32.mrf.mxu0
    %v1613 = vadd.f32 %v1558, %v1612
    %v1614 = vpop.f32.mrf.mxu0
    %v1615 = vpop.f32.mrf.mxu0
    %v1616 = vpop.f32.mrf.mxu0
    %1617 = vdwg.mxu0
    %v1618 = vld [vmem:[%s8] sm:$0xf]
    %v1619 = vld [vmem:[%s8 + $0x4] sm:$0xf]
    %v1620 = vld [vmem:[%s8 + $0x8] sm:$0xf]
    %v1621 = vld [vmem:[%s8 + $0xc] sm:$0xf]
    %v1626 = vunpack.c.l.b16 %v1618
    %v1627 = vunpack.c.l.b16 %v1619
    %v1628 = vunpack.c.l.b16 %v1620
    %v1629 = vunpack.c.l.b16 %v1621
    %v1630 = vpack.c.b16 %v1627, %v1626
    %v1631 = vpack.c.b16 %v1629, %v1628
    %1634 = vmatprep.subr.bf16.mxu0 0
    %1635 = vmatpush1.bf16.msra.mxu0 0
    %1636 = vmatprep.subr.bf16.mxu0 0
    %1637 = vmatpush1.bf16.msra.mxu0 0
    %1638 = vmatprep.subr.bf16.mxu0 0
    %1639 = vmatpush1.bf16.msra.mxu0 0
    %1640 = vmatprep.subr.bf16.mxu0 0
    %1641 = vmatpush1.bf16.msra.mxu0 0
    %1642 = vmatprep.subr.bf16.mxu0 0
    %1643 = vmatpush1.bf16.msra.mxu0 0
    %1644 = vmatprep.subr.bf16.mxu0 0
    %1645 = vmatpush1.bf16.msra.mxu0 0
    %1646 = vmatprep.subr.bf16.mxu0 0
    %1647 = vmatpush1.bf16.msra.mxu0 %v1631
    %1648 = vmatprep.subr.bf16.mxu0 0
    %1649 = vmatpush1.bf16.msra.mxu0 %v1630
    %1650 = vmatprep.subr.bf16.mxu0 0
    %1651 = vmatpush2.bf16.msra.mxu0 0
    %1652 = vmatprep.subr.bf16.mxu0 0
    %1653 = vmatpush2.bf16.msra.mxu0 0
    %1654 = vmatprep.subr.bf16.mxu0 0
    %1655 = vmatpush2.bf16.msra.mxu0 0
    %1656 = vmatprep.subr.bf16.mxu0 0
    %1657 = vmatpush2.bf16.msra.mxu0 0
    %1658 = vmatprep.subr.bf16.mxu0 0
    %1659 = vmatpush2.bf16.msra.mxu0 0
    %1660 = vmatprep.subr.bf16.mxu0 0
    %1661 = vmatpush2.bf16.msra.mxu0 0
    %1662 = vmatprep.subr.bf16.mxu0 0
    %1663 = vmatpush2.bf16.msra.mxu0 0
    %1664 = vmatprep.subr.bf16.mxu0 0
    %1665 = vmatpush2.bf16.msra.mxu0 0
    %1666 = vmatprep.mubr.bf16.mxu0 0
    %1667 = vmatmul.mubr.bf16.gmra.mxu0 %v217
    %v1668 = vpop.f32.mrf.mxu0
    %v1669 = vadd.f32 0.0, %v1668
    %v1670 = vpop.f32.mrf.mxu0
    %v1671 = vpop.f32.mrf.mxu0
    %v1672 = vpop.f32.mrf.mxu0
    %1673 = vdwg.mxu0
    %v1674 = vadd.f32 %v1613, %v1669
    %v1675 = vxor.u32 %v1674, 2147483648
    %v1676 = vmul.f32 %v1675, 1.442695
    %v1677 = vpow.pop %v1676
    %v1678 = vadd.f32 %v1677, 1.0
    %v1679 = vrcp.pop %v1678
    %v1680 = vmul.f32 1.0, %v1679
    %v1681 = vtanh.pop %v1674
    %v1682 = vmul.f32 %v1680, 0.0
    %1684 = vrot.lane.b32.xlu0 %v1681, 64
    %v1685 = vpop.permute.xlu0 %1684
    %v1687 = vmul.f32 %v1680, %v1685
    %1689 = vrot.lane.b32.xlu0 %v1687, 32
    %v1690 = vpop.permute.xlu0 %1689
    %v1692 = vadd.f32 %v1682, %v1690
    %v1693 = vtanh.pop %v1692
    %1695 = vrot.lane.b32.xlu0 %v1693, 64
    %v1696 = vpop.permute.xlu0 %1695
    %v1698 = vmul.f32 %v1680, %v1696
    %1700 = vrot.lane.b32.xlu0 %v1698, 32
    %v1701 = vpop.permute.xlu0 %1700
    %1703 = vst.msk [vmem:[#allocation2] sm:$0xff] %vm215, %v1701
    %v1704 = vpack.c.bf16 %v1698, %v1698
    %1706 = vrot.lane.b32.xlu0 %v1704, 32
    %v1707 = vpop.permute.xlu0 %1706
    %v1709 = vsel %vm215, %v1707, 0
    %1711 = vmatprep.subr.bf16.mxu0 0
    %1712 = vmatpush1.bf16.msra.mxu0 0
    %1713 = vmatprep.subr.bf16.mxu0 0
    %1714 = vmatpush1.bf16.msra.mxu0 0
    %1715 = vmatprep.subr.bf16.mxu0 0
    %1716 = vmatpush1.bf16.msra.mxu0 0
    %1717 = vmatprep.subr.bf16.mxu0 0
    %1718 = vmatpush1.bf16.msra.mxu0 0
    %1719 = vmatprep.subr.bf16.mxu0 0
    %1720 = vmatpush1.bf16.msra.mxu0 0
    %1721 = vmatprep.subr.bf16.mxu0 0
    %1722 = vmatpush1.bf16.msra.mxu0 0
    %1723 = vmatprep.subr.bf16.mxu0 0
    %1724 = vmatpush1.bf16.msra.mxu0 %v1631
    %1725 = vmatprep.subr.bf16.mxu0 0
    %1726 = vmatpush1.bf16.msra.mxu0 %v1630
    %1727 = vmatprep.subr.bf16.mxu0 0
    %1728 = vmatpush2.bf16.msra.mxu0 0
    %1729 = vmatprep.subr.bf16.mxu0 0
    %1730 = vmatpush2.bf16.msra.mxu0 0
    %1731 = vmatprep.subr.bf16.mxu0 0
    %1732 = vmatpush2.bf16.msra.mxu0 0
    %1733 = vmatprep.subr.bf16.mxu0 0
    %1734 = vmatpush2.bf16.msra.mxu0 0
    %1735 = vmatprep.subr.bf16.mxu0 0
    %1736 = vmatpush2.bf16.msra.mxu0 0
    %1737 = vmatprep.subr.bf16.mxu0 0
    %1738 = vmatpush2.bf16.msra.mxu0 0
    %1739 = vmatprep.subr.bf16.mxu0 0
    %1740 = vmatpush2.bf16.msra.mxu0 0
    %1741 = vmatprep.subr.bf16.mxu0 0
    %1742 = vmatpush2.bf16.msra.mxu0 0
    %1743 = vmatprep.mubr.bf16.mxu0 0
    %1744 = vmatmul.mubr.bf16.gmra.mxu0 %v1709
    %v1745 = vpop.f32.mrf.mxu0
    %v1746 = vadd.f32 0.0, %v1745
    %v1747 = vpop.f32.mrf.mxu0
    %v1748 = vpop.f32.mrf.mxu0
    %v1749 = vpop.f32.mrf.mxu0
    %1750 = vdwg.mxu0
    %v1751 = vadd.f32 %v1613, %v1746
    %v1752 = vxor.u32 %v1751, 2147483648
    %v1753 = vmul.f32 %v1752, 1.442695
    %v1754 = vpow.pop %v1753
    %v1755 = vadd.f32 %v1754, 1.0
    %v1756 = vrcp.pop %v1755
    %v1757 = vmul.f32 1.0, %v1756
    %v1758 = vtanh.pop %v1751
    %v1759 = vmul.f32 %v1757, %v1692
    %1761 = vrot.lane.b32.xlu0 %v1758, 64
    %v1762 = vpop.permute.xlu0 %1761
    %v1764 = vmul.f32 %v1757, %v1762
    %1766 = vrot.lane.b32.xlu0 %v1764, 32
    %v1767 = vpop.permute.xlu0 %1766
    %v1769 = vadd.f32 %v1759, %v1767
    %v1770 = vtanh.pop %v1769
    %1772 = vrot.lane.b32.xlu0 %v1770, 64
    %v1773 = vpop.permute.xlu0 %1772
    %v1775 = vmul.f32 %v1757, %v1773
    %1777 = vrot.lane.b32.xlu0 %v1775, 32
    %v1778 = vpop.permute.xlu0 %1777
    %1780 = vst.msk [vmem:[#allocation2 + $0x8] sm:$0xff] %vm215, %v1778
    %v1781 = vpack.c.bf16 %v1775, %v1775
    %1783 = vrot.lane.b32.xlu0 %v1781, 32
    %v1784 = vpop.permute.xlu0 %1783
    %v1786 = vsel %vm215, %v1784, 0
    %1788 = vmatprep.subr.bf16.mxu0 0
    %1789 = vmatpush1.bf16.msra.mxu0 0
    %1790 = vmatprep.subr.bf16.mxu0 0
    %1791 = vmatpush1.bf16.msra.mxu0 0
    %1792 = vmatprep.subr.bf16.mxu0 0
    %1793 = vmatpush1.bf16.msra.mxu0 0
    %1794 = vmatprep.subr.bf16.mxu0 0
    %1795 = vmatpush1.bf16.msra.mxu0 0
    %1796 = vmatprep.subr.bf16.mxu0 0
    %1797 = vmatpush1.bf16.msra.mxu0 0
    %1798 = vmatprep.subr.bf16.mxu0 0
    %1799 = vmatpush1.bf16.msra.mxu0 0
    %1800 = vmatprep.subr.bf16.mxu0 0
    %1801 = vmatpush1.bf16.msra.mxu0 %v1631
    %1802 = vmatprep.subr.bf16.mxu0 0
    %1803 = vmatpush1.bf16.msra.mxu0 %v1630
    %1804 = vmatprep.subr.bf16.mxu0 0
    %1805 = vmatpush2.bf16.msra.mxu0 0
    %1806 = vmatprep.subr.bf16.mxu0 0
    %1807 = vmatpush2.bf16.msra.mxu0 0
    %1808 = vmatprep.subr.bf16.mxu0 0
    %1809 = vmatpush2.bf16.msra.mxu0 0
    %1810 = vmatprep.subr.bf16.mxu0 0
    %1811 = vmatpush2.bf16.msra.mxu0 0
    %1812 = vmatprep.subr.bf16.mxu0 0
    %1813 = vmatpush2.bf16.msra.mxu0 0
    %1814 = vmatprep.subr.bf16.mxu0 0
    %1815 = vmatpush2.bf16.msra.mxu0 0
    %1816 = vmatprep.subr.bf16.mxu0 0
    %1817 = vmatpush2.bf16.msra.mxu0 0
    %1818 = vmatprep.subr.bf16.mxu0 0
    %1819 = vmatpush2.bf16.msra.mxu0 0
    %1820 = vmatprep.mubr.bf16.mxu0 0
    %1821 = vmatmul.mubr.bf16.gmra.mxu0 %v1786
    %v1822 = vpop.f32.mrf.mxu0
    %v1823 = vadd.f32 0.0, %v1822
    %v1824 = vpop.f32.mrf.mxu0
    %v1825 = vpop.f32.mrf.mxu0
    %v1826 = vpop.f32.mrf.mxu0
    %1827 = vdwg.mxu0
    %v1828 = vadd.f32 %v1613, %v1823
    %v1829 = vxor.u32 %v1828, 2147483648
    %v1830 = vmul.f32 %v1829, 1.442695
    %v1831 = vpow.pop %v1830
    %v1832 = vadd.f32 %v1831, 1.0
    %v1833 = vrcp.pop %v1832
    %v1834 = vmul.f32 1.0, %v1833
    %v1835 = vtanh.pop %v1828
    %v1836 = vmul.f32 %v1834, %v1769
    %1838 = vrot.lane.b32.xlu0 %v1835, 64
    %v1839 = vpop.permute.xlu0 %1838
    %v1841 = vmul.f32 %v1834, %v1839
    %1843 = vrot.lane.b32.xlu0 %v1841, 32
    %v1844 = vpop.permute.xlu0 %1843
    %v1846 = vadd.f32 %v1836, %v1844
    %v1847 = vtanh.pop %v1846
    %1849 = vrot.lane.b32.xlu0 %v1847, 64
    %v1850 = vpop.permute.xlu0 %1849
    %v1852 = vmul.f32 %v1834, %v1850
    %1854 = vrot.lane.b32.xlu0 %v1852, 32
    %v1855 = vpop.permute.xlu0 %1854
    %1857 = vst.msk [vmem:[#allocation2 + $0x10] sm:$0xff] %vm215, %v1855
    %v1858 = vpack.c.bf16 %v1852, %v1852
    %1860 = vrot.lane.b32.xlu0 %v1858, 32
    %v1861 = vpop.permute.xlu0 %1860
    %v1863 = vsel %vm215, %v1861, 0
    %1865 = vmatprep.subr.bf16.mxu0 0
    %1866 = vmatpush1.bf16.msra.mxu0 0
    %1867 = vmatprep.subr.bf16.mxu0 0
    %1868 = vmatpush1.bf16.msra.mxu0 0
    %1869 = vmatprep.subr.bf16.mxu0 0
    %1870 = vmatpush1.bf16.msra.mxu0 0
    %1871 = vmatprep.subr.bf16.mxu0 0
    %1872 = vmatpush1.bf16.msra.mxu0 0
    %1873 = vmatprep.subr.bf16.mxu0 0
    %1874 = vmatpush1.bf16.msra.mxu0 0
    %1875 = vmatprep.subr.bf16.mxu0 0
    %1876 = vmatpush1.bf16.msra.mxu0 0
    %1877 = vmatprep.subr.bf16.mxu0 0
    %1878 = vmatpush1.bf16.msra.mxu0 %v1631
    %1879 = vmatprep.subr.bf16.mxu0 0
    %1880 = vmatpush1.bf16.msra.mxu0 %v1630
    %1881 = vmatprep.subr.bf16.mxu0 0
    %1882 = vmatpush2.bf16.msra.mxu0 0
    %1883 = vmatprep.subr.bf16.mxu0 0
    %1884 = vmatpush2.bf16.msra.mxu0 0
    %1885 = vmatprep.subr.bf16.mxu0 0
    %1886 = vmatpush2.bf16.msra.mxu0 0
    %1887 = vmatprep.subr.bf16.mxu0 0
    %1888 = vmatpush2.bf16.msra.mxu0 0
    %1889 = vmatprep.subr.bf16.mxu0 0
    %1890 = vmatpush2.bf16.msra.mxu0 0
    %1891 = vmatprep.subr.bf16.mxu0 0
    %1892 = vmatpush2.bf16.msra.mxu0 0
    %1893 = vmatprep.subr.bf16.mxu0 0
    %1894 = vmatpush2.bf16.msra.mxu0 0
    %1895 = vmatprep.subr.bf16.mxu0 0
    %1896 = vmatpush2.bf16.msra.mxu0 0
    %1897 = vmatprep.mubr.bf16.mxu0 0
    %1898 = vmatmul.mubr.bf16.gmra.mxu0 %v1863
    %v1899 = vpop.f32.mrf.mxu0
    %v1900 = vadd.f32 0.0, %v1899
    %v1901 = vpop.f32.mrf.mxu0
    %v1902 = vpop.f32.mrf.mxu0
    %v1903 = vpop.f32.mrf.mxu0
    %1904 = vdwg.mxu0
    %v1905 = vadd.f32 %v1613, %v1900
    %v1906 = vxor.u32 %v1905, 2147483648
    %v1907 = vmul.f32 %v1906, 1.442695
    %v1908 = vpow.pop %v1907
    %v1909 = vadd.f32 %v1908, 1.0
    %v1910 = vrcp.pop %v1909
    %v1911 = vmul.f32 1.0, %v1910
    %v1912 = vtanh.pop %v1905
    %v1913 = vmul.f32 %v1911, %v1846
    %1915 = vrot.lane.b32.xlu0 %v1912, 64
    %v1916 = vpop.permute.xlu0 %1915
    %v1918 = vmul.f32 %v1911, %v1916
    %1920 = vrot.lane.b32.xlu0 %v1918, 32
    %v1921 = vpop.permute.xlu0 %1920
    %v1923 = vadd.f32 %v1913, %v1921
    %v1924 = vtanh.pop %v1923
    %1926 = vrot.lane.b32.xlu0 %v1924, 64
    %v1927 = vpop.permute.xlu0 %1926
    %v1929 = vmul.f32 %v1911, %v1927
    %1931 = vrot.lane.b32.xlu0 %v1929, 32
    %v1932 = vpop.permute.xlu0 %1931
    %1934 = vst.msk [vmem:[#allocation2 + $0x18] sm:$0xff] %vm215, %v1932
    %v1935 = vpack.c.bf16 %v1929, %v1929
    %1937 = vrot.lane.b32.xlu0 %v1935, 32
    %v1938 = vpop.permute.xlu0 %1937
    %v1940 = vsel %vm215, %v1938, 0
    %1942 = vmatprep.subr.bf16.mxu0 0
    %1943 = vmatpush1.bf16.msra.mxu0 0
    %1944 = vmatprep.subr.bf16.mxu0 0
    %1945 = vmatpush1.bf16.msra.mxu0 0
    %1946 = vmatprep.subr.bf16.mxu0 0
    %1947 = vmatpush1.bf16.msra.mxu0 0
    %1948 = vmatprep.subr.bf16.mxu0 0
    %1949 = vmatpush1.bf16.msra.mxu0 0
    %1950 = vmatprep.subr.bf16.mxu0 0
    %1951 = vmatpush1.bf16.msra.mxu0 0
    %1952 = vmatprep.subr.bf16.mxu0 0
    %1953 = vmatpush1.bf16.msra.mxu0 0
    %1954 = vmatprep.subr.bf16.mxu0 0
    %1955 = vmatpush1.bf16.msra.mxu0 %v1631
    %1956 = vmatprep.subr.bf16.mxu0 0
    %1957 = vmatpush1.bf16.msra.mxu0 %v1630
    %1958 = vmatprep.subr.bf16.mxu0 0
    %1959 = vmatpush2.bf16.msra.mxu0 0
    %1960 = vmatprep.subr.bf16.mxu0 0
    %1961 = vmatpush2.bf16.msra.mxu0 0
    %1962 = vmatprep.subr.bf16.mxu0 0
    %1963 = vmatpush2.bf16.msra.mxu0 0
    %1964 = vmatprep.subr.bf16.mxu0 0
    %1965 = vmatpush2.bf16.msra.mxu0 0
    %1966 = vmatprep.subr.bf16.mxu0 0
    %1967 = vmatpush2.bf16.msra.mxu0 0
    %1968 = vmatprep.subr.bf16.mxu0 0
    %1969 = vmatpush2.bf16.msra.mxu0 0
    %1970 = vmatprep.subr.bf16.mxu0 0
    %1971 = vmatpush2.bf16.msra.mxu0 0
    %1972 = vmatprep.subr.bf16.mxu0 0
    %1973 = vmatpush2.bf16.msra.mxu0 0
    %1974 = vmatprep.mubr.bf16.mxu0 0
    %1975 = vmatmul.mubr.bf16.gmra.mxu0 %v1940
    %v1976 = vpop.f32.mrf.mxu0
    %v1977 = vadd.f32 0.0, %v1976
    %v1978 = vpop.f32.mrf.mxu0
    %v1979 = vpop.f32.mrf.mxu0
    %v1980 = vpop.f32.mrf.mxu0
    %1981 = vdwg.mxu0
    %v1982 = vadd.f32 %v1613, %v1977
    %v1983 = vxor.u32 %v1982, 2147483648
    %v1984 = vmul.f32 %v1983, 1.442695
    %v1985 = vpow.pop %v1984
    %v1986 = vadd.f32 %v1985, 1.0
    %v1987 = vrcp.pop %v1986
    %v1988 = vmul.f32 1.0, %v1987
    %v1989 = vtanh.pop %v1982
    %v1990 = vmul.f32 %v1988, %v1923
    %1992 = vrot.lane.b32.xlu0 %v1989, 64
    %v1993 = vpop.permute.xlu0 %1992
    %v1995 = vmul.f32 %v1988, %v1993
    %1997 = vrot.lane.b32.xlu0 %v1995, 32
    %v1998 = vpop.permute.xlu0 %1997
    %v2000 = vadd.f32 %v1990, %v1998
    %v2001 = vtanh.pop %v2000
    %2003 = vrot.lane.b32.xlu0 %v2001, 64
    %v2004 = vpop.permute.xlu0 %2003
    %v2006 = vmul.f32 %v1988, %v2004
    %2008 = vrot.lane.b32.xlu0 %v2006, 32
    %v2009 = vpop.permute.xlu0 %2008
    %2011 = vst.msk [vmem:[#allocation2 + $0x20] sm:$0xff] %vm215, %v2009
    %v2012 = vpack.c.bf16 %v2006, %v2006
    %2014 = vrot.lane.b32.xlu0 %v2012, 32
    %v2015 = vpop.permute.xlu0 %2014
    %v2017 = vsel %vm215, %v2015, 0
    %2019 = vmatprep.subr.bf16.mxu0 0
    %2020 = vmatpush1.bf16.msra.mxu0 0
    %2021 = vmatprep.subr.bf16.mxu0 0
    %2022 = vmatpush1.bf16.msra.mxu0 0
    %2023 = vmatprep.subr.bf16.mxu0 0
    %2024 = vmatpush1.bf16.msra.mxu0 0
    %2025 = vmatprep.subr.bf16.mxu0 0
    %2026 = vmatpush1.bf16.msra.mxu0 0
    %2027 = vmatprep.subr.bf16.mxu0 0
    %2028 = vmatpush1.bf16.msra.mxu0 0
    %2029 = vmatprep.subr.bf16.mxu0 0
    %2030 = vmatpush1.bf16.msra.mxu0 0
    %2031 = vmatprep.subr.bf16.mxu0 0
    %2032 = vmatpush1.bf16.msra.mxu0 %v1631
    %2033 = vmatprep.subr.bf16.mxu0 0
    %2034 = vmatpush1.bf16.msra.mxu0 %v1630
    %2035 = vmatprep.subr.bf16.mxu0 0
    %2036 = vmatpush2.bf16.msra.mxu0 0
    %2037 = vmatprep.subr.bf16.mxu0 0
    %2038 = vmatpush2.bf16.msra.mxu0 0
    %2039 = vmatprep.subr.bf16.mxu0 0
    %2040 = vmatpush2.bf16.msra.mxu0 0
    %2041 = vmatprep.subr.bf16.mxu0 0
    %2042 = vmatpush2.bf16.msra.mxu0 0
    %2043 = vmatprep.subr.bf16.mxu0 0
    %2044 = vmatpush2.bf16.msra.mxu0 0
    %2045 = vmatprep.subr.bf16.mxu0 0
    %2046 = vmatpush2.bf16.msra.mxu0 0
    %2047 = vmatprep.subr.bf16.mxu0 0
    %2048 = vmatpush2.bf16.msra.mxu0 0
    %2049 = vmatprep.subr.bf16.mxu0 0
    %2050 = vmatpush2.bf16.msra.mxu0 0
    %2051 = vmatprep.mubr.bf16.mxu0 0
    %2052 = vmatmul.mubr.bf16.gmra.mxu0 %v2017
    %v2053 = vpop.f32.mrf.mxu0
    %v2054 = vadd.f32 0.0, %v2053
    %v2055 = vpop.f32.mrf.mxu0
    %v2056 = vpop.f32.mrf.mxu0
    %v2057 = vpop.f32.mrf.mxu0
    %2058 = vdwg.mxu0
    %v2059 = vadd.f32 %v1613, %v2054
    %v2060 = vxor.u32 %v2059, 2147483648
    %v2061 = vmul.f32 %v2060, 1.442695
    %v2062 = vpow.pop %v2061
    %v2063 = vadd.f32 %v2062, 1.0
    %v2064 = vrcp.pop %v2063
    %v2065 = vmul.f32 1.0, %v2064
    %v2066 = vtanh.pop %v2059
    %v2067 = vmul.f32 %v2065, %v2000
    %2069 = vrot.lane.b32.xlu0 %v2066, 64
    %v2070 = vpop.permute.xlu0 %2069
    %v2072 = vmul.f32 %v2065, %v2070
    %2074 = vrot.lane.b32.xlu0 %v2072, 32
    %v2075 = vpop.permute.xlu0 %2074
    %v2077 = vadd.f32 %v2067, %v2075
    %v2078 = vtanh.pop %v2077
    %2080 = vrot.lane.b32.xlu0 %v2078, 64
    %v2081 = vpop.permute.xlu0 %2080
    %v2083 = vmul.f32 %v2065, %v2081
    %2085 = vrot.lane.b32.xlu0 %v2083, 32
    %v2086 = vpop.permute.xlu0 %2085
    %2088 = vst.msk [vmem:[#allocation2 + $0x28] sm:$0xff] %vm215, %v2086
    %v2089 = vpack.c.bf16 %v2083, %v2083
    %2091 = vrot.lane.b32.xlu0 %v2089, 32
    %v2092 = vpop.permute.xlu0 %2091
    %v2094 = vsel %vm215, %v2092, 0
    %2096 = vmatprep.subr.bf16.mxu0 0
    %2097 = vmatpush1.bf16.msra.mxu0 0
    %2098 = vmatprep.subr.bf16.mxu0 0
    %2099 = vmatpush1.bf16.msra.mxu0 0
    %2100 = vmatprep.subr.bf16.mxu0 0
    %2101 = vmatpush1.bf16.msra.mxu0 0
    %2102 = vmatprep.subr.bf16.mxu0 0
    %2103 = vmatpush1.bf16.msra.mxu0 0
    %2104 = vmatprep.subr.bf16.mxu0 0
    %2105 = vmatpush1.bf16.msra.mxu0 0
    %2106 = vmatprep.subr.bf16.mxu0 0
    %2107 = vmatpush1.bf16.msra.mxu0 0
    %2108 = vmatprep.subr.bf16.mxu0 0
    %2109 = vmatpush1.bf16.msra.mxu0 %v1631
    %2110 = vmatprep.subr.bf16.mxu0 0
    %2111 = vmatpush1.bf16.msra.mxu0 %v1630
    %2112 = vmatprep.subr.bf16.mxu0 0
    %2113 = vmatpush2.bf16.msra.mxu0 0
    %2114 = vmatprep.subr.bf16.mxu0 0
    %2115 = vmatpush2.bf16.msra.mxu0 0
    %2116 = vmatprep.subr.bf16.mxu0 0
    %2117 = vmatpush2.bf16.msra.mxu0 0
    %2118 = vmatprep.subr.bf16.mxu0 0
    %2119 = vmatpush2.bf16.msra.mxu0 0
    %2120 = vmatprep.subr.bf16.mxu0 0
    %2121 = vmatpush2.bf16.msra.mxu0 0
    %2122 = vmatprep.subr.bf16.mxu0 0
    %2123 = vmatpush2.bf16.msra.mxu0 0
    %2124 = vmatprep.subr.bf16.mxu0 0
    %2125 = vmatpush2.bf16.msra.mxu0 0
    %2126 = vmatprep.subr.bf16.mxu0 0
    %2127 = vmatpush2.bf16.msra.mxu0 0
    %2128 = vmatprep.mubr.bf16.mxu0 0
    %2129 = vmatmul.mubr.bf16.gmra.mxu0 %v2094
    %v2130 = vpop.f32.mrf.mxu0
    %v2131 = vadd.f32 0.0, %v2130
    %v2132 = vpop.f32.mrf.mxu0
    %v2133 = vpop.f32.mrf.mxu0
    %v2134 = vpop.f32.mrf.mxu0
    %2135 = vdwg.mxu0
    %v2136 = vadd.f32 %v1613, %v2131
    %v2137 = vxor.u32 %v2136, 2147483648
    %v2138 = vmul.f32 %v2137, 1.442695
    %v2139 = vpow.pop %v2138
    %v2140 = vadd.f32 %v2139, 1.0
    %v2141 = vrcp.pop %v2140
    %v2142 = vmul.f32 1.0, %v2141
    %v2143 = vtanh.pop %v2136
    %v2144 = vmul.f32 %v2142, %v2077
    %2146 = vrot.lane.b32.xlu0 %v2143, 64
    %v2147 = vpop.permute.xlu0 %2146
    %v2149 = vmul.f32 %v2142, %v2147
    %2151 = vrot.lane.b32.xlu0 %v2149, 32
    %v2152 = vpop.permute.xlu0 %2151
    %v2154 = vadd.f32 %v2144, %v2152
    %v2155 = vtanh.pop %v2154
    %2157 = vrot.lane.b32.xlu0 %v2155, 64
    %v2158 = vpop.permute.xlu0 %2157
    %v2160 = vmul.f32 %v2142, %v2158
    %2162 = vrot.lane.b32.xlu0 %v2160, 32
    %v2163 = vpop.permute.xlu0 %2162
    %2165 = vst.msk [vmem:[#allocation2 + $0x30] sm:$0xff] %vm215, %v2163
    %v2166 = vpack.c.bf16 %v2160, %v2160
    %2168 = vrot.lane.b32.xlu0 %v2166, 32
    %v2169 = vpop.permute.xlu0 %2168
    %v2171 = vsel %vm215, %v2169, 0
    %2173 = vmatprep.subr.bf16.mxu0 0
    %2174 = vmatpush1.bf16.msra.mxu0 0
    %2175 = vmatprep.subr.bf16.mxu0 0
    %2176 = vmatpush1.bf16.msra.mxu0 0
    %2177 = vmatprep.subr.bf16.mxu0 0
    %2178 = vmatpush1.bf16.msra.mxu0 0
    %2179 = vmatprep.subr.bf16.mxu0 0
    %2180 = vmatpush1.bf16.msra.mxu0 0
    %2181 = vmatprep.subr.bf16.mxu0 0
    %2182 = vmatpush1.bf16.msra.mxu0 0
    %2183 = vmatprep.subr.bf16.mxu0 0
    %2184 = vmatpush1.bf16.msra.mxu0 0
    %2185 = vmatprep.subr.bf16.mxu0 0
    %2186 = vmatpush1.bf16.msra.mxu0 %v1631
    %2187 = vmatprep.subr.bf16.mxu0 0
    %2188 = vmatpush1.bf16.msra.mxu0 %v1630
    %2189 = vmatprep.subr.bf16.mxu0 0
    %2190 = vmatpush2.bf16.msra.mxu0 0
    %2191 = vmatprep.subr.bf16.mxu0 0
    %2192 = vmatpush2.bf16.msra.mxu0 0
    %2193 = vmatprep.subr.bf16.mxu0 0
    %2194 = vmatpush2.bf16.msra.mxu0 0
    %2195 = vmatprep.subr.bf16.mxu0 0
    %2196 = vmatpush2.bf16.msra.mxu0 0
    %2197 = vmatprep.subr.bf16.mxu0 0
    %2198 = vmatpush2.bf16.msra.mxu0 0
    %2199 = vmatprep.subr.bf16.mxu0 0
    %2200 = vmatpush2.bf16.msra.mxu0 0
    %2201 = vmatprep.subr.bf16.mxu0 0
    %2202 = vmatpush2.bf16.msra.mxu0 0
    %2203 = vmatprep.subr.bf16.mxu0 0
    %2204 = vmatpush2.bf16.msra.mxu0 0
    %2205 = vmatprep.mubr.bf16.mxu0 0
    %2206 = vmatmul.mubr.bf16.gmra.mxu0 %v2171
    %v2207 = vpop.f32.mrf.mxu0
    %v2208 = vadd.f32 0.0, %v2207
    %v2209 = vpop.f32.mrf.mxu0
    %v2210 = vpop.f32.mrf.mxu0
    %v2211 = vpop.f32.mrf.mxu0
    %2212 = vdwg.mxu0
    %v2213 = vadd.f32 %v1613, %v2208
    %v2214 = vxor.u32 %v2213, 2147483648
    %v2215 = vmul.f32 %v2214, 1.442695
    %v2216 = vpow.pop %v2215
    %v2217 = vadd.f32 %v2216, 1.0
    %v2218 = vrcp.pop %v2217
    %v2219 = vmul.f32 1.0, %v2218
    %v2220 = vtanh.pop %v2213
    %v2221 = vmul.f32 %v2219, %v2154
    %2223 = vrot.lane.b32.xlu0 %v2220, 64
    %v2224 = vpop.permute.xlu0 %2223
    %v2226 = vmul.f32 %v2219, %v2224
    %2228 = vrot.lane.b32.xlu0 %v2226, 32
    %v2229 = vpop.permute.xlu0 %2228
    %v2231 = vadd.f32 %v2221, %v2229
    %v2232 = vtanh.pop %v2231
    %2234 = vrot.lane.b32.xlu0 %v2232, 64
    %v2235 = vpop.permute.xlu0 %2234
    %v2237 = vmul.f32 %v2219, %v2235
    %2239 = vrot.lane.b32.xlu0 %v2237, 32
    %v2240 = vpop.permute.xlu0 %2239
    %2242 = vst.msk [vmem:[#allocation2 + $0x38] sm:$0xff] %vm215, %v2240
    %v2243 = vld [vmem:[%s10] sm:$0xf]
    %v2244 = vld [vmem:[%s10 + $0x4] sm:$0xf]
    %v2245 = vld [vmem:[%s10 + $0x8] sm:$0xf]
    %v2246 = vld [vmem:[%s10 + $0xc] sm:$0xf]
    %v2247 = vld [vmem:[%s12] sm:$0x1]
    %v2248 = vld [vmem:[%s11] sm:$0xf]
    %v2249 = vld [vmem:[%s11 + $0x4] sm:$0xf]
    %v2250 = vld [vmem:[%s11 + $0x8] sm:$0xf]
    %v2251 = vld [vmem:[%s11 + $0xc] sm:$0xf]
    %v2252 = vld [vmem:[#allocation2] sm:$0xff]
    %v2253 = vld [vmem:[#allocation2 + $0x8] sm:$0xff]
    %v2254 = vld [vmem:[#allocation2 + $0x10] sm:$0xff]
    %v2255 = vld [vmem:[#allocation2 + $0x18] sm:$0xff]
    %v2256 = vld [vmem:[#allocation2 + $0x20] sm:$0xff]
    %v2257 = vld [vmem:[#allocation2 + $0x28] sm:$0xff]
    %v2258 = vld [vmem:[#allocation2 + $0x30] sm:$0xff]
    %v2259 = vld [vmem:[#allocation2 + $0x38] sm:$0xff]
    %v2260 = vpack.c.bf16 %v2253, %v2252
    %v2261 = vpack.c.bf16 %v2255, %v2254
    %v2262 = vpack.c.bf16 %v2257, %v2256
    %v2263 = vpack.c.bf16 %v2259, %v2258
    %v2265 = vlaneseq
    %v2266 = vshrl.u32 %v2265, 7
    %v2267 = vsub.s32 0, %v2266
    %v2268 = vrot.slane %v2247, %v2267
    %v2274 = vunpack.c.l.b16 %v2243
    %v2275 = vunpack.c.l.b16 %v2244
    %v2276 = vunpack.c.l.b16 %v2245
    %v2277 = vunpack.c.l.b16 %v2246
    %v2278 = vpack.c.b16 %v2275, %v2274
    %v2279 = vpack.c.b16 %v2277, %v2276
    %v2283 = vsel %vm215, %v2260, 0
    %v2286 = vsel %vm215, %v2261, 0
    %v2289 = vsel %vm215, %v2262, 0
    %v2292 = vsel %vm215, %v2263, 0
    %2294 = vmatprep.subr.bf16.mxu0 0
    %2295 = vmatpush1.bf16.msra.mxu0 0
    %2296 = vmatprep.subr.bf16.mxu0 0
    %2297 = vmatpush1.bf16.msra.mxu0 0
    %2298 = vmatprep.subr.bf16.mxu0 0
    %2299 = vmatpush1.bf16.msra.mxu0 0
    %2300 = vmatprep.subr.bf16.mxu0 0
    %2301 = vmatpush1.bf16.msra.mxu0 0
    %2302 = vmatprep.subr.bf16.mxu0 0
    %2303 = vmatpush1.bf16.msra.mxu0 0
    %2304 = vmatprep.subr.bf16.mxu0 0
    %2305 = vmatpush1.bf16.msra.mxu0 0
    %2306 = vmatprep.subr.bf16.mxu0 0
    %2307 = vmatpush1.bf16.msra.mxu0 %v2279
    %2308 = vmatprep.subr.bf16.mxu0 0
    %2309 = vmatpush1.bf16.msra.mxu0 %v2278
    %2310 = vmatprep.subr.bf16.mxu0 0
    %2311 = vmatpush2.bf16.msra.mxu0 0
    %2312 = vmatprep.subr.bf16.mxu0 0
    %2313 = vmatpush2.bf16.msra.mxu0 0
    %2314 = vmatprep.subr.bf16.mxu0 0
    %2315 = vmatpush2.bf16.msra.mxu0 0
    %2316 = vmatprep.subr.bf16.mxu0 0
    %2317 = vmatpush2.bf16.msra.mxu0 0
    %2318 = vmatprep.subr.bf16.mxu0 0
    %2319 = vmatpush2.bf16.msra.mxu0 0
    %2320 = vmatprep.subr.bf16.mxu0 0
    %2321 = vmatpush2.bf16.msra.mxu0 0
    %2322 = vmatprep.subr.bf16.mxu0 0
    %2323 = vmatpush2.bf16.msra.mxu0 0
    %2324 = vmatprep.subr.bf16.mxu0 0
    %2325 = vmatpush2.bf16.msra.mxu0 0
    %2326 = vmatprep.mubr.bf16.mxu0 0
    %2327 = vmatmul.mubr.bf16.gmra.mxu0 %v2283
    %v2328 = vpop.f32.mrf.mxu0
    %v2329 = vadd.f32 %v2268, %v2328
    %v2330 = vpop.f32.mrf.mxu0
    %v2331 = vpop.f32.mrf.mxu0
    %v2332 = vadd.f32 %v2268, %v2331
    %v2333 = vpop.f32.mrf.mxu0
    %2334 = vmatprep.mubr.bf16.mxu0 0
    %2335 = vmatmul.mubr.bf16.gmra.mxu0 %v2286
    %v2336 = vpop.f32.mrf.mxu0
    %v2337 = vadd.f32 %v2268, %v2336
    %v2338 = vpop.f32.mrf.mxu0
    %v2339 = vpop.f32.mrf.mxu0
    %v2340 = vadd.f32 %v2268, %v2339
    %v2341 = vpop.f32.mrf.mxu0
    %2342 = vmatprep.mubr.bf16.mxu0 0
    %2343 = vmatmul.mubr.bf16.gmra.mxu0 %v2289
    %v2344 = vpop.f32.mrf.mxu0
    %v2345 = vadd.f32 %v2268, %v2344
    %v2346 = vpop.f32.mrf.mxu0
    %v2347 = vpop.f32.mrf.mxu0
    %v2348 = vadd.f32 %v2268, %v2347
    %v2349 = vpop.f32.mrf.mxu0
    %2350 = vmatprep.mubr.bf16.mxu0 0
    %2351 = vmatmul.mubr.bf16.gmra.mxu0 %v2292
    %v2352 = vpop.f32.mrf.mxu0
    %v2353 = vadd.f32 %v2268, %v2352
    %v2354 = vpop.f32.mrf.mxu0
    %v2355 = vpop.f32.mrf.mxu0
    %v2356 = vadd.f32 %v2268, %v2355
    %v2357 = vpop.f32.mrf.mxu0
    %2358 = vdwg.mxu0
    %2359 = vst [vmem:[#allocation4] sm:$0xff] %v2329
    %2360 = vst [vmem:[#allocation4 + $0x8] sm:$0xff] %v2332
    %2361 = vst [vmem:[#allocation4 + $0x10] sm:$0xff] %v2337
    %2362 = vst [vmem:[#allocation4 + $0x18] sm:$0xff] %v2340
    %2363 = vst [vmem:[#allocation4 + $0x20] sm:$0xff] %v2345
    %2364 = vst [vmem:[#allocation4 + $0x28] sm:$0xff] %v2348
    %2365 = vst [vmem:[#allocation4 + $0x30] sm:$0xff] %v2353
    %2366 = vst [vmem:[#allocation4 + $0x38] sm:$0xff] %v2356
    %v2367 = vld [vmem:[#allocation4] sm:$0xff]
    %v2372 = vunpack.c.l.b16 %v2248
    %v2373 = vunpack.c.l.b16 %v2249
    %v2374 = vunpack.c.l.b16 %v2250
    %v2375 = vunpack.c.l.b16 %v2251
    %v2376 = vpack.c.b16 %v2373, %v2372
    %v2377 = vpack.c.b16 %v2375, %v2374
    %2380 = vmatprep.subr.bf16.mxu0 0
    %2381 = vmatpush1.bf16.msra.mxu0 0
    %2382 = vmatprep.subr.bf16.mxu0 0
    %2383 = vmatpush1.bf16.msra.mxu0 0
    %2384 = vmatprep.subr.bf16.mxu0 0
    %2385 = vmatpush1.bf16.msra.mxu0 0
    %2386 = vmatprep.subr.bf16.mxu0 0
    %2387 = vmatpush1.bf16.msra.mxu0 0
    %2388 = vmatprep.subr.bf16.mxu0 0
    %2389 = vmatpush1.bf16.msra.mxu0 0
    %2390 = vmatprep.subr.bf16.mxu0 0
    %2391 = vmatpush1.bf16.msra.mxu0 0
    %2392 = vmatprep.subr.bf16.mxu0 0
    %2393 = vmatpush1.bf16.msra.mxu0 %v2377
    %2394 = vmatprep.subr.bf16.mxu0 0
    %2395 = vmatpush1.bf16.msra.mxu0 %v2376
    %2396 = vmatprep.subr.bf16.mxu0 0
    %2397 = vmatpush2.bf16.msra.mxu0 0
    %2398 = vmatprep.subr.bf16.mxu0 0
    %2399 = vmatpush2.bf16.msra.mxu0 0
    %2400 = vmatprep.subr.bf16.mxu0 0
    %2401 = vmatpush2.bf16.msra.mxu0 0
    %2402 = vmatprep.subr.bf16.mxu0 0
    %2403 = vmatpush2.bf16.msra.mxu0 0
    %2404 = vmatprep.subr.bf16.mxu0 0
    %2405 = vmatpush2.bf16.msra.mxu0 0
    %2406 = vmatprep.subr.bf16.mxu0 0
    %2407 = vmatpush2.bf16.msra.mxu0 0
    %2408 = vmatprep.subr.bf16.mxu0 0
    %2409 = vmatpush2.bf16.msra.mxu0 0
    %2410 = vmatprep.subr.bf16.mxu0 0
    %2411 = vmatpush2.bf16.msra.mxu0 0
    %2412 = vmatprep.mubr.bf16.mxu0 0
    %2413 = vmatmul.mubr.bf16.gmra.mxu0 %v217
    %v2414 = vpop.f32.mrf.mxu0
    %v2415 = vadd.f32 0.0, %v2414
    %v2416 = vpop.f32.mrf.mxu0
    %v2417 = vpop.f32.mrf.mxu0
    %v2418 = vpop.f32.mrf.mxu0
    %2419 = vdwg.mxu0
    %v2420 = vadd.f32 %v2367, %v2415
    %v2421 = vxor.u32 %v2420, 2147483648
    %v2422 = vmul.f32 %v2421, 1.442695
    %v2423 = vpow.pop %v2422
    %v2424 = vadd.f32 %v2423, 1.0
    %v2425 = vrcp.pop %v2424
    %v2426 = vmul.f32 1.0, %v2425
    %v2427 = vtanh.pop %v2420
    %v2428 = vmul.f32 %v2426, 0.0
    %2430 = vrot.lane.b32.xlu0 %v2427, 64
    %v2431 = vpop.permute.xlu0 %2430
    %v2433 = vmul.f32 %v2426, %v2431
    %2435 = vrot.lane.b32.xlu0 %v2433, 32
    %v2436 = vpop.permute.xlu0 %2435
    %v2438 = vadd.f32 %v2428, %v2436
    %v2439 = vtanh.pop %v2438
    %2441 = vrot.lane.b32.xlu0 %v2439, 64
    %v2442 = vpop.permute.xlu0 %2441
    %v2444 = vmul.f32 %v2426, %v2442
    %2446 = vrot.lane.b32.xlu0 %v2444, 32
    %v2447 = vpop.permute.xlu0 %2446
    %2449 = vst.msk [vmem:[#allocation3] sm:$0xff] %vm215, %v2447
    %v2450 = vld [vmem:[#allocation4 + $0x8] sm:$0xff]
    %v2451 = vpack.c.bf16 %v2444, %v2444
    %2453 = vrot.lane.b32.xlu0 %v2451, 32
    %v2454 = vpop.permute.xlu0 %2453
    %v2456 = vsel %vm215, %v2454, 0
    %2458 = vmatprep.subr.bf16.mxu0 0
    %2459 = vmatpush1.bf16.msra.mxu0 0
    %2460 = vmatprep.subr.bf16.mxu0 0
    %2461 = vmatpush1.bf16.msra.mxu0 0
    %2462 = vmatprep.subr.bf16.mxu0 0
    %2463 = vmatpush1.bf16.msra.mxu0 0
    %2464 = vmatprep.subr.bf16.mxu0 0
    %2465 = vmatpush1.bf16.msra.mxu0 0
    %2466 = vmatprep.subr.bf16.mxu0 0
    %2467 = vmatpush1.bf16.msra.mxu0 0
    %2468 = vmatprep.subr.bf16.mxu0 0
    %2469 = vmatpush1.bf16.msra.mxu0 0
    %2470 = vmatprep.subr.bf16.mxu0 0
    %2471 = vmatpush1.bf16.msra.mxu0 %v2377
    %2472 = vmatprep.subr.bf16.mxu0 0
    %2473 = vmatpush1.bf16.msra.mxu0 %v2376
    %2474 = vmatprep.subr.bf16.mxu0 0
    %2475 = vmatpush2.bf16.msra.mxu0 0
    %2476 = vmatprep.subr.bf16.mxu0 0
    %2477 = vmatpush2.bf16.msra.mxu0 0
    %2478 = vmatprep.subr.bf16.mxu0 0
    %2479 = vmatpush2.bf16.msra.mxu0 0
    %2480 = vmatprep.subr.bf16.mxu0 0
    %2481 = vmatpush2.bf16.msra.mxu0 0
    %2482 = vmatprep.subr.bf16.mxu0 0
    %2483 = vmatpush2.bf16.msra.mxu0 0
    %2484 = vmatprep.subr.bf16.mxu0 0
    %2485 = vmatpush2.bf16.msra.mxu0 0
    %2486 = vmatprep.subr.bf16.mxu0 0
    %2487 = vmatpush2.bf16.msra.mxu0 0
    %2488 = vmatprep.subr.bf16.mxu0 0
    %2489 = vmatpush2.bf16.msra.mxu0 0
    %2490 = vmatprep.mubr.bf16.mxu0 0
    %2491 = vmatmul.mubr.bf16.gmra.mxu0 %v2456
    %v2492 = vpop.f32.mrf.mxu0
    %v2493 = vadd.f32 0.0, %v2492
    %v2494 = vpop.f32.mrf.mxu0
    %v2495 = vpop.f32.mrf.mxu0
    %v2496 = vpop.f32.mrf.mxu0
    %2497 = vdwg.mxu0
    %v2498 = vadd.f32 %v2450, %v2493
    %v2499 = vxor.u32 %v2498, 2147483648
    %v2500 = vmul.f32 %v2499, 1.442695
    %v2501 = vpow.pop %v2500
    %v2502 = vadd.f32 %v2501, 1.0
    %v2503 = vrcp.pop %v2502
    %v2504 = vmul.f32 1.0, %v2503
    %v2505 = vtanh.pop %v2498
    %v2506 = vmul.f32 %v2504, %v2438
    %2508 = vrot.lane.b32.xlu0 %v2505, 64
    %v2509 = vpop.permute.xlu0 %2508
    %v2511 = vmul.f32 %v2504, %v2509
    %2513 = vrot.lane.b32.xlu0 %v2511, 32
    %v2514 = vpop.permute.xlu0 %2513
    %v2516 = vadd.f32 %v2506, %v2514
    %v2517 = vtanh.pop %v2516
    %2519 = vrot.lane.b32.xlu0 %v2517, 64
    %v2520 = vpop.permute.xlu0 %2519
    %v2522 = vmul.f32 %v2504, %v2520
    %2524 = vrot.lane.b32.xlu0 %v2522, 32
    %v2525 = vpop.permute.xlu0 %2524
    %2527 = vst.msk [vmem:[#allocation3 + $0x8] sm:$0xff] %vm215, %v2525
    %v2528 = vld [vmem:[#allocation4 + $0x10] sm:$0xff]
    %v2529 = vpack.c.bf16 %v2522, %v2522
    %2531 = vrot.lane.b32.xlu0 %v2529, 32
    %v2532 = vpop.permute.xlu0 %2531
    %v2534 = vsel %vm215, %v2532, 0
    %2536 = vmatprep.subr.bf16.mxu0 0
    %2537 = vmatpush1.bf16.msra.mxu0 0
    %2538 = vmatprep.subr.bf16.mxu0 0
    %2539 = vmatpush1.bf16.msra.mxu0 0
    %2540 = vmatprep.subr.bf16.mxu0 0
    %2541 = vmatpush1.bf16.msra.mxu0 0
    %2542 = vmatprep.subr.bf16.mxu0 0
    %2543 = vmatpush1.bf16.msra.mxu0 0
    %2544 = vmatprep.subr.bf16.mxu0 0
    %2545 = vmatpush1.bf16.msra.mxu0 0
    %2546 = vmatprep.subr.bf16.mxu0 0
    %2547 = vmatpush1.bf16.msra.mxu0 0
    %2548 = vmatprep.subr.bf16.mxu0 0
    %2549 = vmatpush1.bf16.msra.mxu0 %v2377
    %2550 = vmatprep.subr.bf16.mxu0 0
    %2551 = vmatpush1.bf16.msra.mxu0 %v2376
    %2552 = vmatprep.subr.bf16.mxu0 0
    %2553 = vmatpush2.bf16.msra.mxu0 0
    %2554 = vmatprep.subr.bf16.mxu0 0
    %2555 = vmatpush2.bf16.msra.mxu0 0
    %2556 = vmatprep.subr.bf16.mxu0 0
    %2557 = vmatpush2.bf16.msra.mxu0 0
    %2558 = vmatprep.subr.bf16.mxu0 0
    %2559 = vmatpush2.bf16.msra.mxu0 0
    %2560 = vmatprep.subr.bf16.mxu0 0
    %2561 = vmatpush2.bf16.msra.mxu0 0
    %2562 = vmatprep.subr.bf16.mxu0 0
    %2563 = vmatpush2.bf16.msra.mxu0 0
    %2564 = vmatprep.subr.bf16.mxu0 0
    %2565 = vmatpush2.bf16.msra.mxu0 0
    %2566 = vmatprep.subr.bf16.mxu0 0
    %2567 = vmatpush2.bf16.msra.mxu0 0
    %2568 = vmatprep.mubr.bf16.mxu0 0
    %2569 = vmatmul.mubr.bf16.gmra.mxu0 %v2534
    %v2570 = vpop.f32.mrf.mxu0
    %v2571 = vadd.f32 0.0, %v2570
    %v2572 = vpop.f32.mrf.mxu0
    %v2573 = vpop.f32.mrf.mxu0
    %v2574 = vpop.f32.mrf.mxu0
    %2575 = vdwg.mxu0
    %v2576 = vadd.f32 %v2528, %v2571
    %v2577 = vxor.u32 %v2576, 2147483648
    %v2578 = vmul.f32 %v2577, 1.442695
    %v2579 = vpow.pop %v2578
    %v2580 = vadd.f32 %v2579, 1.0
    %v2581 = vrcp.pop %v2580
    %v2582 = vmul.f32 1.0, %v2581
    %v2583 = vtanh.pop %v2576
    %v2584 = vmul.f32 %v2582, %v2516
    %2586 = vrot.lane.b32.xlu0 %v2583, 64
    %v2587 = vpop.permute.xlu0 %2586
    %v2589 = vmul.f32 %v2582, %v2587
    %2591 = vrot.lane.b32.xlu0 %v2589, 32
    %v2592 = vpop.permute.xlu0 %2591
    %v2594 = vadd.f32 %v2584, %v2592
    %v2595 = vtanh.pop %v2594
    %2597 = vrot.lane.b32.xlu0 %v2595, 64
    %v2598 = vpop.permute.xlu0 %2597
    %v2600 = vmul.f32 %v2582, %v2598
    %2602 = vrot.lane.b32.xlu0 %v2600, 32
    %v2603 = vpop.permute.xlu0 %2602
    %2605 = vst.msk [vmem:[#allocation3 + $0x10] sm:$0xff] %vm215, %v2603
    %v2606 = vld [vmem:[#allocation4 + $0x18] sm:$0xff]
    %v2607 = vpack.c.bf16 %v2600, %v2600
    %2609 = vrot.lane.b32.xlu0 %v2607, 32
    %v2610 = vpop.permute.xlu0 %2609
    %v2612 = vsel %vm215, %v2610, 0
    %2614 = vmatprep.subr.bf16.mxu0 0
    %2615 = vmatpush1.bf16.msra.mxu0 0
    %2616 = vmatprep.subr.bf16.mxu0 0
    %2617 = vmatpush1.bf16.msra.mxu0 0
    %2618 = vmatprep.subr.bf16.mxu0 0
    %2619 = vmatpush1.bf16.msra.mxu0 0
    %2620 = vmatprep.subr.bf16.mxu0 0
    %2621 = vmatpush1.bf16.msra.mxu0 0
    %2622 = vmatprep.subr.bf16.mxu0 0
    %2623 = vmatpush1.bf16.msra.mxu0 0
    %2624 = vmatprep.subr.bf16.mxu0 0
    %2625 = vmatpush1.bf16.msra.mxu0 0
    %2626 = vmatprep.subr.bf16.mxu0 0
    %2627 = vmatpush1.bf16.msra.mxu0 %v2377
    %2628 = vmatprep.subr.bf16.mxu0 0
    %2629 = vmatpush1.bf16.msra.mxu0 %v2376
    %2630 = vmatprep.subr.bf16.mxu0 0
    %2631 = vmatpush2.bf16.msra.mxu0 0
    %2632 = vmatprep.subr.bf16.mxu0 0
    %2633 = vmatpush2.bf16.msra.mxu0 0
    %2634 = vmatprep.subr.bf16.mxu0 0
    %2635 = vmatpush2.bf16.msra.mxu0 0
    %2636 = vmatprep.subr.bf16.mxu0 0
    %2637 = vmatpush2.bf16.msra.mxu0 0
    %2638 = vmatprep.subr.bf16.mxu0 0
    %2639 = vmatpush2.bf16.msra.mxu0 0
    %2640 = vmatprep.subr.bf16.mxu0 0
    %2641 = vmatpush2.bf16.msra.mxu0 0
    %2642 = vmatprep.subr.bf16.mxu0 0
    %2643 = vmatpush2.bf16.msra.mxu0 0
    %2644 = vmatprep.subr.bf16.mxu0 0
    %2645 = vmatpush2.bf16.msra.mxu0 0
    %2646 = vmatprep.mubr.bf16.mxu0 0
    %2647 = vmatmul.mubr.bf16.gmra.mxu0 %v2612
    %v2648 = vpop.f32.mrf.mxu0
    %v2649 = vadd.f32 0.0, %v2648
    %v2650 = vpop.f32.mrf.mxu0
    %v2651 = vpop.f32.mrf.mxu0
    %v2652 = vpop.f32.mrf.mxu0
    %2653 = vdwg.mxu0
    %v2654 = vadd.f32 %v2606, %v2649
    %v2655 = vxor.u32 %v2654, 2147483648
    %v2656 = vmul.f32 %v2655, 1.442695
    %v2657 = vpow.pop %v2656
    %v2658 = vadd.f32 %v2657, 1.0
    %v2659 = vrcp.pop %v2658
    %v2660 = vmul.f32 1.0, %v2659
    %v2661 = vtanh.pop %v2654
    %v2662 = vmul.f32 %v2660, %v2594
    %2664 = vrot.lane.b32.xlu0 %v2661, 64
    %v2665 = vpop.permute.xlu0 %2664
    %v2667 = vmul.f32 %v2660, %v2665
    %2669 = vrot.lane.b32.xlu0 %v2667, 32
    %v2670 = vpop.permute.xlu0 %2669
    %v2672 = vadd.f32 %v2662, %v2670
    %v2673 = vtanh.pop %v2672
    %2675 = vrot.lane.b32.xlu0 %v2673, 64
    %v2676 = vpop.permute.xlu0 %2675
    %v2678 = vmul.f32 %v2660, %v2676
    %2680 = vrot.lane.b32.xlu0 %v2678, 32
    %v2681 = vpop.permute.xlu0 %2680
    %2683 = vst.msk [vmem:[#allocation3 + $0x18] sm:$0xff] %vm215, %v2681
    %v2684 = vld [vmem:[#allocation4 + $0x20] sm:$0xff]
    %v2685 = vpack.c.bf16 %v2678, %v2678
    %2687 = vrot.lane.b32.xlu0 %v2685, 32
    %v2688 = vpop.permute.xlu0 %2687
    %v2690 = vsel %vm215, %v2688, 0
    %2692 = vmatprep.subr.bf16.mxu0 0
    %2693 = vmatpush1.bf16.msra.mxu0 0
    %2694 = vmatprep.subr.bf16.mxu0 0
    %2695 = vmatpush1.bf16.msra.mxu0 0
    %2696 = vmatprep.subr.bf16.mxu0 0
    %2697 = vmatpush1.bf16.msra.mxu0 0
    %2698 = vmatprep.subr.bf16.mxu0 0
    %2699 = vmatpush1.bf16.msra.mxu0 0
    %2700 = vmatprep.subr.bf16.mxu0 0
    %2701 = vmatpush1.bf16.msra.mxu0 0
    %2702 = vmatprep.subr.bf16.mxu0 0
    %2703 = vmatpush1.bf16.msra.mxu0 0
    %2704 = vmatprep.subr.bf16.mxu0 0
    %2705 = vmatpush1.bf16.msra.mxu0 %v2377
    %2706 = vmatprep.subr.bf16.mxu0 0
    %2707 = vmatpush1.bf16.msra.mxu0 %v2376
    %2708 = vmatprep.subr.bf16.mxu0 0
    %2709 = vmatpush2.bf16.msra.mxu0 0
    %2710 = vmatprep.subr.bf16.mxu0 0
    %2711 = vmatpush2.bf16.msra.mxu0 0
    %2712 = vmatprep.subr.bf16.mxu0 0
    %2713 = vmatpush2.bf16.msra.mxu0 0
    %2714 = vmatprep.subr.bf16.mxu0 0
    %2715 = vmatpush2.bf16.msra.mxu0 0
    %2716 = vmatprep.subr.bf16.mxu0 0
    %2717 = vmatpush2.bf16.msra.mxu0 0
    %2718 = vmatprep.subr.bf16.mxu0 0
    %2719 = vmatpush2.bf16.msra.mxu0 0
    %2720 = vmatprep.subr.bf16.mxu0 0
    %2721 = vmatpush2.bf16.msra.mxu0 0
    %2722 = vmatprep.subr.bf16.mxu0 0
    %2723 = vmatpush2.bf16.msra.mxu0 0
    %2724 = vmatprep.mubr.bf16.mxu0 0
    %2725 = vmatmul.mubr.bf16.gmra.mxu0 %v2690
    %v2726 = vpop.f32.mrf.mxu0
    %v2727 = vadd.f32 0.0, %v2726
    %v2728 = vpop.f32.mrf.mxu0
    %v2729 = vpop.f32.mrf.mxu0
    %v2730 = vpop.f32.mrf.mxu0
    %2731 = vdwg.mxu0
    %v2732 = vadd.f32 %v2684, %v2727
    %v2733 = vxor.u32 %v2732, 2147483648
    %v2734 = vmul.f32 %v2733, 1.442695
    %v2735 = vpow.pop %v2734
    %v2736 = vadd.f32 %v2735, 1.0
    %v2737 = vrcp.pop %v2736
    %v2738 = vmul.f32 1.0, %v2737
    %v2739 = vtanh.pop %v2732
    %v2740 = vmul.f32 %v2738, %v2672
    %2742 = vrot.lane.b32.xlu0 %v2739, 64
    %v2743 = vpop.permute.xlu0 %2742
    %v2745 = vmul.f32 %v2738, %v2743
    %2747 = vrot.lane.b32.xlu0 %v2745, 32
    %v2748 = vpop.permute.xlu0 %2747
    %v2750 = vadd.f32 %v2740, %v2748
    %v2751 = vtanh.pop %v2750
    %2753 = vrot.lane.b32.xlu0 %v2751, 64
    %v2754 = vpop.permute.xlu0 %2753
    %v2756 = vmul.f32 %v2738, %v2754
    %2758 = vrot.lane.b32.xlu0 %v2756, 32
    %v2759 = vpop.permute.xlu0 %2758
    %2761 = vst.msk [vmem:[#allocation3 + $0x20] sm:$0xff] %vm215, %v2759
    %v2762 = vld [vmem:[#allocation4 + $0x28] sm:$0xff]
    %v2763 = vpack.c.bf16 %v2756, %v2756
    %2765 = vrot.lane.b32.xlu0 %v2763, 32
    %v2766 = vpop.permute.xlu0 %2765
    %v2768 = vsel %vm215, %v2766, 0
    %2770 = vmatprep.subr.bf16.mxu0 0
    %2771 = vmatpush1.bf16.msra.mxu0 0
    %2772 = vmatprep.subr.bf16.mxu0 0
    %2773 = vmatpush1.bf16.msra.mxu0 0
    %2774 = vmatprep.subr.bf16.mxu0 0
    %2775 = vmatpush1.bf16.msra.mxu0 0
    %2776 = vmatprep.subr.bf16.mxu0 0
    %2777 = vmatpush1.bf16.msra.mxu0 0
    %2778 = vmatprep.subr.bf16.mxu0 0
    %2779 = vmatpush1.bf16.msra.mxu0 0
    %2780 = vmatprep.subr.bf16.mxu0 0
    %2781 = vmatpush1.bf16.msra.mxu0 0
    %2782 = vmatprep.subr.bf16.mxu0 0
    %2783 = vmatpush1.bf16.msra.mxu0 %v2377
    %2784 = vmatprep.subr.bf16.mxu0 0
    %2785 = vmatpush1.bf16.msra.mxu0 %v2376
    %2786 = vmatprep.subr.bf16.mxu0 0
    %2787 = vmatpush2.bf16.msra.mxu0 0
    %2788 = vmatprep.subr.bf16.mxu0 0
    %2789 = vmatpush2.bf16.msra.mxu0 0
    %2790 = vmatprep.subr.bf16.mxu0 0
    %2791 = vmatpush2.bf16.msra.mxu0 0
    %2792 = vmatprep.subr.bf16.mxu0 0
    %2793 = vmatpush2.bf16.msra.mxu0 0
    %2794 = vmatprep.subr.bf16.mxu0 0
    %2795 = vmatpush2.bf16.msra.mxu0 0
    %2796 = vmatprep.subr.bf16.mxu0 0
    %2797 = vmatpush2.bf16.msra.mxu0 0
    %2798 = vmatprep.subr.bf16.mxu0 0
    %2799 = vmatpush2.bf16.msra.mxu0 0
    %2800 = vmatprep.subr.bf16.mxu0 0
    %2801 = vmatpush2.bf16.msra.mxu0 0
    %2802 = vmatprep.mubr.bf16.mxu0 0
    %2803 = vmatmul.mubr.bf16.gmra.mxu0 %v2768
    %v2804 = vpop.f32.mrf.mxu0
    %v2805 = vadd.f32 0.0, %v2804
    %v2806 = vpop.f32.mrf.mxu0
    %v2807 = vpop.f32.mrf.mxu0
    %v2808 = vpop.f32.mrf.mxu0
    %2809 = vdwg.mxu0
    %v2810 = vadd.f32 %v2762, %v2805
    %v2811 = vxor.u32 %v2810, 2147483648
    %v2812 = vmul.f32 %v2811, 1.442695
    %v2813 = vpow.pop %v2812
    %v2814 = vadd.f32 %v2813, 1.0
    %v2815 = vrcp.pop %v2814
    %v2816 = vmul.f32 1.0, %v2815
    %v2817 = vtanh.pop %v2810
    %v2818 = vmul.f32 %v2816, %v2750
    %2820 = vrot.lane.b32.xlu0 %v2817, 64
    %v2821 = vpop.permute.xlu0 %2820
    %v2823 = vmul.f32 %v2816, %v2821
    %2825 = vrot.lane.b32.xlu0 %v2823, 32
    %v2826 = vpop.permute.xlu0 %2825
    %v2828 = vadd.f32 %v2818, %v2826
    %v2829 = vtanh.pop %v2828
    %2831 = vrot.lane.b32.xlu0 %v2829, 64
    %v2832 = vpop.permute.xlu0 %2831
    %v2834 = vmul.f32 %v2816, %v2832
    %2836 = vrot.lane.b32.xlu0 %v2834, 32
    %v2837 = vpop.permute.xlu0 %2836
    %2839 = vst.msk [vmem:[#allocation3 + $0x28] sm:$0xff] %vm215, %v2837
    %v2840 = vld [vmem:[#allocation4 + $0x30] sm:$0xff]
    %v2841 = vpack.c.bf16 %v2834, %v2834
    %2843 = vrot.lane.b32.xlu0 %v2841, 32
    %v2844 = vpop.permute.xlu0 %2843
    %v2846 = vsel %vm215, %v2844, 0
    %2848 = vmatprep.subr.bf16.mxu0 0
    %2849 = vmatpush1.bf16.msra.mxu0 0
    %2850 = vmatprep.subr.bf16.mxu0 0
    %2851 = vmatpush1.bf16.msra.mxu0 0
    %2852 = vmatprep.subr.bf16.mxu0 0
    %2853 = vmatpush1.bf16.msra.mxu0 0
    %2854 = vmatprep.subr.bf16.mxu0 0
    %2855 = vmatpush1.bf16.msra.mxu0 0
    %2856 = vmatprep.subr.bf16.mxu0 0
    %2857 = vmatpush1.bf16.msra.mxu0 0
    %2858 = vmatprep.subr.bf16.mxu0 0
    %2859 = vmatpush1.bf16.msra.mxu0 0
    %2860 = vmatprep.subr.bf16.mxu0 0
    %2861 = vmatpush1.bf16.msra.mxu0 %v2377
    %2862 = vmatprep.subr.bf16.mxu0 0
    %2863 = vmatpush1.bf16.msra.mxu0 %v2376
    %2864 = vmatprep.subr.bf16.mxu0 0
    %2865 = vmatpush2.bf16.msra.mxu0 0
    %2866 = vmatprep.subr.bf16.mxu0 0
    %2867 = vmatpush2.bf16.msra.mxu0 0
    %2868 = vmatprep.subr.bf16.mxu0 0
    %2869 = vmatpush2.bf16.msra.mxu0 0
    %2870 = vmatprep.subr.bf16.mxu0 0
    %2871 = vmatpush2.bf16.msra.mxu0 0
    %2872 = vmatprep.subr.bf16.mxu0 0
    %2873 = vmatpush2.bf16.msra.mxu0 0
    %2874 = vmatprep.subr.bf16.mxu0 0
    %2875 = vmatpush2.bf16.msra.mxu0 0
    %2876 = vmatprep.subr.bf16.mxu0 0
    %2877 = vmatpush2.bf16.msra.mxu0 0
    %2878 = vmatprep.subr.bf16.mxu0 0
    %2879 = vmatpush2.bf16.msra.mxu0 0
    %2880 = vmatprep.mubr.bf16.mxu0 0
    %2881 = vmatmul.mubr.bf16.gmra.mxu0 %v2846
    %v2882 = vpop.f32.mrf.mxu0
    %v2883 = vadd.f32 0.0, %v2882
    %v2884 = vpop.f32.mrf.mxu0
    %v2885 = vpop.f32.mrf.mxu0
    %v2886 = vpop.f32.mrf.mxu0
    %2887 = vdwg.mxu0
    %v2888 = vadd.f32 %v2840, %v2883
    %v2889 = vxor.u32 %v2888, 2147483648
    %v2890 = vmul.f32 %v2889, 1.442695
    %v2891 = vpow.pop %v2890
    %v2892 = vadd.f32 %v2891, 1.0
    %v2893 = vrcp.pop %v2892
    %v2894 = vmul.f32 1.0, %v2893
    %v2895 = vtanh.pop %v2888
    %v2896 = vmul.f32 %v2894, %v2828
    %2898 = vrot.lane.b32.xlu0 %v2895, 64
    %v2899 = vpop.permute.xlu0 %2898
    %v2901 = vmul.f32 %v2894, %v2899
    %2903 = vrot.lane.b32.xlu0 %v2901, 32
    %v2904 = vpop.permute.xlu0 %2903
    %v2906 = vadd.f32 %v2896, %v2904
    %v2907 = vtanh.pop %v2906
    %2909 = vrot.lane.b32.xlu0 %v2907, 64
    %v2910 = vpop.permute.xlu0 %2909
    %v2912 = vmul.f32 %v2894, %v2910
    %2914 = vrot.lane.b32.xlu0 %v2912, 32
    %v2915 = vpop.permute.xlu0 %2914
    %2917 = vst.msk [vmem:[#allocation3 + $0x30] sm:$0xff] %vm215, %v2915
    %v2918 = vld [vmem:[#allocation4 + $0x38] sm:$0xff]
    %v2919 = vpack.c.bf16 %v2912, %v2912
    %2921 = vrot.lane.b32.xlu0 %v2919, 32
    %v2922 = vpop.permute.xlu0 %2921
    %v2924 = vsel %vm215, %v2922, 0
    %2926 = vmatprep.subr.bf16.mxu0 0
    %2927 = vmatpush1.bf16.msra.mxu0 0
    %2928 = vmatprep.subr.bf16.mxu0 0
    %2929 = vmatpush1.bf16.msra.mxu0 0
    %2930 = vmatprep.subr.bf16.mxu0 0
    %2931 = vmatpush1.bf16.msra.mxu0 0
    %2932 = vmatprep.subr.bf16.mxu0 0
    %2933 = vmatpush1.bf16.msra.mxu0 0
    %2934 = vmatprep.subr.bf16.mxu0 0
    %2935 = vmatpush1.bf16.msra.mxu0 0
    %2936 = vmatprep.subr.bf16.mxu0 0
    %2937 = vmatpush1.bf16.msra.mxu0 0
    %2938 = vmatprep.subr.bf16.mxu0 0
    %2939 = vmatpush1.bf16.msra.mxu0 %v2377
    %2940 = vmatprep.subr.bf16.mxu0 0
    %2941 = vmatpush1.bf16.msra.mxu0 %v2376
    %2942 = vmatprep.subr.bf16.mxu0 0
    %2943 = vmatpush2.bf16.msra.mxu0 0
    %2944 = vmatprep.subr.bf16.mxu0 0
    %2945 = vmatpush2.bf16.msra.mxu0 0
    %2946 = vmatprep.subr.bf16.mxu0 0
    %2947 = vmatpush2.bf16.msra.mxu0 0
    %2948 = vmatprep.subr.bf16.mxu0 0
    %2949 = vmatpush2.bf16.msra.mxu0 0
    %2950 = vmatprep.subr.bf16.mxu0 0
    %2951 = vmatpush2.bf16.msra.mxu0 0
    %2952 = vmatprep.subr.bf16.mxu0 0
    %2953 = vmatpush2.bf16.msra.mxu0 0
    %2954 = vmatprep.subr.bf16.mxu0 0
    %2955 = vmatpush2.bf16.msra.mxu0 0
    %2956 = vmatprep.subr.bf16.mxu0 0
    %2957 = vmatpush2.bf16.msra.mxu0 0
    %2958 = vmatprep.mubr.bf16.mxu0 0
    %2959 = vmatmul.mubr.bf16.gmra.mxu0 %v2924
    %v2960 = vpop.f32.mrf.mxu0
    %v2961 = vadd.f32 0.0, %v2960
    %v2962 = vpop.f32.mrf.mxu0
    %v2963 = vpop.f32.mrf.mxu0
    %v2964 = vpop.f32.mrf.mxu0
    %2965 = vdwg.mxu0
    %v2966 = vadd.f32 %v2918, %v2961
    %v2967 = vxor.u32 %v2966, 2147483648
    %v2968 = vmul.f32 %v2967, 1.442695
    %v2969 = vpow.pop %v2968
    %v2970 = vadd.f32 %v2969, 1.0
    %v2971 = vrcp.pop %v2970
    %v2972 = vmul.f32 1.0, %v2971
    %v2973 = vtanh.pop %v2966
    %v2974 = vmul.f32 %v2972, %v2906
    %2976 = vrot.lane.b32.xlu0 %v2973, 64
    %v2977 = vpop.permute.xlu0 %2976
    %v2979 = vmul.f32 %v2972, %v2977
    %2981 = vrot.lane.b32.xlu0 %v2979, 32
    %v2982 = vpop.permute.xlu0 %2981
    %v2984 = vadd.f32 %v2974, %v2982
    %v2985 = vtanh.pop %v2984
    %2987 = vrot.lane.b32.xlu0 %v2985, 64
    %v2988 = vpop.permute.xlu0 %2987
    %v2990 = vmul.f32 %v2972, %v2988
    %2992 = vrot.lane.b32.xlu0 %v2990, 32
    %v2993 = vpop.permute.xlu0 %2992
    %2995 = vst.msk [vmem:[#allocation3 + $0x38] sm:$0xff] %vm215, %v2993
    %v2996 = vld [vmem:[#allocation3] sm:$0xff]
    %v2997 = vld [vmem:[#allocation3 + $0x8] sm:$0xff]
    %v2998 = vld [vmem:[#allocation3 + $0x10] sm:$0xff]
    %v2999 = vld [vmem:[#allocation3 + $0x18] sm:$0xff]
    %v3000 = vld [vmem:[#allocation3 + $0x20] sm:$0xff]
    %v3001 = vld [vmem:[#allocation3 + $0x28] sm:$0xff]
    %v3002 = vld [vmem:[#allocation3 + $0x30] sm:$0xff]
    %v3003 = vld [vmem:[#allocation3 + $0x38] sm:$0xff]
    %v3004 = vpack.c.bf16 %v2997, %v2996
    %v3005 = vpack.c.bf16 %v2999, %v2998
    %v3006 = vpack.c.bf16 %v3001, %v3000
    %v3007 = vpack.c.bf16 %v3003, %v3002
    %v3008 = vld [vmem:[%s13] sm:$0xf]
    %v3009 = vld [vmem:[%s13 + $0x4] sm:$0xf]
    %v3010 = vld [vmem:[%s13 + $0x8] sm:$0xf]
    %v3011 = vld [vmem:[%s13 + $0xc] sm:$0xf]
    %v3012 = vld [vmem:[%s14] sm:$0x1]
    %v3014 = vlaneseq
    %v3015 = vshrl.u32 %v3014, 7
    %v3016 = vsub.s32 0, %v3015
    %v3017 = vrot.slane %v3012, %v3016
    %v3023 = vunpack.c.l.b16 %v3008
    %v3024 = vunpack.c.l.b16 %v3009
    %v3025 = vunpack.c.l.b16 %v3010
    %v3026 = vunpack.c.l.b16 %v3011
    %v3027 = vpack.c.b16 %v3024, %v3023
    %v3028 = vpack.c.b16 %v3026, %v3025
    %v3032 = vsel %vm215, %v3004, 0
    %v3035 = vsel %vm215, %v3005, 0
    %v3038 = vsel %vm215, %v3006, 0
    %v3041 = vsel %vm215, %v3007, 0
    %3043 = vmatprep.subr.bf16.mxu0 0
    %3044 = vmatpush1.bf16.msra.mxu0 0
    %3045 = vmatprep.subr.bf16.mxu0 0
    %3046 = vmatpush1.bf16.msra.mxu0 0
    %3047 = vmatprep.subr.bf16.mxu0 0
    %3048 = vmatpush1.bf16.msra.mxu0 0
    %3049 = vmatprep.subr.bf16.mxu0 0
    %3050 = vmatpush1.bf16.msra.mxu0 0
    %3051 = vmatprep.subr.bf16.mxu0 0
    %3052 = vmatpush1.bf16.msra.mxu0 0
    %3053 = vmatprep.subr.bf16.mxu0 0
    %3054 = vmatpush1.bf16.msra.mxu0 0
    %3055 = vmatprep.subr.bf16.mxu0 0
    %3056 = vmatpush1.bf16.msra.mxu0 %v3028
    %3057 = vmatprep.subr.bf16.mxu0 0
    %3058 = vmatpush1.bf16.msra.mxu0 %v3027
    %3059 = vmatprep.subr.bf16.mxu0 0
    %3060 = vmatpush2.bf16.msra.mxu0 0
    %3061 = vmatprep.subr.bf16.mxu0 0
    %3062 = vmatpush2.bf16.msra.mxu0 0
    %3063 = vmatprep.subr.bf16.mxu0 0
    %3064 = vmatpush2.bf16.msra.mxu0 0
    %3065 = vmatprep.subr.bf16.mxu0 0
    %3066 = vmatpush2.bf16.msra.mxu0 0
    %3067 = vmatprep.subr.bf16.mxu0 0
    %3068 = vmatpush2.bf16.msra.mxu0 0
    %3069 = vmatprep.subr.bf16.mxu0 0
    %3070 = vmatpush2.bf16.msra.mxu0 0
    %3071 = vmatprep.subr.bf16.mxu0 0
    %3072 = vmatpush2.bf16.msra.mxu0 0
    %3073 = vmatprep.subr.bf16.mxu0 0
    %3074 = vmatpush2.bf16.msra.mxu0 0
    %3075 = vmatprep.mubr.bf16.mxu0 0
    %3076 = vmatmul.mubr.bf16.gmra.mxu0 %v3032
    %v3077 = vpop.f32.mrf.mxu0
    %v3078 = vadd.f32 %v3017, %v3077
    %v3079 = vpop.f32.mrf.mxu0
    %v3080 = vpop.f32.mrf.mxu0
    %v3081 = vadd.f32 %v3017, %v3080
    %v3082 = vpop.f32.mrf.mxu0
    %3083 = vmatprep.mubr.bf16.mxu0 0
    %3084 = vmatmul.mubr.bf16.gmra.mxu0 %v3035
    %v3085 = vpop.f32.mrf.mxu0
    %v3086 = vadd.f32 %v3017, %v3085
    %v3087 = vpop.f32.mrf.mxu0
    %v3088 = vpop.f32.mrf.mxu0
    %v3089 = vadd.f32 %v3017, %v3088
    %v3090 = vpop.f32.mrf.mxu0
    %3091 = vmatprep.mubr.bf16.mxu0 0
    %3092 = vmatmul.mubr.bf16.gmra.mxu0 %v3038
    %v3093 = vpop.f32.mrf.mxu0
    %v3094 = vadd.f32 %v3017, %v3093
    %v3095 = vpop.f32.mrf.mxu0
    %v3096 = vpop.f32.mrf.mxu0
    %v3097 = vadd.f32 %v3017, %v3096
    %v3098 = vpop.f32.mrf.mxu0
    %3099 = vmatprep.mubr.bf16.mxu0 0
    %3100 = vmatmul.mubr.bf16.gmra.mxu0 %v3041
    %v3101 = vpop.f32.mrf.mxu0
    %v3102 = vadd.f32 %v3017, %v3101
    %v3103 = vpop.f32.mrf.mxu0
    %v3104 = vpop.f32.mrf.mxu0
    %v3105 = vadd.f32 %v3017, %v3104
    %v3106 = vpop.f32.mrf.mxu0
    %3107 = vdwg.mxu0
    %v3108 = vtanh.pop %v3078
    %v3109 = vtanh.pop %v3081
    %v3110 = vtanh.pop %v3086
    %v3111 = vtanh.pop %v3089
    %v3112 = vtanh.pop %v3094
    %v3113 = vtanh.pop %v3097
    %v3114 = vtanh.pop %v3102
    %v3115 = vtanh.pop %v3105
    %3116 = vst [vmem:[%s15] sm:$0xff] %v3108
    %3117 = vst [vmem:[%s15 + $0x8] sm:$0xff] %v3109
    %3118 = vst [vmem:[%s15 + $0x10] sm:$0xff] %v3110
    %3119 = vst [vmem:[%s15 + $0x18] sm:$0xff] %v3111
    %3120 = vst [vmem:[%s15 + $0x20] sm:$0xff] %v3112
    %3121 = vst [vmem:[%s15 + $0x28] sm:$0xff] %v3113
    %3122 = vst [vmem:[%s15 + $0x30] sm:$0xff] %v3114
    %3123 = vst [vmem:[%s15 + $0x38] sm:$0xff] %v3115
    // Predicated region
    $region74: #{lstm_autoencoder_forward.1} parent=1 // pred_check
      _
    $region75: #{lstm_autoencoder_forward.1} parent=1 // pred_check_branch
      %3125 = sbr.rel (0) target = $region77
    $region76: #{lstm_autoencoder_forward.1} parent=1 // pred_region
      _
    $region77: #{lstm_autoencoder_forward.1} parent=1 // pred_fallthru
      _
    // Predicated region
    $region78: #{lstm_autoencoder_forward.1} parent=1 // pred_check
      _
    $region79: #{lstm_autoencoder_forward.1} parent=1 // pred_check_branch
      %3127 = sbr.rel (0) target = $region81
    $region80: #{lstm_autoencoder_forward.1} parent=1 // pred_region
      _
    $region81: #{lstm_autoencoder_forward.1} parent=1 // pred_fallthru
      _
    %3128 = vsyncpa [#allocation6], 1
    %3129 = vsyncpa [#allocation8], 1

</llo_original>
